<compile_context>
chip_gen: v6e
topology: v6e:2x2x1
jax: 0.10.0
libtpu: 0.0.40
codegen_flags: <defaults>
</compile_context>

<pallas_src>
import jax
import jax.numpy as jnp
from jax.experimental import pallas as pl
from jax.experimental.pallas import tpu as pltpu

FEATURES = 40              # implied by protein_512_40 -> W_att(features, features)
A69_ROWS = 452             # static -> takes the L2ceng452_256 branch
A69_COLS = 30
A69_FLAT = A69_ROWS * A69_COLS   # 13560 (multiple of 8)
PROT_LEN = 512
OUT_PAD = 128              # 2-class logits padded to one full lane tile (dense stores)
BATCH_TILE = 128           # max batch rows per grid step (wrapper may pick smaller)

# ---- packed-slab layout (all segment starts 8-row aligned) -------------------------
# slab A, width 40: protein-branch fused weight for the raw protein vector, attention
# weight, fused bias, attention bias.
_W3EFF_OFF, _WATT_OFF = 0, 512
_BEFF_ROW, _BATT_ROW = 552, 560
_SLAB_A_ROWS = 568
# slab B, width 80: MLP weights/biases (MLP[0] split 40|40 to emulate the concat)
_WM1A_OFF, _WM1B_OFF, _WM2_OFF = 0, 40, 80
_BM1_ROW, _BM2_ROW = 160, 168
_SLAB_B_ROWS = 176
# slab C, width 128: classification head, lane-padded so the output store is dense
_WC_OFF, _BC_ROW = 0, 80
_SLAB_C_ROWS = 88


def gandti_kernel(compound_ref, a69_ref, prot_ref, wbig_ref,
                  slab_a_ref, slab_b_ref, slab_c_ref, out_ref):
    f32 = jnp.float32

    w3eff = slab_a_ref[_W3EFF_OFF:_W3EFF_OFF + PROT_LEN, :]             # [512, 40]
    watt = slab_a_ref[_WATT_OFF:_WATT_OFF + FEATURES, :]                # [40, 40]
    b_eff = slab_a_ref[_BEFF_ROW:_BEFF_ROW + 1, :]                      # [1, 40]
    batt = slab_a_ref[_BATT_ROW:_BATT_ROW + 1, :]                       # [1, 40]

    # ---- protein branch: L1ceng30_1 + L2ceng452_256 + L3ceng512_256 + protein_512_40
    # all pre-fused into two matmuls; the 30-channel reduction lives inside the
    # W_big contraction, entirely on the MXU (no VPU reduce).
    prot40 = (jnp.dot(a69_ref[...], wbig_ref[...], preferred_element_type=f32)
              + jnp.dot(prot_ref[...], w3eff, preferred_element_type=f32)
              + b_eff)                                                  # [Bt, 40]

    # ---- Attention (strictly per row == per batch-of-1 sample) ---------------------
    compound = compound_ref[...]                                        # [Bt, 40]
    # compound_h = relu(W_att(compound)) is computed but never used in the reference
    # forward -> dead code, omitted.
    protein_h = jnp.maximum(
        jnp.dot(prot40, watt, preferred_element_type=f32) + batt, 0.0)  # [Bt, 40]
    mult = jnp.sum(compound * protein_h, axis=-1, keepdims=True)        # [Bt, 1]
    weights = jnp.tanh(mult)                                            # [Bt, 1]
    # torch.mean(protein, 0) over the single row of each sample + unsqueeze == identity
    protein_vector = weights * protein_h                                # [Bt, 40]

    # ---- MLP head on cat((compound, protein_vector), 1): split matmuls -------------
    # (40+40 lane concat would force an XLU relayout; the weight split is free.)
    wm1a = slab_b_ref[_WM1A_OFF:_WM1A_OFF + FEATURES, :]                # [40, 80]
    wm1b = slab_b_ref[_WM1B_OFF:_WM1B_OFF + FEATURES, :]                # [40, 80]
    wm2 = slab_b_ref[_WM2_OFF:_WM2_OFF + 2 * FEATURES, :]               # [80, 80]
    bm1 = slab_b_ref[_BM1_ROW:_BM1_ROW + 1, :]                          # [1, 80]
    bm2 = slab_b_ref[_BM2_ROW:_BM2_ROW + 1, :]                          # [1, 80]

    h = jnp.maximum(jnp.dot(compound, wm1a, preferred_element_type=f32)
                    + jnp.dot(protein_vector, wm1b, preferred_element_type=f32)
                    + bm1, 0.0)                                         # [Bt, 80]
    h = jnp.maximum(jnp.dot(h, wm2, preferred_element_type=f32) + bm2, 0.0)

    # dropout(0.5): eval-mode identity (see TODO at top of file).
    wc = slab_c_ref[_WC_OFF:_WC_OFF + 2 * FEATURES, :]                  # [80, 128]
    bc = slab_c_ref[_BC_ROW:_BC_ROW + 1, :]                             # [1, 128]
    out_ref[...] = jnp.dot(h, wc, preferred_element_type=f32) + bc      # [Bt, 128]


def prepare_params(P):
    """One-time weight fusion / transposition / packing (hoisted off the call path)."""
    hi = jax.lax.Precision.HIGHEST
    f = FEATURES
    wp_a = P["wp"][:, :256]                                    # [40, 256]
    wp_b = P["wp"][:, 256:]                                    # [40, 256]
    # Fused effective weights:
    #   prot40 = a69_flat @ W_big + prot @ w3eff + b_eff
    w2eff_t = jnp.dot(wp_a, P["w2"], precision=hi).T           # [452, 40]
    w3eff_t = jnp.dot(wp_b, P["w3"], precision=hi).T           # [512, 40]
    b_eff = (jnp.dot(wp_a, P["b2"], precision=hi)
             + jnp.dot(wp_b, P["b3"], precision=hi)
             + P["bp"]
             + P["b1"][0] * jnp.sum(w2eff_t, axis=0))          # [40]

    # Fold L1ceng30_1's weight into the a69 contraction:
    #   W_big[i*30 + c, k] = w1[c] * w2eff[i, k]   (matches a69.reshape(B, 13560))
    w_big = (w2eff_t[:, None, :] * P["w1"][0][None, :, None]
             ).reshape(A69_FLAT, f).astype(jnp.float32)        # [13560, 40]

    slab_a = jnp.zeros((_SLAB_A_ROWS, f), jnp.float32)
    slab_a = slab_a.at[_W3EFF_OFF:_W3EFF_OFF + PROT_LEN, :].set(w3eff_t)
    slab_a = slab_a.at[_WATT_OFF:_WATT_OFF + f, :].set(P["watt"].T)
    slab_a = slab_a.at[_BEFF_ROW, :].set(b_eff)
    slab_a = slab_a.at[_BATT_ROW, :].set(P["batt"])

    slab_b = jnp.zeros((_SLAB_B_ROWS, 2 * f), jnp.float32)
    slab_b = slab_b.at[_WM1A_OFF:_WM1A_OFF + f, :].set(P["wm1"].T[:f, :])
    slab_b = slab_b.at[_WM1B_OFF:_WM1B_OFF + f, :].set(P["wm1"].T[f:, :])
    slab_b = slab_b.at[_WM2_OFF:_WM2_OFF + 2 * f, :].set(P["wm2"].T)
    slab_b = slab_b.at[_BM1_ROW, :].set(P["bm1"])
    slab_b = slab_b.at[_BM2_ROW, :].set(P["bm2"])

    slab_c = jnp.zeros((_SLAB_C_ROWS, OUT_PAD), jnp.float32)
    slab_c = slab_c.at[_WC_OFF:_WC_OFF + 2 * f, 0:2].set(P["wc"].T)
    slab_c = slab_c.at[_BC_ROW, 0:2].set(P["bc"])

    return dict(w_big=w_big, slab_a=slab_a, slab_b=slab_b, slab_c=slab_c)


def _round_up(n, m):
    return ((n + m - 1) // m) * m


@jax.jit
def gandti_forward(compound, a69, prot, prep):
    """compound [B,40], a69 [B,452,30], prot [B,512]; prep from prepare_params()."""
    B = compound.shape[0]

    # Batch tile: as big as the VMEM budget allows, but keep >= 2 grid steps whenever
    # B > 8 so the "parallel" axis actually feeds both of v7x's TensorCores.
    if B > 8:
        bt = min(BATCH_TILE, _round_up(-(-B // 2), 8))
    else:
        bt = 8

    # Free, contiguous reshape -- no transpose / pad pass over the dominant stream.
    a69f = a69.reshape(B, A69_FLAT).astype(jnp.float32)
    compound = compound.astype(jnp.float32)
    prot = prot.astype(jnp.float32)

    # Arbitrary batch sizes: pad the batch up to the tile (static, trace-time branch).
    pad = (-B) % bt
    if pad:
        compound = jnp.pad(compound, ((0, pad), (0, 0)))
        a69f = jnp.pad(a69f, ((0, pad), (0, 0)))
        prot = jnp.pad(prot, ((0, pad), (0, 0)))
    Bp = B + pad

    out = pl.pallas_call(
        gandti_kernel,
        out_shape=jax.ShapeDtypeStruct((Bp, OUT_PAD), jnp.float32),
        grid_spec=pltpu.PrefetchScalarGridSpec(
            num_scalar_prefetch=0,
            grid=(Bp // bt,),
            in_specs=[
                pl.BlockSpec((bt, FEATURES), lambda i: (i, 0)),
                pl.BlockSpec((bt, A69_FLAT), lambda i: (i, 0)),
                pl.BlockSpec((bt, PROT_LEN), lambda i: (i, 0)),
                # Constant-index weights: DMA'd from HBM once, reused every step.
                pl.BlockSpec((A69_FLAT, FEATURES), lambda i: (0, 0)),
                pl.BlockSpec((_SLAB_A_ROWS, FEATURES), lambda i: (0, 0)),
                pl.BlockSpec((_SLAB_B_ROWS, 2 * FEATURES), lambda i: (0, 0)),
                pl.BlockSpec((_SLAB_C_ROWS, OUT_PAD), lambda i: (0, 0)),
            ],
            out_specs=pl.BlockSpec((bt, OUT_PAD), lambda i: (i, 0)),
        ),
        # Batch tiles are independent -> shard grid steps across v7x's 2 TensorCores.
        # 48 MiB scoped VMEM covers the worst-case tile (~30 MB double-buffered) on
        # every generation (v5e default is only 16 MiB; v7x physical is 64 MiB).
        compiler_params=pltpu.CompilerParams(
            dimension_semantics=("parallel",),
            vmem_limit_bytes=48 * 1024 * 1024),
    )(compound, a69f, prot,
      prep["w_big"], prep["slab_a"], prep["slab_b"], prep["slab_c"])
    return out[:B, :2]          # drop batch padding and the lane padding of the logits


def gandti_reference(compound, a69, prot_vec, P):
    """Pure-JAX replica of the PyTorch forward (eval mode), single sample."""
    lin = lambda x, W, b: x @ W.T + b
    a69_1 = lin(a69, P["w1"], P["b1"]).reshape(A69_ROWS)          # [452]
    a69_256 = lin(a69_1, P["w2"], P["b2"]).reshape(1, 256)
    prot_256 = lin(prot_vec, P["w3"], P["b3"]).reshape(1, 256)
    cat512 = jnp.concatenate([a69_256, prot_256], axis=1)         # [1,512]
    prot40 = lin(cat512, P["wp"], P["bp"])                        # [1,40]
    protein_h = jax.nn.relu(lin(prot40, P["watt"], P["batt"]))
    mult = compound @ protein_h.T
    weights = jnp.tanh(mult)
    protein = weights.T * protein_h
    protein_vector = jnp.mean(protein, axis=0, keepdims=True)
    cp = jnp.concatenate([compound, protein_vector], axis=1)      # [1,80]
    cp = jax.nn.relu(lin(cp, P["wm1"], P["bm1"]))
    cp = jax.nn.relu(lin(cp, P["wm2"], P["bm2"]))
    return lin(cp, P["wc"], P["bc"])


def make_params(key):
    def linear(k, out_f, in_f):
        kw, kb = jax.random.split(k)
        return (jax.random.normal(kw, (out_f, in_f), jnp.float32) * 0.05,
                jax.random.normal(kb, (out_f,), jnp.float32) * 0.05)
    ks = jax.random.split(key, 9)
    f = FEATURES
    P = {}
    P["w1"], P["b1"] = linear(ks[0], 1, A69_COLS)        # L1ceng30_1
    P["w2"], P["b2"] = linear(ks[1], 256, A69_ROWS)      # L2ceng452_256
    P["w3"], P["b3"] = linear(ks[2], 256, PROT_LEN)      # L3ceng512_256
    P["wp"], P["bp"] = linear(ks[3], f, 512)             # protein_512_40
    P["watt"], P["batt"] = linear(ks[4], f, f)           # W_att
    P["wm1"], P["bm1"] = linear(ks[5], 2 * f, 2 * f)     # MLP[0]
    P["wm2"], P["bm2"] = linear(ks[6], 2 * f, 2 * f)     # MLP[1]
    P["wc"], P["bc"] = linear(ks[7], 2, 2 * f)           # classification_out
    return P


if __name__ == "__main__":
    key = jax.random.PRNGKey(0)
    k_par, k_cmp, k_a69, k_prot = jax.random.split(key, 4)

    P = make_params(k_par)
    prep = prepare_params(P)       # one-time weight fusion / transposition / packing

    B = 16                         # small demo batch -> bt=8, 2 grid steps
    compound = jax.random.normal(k_cmp, (B, FEATURES), jnp.float32)
    a69 = jax.random.normal(k_a69, (B, A69_ROWS, A69_COLS), jnp.float32)
    prot = jax.random.normal(k_prot, (B, PROT_LEN), jnp.float32)

    out = gandti_forward(compound, a69, prot, prep)
    out = jax.block_until_ready(out)

    ref = jnp.concatenate(
        [gandti_reference(compound[b:b + 1], a69[b], prot[b], P) for b in range(B)],
        axis=0)

    assert out.shape == (B, 2) and out.dtype == jnp.float32
    # Pre-fusing the linear chain reorders f32 accumulation slightly; ~1e-5 level
    # differences are expected, hence the slightly relaxed atol.
    assert jnp.allclose(out, ref, rtol=1e-4, atol=2e-4), (out, ref)

    print("KERNEL_OK")
</pallas_src>

<mosaic_0001>
module attributes {stable_mosaic.version = 11 : i64} {
  func.func @gandti_kernel(%arg0: i32, %arg1: memref<8x40xf32, #tpu.memory_space<vmem>>, %arg2: memref<8x13560xf32, #tpu.memory_space<vmem>>, %arg3: memref<8x512xf32, #tpu.memory_space<vmem>>, %arg4: memref<13560x40xf32, #tpu.memory_space<vmem>>, %arg5: memref<568x40xf32, #tpu.memory_space<vmem>>, %arg6: memref<176x80xf32, #tpu.memory_space<vmem>>, %arg7: memref<88x128xf32, #tpu.memory_space<vmem>>, %arg8: memref<8x128xf32, #tpu.memory_space<vmem>>) attributes {dimension_semantics = [#tpu.dimension_semantics<parallel>], iteration_bounds = array<i64: 2>, scalar_prefetch = 0 : i64, scratch_operands = 0 : i64, tpu.core_type = #tpu.core_type<tc>, window_params = [{transform_indices = @transform_0, window_bounds = array<i64: 8, 40>}, {transform_indices = @transform_1, window_bounds = array<i64: 8, 13560>}, {transform_indices = @transform_2, window_bounds = array<i64: 8, 512>}, {pipeline_mode = #tpu.pipeline_mode<synchronous>, transform_indices = @transform_3, window_bounds = array<i64: 13560, 40>}, {pipeline_mode = #tpu.pipeline_mode<synchronous>, transform_indices = @transform_4, window_bounds = array<i64: 568, 40>}, {pipeline_mode = #tpu.pipeline_mode<synchronous>, transform_indices = @transform_5, window_bounds = array<i64: 176, 80>}, {pipeline_mode = #tpu.pipeline_mode<synchronous>, transform_indices = @transform_6, window_bounds = array<i64: 88, 128>}, {transform_indices = @transform_7, window_bounds = array<i64: 8, 128>}]} {
    %c0 = arith.constant 0 : index
    %c0_0 = arith.constant 0 : index
    %0 = vector.load %arg5[%c0, %c0_0] : memref<568x40xf32, #tpu.memory_space<vmem>>, vector<512x40xf32>
    %c512 = arith.constant 512 : index
    %c0_1 = arith.constant 0 : index
    %1 = vector.load %arg5[%c512, %c0_1] : memref<568x40xf32, #tpu.memory_space<vmem>>, vector<40x40xf32>
    %c552 = arith.constant 552 : index
    %c0_2 = arith.constant 0 : index
    %2 = vector.load %arg5[%c552, %c0_2] : memref<568x40xf32, #tpu.memory_space<vmem>>, vector<1x40xf32>
    %c560 = arith.constant 560 : index
    %c0_3 = arith.constant 0 : index
    %3 = vector.load %arg5[%c560, %c0_3] : memref<568x40xf32, #tpu.memory_space<vmem>>, vector<1x40xf32>
    %c0_4 = arith.constant 0 : index
    %c0_5 = arith.constant 0 : index
    %4 = vector.load %arg2[%c0_4, %c0_5] : memref<8x13560xf32, #tpu.memory_space<vmem>>, vector<8x13560xf32>
    %c0_6 = arith.constant 0 : index
    %c0_7 = arith.constant 0 : index
    %5 = vector.load %arg4[%c0_6, %c0_7] : memref<13560x40xf32, #tpu.memory_space<vmem>>, vector<13560x40xf32>
    %cst = arith.constant dense<0.000000e+00> : vector<8x40xf32>
    %6 = tpu.matmul %4, %5, %cst {dimension_numbers = #tpu.dot_dimension_numbers<[1], [0], [0], [1], [0, 0, 1, 1], [], []>} : vector<8x13560xf32>, vector<13560x40xf32>, vector<8x40xf32> -> vector<8x40xf32>
    %c0_8 = arith.constant 0 : index
    %c0_9 = arith.constant 0 : index
    %7 = vector.load %arg3[%c0_8, %c0_9] : memref<8x512xf32, #tpu.memory_space<vmem>>, vector<8x512xf32>
    %cst_10 = arith.constant dense<0.000000e+00> : vector<8x40xf32>
    %8 = tpu.matmul %7, %0, %cst_10 {dimension_numbers = #tpu.dot_dimension_numbers<[1], [0], [0], [1], [0, 0, 1, 1], [], []>} : vector<8x512xf32>, vector<512x40xf32>, vector<8x40xf32> -> vector<8x40xf32>
    %9 = arith.addf %6, %8 : vector<8x40xf32>
    %10 = vector.broadcast %2 : vector<1x40xf32> to vector<8x40xf32>
    %11 = arith.addf %9, %10 : vector<8x40xf32>
    %c0_11 = arith.constant 0 : index
    %c0_12 = arith.constant 0 : index
    %12 = vector.load %arg1[%c0_11, %c0_12] : memref<8x40xf32, #tpu.memory_space<vmem>>, vector<8x40xf32>
    %cst_13 = arith.constant dense<0.000000e+00> : vector<8x40xf32>
    %13 = tpu.matmul %11, %1, %cst_13 {dimension_numbers = #tpu.dot_dimension_numbers<[1], [0], [0], [1], [0, 0, 1, 1], [], []>} : vector<8x40xf32>, vector<40x40xf32>, vector<8x40xf32> -> vector<8x40xf32>
    %14 = vector.broadcast %3 : vector<1x40xf32> to vector<8x40xf32>
    %15 = arith.addf %13, %14 : vector<8x40xf32>
    %cst_14 = arith.constant 0.000000e+00 : f32
    %16 = vector.broadcast %cst_14 : f32 to vector<8x40xf32>
    %17 = arith.maximumf %15, %16 : vector<8x40xf32>
    %18 = arith.mulf %12, %17 : vector<8x40xf32>
    %cst_15 = arith.constant dense<0.000000e+00> : vector<8xf32>
    %19 = vector.multi_reduction <add>, %18, %cst_15 [1] : vector<8x40xf32> to vector<8xf32>
    %20 = vector.shape_cast %19 : vector<8xf32> to vector<8x1xf32>
    %21 = math.tanh %20 : vector<8x1xf32>
    %22 = vector.broadcast %21 : vector<8x1xf32> to vector<8x40xf32>
    %23 = arith.mulf %22, %17 : vector<8x40xf32>
    %c0_16 = arith.constant 0 : index
    %c0_17 = arith.constant 0 : index
    %24 = vector.load %arg6[%c0_16, %c0_17] : memref<176x80xf32, #tpu.memory_space<vmem>>, vector<40x80xf32>
    %c40 = arith.constant 40 : index
    %c0_18 = arith.constant 0 : index
    %25 = vector.load %arg6[%c40, %c0_18] : memref<176x80xf32, #tpu.memory_space<vmem>>, vector<40x80xf32>
    %c80 = arith.constant 80 : index
    %c0_19 = arith.constant 0 : index
    %26 = vector.load %arg6[%c80, %c0_19] : memref<176x80xf32, #tpu.memory_space<vmem>>, vector<80x80xf32>
    %c160 = arith.constant 160 : index
    %c0_20 = arith.constant 0 : index
    %27 = vector.load %arg6[%c160, %c0_20] : memref<176x80xf32, #tpu.memory_space<vmem>>, vector<1x80xf32>
    %c168 = arith.constant 168 : index
    %c0_21 = arith.constant 0 : index
    %28 = vector.load %arg6[%c168, %c0_21] : memref<176x80xf32, #tpu.memory_space<vmem>>, vector<1x80xf32>
    %cst_22 = arith.constant dense<0.000000e+00> : vector<8x80xf32>
    %29 = tpu.matmul %12, %24, %cst_22 {dimension_numbers = #tpu.dot_dimension_numbers<[1], [0], [0], [1], [0, 0, 1, 1], [], []>} : vector<8x40xf32>, vector<40x80xf32>, vector<8x80xf32> -> vector<8x80xf32>
    %cst_23 = arith.constant dense<0.000000e+00> : vector<8x80xf32>
    %30 = tpu.matmul %23, %25, %cst_23 {dimension_numbers = #tpu.dot_dimension_numbers<[1], [0], [0], [1], [0, 0, 1, 1], [], []>} : vector<8x40xf32>, vector<40x80xf32>, vector<8x80xf32> -> vector<8x80xf32>
    %31 = arith.addf %29, %30 : vector<8x80xf32>
    %32 = vector.broadcast %27 : vector<1x80xf32> to vector<8x80xf32>
    %33 = arith.addf %31, %32 : vector<8x80xf32>
    %cst_24 = arith.constant 0.000000e+00 : f32
    %34 = vector.broadcast %cst_24 : f32 to vector<8x80xf32>
    %35 = arith.maximumf %33, %34 : vector<8x80xf32>
    %cst_25 = arith.constant dense<0.000000e+00> : vector<8x80xf32>
    %36 = tpu.matmul %35, %26, %cst_25 {dimension_numbers = #tpu.dot_dimension_numbers<[1], [0], [0], [1], [0, 0, 1, 1], [], []>} : vector<8x80xf32>, vector<80x80xf32>, vector<8x80xf32> -> vector<8x80xf32>
    %37 = vector.broadcast %28 : vector<1x80xf32> to vector<8x80xf32>
    %38 = arith.addf %36, %37 : vector<8x80xf32>
    %cst_26 = arith.constant 0.000000e+00 : f32
    %39 = vector.broadcast %cst_26 : f32 to vector<8x80xf32>
    %40 = arith.maximumf %38, %39 : vector<8x80xf32>
    %c0_27 = arith.constant 0 : index
    %c0_28 = arith.constant 0 : index
    %41 = vector.load %arg7[%c0_27, %c0_28] : memref<88x128xf32, #tpu.memory_space<vmem>>, vector<80x128xf32>
    %c80_29 = arith.constant 80 : index
    %c0_30 = arith.constant 0 : index
    %42 = vector.load %arg7[%c80_29, %c0_30] : memref<88x128xf32, #tpu.memory_space<vmem>>, vector<1x128xf32>
    %cst_31 = arith.constant dense<0.000000e+00> : vector<8x128xf32>
    %43 = tpu.matmul %40, %41, %cst_31 {dimension_numbers = #tpu.dot_dimension_numbers<[1], [0], [0], [1], [0, 0, 1, 1], [], []>} : vector<8x80xf32>, vector<80x128xf32>, vector<8x128xf32> -> vector<8x128xf32>
    %44 = vector.broadcast %42 : vector<1x128xf32> to vector<8x128xf32>
    %45 = arith.addf %43, %44 : vector<8x128xf32>
    %c0_32 = arith.constant 0 : index
    %c0_33 = arith.constant 0 : index
    %46 = vector.load %arg8[%c0_32, %c0_33] : memref<8x128xf32, #tpu.memory_space<vmem>>, vector<8x128xf32>
    tpu.vector_store %arg8[%c0_32, %c0_33], %45 {strides = array<i32>} : memref<8x128xf32, #tpu.memory_space<vmem>>, vector<8x128xf32>,
    return
  }
  func.func @transform_0(%arg0: i32) -> (i32, i32) {
    %c0_i32 = arith.constant 0 : i32
    %c0_i32_0 = arith.constant 0 : i32
    return %arg0, %c0_i32 : i32, i32
  }
  func.func @transform_1(%arg0: i32) -> (i32, i32) {
    %c0_i32 = arith.constant 0 : i32
    %c0_i32_0 = arith.constant 0 : i32
    return %arg0, %c0_i32 : i32, i32
  }
  func.func @transform_2(%arg0: i32) -> (i32, i32) {
    %c0_i32 = arith.constant 0 : i32
    %c0_i32_0 = arith.constant 0 : i32
    return %arg0, %c0_i32 : i32, i32
  }
  func.func @transform_3(%arg0: i32) -> (i32, i32) {
    %c0_i32 = arith.constant 0 : i32
    %c0_i32_0 = arith.constant 0 : i32
    %c0_i32_1 = arith.constant 0 : i32
    return %c0_i32, %c0_i32_0 : i32, i32
  }
  func.func @transform_4(%arg0: i32) -> (i32, i32) {
    %c0_i32 = arith.constant 0 : i32
    %c0_i32_0 = arith.constant 0 : i32
    %c0_i32_1 = arith.constant 0 : i32
    return %c0_i32, %c0_i32_0 : i32, i32
  }
  func.func @transform_5(%arg0: i32) -> (i32, i32) {
    %c0_i32 = arith.constant 0 : i32
    %c0_i32_0 = arith.constant 0 : i32
    %c0_i32_1 = arith.constant 0 : i32
    return %c0_i32, %c0_i32_0 : i32, i32
  }
  func.func @transform_6(%arg0: i32) -> (i32, i32) {
    %c0_i32 = arith.constant 0 : i32
    %c0_i32_0 = arith.constant 0 : i32
    %c0_i32_1 = arith.constant 0 : i32
    return %c0_i32, %c0_i32_0 : i32, i32
  }
  func.func @transform_7(%arg0: i32) -> (i32, i32) {
    %c0_i32 = arith.constant 0 : i32
    %c0_i32_0 = arith.constant 0 : i32
    return %arg0, %c0_i32 : i32, i32
  }
}

</mosaic_0001>

<llo_original>
// kernel: gandti_forward.1
$region0: #{gandti_forward.1}
  #allocation0 [shape = 'u32[]', space=smem, size = 0x4, offset = 0x4, fixed_abs, tag = 'smem constant byte address 0x4 - core index']
  #allocation1 [shape = 'u32[144,128]{1,0:T(1,128)}', space=vmem, size = 0x12000, scoped, tag = 'internal scratch']
  %s0 = inlined_call_operand.vmem [shape: f32[16,40], index: 0, kind: input, shape index: {}]
  %s1 = inlined_call_operand.vmem [shape: f32[16,13560], index: 1, kind: input, shape index: {}]
  %s2 = inlined_call_operand.vmem [shape: f32[16,512], index: 2, kind: input, shape index: {}]
  %s3 = inlined_call_operand.vmem [shape: f32[13560,40], index: 3, kind: input, shape index: {}]
  %s4 = inlined_call_operand.vmem [shape: f32[568,40], index: 4, kind: input, shape index: {}]
  %s5 = inlined_call_operand.vmem [shape: f32[176,80], index: 5, kind: input, shape index: {}]
  %s6 = inlined_call_operand.vmem [shape: f32[88,128], index: 6, kind: input, shape index: {}]
  %s7 = inlined_call_operand.vmem [shape: f32[16,128], index: 7, kind: output, shape index: {}]
  %s8 = sld [smem:[#allocation0]]
  $region61: #{gandti_forward.1} parent=0
    _
  %s10 = ssub.s32 1, %s8
  %s11 = scalar_select 0, %s10, %s8
  loop: start=0, step=1, limit=4
  $region2: #{gandti_forward.1} parent=0 // loop_pre_header
    _
  $region3: #{gandti_forward.1} parent=0 // loop_header
    %s13 = sphi 0, %s17
    %p14 = scmp.ge.s32.totalorder %s13, 4
    %s23 = sphi 0, %s25
    %s26 = sphi 0, %s23
    %s27 = sphi 0, %s26
    %s43 = sphi 0, %s27
    %s49 = sphi 0, %s51
    %s52 = sphi 0, %s49
    %s53 = sphi 0, %s52
    %s69 = sphi 0, %s53
    %s75 = sphi 0, %s77
    %s78 = sphi 0, %s75
    %s79 = sphi 0, %s78
    %s95 = sphi 0, %s79
    %s99 = sphi 0, %s99
    %s101 = sphi 0, %s99
    %s102 = sphi 0, %s101
    %s116 = sphi 0, %s102
    %s120 = sphi 0, %s120
    %s122 = sphi 0, %s120
    %s123 = sphi 0, %s122
    %s137 = sphi 0, %s123
    %s141 = sphi 0, %s141
    %s143 = sphi 0, %s141
    %s144 = sphi 0, %s143
    %s158 = sphi 0, %s144
    %s162 = sphi 0, %s162
    %s164 = sphi 0, %s162
    %s165 = sphi 0, %s164
    %s179 = sphi 0, %s165
    %s185 = sphi 0, %s187
    %s188 = sphi 0, %s185
    %s189 = sphi 0, %s188
    %s205 = sphi 0, %s189
  $region4: #{gandti_forward.1} parent=0 // loop_header_branch
    %16 = sbr.rel (%p14) target = $region8
  $region5: #{gandti_forward.1} parent=0 // loop_body
    %s18 = ssub.s32 %s13, 1
    %s19 = ssub.s32 %s13, 2
    %s20 = sadd.s32 %s13, 1
    %s21 = ssub.s32 %s13, %s20
    %p22 = scmp.eq.s32.totalorder %s21, 0
    %s24 = sadd.s32 %s23, 1
    %s25 = scalar_select %p22, %s23, %s24
    %p28 = pneg %p22
    %p29 = scmp.eq.s32.totalorder %s13, 1
    %p30 = por %p28, %p29
    %p31 = scmp.ne.s32.totalorder %s23, %s26
    %p32 = scmp.eq.s32.totalorder %s13, 0
    %p33 = por %p31, %p32
    %p34 = scmp.ne.s32.totalorder %s23, %s26
    %p35 = scmp.eq.s32.totalorder %s18, 1
    %p36 = por %p34, %p35
    %p37 = scmp.ne.s32.totalorder %s26, %s27
    %p38 = scmp.eq.s32.totalorder %s18, 0
    %p39 = por %p37, %p38
    %p40 = scmp.ne.s32.totalorder %s26, %s27
    %p41 = scmp.eq.s32.totalorder %s19, 1
    %p42 = por %p40, %p41
    %p44 = scmp.ne.s32.totalorder %s27, %s43
    %p45 = scmp.eq.s32.totalorder %s19, 0
    %p46 = por %p44, %p45
    %s47 = ssub.s32 %s13, %s20
    %p48 = scmp.eq.s32.totalorder %s47, 0
    %s50 = sadd.s32 %s49, 1
    %s51 = scalar_select %p48, %s49, %s50
    %p54 = pneg %p48
    %p55 = scmp.eq.s32.totalorder %s13, 1
    %p56 = por %p54, %p55
    %p57 = scmp.ne.s32.totalorder %s49, %s52
    %p58 = scmp.eq.s32.totalorder %s13, 0
    %p59 = por %p57, %p58
    %p60 = scmp.ne.s32.totalorder %s49, %s52
    %p61 = scmp.eq.s32.totalorder %s18, 1
    %p62 = por %p60, %p61
    %p63 = scmp.ne.s32.totalorder %s52, %s53
    %p64 = scmp.eq.s32.totalorder %s18, 0
    %p65 = por %p63, %p64
    %p66 = scmp.ne.s32.totalorder %s52, %s53
    %p67 = scmp.eq.s32.totalorder %s19, 1
    %p68 = por %p66, %p67
    %p70 = scmp.ne.s32.totalorder %s53, %s69
    %p71 = scmp.eq.s32.totalorder %s19, 0
    %p72 = por %p70, %p71
    %s73 = ssub.s32 %s13, %s20
    %p74 = scmp.eq.s32.totalorder %s73, 0
    %s76 = sadd.s32 %s75, 1
    %s77 = scalar_select %p74, %s75, %s76
    %p80 = pneg %p74
    %p81 = scmp.eq.s32.totalorder %s13, 1
    %p82 = por %p80, %p81
    %p83 = scmp.ne.s32.totalorder %s75, %s78
    %p84 = scmp.eq.s32.totalorder %s13, 0
    %p85 = por %p83, %p84
    %p86 = scmp.ne.s32.totalorder %s75, %s78
    %p87 = scmp.eq.s32.totalorder %s18, 1
    %p88 = por %p86, %p87
    %p89 = scmp.ne.s32.totalorder %s78, %s79
    %p90 = scmp.eq.s32.totalorder %s18, 0
    %p91 = por %p89, %p90
    %p92 = scmp.ne.s32.totalorder %s78, %s79
    %p93 = scmp.eq.s32.totalorder %s19, 1
    %p94 = por %p92, %p93
    %p96 = scmp.ne.s32.totalorder %s79, %s95
    %p97 = scmp.eq.s32.totalorder %s19, 0
    %p98 = por %p96, %p97
    %s100 = sadd.s32 %s99, 1
    %p103 = scmp.eq.s32.totalorder %s13, 1
    %p104 = scmp.ne.s32.totalorder %s99, %s101
    %p105 = scmp.eq.s32.totalorder %s13, 0
    %p106 = por %p104, %p105
    %p107 = scmp.ne.s32.totalorder %s99, %s101
    %p108 = scmp.eq.s32.totalorder %s18, 1
    %p109 = por %p107, %p108
    %p110 = scmp.ne.s32.totalorder %s101, %s102
    %p111 = scmp.eq.s32.totalorder %s18, 0
    %p112 = por %p110, %p111
    %p113 = scmp.ne.s32.totalorder %s101, %s102
    %p114 = scmp.eq.s32.totalorder %s19, 1
    %p115 = por %p113, %p114
    %p117 = scmp.ne.s32.totalorder %s102, %s116
    %p118 = scmp.eq.s32.totalorder %s19, 0
    %p119 = por %p117, %p118
    %s121 = sadd.s32 %s120, 1
    %p124 = scmp.eq.s32.totalorder %s13, 1
    %p125 = scmp.ne.s32.totalorder %s120, %s122
    %p126 = scmp.eq.s32.totalorder %s13, 0
    %p127 = por %p125, %p126
    %p128 = scmp.ne.s32.totalorder %s120, %s122
    %p129 = scmp.eq.s32.totalorder %s18, 1
    %p130 = por %p128, %p129
    %p131 = scmp.ne.s32.totalorder %s122, %s123
    %p132 = scmp.eq.s32.totalorder %s18, 0
    %p133 = por %p131, %p132
    %p134 = scmp.ne.s32.totalorder %s122, %s123
    %p135 = scmp.eq.s32.totalorder %s19, 1
    %p136 = por %p134, %p135
    %p138 = scmp.ne.s32.totalorder %s123, %s137
    %p139 = scmp.eq.s32.totalorder %s19, 0
    %p140 = por %p138, %p139
    %s142 = sadd.s32 %s141, 1
    %p145 = scmp.eq.s32.totalorder %s13, 1
    %p146 = scmp.ne.s32.totalorder %s141, %s143
    %p147 = scmp.eq.s32.totalorder %s13, 0
    %p148 = por %p146, %p147
    %p149 = scmp.ne.s32.totalorder %s141, %s143
    %p150 = scmp.eq.s32.totalorder %s18, 1
    %p151 = por %p149, %p150
    %p152 = scmp.ne.s32.totalorder %s143, %s144
    %p153 = scmp.eq.s32.totalorder %s18, 0
    %p154 = por %p152, %p153
    %p155 = scmp.ne.s32.totalorder %s143, %s144
    %p156 = scmp.eq.s32.totalorder %s19, 1
    %p157 = por %p155, %p156
    %p159 = scmp.ne.s32.totalorder %s144, %s158
    %p160 = scmp.eq.s32.totalorder %s19, 0
    %p161 = por %p159, %p160
    %s163 = sadd.s32 %s162, 1
    %p166 = scmp.eq.s32.totalorder %s13, 1
    %p167 = scmp.ne.s32.totalorder %s162, %s164
    %p168 = scmp.eq.s32.totalorder %s13, 0
    %p169 = por %p167, %p168
    %p170 = scmp.ne.s32.totalorder %s162, %s164
    %p171 = scmp.eq.s32.totalorder %s18, 1
    %p172 = por %p170, %p171
    %p173 = scmp.ne.s32.totalorder %s164, %s165
    %p174 = scmp.eq.s32.totalorder %s18, 0
    %p175 = por %p173, %p174
    %p176 = scmp.ne.s32.totalorder %s164, %s165
    %p177 = scmp.eq.s32.totalorder %s19, 1
    %p178 = por %p176, %p177
    %p180 = scmp.ne.s32.totalorder %s165, %s179
    %p181 = scmp.eq.s32.totalorder %s19, 0
    %p182 = por %p180, %p181
    %s183 = ssub.s32 %s13, %s20
    %p184 = scmp.eq.s32.totalorder %s183, 0
    %s186 = sadd.s32 %s185, 1
    %s187 = scalar_select %p184, %s185, %s186
    %p190 = pneg %p184
    %p191 = scmp.eq.s32.totalorder %s13, 1
    %p192 = por %p190, %p191
    %p193 = scmp.ne.s32.totalorder %s185, %s188
    %p194 = scmp.eq.s32.totalorder %s13, 0
    %p195 = por %p193, %p194
    %p196 = scmp.ne.s32.totalorder %s185, %s188
    %p197 = scmp.eq.s32.totalorder %s18, 1
    %p198 = por %p196, %p197
    %p199 = scmp.ne.s32.totalorder %s188, %s189
    %p200 = scmp.eq.s32.totalorder %s18, 0
    %p201 = por %p199, %p200
    %p202 = scmp.ne.s32.totalorder %s188, %s189
    %p203 = scmp.eq.s32.totalorder %s19, 1
    %p204 = por %p202, %p203
    %p206 = scmp.ne.s32.totalorder %s189, %s205
    %p207 = scmp.eq.s32.totalorder %s19, 0
    %p208 = por %p206, %p207
    %p209 = scmp.le.s32.totalorder 1, %s13
    %p210 = scmp.lt.s32.totalorder %s13, 3
    %p211 = pnand %p209, %p210
    %p212 = pneg %p211
    // Predicated region
    $region9: #{gandti_forward.1} parent=5 // pred_check
      _
    $region10: #{gandti_forward.1} parent=5 // pred_check_branch
      %214 = sbr.rel (%p211) target = $region12
    $region11: #{gandti_forward.1} parent=5 // pred_region
      %s215 = ssub.s32 %s13, 1
      // Predicated region
      $region13: #{gandti_forward.1} parent=11 // pred_check
        %p216 = pneg %p112
      $region14: #{gandti_forward.1} parent=11 // pred_check_branch
        %218 = sbr.rel (%p216) target = $region16
      $region15: #{gandti_forward.1} parent=11 // pred_region
        _
      $region16: #{gandti_forward.1} parent=11 // pred_fallthru
        _
      // Predicated region
      $region17: #{gandti_forward.1} parent=11 // pred_check
        %p219 = pneg %p133
      $region18: #{gandti_forward.1} parent=11 // pred_check_branch
        %221 = sbr.rel (%p219) target = $region20
      $region19: #{gandti_forward.1} parent=11 // pred_region
        _
      $region20: #{gandti_forward.1} parent=11 // pred_fallthru
        _
      // Predicated region
      $region21: #{gandti_forward.1} parent=11 // pred_check
        %p222 = pneg %p154
      $region22: #{gandti_forward.1} parent=11 // pred_check_branch
        %224 = sbr.rel (%p222) target = $region24
      $region23: #{gandti_forward.1} parent=11 // pred_region
        _
      $region24: #{gandti_forward.1} parent=11 // pred_fallthru
        _
      // Predicated region
      $region25: #{gandti_forward.1} parent=11 // pred_check
        %p225 = pneg %p175
      $region26: #{gandti_forward.1} parent=11 // pred_check_branch
        %227 = sbr.rel (%p225) target = $region28
      $region27: #{gandti_forward.1} parent=11 // pred_region
        _
      $region28: #{gandti_forward.1} parent=11 // pred_fallthru
        _
    $region12: #{gandti_forward.1} parent=5 // pred_fallthru
      _
    %p228 = scmp.lt.s32.totalorder %s13, 2
    // Predicated region
    $region29: #{gandti_forward.1} parent=5 // pred_check
      %p229 = pneg %p228
    $region30: #{gandti_forward.1} parent=5 // pred_check_branch
      %231 = sbr.rel (%p229) target = $region32
    $region31: #{gandti_forward.1} parent=5 // pred_region
      // Predicated region
      $region33: #{gandti_forward.1} parent=31 // pred_check
        %p232 = pneg %p33
      $region34: #{gandti_forward.1} parent=31 // pred_check_branch
        %234 = sbr.rel (%p232) target = $region36
      $region35: #{gandti_forward.1} parent=31 // pred_region
        %p235 = scmp.lt.s32.totalorder %s13, 1
        %s236 = scalar_select %p235, %s13, 1
        %s237 = smul.addr %s236, 8
        %s238 = scalar_lea.vmem %s0, %s237
      $region36: #{gandti_forward.1} parent=31 // pred_fallthru
        _
      // Predicated region
      $region37: #{gandti_forward.1} parent=31 // pred_check
        %p239 = pneg %p59
      $region38: #{gandti_forward.1} parent=31 // pred_check_branch
        %241 = sbr.rel (%p239) target = $region40
      $region39: #{gandti_forward.1} parent=31 // pred_region
        %p242 = scmp.lt.s32.totalorder %s13, 1
        %s243 = scalar_select %p242, %s13, 1
        %s244 = smul.addr %s243, 106
        %s245 = smul.addr %s244, 8
        %s246 = scalar_lea.vmem %s1, %s245
      $region40: #{gandti_forward.1} parent=31 // pred_fallthru
        _
      // Predicated region
      $region41: #{gandti_forward.1} parent=31 // pred_check
        %p247 = pneg %p85
      $region42: #{gandti_forward.1} parent=31 // pred_check_branch
        %249 = sbr.rel (%p247) target = $region44
      $region43: #{gandti_forward.1} parent=31 // pred_region
        %p250 = scmp.lt.s32.totalorder %s13, 1
        %s251 = scalar_select %p250, %s13, 1
        %s252 = smul.addr %s251, 4
        %s253 = smul.addr %s252, 8
        %s254 = scalar_lea.vmem %s2, %s253
      $region44: #{gandti_forward.1} parent=31 // pred_fallthru
        _
    $region32: #{gandti_forward.1} parent=5 // pred_fallthru
      _
    %p255 = scmp.le.s32.totalorder 1, %s13
    %p256 = scmp.lt.s32.totalorder %s13, 3
    %p257 = pnand %p255, %p256
    %p258 = pneg %p257
    // Predicated region
    $region45: #{gandti_forward.1} parent=5 // pred_check
      _
    $region46: #{gandti_forward.1} parent=5 // pred_check_branch
      %260 = sbr.rel (%p257) target = $region48
    $region47: #{gandti_forward.1} parent=5 // pred_region
      %s261 = ssub.s32 %s13, 1
      %p262 = scmp.lt.s32.totalorder %s18, 1
      %s263 = scalar_select %p262, %s18, 1
      %s264 = smul.addr %s263, 8
      %s265 = scalar_lea.vmem %s0, %s264
      %p266 = pneg %p39
      %p267 = pneg %p36
      %p268 = scmp.lt.s32.totalorder %s18, 1
      %s269 = scalar_select %p268, %s18, 1
      %s270 = smul.addr %s269, 106
      %s271 = smul.addr %s270, 8
      %s272 = scalar_lea.vmem %s1, %s271
      %p273 = pneg %p65
      %p274 = pneg %p62
      %p275 = scmp.lt.s32.totalorder %s18, 1
      %s276 = scalar_select %p275, %s18, 1
      %s277 = smul.addr %s276, 4
      %s278 = smul.addr %s277, 8
      %s279 = scalar_lea.vmem %s2, %s278
      %p280 = pneg %p91
      %p281 = pneg %p88
      %p282 = pneg %p112
      %p283 = pneg %p109
      %p284 = pneg %p133
      %p285 = pneg %p130
      %p286 = pneg %p154
      %p287 = pneg %p151
      %p288 = pneg %p175
      %p289 = pneg %p172
      %p290 = pneg %p201
      %p291 = pneg %p198
      %p292 = scmp.lt.s32.totalorder %s18, 1
      %s293 = scalar_select %p292, %s18, 1
      %s294 = smul.addr %s293, 8
      %s295 = scalar_lea.vmem %s7, %s294
      %p296 = scmp.lt.s32.totalorder %s18, 1
      %s297 = scalar_select %p296, %s18, 1
      %s298 = smul.addr %s297, 8
      %s299 = scalar_lea.vmem %s0, %s298
      %p300 = scmp.lt.s32.totalorder %s18, 1
      %s301 = scalar_select %p300, %s18, 1
      %s302 = smul.addr %s301, 106
      %s303 = smul.addr %s302, 8
      %s304 = scalar_lea.vmem %s1, %s303
      %p305 = scmp.lt.s32.totalorder %s18, 1
      %s306 = scalar_select %p305, %s18, 1
      %s307 = smul.addr %s306, 4
      %s308 = smul.addr %s307, 8
      %s309 = scalar_lea.vmem %s2, %s308
      %p310 = scmp.lt.s32.totalorder %s18, 1
      %s311 = scalar_select %p310, %s18, 1
      %s312 = smul.addr %s311, 8
      %s313 = scalar_lea.vmem %s7, %s312
      %v314 = vld [vmem:[%s4] sm:$0xff]
      %v315 = vld [vmem:[%s4 + $0x8] sm:$0xff]
      %v316 = vld [vmem:[%s4 + $0x10] sm:$0xff]
      %v317 = vld [vmem:[%s4 + $0x18] sm:$0xff]
      %v318 = vld [vmem:[%s4 + $0x20] sm:$0xff]
      %v319 = vld [vmem:[%s4 + $0x28] sm:$0xff]
      %v320 = vld [vmem:[%s4 + $0x30] sm:$0xff]
      %v321 = vld [vmem:[%s4 + $0x38] sm:$0xff]
      %v322 = vld [vmem:[%s4 + $0x40] sm:$0xff]
      %v323 = vld [vmem:[%s4 + $0x48] sm:$0xff]
      %v324 = vld [vmem:[%s4 + $0x50] sm:$0xff]
      %v325 = vld [vmem:[%s4 + $0x58] sm:$0xff]
      %v326 = vld [vmem:[%s4 + $0x60] sm:$0xff]
      %v327 = vld [vmem:[%s4 + $0x68] sm:$0xff]
      %v328 = vld [vmem:[%s4 + $0x70] sm:$0xff]
      %v329 = vld [vmem:[%s4 + $0x78] sm:$0xff]
      %v330 = vld [vmem:[%s4 + $0x80] sm:$0xff]
      %v331 = vld [vmem:[%s4 + $0x88] sm:$0xff]
      %v332 = vld [vmem:[%s4 + $0x90] sm:$0xff]
      %v333 = vld [vmem:[%s4 + $0x98] sm:$0xff]
      %v334 = vld [vmem:[%s4 + $0xa0] sm:$0xff]
      %v335 = vld [vmem:[%s4 + $0xa8] sm:$0xff]
      %v336 = vld [vmem:[%s4 + $0xb0] sm:$0xff]
      %v337 = vld [vmem:[%s4 + $0xb8] sm:$0xff]
      %v338 = vld [vmem:[%s4 + $0xc0] sm:$0xff]
      %v339 = vld [vmem:[%s4 + $0xc8] sm:$0xff]
      %v340 = vld [vmem:[%s4 + $0xd0] sm:$0xff]
      %v341 = vld [vmem:[%s4 + $0xd8] sm:$0xff]
      %v342 = vld [vmem:[%s4 + $0xe0] sm:$0xff]
      %v343 = vld [vmem:[%s4 + $0xe8] sm:$0xff]
      %v344 = vld [vmem:[%s4 + $0xf0] sm:$0xff]
      %v345 = vld [vmem:[%s4 + $0xf8] sm:$0xff]
      %v346 = vld [vmem:[%s4 + $0x100] sm:$0xff]
      %v347 = vld [vmem:[%s4 + $0x108] sm:$0xff]
      %v348 = vld [vmem:[%s4 + $0x110] sm:$0xff]
      %v349 = vld [vmem:[%s4 + $0x118] sm:$0xff]
      %v350 = vld [vmem:[%s4 + $0x120] sm:$0xff]
      %v351 = vld [vmem:[%s4 + $0x128] sm:$0xff]
      %v352 = vld [vmem:[%s4 + $0x130] sm:$0xff]
      %v353 = vld [vmem:[%s4 + $0x138] sm:$0xff]
      %v354 = vld [vmem:[%s4 + $0x140] sm:$0xff]
      %v355 = vld [vmem:[%s4 + $0x148] sm:$0xff]
      %v356 = vld [vmem:[%s4 + $0x150] sm:$0xff]
      %v357 = vld [vmem:[%s4 + $0x158] sm:$0xff]
      %v358 = vld [vmem:[%s4 + $0x160] sm:$0xff]
      %v359 = vld [vmem:[%s4 + $0x168] sm:$0xff]
      %v360 = vld [vmem:[%s4 + $0x170] sm:$0xff]
      %v361 = vld [vmem:[%s4 + $0x178] sm:$0xff]
      %v362 = vld [vmem:[%s4 + $0x180] sm:$0xff]
      %v363 = vld [vmem:[%s4 + $0x188] sm:$0xff]
      %v364 = vld [vmem:[%s4 + $0x190] sm:$0xff]
      %v365 = vld [vmem:[%s4 + $0x198] sm:$0xff]
      %v366 = vld [vmem:[%s4 + $0x1a0] sm:$0xff]
      %v367 = vld [vmem:[%s4 + $0x1a8] sm:$0xff]
      %v368 = vld [vmem:[%s4 + $0x1b0] sm:$0xff]
      %v369 = vld [vmem:[%s4 + $0x1b8] sm:$0xff]
      %v370 = vld [vmem:[%s4 + $0x1c0] sm:$0xff]
      %v371 = vld [vmem:[%s4 + $0x1c8] sm:$0xff]
      %v372 = vld [vmem:[%s4 + $0x1d0] sm:$0xff]
      %v373 = vld [vmem:[%s4 + $0x1d8] sm:$0xff]
      %v374 = vld [vmem:[%s4 + $0x1e0] sm:$0xff]
      %v375 = vld [vmem:[%s4 + $0x1e8] sm:$0xff]
      %v376 = vld [vmem:[%s4 + $0x1f0] sm:$0xff]
      %v377 = vld [vmem:[%s4 + $0x1f8] sm:$0xff]
      %v378 = vld [vmem:[%s4 + $0x200] sm:$0xff]
      %v379 = vld [vmem:[%s4 + $0x208] sm:$0xff]
      %v380 = vld [vmem:[%s4 + $0x210] sm:$0xff]
      %v381 = vld [vmem:[%s4 + $0x218] sm:$0xff]
      %v382 = vld [vmem:[%s4 + $0x220] sm:$0xff]
      %v383 = vld [vmem:[%s4 + $0x228] sm:$0x1]
      %v384 = vld [vmem:[%s4 + $0x230] sm:$0x1]
      %v385 = vld [vmem:[%s304] sm:$0xff]
      %v386 = vld [vmem:[%s304 + $0x8] sm:$0xff]
      %v387 = vld [vmem:[%s304 + $0x10] sm:$0xff]
      %v388 = vld [vmem:[%s304 + $0x18] sm:$0xff]
      %v389 = vld [vmem:[%s304 + $0x20] sm:$0xff]
      %v390 = vld [vmem:[%s304 + $0x28] sm:$0xff]
      %v391 = vld [vmem:[%s304 + $0x30] sm:$0xff]
      %v392 = vld [vmem:[%s304 + $0x38] sm:$0xff]
      %v393 = vld [vmem:[%s304 + $0x40] sm:$0xff]
      %v394 = vld [vmem:[%s304 + $0x48] sm:$0xff]
      %v395 = vld [vmem:[%s304 + $0x50] sm:$0xff]
      %v396 = vld [vmem:[%s304 + $0x58] sm:$0xff]
      %v397 = vld [vmem:[%s304 + $0x60] sm:$0xff]
      %v398 = vld [vmem:[%s304 + $0x68] sm:$0xff]
      %v399 = vld [vmem:[%s304 + $0x70] sm:$0xff]
      %v400 = vld [vmem:[%s304 + $0x78] sm:$0xff]
      %v401 = vld [vmem:[%s304 + $0x80] sm:$0xff]
      %v402 = vld [vmem:[%s304 + $0x88] sm:$0xff]
      %v403 = vld [vmem:[%s304 + $0x90] sm:$0xff]
      %v404 = vld [vmem:[%s304 + $0x98] sm:$0xff]
      %v405 = vld [vmem:[%s304 + $0xa0] sm:$0xff]
      %v406 = vld [vmem:[%s304 + $0xa8] sm:$0xff]
      %v407 = vld [vmem:[%s304 + $0xb0] sm:$0xff]
      %v408 = vld [vmem:[%s304 + $0xb8] sm:$0xff]
      %v409 = vld [vmem:[%s304 + $0xc0] sm:$0xff]
      %v410 = vld [vmem:[%s304 + $0xc8] sm:$0xff]
      %v411 = vld [vmem:[%s304 + $0xd0] sm:$0xff]
      %v412 = vld [vmem:[%s304 + $0xd8] sm:$0xff]
      %v413 = vld [vmem:[%s304 + $0xe0] sm:$0xff]
      %v414 = vld [vmem:[%s304 + $0xe8] sm:$0xff]
      %v415 = vld [vmem:[%s304 + $0xf0] sm:$0xff]
      %v416 = vld [vmem:[%s304 + $0xf8] sm:$0xff]
      %v417 = vld [vmem:[%s304 + $0x100] sm:$0xff]
      %v418 = vld [vmem:[%s304 + $0x108] sm:$0xff]
      %v419 = vld [vmem:[%s304 + $0x110] sm:$0xff]
      %v420 = vld [vmem:[%s304 + $0x118] sm:$0xff]
      %v421 = vld [vmem:[%s304 + $0x120] sm:$0xff]
      %v422 = vld [vmem:[%s304 + $0x128] sm:$0xff]
      %v423 = vld [vmem:[%s304 + $0x130] sm:$0xff]
      %v424 = vld [vmem:[%s304 + $0x138] sm:$0xff]
      %v425 = vld [vmem:[%s304 + $0x140] sm:$0xff]
      %v426 = vld [vmem:[%s304 + $0x148] sm:$0xff]
      %v427 = vld [vmem:[%s304 + $0x150] sm:$0xff]
      %v428 = vld [vmem:[%s304 + $0x158] sm:$0xff]
      %v429 = vld [vmem:[%s304 + $0x160] sm:$0xff]
      %v430 = vld [vmem:[%s304 + $0x168] sm:$0xff]
      %v431 = vld [vmem:[%s304 + $0x170] sm:$0xff]
      %v432 = vld [vmem:[%s304 + $0x178] sm:$0xff]
      %v433 = vld [vmem:[%s304 + $0x180] sm:$0xff]
      %v434 = vld [vmem:[%s304 + $0x188] sm:$0xff]
      %v435 = vld [vmem:[%s304 + $0x190] sm:$0xff]
      %v436 = vld [vmem:[%s304 + $0x198] sm:$0xff]
      %v437 = vld [vmem:[%s304 + $0x1a0] sm:$0xff]
      %v438 = vld [vmem:[%s304 + $0x1a8] sm:$0xff]
      %v439 = vld [vmem:[%s304 + $0x1b0] sm:$0xff]
      %v440 = vld [vmem:[%s304 + $0x1b8] sm:$0xff]
      %v441 = vld [vmem:[%s304 + $0x1c0] sm:$0xff]
      %v442 = vld [vmem:[%s304 + $0x1c8] sm:$0xff]
      %v443 = vld [vmem:[%s304 + $0x1d0] sm:$0xff]
      %v444 = vld [vmem:[%s304 + $0x1d8] sm:$0xff]
      %v445 = vld [vmem:[%s304 + $0x1e0] sm:$0xff]
      %v446 = vld [vmem:[%s304 + $0x1e8] sm:$0xff]
      %v447 = vld [vmem:[%s304 + $0x1f0] sm:$0xff]
      %v448 = vld [vmem:[%s304 + $0x1f8] sm:$0xff]
      %v449 = vld [vmem:[%s304 + $0x200] sm:$0xff]
      %v450 = vld [vmem:[%s304 + $0x208] sm:$0xff]
      %v451 = vld [vmem:[%s304 + $0x210] sm:$0xff]
      %v452 = vld [vmem:[%s304 + $0x218] sm:$0xff]
      %v453 = vld [vmem:[%s304 + $0x220] sm:$0xff]
      %v454 = vld [vmem:[%s304 + $0x228] sm:$0xff]
      %v455 = vld [vmem:[%s304 + $0x230] sm:$0xff]
      %v456 = vld [vmem:[%s304 + $0x238] sm:$0xff]
      %v457 = vld [vmem:[%s304 + $0x240] sm:$0xff]
      %v458 = vld [vmem:[%s304 + $0x248] sm:$0xff]
      %v459 = vld [vmem:[%s304 + $0x250] sm:$0xff]
      %v460 = vld [vmem:[%s304 + $0x258] sm:$0xff]
      %v461 = vld [vmem:[%s304 + $0x260] sm:$0xff]
      %v462 = vld [vmem:[%s304 + $0x268] sm:$0xff]
      %v463 = vld [vmem:[%s304 + $0x270] sm:$0xff]
      %v464 = vld [vmem:[%s304 + $0x278] sm:$0xff]
      %v465 = vld [vmem:[%s304 + $0x280] sm:$0xff]
      %v466 = vld [vmem:[%s304 + $0x288] sm:$0xff]
      %v467 = vld [vmem:[%s304 + $0x290] sm:$0xff]
      %v468 = vld [vmem:[%s304 + $0x298] sm:$0xff]
      %v469 = vld [vmem:[%s304 + $0x2a0] sm:$0xff]
      %v470 = vld [vmem:[%s304 + $0x2a8] sm:$0xff]
      %v471 = vld [vmem:[%s304 + $0x2b0] sm:$0xff]
      %v472 = vld [vmem:[%s304 + $0x2b8] sm:$0xff]
      %v473 = vld [vmem:[%s304 + $0x2c0] sm:$0xff]
      %v474 = vld [vmem:[%s304 + $0x2c8] sm:$0xff]
      %v475 = vld [vmem:[%s304 + $0x2d0] sm:$0xff]
      %v476 = vld [vmem:[%s304 + $0x2d8] sm:$0xff]
      %v477 = vld [vmem:[%s304 + $0x2e0] sm:$0xff]
      %v478 = vld [vmem:[%s304 + $0x2e8] sm:$0xff]
      %v479 = vld [vmem:[%s304 + $0x2f0] sm:$0xff]
      %v480 = vld [vmem:[%s304 + $0x2f8] sm:$0xff]
      %v481 = vld [vmem:[%s304 + $0x300] sm:$0xff]
      %v482 = vld [vmem:[%s304 + $0x308] sm:$0xff]
      %v483 = vld [vmem:[%s304 + $0x310] sm:$0xff]
      %v484 = vld [vmem:[%s304 + $0x318] sm:$0xff]
      %v485 = vld [vmem:[%s304 + $0x320] sm:$0xff]
      %v486 = vld [vmem:[%s304 + $0x328] sm:$0xff]
      %v487 = vld [vmem:[%s304 + $0x330] sm:$0xff]
      %v488 = vld [vmem:[%s304 + $0x338] sm:$0xff]
      %v489 = vld [vmem:[%s304 + $0x340] sm:$0xff]
      %v490 = vld [vmem:[%s304 + $0x348] sm:$0xff]
      %v491 = vld [vmem:[%s3] sm:$0xff]
      %v492 = vld [vmem:[%s3 + $0x8] sm:$0xff]
      %v493 = vld [vmem:[%s3 + $0x10] sm:$0xff]
      %v494 = vld [vmem:[%s3 + $0x18] sm:$0xff]
      %v495 = vld [vmem:[%s3 + $0x20] sm:$0xff]
      %v496 = vld [vmem:[%s3 + $0x28] sm:$0xff]
      %v497 = vld [vmem:[%s3 + $0x30] sm:$0xff]
      %v498 = vld [vmem:[%s3 + $0x38] sm:$0xff]
      %v499 = vld [vmem:[%s3 + $0x40] sm:$0xff]
      %v500 = vld [vmem:[%s3 + $0x48] sm:$0xff]
      %v501 = vld [vmem:[%s3 + $0x50] sm:$0xff]
      %v502 = vld [vmem:[%s3 + $0x58] sm:$0xff]
      %v503 = vld [vmem:[%s3 + $0x60] sm:$0xff]
      %v504 = vld [vmem:[%s3 + $0x68] sm:$0xff]
      %v505 = vld [vmem:[%s3 + $0x70] sm:$0xff]
      %v506 = vld [vmem:[%s3 + $0x78] sm:$0xff]
      %v507 = vld [vmem:[%s3 + $0x80] sm:$0xff]
      %v508 = vld [vmem:[%s3 + $0x88] sm:$0xff]
      %v509 = vld [vmem:[%s3 + $0x90] sm:$0xff]
      %v510 = vld [vmem:[%s3 + $0x98] sm:$0xff]
      %v511 = vld [vmem:[%s3 + $0xa0] sm:$0xff]
      %v512 = vld [vmem:[%s3 + $0xa8] sm:$0xff]
      %v513 = vld [vmem:[%s3 + $0xb0] sm:$0xff]
      %v514 = vld [vmem:[%s3 + $0xb8] sm:$0xff]
      %v515 = vld [vmem:[%s3 + $0xc0] sm:$0xff]
      %v516 = vld [vmem:[%s3 + $0xc8] sm:$0xff]
      %v517 = vld [vmem:[%s3 + $0xd0] sm:$0xff]
      %v518 = vld [vmem:[%s3 + $0xd8] sm:$0xff]
      %v519 = vld [vmem:[%s3 + $0xe0] sm:$0xff]
      %v520 = vld [vmem:[%s3 + $0xe8] sm:$0xff]
      %v521 = vld [vmem:[%s3 + $0xf0] sm:$0xff]
      %v522 = vld [vmem:[%s3 + $0xf8] sm:$0xff]
      %v523 = vld [vmem:[%s3 + $0x100] sm:$0xff]
      %v524 = vld [vmem:[%s3 + $0x108] sm:$0xff]
      %v525 = vld [vmem:[%s3 + $0x110] sm:$0xff]
      %v526 = vld [vmem:[%s3 + $0x118] sm:$0xff]
      %v527 = vld [vmem:[%s3 + $0x120] sm:$0xff]
      %v528 = vld [vmem:[%s3 + $0x128] sm:$0xff]
      %v529 = vld [vmem:[%s3 + $0x130] sm:$0xff]
      %v530 = vld [vmem:[%s3 + $0x138] sm:$0xff]
      %v531 = vld [vmem:[%s3 + $0x140] sm:$0xff]
      %v532 = vld [vmem:[%s3 + $0x148] sm:$0xff]
      %v533 = vld [vmem:[%s3 + $0x150] sm:$0xff]
      %v534 = vld [vmem:[%s3 + $0x158] sm:$0xff]
      %v535 = vld [vmem:[%s3 + $0x160] sm:$0xff]
      %v536 = vld [vmem:[%s3 + $0x168] sm:$0xff]
      %v537 = vld [vmem:[%s3 + $0x170] sm:$0xff]
      %v538 = vld [vmem:[%s3 + $0x178] sm:$0xff]
      %v539 = vld [vmem:[%s3 + $0x180] sm:$0xff]
      %v540 = vld [vmem:[%s3 + $0x188] sm:$0xff]
      %v541 = vld [vmem:[%s3 + $0x190] sm:$0xff]
      %v542 = vld [vmem:[%s3 + $0x198] sm:$0xff]
      %v543 = vld [vmem:[%s3 + $0x1a0] sm:$0xff]
      %v544 = vld [vmem:[%s3 + $0x1a8] sm:$0xff]
      %v545 = vld [vmem:[%s3 + $0x1b0] sm:$0xff]
      %v546 = vld [vmem:[%s3 + $0x1b8] sm:$0xff]
      %v547 = vld [vmem:[%s3 + $0x1c0] sm:$0xff]
      %v548 = vld [vmem:[%s3 + $0x1c8] sm:$0xff]
      %v549 = vld [vmem:[%s3 + $0x1d0] sm:$0xff]
      %v550 = vld [vmem:[%s3 + $0x1d8] sm:$0xff]
      %v551 = vld [vmem:[%s3 + $0x1e0] sm:$0xff]
      %v552 = vld [vmem:[%s3 + $0x1e8] sm:$0xff]
      %v553 = vld [vmem:[%s3 + $0x1f0] sm:$0xff]
      %v554 = vld [vmem:[%s3 + $0x1f8] sm:$0xff]
      %v555 = vld [vmem:[%s3 + $0x200] sm:$0xff]
      %v556 = vld [vmem:[%s3 + $0x208] sm:$0xff]
      %v557 = vld [vmem:[%s3 + $0x210] sm:$0xff]
      %v558 = vld [vmem:[%s3 + $0x218] sm:$0xff]
      %v559 = vld [vmem:[%s3 + $0x220] sm:$0xff]
      %v560 = vld [vmem:[%s3 + $0x228] sm:$0xff]
      %v561 = vld [vmem:[%s3 + $0x230] sm:$0xff]
      %v562 = vld [vmem:[%s3 + $0x238] sm:$0xff]
      %v563 = vld [vmem:[%s3 + $0x240] sm:$0xff]
      %v564 = vld [vmem:[%s3 + $0x248] sm:$0xff]
      %v565 = vld [vmem:[%s3 + $0x250] sm:$0xff]
      %v566 = vld [vmem:[%s3 + $0x258] sm:$0xff]
      %v567 = vld [vmem:[%s3 + $0x260] sm:$0xff]
      %v568 = vld [vmem:[%s3 + $0x268] sm:$0xff]
      %v569 = vld [vmem:[%s3 + $0x270] sm:$0xff]
      %v570 = vld [vmem:[%s3 + $0x278] sm:$0xff]
      %v571 = vld [vmem:[%s3 + $0x280] sm:$0xff]
      %v572 = vld [vmem:[%s3 + $0x288] sm:$0xff]
      %v573 = vld [vmem:[%s3 + $0x290] sm:$0xff]
      %v574 = vld [vmem:[%s3 + $0x298] sm:$0xff]
      %v575 = vld [vmem:[%s3 + $0x2a0] sm:$0xff]
      %v576 = vld [vmem:[%s3 + $0x2a8] sm:$0xff]
      %v577 = vld [vmem:[%s3 + $0x2b0] sm:$0xff]
      %v578 = vld [vmem:[%s3 + $0x2b8] sm:$0xff]
      %v579 = vld [vmem:[%s3 + $0x2c0] sm:$0xff]
      %v580 = vld [vmem:[%s3 + $0x2c8] sm:$0xff]
      %v581 = vld [vmem:[%s3 + $0x2d0] sm:$0xff]
      %v582 = vld [vmem:[%s3 + $0x2d8] sm:$0xff]
      %v583 = vld [vmem:[%s3 + $0x2e0] sm:$0xff]
      %v584 = vld [vmem:[%s3 + $0x2e8] sm:$0xff]
      %v585 = vld [vmem:[%s3 + $0x2f0] sm:$0xff]
      %v586 = vld [vmem:[%s3 + $0x2f8] sm:$0xff]
      %v587 = vld [vmem:[%s3 + $0x300] sm:$0xff]
      %v588 = vld [vmem:[%s3 + $0x308] sm:$0xff]
      %v589 = vld [vmem:[%s3 + $0x310] sm:$0xff]
      %v590 = vld [vmem:[%s3 + $0x318] sm:$0xff]
      %v591 = vld [vmem:[%s3 + $0x320] sm:$0xff]
      %v592 = vld [vmem:[%s3 + $0x328] sm:$0xff]
      %v593 = vld [vmem:[%s3 + $0x330] sm:$0xff]
      %v594 = vld [vmem:[%s3 + $0x338] sm:$0xff]
      %v595 = vld [vmem:[%s3 + $0x340] sm:$0xff]
      %v596 = vld [vmem:[%s3 + $0x348] sm:$0xff]
      %v597 = vld [vmem:[%s3 + $0x350] sm:$0xff]
      %v598 = vld [vmem:[%s3 + $0x358] sm:$0xff]
      %v599 = vld [vmem:[%s3 + $0x360] sm:$0xff]
      %v600 = vld [vmem:[%s3 + $0x368] sm:$0xff]
      %v601 = vld [vmem:[%s3 + $0x370] sm:$0xff]
      %v602 = vld [vmem:[%s3 + $0x378] sm:$0xff]
      %v603 = vld [vmem:[%s3 + $0x380] sm:$0xff]
      %v604 = vld [vmem:[%s3 + $0x388] sm:$0xff]
      %v605 = vld [vmem:[%s3 + $0x390] sm:$0xff]
      %v606 = vld [vmem:[%s3 + $0x398] sm:$0xff]
      %v607 = vld [vmem:[%s3 + $0x3a0] sm:$0xff]
      %v608 = vld [vmem:[%s3 + $0x3a8] sm:$0xff]
      %v609 = vld [vmem:[%s3 + $0x3b0] sm:$0xff]
      %v610 = vld [vmem:[%s3 + $0x3b8] sm:$0xff]
      %v611 = vld [vmem:[%s3 + $0x3c0] sm:$0xff]
      %v612 = vld [vmem:[%s3 + $0x3c8] sm:$0xff]
      %v613 = vld [vmem:[%s3 + $0x3d0] sm:$0xff]
      %v614 = vld [vmem:[%s3 + $0x3d8] sm:$0xff]
      %v615 = vld [vmem:[%s3 + $0x3e0] sm:$0xff]
      %v616 = vld [vmem:[%s3 + $0x3e8] sm:$0xff]
      %v617 = vld [vmem:[%s3 + $0x3f0] sm:$0xff]
      %v618 = vld [vmem:[%s3 + $0x3f8] sm:$0xff]
      %v619 = vld [vmem:[%s3 + $0x400] sm:$0xff]
      %v620 = vld [vmem:[%s3 + $0x408] sm:$0xff]
      %v621 = vld [vmem:[%s3 + $0x410] sm:$0xff]
      %v622 = vld [vmem:[%s3 + $0x418] sm:$0xff]
      %v623 = vld [vmem:[%s3 + $0x420] sm:$0xff]
      %v624 = vld [vmem:[%s3 + $0x428] sm:$0xff]
      %v625 = vld [vmem:[%s3 + $0x430] sm:$0xff]
      %v626 = vld [vmem:[%s3 + $0x438] sm:$0xff]
      %v627 = vld [vmem:[%s3 + $0x440] sm:$0xff]
      %v628 = vld [vmem:[%s3 + $0x448] sm:$0xff]
      %v629 = vld [vmem:[%s3 + $0x450] sm:$0xff]
      %v630 = vld [vmem:[%s3 + $0x458] sm:$0xff]
      %v631 = vld [vmem:[%s3 + $0x460] sm:$0xff]
      %v632 = vld [vmem:[%s3 + $0x468] sm:$0xff]
      %v633 = vld [vmem:[%s3 + $0x470] sm:$0xff]
      %v634 = vld [vmem:[%s3 + $0x478] sm:$0xff]
      %v635 = vld [vmem:[%s3 + $0x480] sm:$0xff]
      %v636 = vld [vmem:[%s3 + $0x488] sm:$0xff]
      %v637 = vld [vmem:[%s3 + $0x490] sm:$0xff]
      %v638 = vld [vmem:[%s3 + $0x498] sm:$0xff]
      %v639 = vld [vmem:[%s3 + $0x4a0] sm:$0xff]
      %v640 = vld [vmem:[%s3 + $0x4a8] sm:$0xff]
      %v641 = vld [vmem:[%s3 + $0x4b0] sm:$0xff]
      %v642 = vld [vmem:[%s3 + $0x4b8] sm:$0xff]
      %v643 = vld [vmem:[%s3 + $0x4c0] sm:$0xff]
      %v644 = vld [vmem:[%s3 + $0x4c8] sm:$0xff]
      %v645 = vld [vmem:[%s3 + $0x4d0] sm:$0xff]
      %v646 = vld [vmem:[%s3 + $0x4d8] sm:$0xff]
      %v647 = vld [vmem:[%s3 + $0x4e0] sm:$0xff]
      %v648 = vld [vmem:[%s3 + $0x4e8] sm:$0xff]
      %v649 = vld [vmem:[%s3 + $0x4f0] sm:$0xff]
      %v650 = vld [vmem:[%s3 + $0x4f8] sm:$0xff]
      %v651 = vld [vmem:[%s3 + $0x500] sm:$0xff]
      %v652 = vld [vmem:[%s3 + $0x508] sm:$0xff]
      %v653 = vld [vmem:[%s3 + $0x510] sm:$0xff]
      %v654 = vld [vmem:[%s3 + $0x518] sm:$0xff]
      %v655 = vld [vmem:[%s3 + $0x520] sm:$0xff]
      %v656 = vld [vmem:[%s3 + $0x528] sm:$0xff]
      %v657 = vld [vmem:[%s3 + $0x530] sm:$0xff]
      %v658 = vld [vmem:[%s3 + $0x538] sm:$0xff]
      %v659 = vld [vmem:[%s3 + $0x540] sm:$0xff]
      %v660 = vld [vmem:[%s3 + $0x548] sm:$0xff]
      %v661 = vld [vmem:[%s3 + $0x550] sm:$0xff]
      %v662 = vld [vmem:[%s3 + $0x558] sm:$0xff]
      %v663 = vld [vmem:[%s3 + $0x560] sm:$0xff]
      %v664 = vld [vmem:[%s3 + $0x568] sm:$0xff]
      %v665 = vld [vmem:[%s3 + $0x570] sm:$0xff]
      %v666 = vld [vmem:[%s3 + $0x578] sm:$0xff]
      %v667 = vld [vmem:[%s3 + $0x580] sm:$0xff]
      %v668 = vld [vmem:[%s3 + $0x588] sm:$0xff]
      %v669 = vld [vmem:[%s3 + $0x590] sm:$0xff]
      %v670 = vld [vmem:[%s3 + $0x598] sm:$0xff]
      %v671 = vld [vmem:[%s3 + $0x5a0] sm:$0xff]
      %v672 = vld [vmem:[%s3 + $0x5a8] sm:$0xff]
      %v673 = vld [vmem:[%s3 + $0x5b0] sm:$0xff]
      %v674 = vld [vmem:[%s3 + $0x5b8] sm:$0xff]
      %v675 = vld [vmem:[%s3 + $0x5c0] sm:$0xff]
      %v676 = vld [vmem:[%s3 + $0x5c8] sm:$0xff]
      %v677 = vld [vmem:[%s3 + $0x5d0] sm:$0xff]
      %v678 = vld [vmem:[%s3 + $0x5d8] sm:$0xff]
      %v679 = vld [vmem:[%s3 + $0x5e0] sm:$0xff]
      %v680 = vld [vmem:[%s3 + $0x5e8] sm:$0xff]
      %v681 = vld [vmem:[%s3 + $0x5f0] sm:$0xff]
      %v682 = vld [vmem:[%s3 + $0x5f8] sm:$0xff]
      %v683 = vld [vmem:[%s3 + $0x600] sm:$0xff]
      %v684 = vld [vmem:[%s3 + $0x608] sm:$0xff]
      %v685 = vld [vmem:[%s3 + $0x610] sm:$0xff]
      %v686 = vld [vmem:[%s3 + $0x618] sm:$0xff]
      %v687 = vld [vmem:[%s3 + $0x620] sm:$0xff]
      %v688 = vld [vmem:[%s3 + $0x628] sm:$0xff]
      %v689 = vld [vmem:[%s3 + $0x630] sm:$0xff]
      %v690 = vld [vmem:[%s3 + $0x638] sm:$0xff]
      %v691 = vld [vmem:[%s3 + $0x640] sm:$0xff]
      %v692 = vld [vmem:[%s3 + $0x648] sm:$0xff]
      %v693 = vld [vmem:[%s3 + $0x650] sm:$0xff]
      %v694 = vld [vmem:[%s3 + $0x658] sm:$0xff]
      %v695 = vld [vmem:[%s3 + $0x660] sm:$0xff]
      %v696 = vld [vmem:[%s3 + $0x668] sm:$0xff]
      %v697 = vld [vmem:[%s3 + $0x670] sm:$0xff]
      %v698 = vld [vmem:[%s3 + $0x678] sm:$0xff]
      %v699 = vld [vmem:[%s3 + $0x680] sm:$0xff]
      %v700 = vld [vmem:[%s3 + $0x688] sm:$0xff]
      %v701 = vld [vmem:[%s3 + $0x690] sm:$0xff]
      %v702 = vld [vmem:[%s3 + $0x698] sm:$0xff]
      %v703 = vld [vmem:[%s3 + $0x6a0] sm:$0xff]
      %v704 = vld [vmem:[%s3 + $0x6a8] sm:$0xff]
      %v705 = vld [vmem:[%s3 + $0x6b0] sm:$0xff]
      %v706 = vld [vmem:[%s3 + $0x6b8] sm:$0xff]
      %v707 = vld [vmem:[%s3 + $0x6c0] sm:$0xff]
      %v708 = vld [vmem:[%s3 + $0x6c8] sm:$0xff]
      %v709 = vld [vmem:[%s3 + $0x6d0] sm:$0xff]
      %v710 = vld [vmem:[%s3 + $0x6d8] sm:$0xff]
      %v711 = vld [vmem:[%s3 + $0x6e0] sm:$0xff]
      %v712 = vld [vmem:[%s3 + $0x6e8] sm:$0xff]
      %v713 = vld [vmem:[%s3 + $0x6f0] sm:$0xff]
      %v714 = vld [vmem:[%s3 + $0x6f8] sm:$0xff]
      %v715 = vld [vmem:[%s3 + $0x700] sm:$0xff]
      %v716 = vld [vmem:[%s3 + $0x708] sm:$0xff]
      %v717 = vld [vmem:[%s3 + $0x710] sm:$0xff]
      %v718 = vld [vmem:[%s3 + $0x718] sm:$0xff]
      %v719 = vld [vmem:[%s3 + $0x720] sm:$0xff]
      %v720 = vld [vmem:[%s3 + $0x728] sm:$0xff]
      %v721 = vld [vmem:[%s3 + $0x730] sm:$0xff]
      %v722 = vld [vmem:[%s3 + $0x738] sm:$0xff]
      %v723 = vld [vmem:[%s3 + $0x740] sm:$0xff]
      %v724 = vld [vmem:[%s3 + $0x748] sm:$0xff]
      %v725 = vld [vmem:[%s3 + $0x750] sm:$0xff]
      %v726 = vld [vmem:[%s3 + $0x758] sm:$0xff]
      %v727 = vld [vmem:[%s3 + $0x760] sm:$0xff]
      %v728 = vld [vmem:[%s3 + $0x768] sm:$0xff]
      %v729 = vld [vmem:[%s3 + $0x770] sm:$0xff]
      %v730 = vld [vmem:[%s3 + $0x778] sm:$0xff]
      %v731 = vld [vmem:[%s3 + $0x780] sm:$0xff]
      %v732 = vld [vmem:[%s3 + $0x788] sm:$0xff]
      %v733 = vld [vmem:[%s3 + $0x790] sm:$0xff]
      %v734 = vld [vmem:[%s3 + $0x798] sm:$0xff]
      %v735 = vld [vmem:[%s3 + $0x7a0] sm:$0xff]
      %v736 = vld [vmem:[%s3 + $0x7a8] sm:$0xff]
      %v737 = vld [vmem:[%s3 + $0x7b0] sm:$0xff]
      %v738 = vld [vmem:[%s3 + $0x7b8] sm:$0xff]
      %v739 = vld [vmem:[%s3 + $0x7c0] sm:$0xff]
      %v740 = vld [vmem:[%s3 + $0x7c8] sm:$0xff]
      %v741 = vld [vmem:[%s3 + $0x7d0] sm:$0xff]
      %v742 = vld [vmem:[%s3 + $0x7d8] sm:$0xff]
      %v743 = vld [vmem:[%s3 + $0x7e0] sm:$0xff]
      %v744 = vld [vmem:[%s3 + $0x7e8] sm:$0xff]
      %v745 = vld [vmem:[%s3 + $0x7f0] sm:$0xff]
      %v746 = vld [vmem:[%s3 + $0x7f8] sm:$0xff]
      %v747 = vld [vmem:[%s3 + $0x800] sm:$0xff]
      %v748 = vld [vmem:[%s3 + $0x808] sm:$0xff]
      %v749 = vld [vmem:[%s3 + $0x810] sm:$0xff]
      %v750 = vld [vmem:[%s3 + $0x818] sm:$0xff]
      %v751 = vld [vmem:[%s3 + $0x820] sm:$0xff]
      %v752 = vld [vmem:[%s3 + $0x828] sm:$0xff]
      %v753 = vld [vmem:[%s3 + $0x830] sm:$0xff]
      %v754 = vld [vmem:[%s3 + $0x838] sm:$0xff]
      %v755 = vld [vmem:[%s3 + $0x840] sm:$0xff]
      %v756 = vld [vmem:[%s3 + $0x848] sm:$0xff]
      %v757 = vld [vmem:[%s3 + $0x850] sm:$0xff]
      %v758 = vld [vmem:[%s3 + $0x858] sm:$0xff]
      %v759 = vld [vmem:[%s3 + $0x860] sm:$0xff]
      %v760 = vld [vmem:[%s3 + $0x868] sm:$0xff]
      %v761 = vld [vmem:[%s3 + $0x870] sm:$0xff]
      %v762 = vld [vmem:[%s3 + $0x878] sm:$0xff]
      %v763 = vld [vmem:[%s3 + $0x880] sm:$0xff]
      %v764 = vld [vmem:[%s3 + $0x888] sm:$0xff]
      %v765 = vld [vmem:[%s3 + $0x890] sm:$0xff]
      %v766 = vld [vmem:[%s3 + $0x898] sm:$0xff]
      %v767 = vld [vmem:[%s3 + $0x8a0] sm:$0xff]
      %v768 = vld [vmem:[%s3 + $0x8a8] sm:$0xff]
      %v769 = vld [vmem:[%s3 + $0x8b0] sm:$0xff]
      %v770 = vld [vmem:[%s3 + $0x8b8] sm:$0xff]
      %v771 = vld [vmem:[%s3 + $0x8c0] sm:$0xff]
      %v772 = vld [vmem:[%s3 + $0x8c8] sm:$0xff]
      %v773 = vld [vmem:[%s3 + $0x8d0] sm:$0xff]
      %v774 = vld [vmem:[%s3 + $0x8d8] sm:$0xff]
      %v775 = vld [vmem:[%s3 + $0x8e0] sm:$0xff]
      %v776 = vld [vmem:[%s3 + $0x8e8] sm:$0xff]
      %v777 = vld [vmem:[%s3 + $0x8f0] sm:$0xff]
      %v778 = vld [vmem:[%s3 + $0x8f8] sm:$0xff]
      %v779 = vld [vmem:[%s3 + $0x900] sm:$0xff]
      %v780 = vld [vmem:[%s3 + $0x908] sm:$0xff]
      %v781 = vld [vmem:[%s3 + $0x910] sm:$0xff]
      %v782 = vld [vmem:[%s3 + $0x918] sm:$0xff]
      %v783 = vld [vmem:[%s3 + $0x920] sm:$0xff]
      %v784 = vld [vmem:[%s3 + $0x928] sm:$0xff]
      %v785 = vld [vmem:[%s3 + $0x930] sm:$0xff]
      %v786 = vld [vmem:[%s3 + $0x938] sm:$0xff]
      %v787 = vld [vmem:[%s3 + $0x940] sm:$0xff]
      %v788 = vld [vmem:[%s3 + $0x948] sm:$0xff]
      %v789 = vld [vmem:[%s3 + $0x950] sm:$0xff]
      %v790 = vld [vmem:[%s3 + $0x958] sm:$0xff]
      %v791 = vld [vmem:[%s3 + $0x960] sm:$0xff]
      %v792 = vld [vmem:[%s3 + $0x968] sm:$0xff]
      %v793 = vld [vmem:[%s3 + $0x970] sm:$0xff]
      %v794 = vld [vmem:[%s3 + $0x978] sm:$0xff]
      %v795 = vld [vmem:[%s3 + $0x980] sm:$0xff]
      %v796 = vld [vmem:[%s3 + $0x988] sm:$0xff]
      %v797 = vld [vmem:[%s3 + $0x990] sm:$0xff]
      %v798 = vld [vmem:[%s3 + $0x998] sm:$0xff]
      %v799 = vld [vmem:[%s3 + $0x9a0] sm:$0xff]
      %v800 = vld [vmem:[%s3 + $0x9a8] sm:$0xff]
      %v801 = vld [vmem:[%s3 + $0x9b0] sm:$0xff]
      %v802 = vld [vmem:[%s3 + $0x9b8] sm:$0xff]
      %v803 = vld [vmem:[%s3 + $0x9c0] sm:$0xff]
      %v804 = vld [vmem:[%s3 + $0x9c8] sm:$0xff]
      %v805 = vld [vmem:[%s3 + $0x9d0] sm:$0xff]
      %v806 = vld [vmem:[%s3 + $0x9d8] sm:$0xff]
      %v807 = vld [vmem:[%s3 + $0x9e0] sm:$0xff]
      %v808 = vld [vmem:[%s3 + $0x9e8] sm:$0xff]
      %v809 = vld [vmem:[%s3 + $0x9f0] sm:$0xff]
      %v810 = vld [vmem:[%s3 + $0x9f8] sm:$0xff]
      %v811 = vld [vmem:[%s3 + $0xa00] sm:$0xff]
      %v812 = vld [vmem:[%s3 + $0xa08] sm:$0xff]
      %v813 = vld [vmem:[%s3 + $0xa10] sm:$0xff]
      %v814 = vld [vmem:[%s3 + $0xa18] sm:$0xff]
      %v815 = vld [vmem:[%s3 + $0xa20] sm:$0xff]
      %v816 = vld [vmem:[%s3 + $0xa28] sm:$0xff]
      %v817 = vld [vmem:[%s3 + $0xa30] sm:$0xff]
      %v818 = vld [vmem:[%s3 + $0xa38] sm:$0xff]
      %v819 = vld [vmem:[%s3 + $0xa40] sm:$0xff]
      %v820 = vld [vmem:[%s3 + $0xa48] sm:$0xff]
      %v821 = vld [vmem:[%s3 + $0xa50] sm:$0xff]
      %v822 = vld [vmem:[%s3 + $0xa58] sm:$0xff]
      %v823 = vld [vmem:[%s3 + $0xa60] sm:$0xff]
      %v824 = vld [vmem:[%s3 + $0xa68] sm:$0xff]
      %v825 = vld [vmem:[%s3 + $0xa70] sm:$0xff]
      %v826 = vld [vmem:[%s3 + $0xa78] sm:$0xff]
      %v827 = vld [vmem:[%s3 + $0xa80] sm:$0xff]
      %v828 = vld [vmem:[%s3 + $0xa88] sm:$0xff]
      %v829 = vld [vmem:[%s3 + $0xa90] sm:$0xff]
      %v830 = vld [vmem:[%s3 + $0xa98] sm:$0xff]
      %v831 = vld [vmem:[%s3 + $0xaa0] sm:$0xff]
      %v832 = vld [vmem:[%s3 + $0xaa8] sm:$0xff]
      %v833 = vld [vmem:[%s3 + $0xab0] sm:$0xff]
      %v834 = vld [vmem:[%s3 + $0xab8] sm:$0xff]
      %v835 = vld [vmem:[%s3 + $0xac0] sm:$0xff]
      %v836 = vld [vmem:[%s3 + $0xac8] sm:$0xff]
      %v837 = vld [vmem:[%s3 + $0xad0] sm:$0xff]
      %v838 = vld [vmem:[%s3 + $0xad8] sm:$0xff]
      %v839 = vld [vmem:[%s3 + $0xae0] sm:$0xff]
      %v840 = vld [vmem:[%s3 + $0xae8] sm:$0xff]
      %v841 = vld [vmem:[%s3 + $0xaf0] sm:$0xff]
      %v842 = vld [vmem:[%s3 + $0xaf8] sm:$0xff]
      %v843 = vld [vmem:[%s3 + $0xb00] sm:$0xff]
      %v844 = vld [vmem:[%s3 + $0xb08] sm:$0xff]
      %v845 = vld [vmem:[%s3 + $0xb10] sm:$0xff]
      %v846 = vld [vmem:[%s3 + $0xb18] sm:$0xff]
      %v847 = vld [vmem:[%s3 + $0xb20] sm:$0xff]
      %v848 = vld [vmem:[%s3 + $0xb28] sm:$0xff]
      %v849 = vld [vmem:[%s3 + $0xb30] sm:$0xff]
      %v850 = vld [vmem:[%s3 + $0xb38] sm:$0xff]
      %v851 = vld [vmem:[%s3 + $0xb40] sm:$0xff]
      %v852 = vld [vmem:[%s3 + $0xb48] sm:$0xff]
      %v853 = vld [vmem:[%s3 + $0xb50] sm:$0xff]
      %v854 = vld [vmem:[%s3 + $0xb58] sm:$0xff]
      %v855 = vld [vmem:[%s3 + $0xb60] sm:$0xff]
      %v856 = vld [vmem:[%s3 + $0xb68] sm:$0xff]
      %v857 = vld [vmem:[%s3 + $0xb70] sm:$0xff]
      %v858 = vld [vmem:[%s3 + $0xb78] sm:$0xff]
      %v859 = vld [vmem:[%s3 + $0xb80] sm:$0xff]
      %v860 = vld [vmem:[%s3 + $0xb88] sm:$0xff]
      %v861 = vld [vmem:[%s3 + $0xb90] sm:$0xff]
      %v862 = vld [vmem:[%s3 + $0xb98] sm:$0xff]
      %v863 = vld [vmem:[%s3 + $0xba0] sm:$0xff]
      %v864 = vld [vmem:[%s3 + $0xba8] sm:$0xff]
      %v865 = vld [vmem:[%s3 + $0xbb0] sm:$0xff]
      %v866 = vld [vmem:[%s3 + $0xbb8] sm:$0xff]
      %v867 = vld [vmem:[%s3 + $0xbc0] sm:$0xff]
      %v868 = vld [vmem:[%s3 + $0xbc8] sm:$0xff]
      %v869 = vld [vmem:[%s3 + $0xbd0] sm:$0xff]
      %v870 = vld [vmem:[%s3 + $0xbd8] sm:$0xff]
      %v871 = vld [vmem:[%s3 + $0xbe0] sm:$0xff]
      %v872 = vld [vmem:[%s3 + $0xbe8] sm:$0xff]
      %v873 = vld [vmem:[%s3 + $0xbf0] sm:$0xff]
      %v874 = vld [vmem:[%s3 + $0xbf8] sm:$0xff]
      %v875 = vld [vmem:[%s3 + $0xc00] sm:$0xff]
      %v876 = vld [vmem:[%s3 + $0xc08] sm:$0xff]
      %v877 = vld [vmem:[%s3 + $0xc10] sm:$0xff]
      %v878 = vld [vmem:[%s3 + $0xc18] sm:$0xff]
      %v879 = vld [vmem:[%s3 + $0xc20] sm:$0xff]
      %v880 = vld [vmem:[%s3 + $0xc28] sm:$0xff]
      %v881 = vld [vmem:[%s3 + $0xc30] sm:$0xff]
      %v882 = vld [vmem:[%s3 + $0xc38] sm:$0xff]
      %v883 = vld [vmem:[%s3 + $0xc40] sm:$0xff]
      %v884 = vld [vmem:[%s3 + $0xc48] sm:$0xff]
      %v885 = vld [vmem:[%s3 + $0xc50] sm:$0xff]
      %v886 = vld [vmem:[%s3 + $0xc58] sm:$0xff]
      %v887 = vld [vmem:[%s3 + $0xc60] sm:$0xff]
      %v888 = vld [vmem:[%s3 + $0xc68] sm:$0xff]
      %v889 = vld [vmem:[%s3 + $0xc70] sm:$0xff]
      %v890 = vld [vmem:[%s3 + $0xc78] sm:$0xff]
      %v891 = vld [vmem:[%s3 + $0xc80] sm:$0xff]
      %v892 = vld [vmem:[%s3 + $0xc88] sm:$0xff]
      %v893 = vld [vmem:[%s3 + $0xc90] sm:$0xff]
      %v894 = vld [vmem:[%s3 + $0xc98] sm:$0xff]
      %v895 = vld [vmem:[%s3 + $0xca0] sm:$0xff]
      %v896 = vld [vmem:[%s3 + $0xca8] sm:$0xff]
      %v897 = vld [vmem:[%s3 + $0xcb0] sm:$0xff]
      %v898 = vld [vmem:[%s3 + $0xcb8] sm:$0xff]
      %v899 = vld [vmem:[%s3 + $0xcc0] sm:$0xff]
      %v900 = vld [vmem:[%s3 + $0xcc8] sm:$0xff]
      %v901 = vld [vmem:[%s3 + $0xcd0] sm:$0xff]
      %v902 = vld [vmem:[%s3 + $0xcd8] sm:$0xff]
      %v903 = vld [vmem:[%s3 + $0xce0] sm:$0xff]
      %v904 = vld [vmem:[%s3 + $0xce8] sm:$0xff]
      %v905 = vld [vmem:[%s3 + $0xcf0] sm:$0xff]
      %v906 = vld [vmem:[%s3 + $0xcf8] sm:$0xff]
      %v907 = vld [vmem:[%s3 + $0xd00] sm:$0xff]
      %v908 = vld [vmem:[%s3 + $0xd08] sm:$0xff]
      %v909 = vld [vmem:[%s3 + $0xd10] sm:$0xff]
      %v910 = vld [vmem:[%s3 + $0xd18] sm:$0xff]
      %v911 = vld [vmem:[%s3 + $0xd20] sm:$0xff]
      %v912 = vld [vmem:[%s3 + $0xd28] sm:$0xff]
      %v913 = vld [vmem:[%s3 + $0xd30] sm:$0xff]
      %v914 = vld [vmem:[%s3 + $0xd38] sm:$0xff]
      %v915 = vld [vmem:[%s3 + $0xd40] sm:$0xff]
      %v916 = vld [vmem:[%s3 + $0xd48] sm:$0xff]
      %v917 = vld [vmem:[%s3 + $0xd50] sm:$0xff]
      %v918 = vld [vmem:[%s3 + $0xd58] sm:$0xff]
      %v919 = vld [vmem:[%s3 + $0xd60] sm:$0xff]
      %v920 = vld [vmem:[%s3 + $0xd68] sm:$0xff]
      %v921 = vld [vmem:[%s3 + $0xd70] sm:$0xff]
      %v922 = vld [vmem:[%s3 + $0xd78] sm:$0xff]
      %v923 = vld [vmem:[%s3 + $0xd80] sm:$0xff]
      %v924 = vld [vmem:[%s3 + $0xd88] sm:$0xff]
      %v925 = vld [vmem:[%s3 + $0xd90] sm:$0xff]
      %v926 = vld [vmem:[%s3 + $0xd98] sm:$0xff]
      %v927 = vld [vmem:[%s3 + $0xda0] sm:$0xff]
      %v928 = vld [vmem:[%s3 + $0xda8] sm:$0xff]
      %v929 = vld [vmem:[%s3 + $0xdb0] sm:$0xff]
      %v930 = vld [vmem:[%s3 + $0xdb8] sm:$0xff]
      %v931 = vld [vmem:[%s3 + $0xdc0] sm:$0xff]
      %v932 = vld [vmem:[%s3 + $0xdc8] sm:$0xff]
      %v933 = vld [vmem:[%s3 + $0xdd0] sm:$0xff]
      %v934 = vld [vmem:[%s3 + $0xdd8] sm:$0xff]
      %v935 = vld [vmem:[%s3 + $0xde0] sm:$0xff]
      %v936 = vld [vmem:[%s3 + $0xde8] sm:$0xff]
      %v937 = vld [vmem:[%s3 + $0xdf0] sm:$0xff]
      %v938 = vld [vmem:[%s3 + $0xdf8] sm:$0xff]
      %v939 = vld [vmem:[%s3 + $0xe00] sm:$0xff]
      %v940 = vld [vmem:[%s3 + $0xe08] sm:$0xff]
      %v941 = vld [vmem:[%s3 + $0xe10] sm:$0xff]
      %v942 = vld [vmem:[%s3 + $0xe18] sm:$0xff]
      %v943 = vld [vmem:[%s3 + $0xe20] sm:$0xff]
      %v944 = vld [vmem:[%s3 + $0xe28] sm:$0xff]
      %v945 = vld [vmem:[%s3 + $0xe30] sm:$0xff]
      %v946 = vld [vmem:[%s3 + $0xe38] sm:$0xff]
      %v947 = vld [vmem:[%s3 + $0xe40] sm:$0xff]
      %v948 = vld [vmem:[%s3 + $0xe48] sm:$0xff]
      %v949 = vld [vmem:[%s3 + $0xe50] sm:$0xff]
      %v950 = vld [vmem:[%s3 + $0xe58] sm:$0xff]
      %v951 = vld [vmem:[%s3 + $0xe60] sm:$0xff]
      %v952 = vld [vmem:[%s3 + $0xe68] sm:$0xff]
      %v953 = vld [vmem:[%s3 + $0xe70] sm:$0xff]
      %v954 = vld [vmem:[%s3 + $0xe78] sm:$0xff]
      %v955 = vld [vmem:[%s3 + $0xe80] sm:$0xff]
      %v956 = vld [vmem:[%s3 + $0xe88] sm:$0xff]
      %v957 = vld [vmem:[%s3 + $0xe90] sm:$0xff]
      %v958 = vld [vmem:[%s3 + $0xe98] sm:$0xff]
      %v959 = vld [vmem:[%s3 + $0xea0] sm:$0xff]
      %v960 = vld [vmem:[%s3 + $0xea8] sm:$0xff]
      %v961 = vld [vmem:[%s3 + $0xeb0] sm:$0xff]
      %v962 = vld [vmem:[%s3 + $0xeb8] sm:$0xff]
      %v963 = vld [vmem:[%s3 + $0xec0] sm:$0xff]
      %v964 = vld [vmem:[%s3 + $0xec8] sm:$0xff]
      %v965 = vld [vmem:[%s3 + $0xed0] sm:$0xff]
      %v966 = vld [vmem:[%s3 + $0xed8] sm:$0xff]
      %v967 = vld [vmem:[%s3 + $0xee0] sm:$0xff]
      %v968 = vld [vmem:[%s3 + $0xee8] sm:$0xff]
      %v969 = vld [vmem:[%s3 + $0xef0] sm:$0xff]
      %v970 = vld [vmem:[%s3 + $0xef8] sm:$0xff]
      %v971 = vld [vmem:[%s3 + $0xf00] sm:$0xff]
      %v972 = vld [vmem:[%s3 + $0xf08] sm:$0xff]
      %v973 = vld [vmem:[%s3 + $0xf10] sm:$0xff]
      %v974 = vld [vmem:[%s3 + $0xf18] sm:$0xff]
      %v975 = vld [vmem:[%s3 + $0xf20] sm:$0xff]
      %v976 = vld [vmem:[%s3 + $0xf28] sm:$0xff]
      %v977 = vld [vmem:[%s3 + $0xf30] sm:$0xff]
      %v978 = vld [vmem:[%s3 + $0xf38] sm:$0xff]
      %v979 = vld [vmem:[%s3 + $0xf40] sm:$0xff]
      %v980 = vld [vmem:[%s3 + $0xf48] sm:$0xff]
      %v981 = vld [vmem:[%s3 + $0xf50] sm:$0xff]
      %v982 = vld [vmem:[%s3 + $0xf58] sm:$0xff]
      %v983 = vld [vmem:[%s3 + $0xf60] sm:$0xff]
      %v984 = vld [vmem:[%s3 + $0xf68] sm:$0xff]
      %v985 = vld [vmem:[%s3 + $0xf70] sm:$0xff]
      %v986 = vld [vmem:[%s3 + $0xf78] sm:$0xff]
      %v987 = vld [vmem:[%s3 + $0xf80] sm:$0xff]
      %v988 = vld [vmem:[%s3 + $0xf88] sm:$0xff]
      %v989 = vld [vmem:[%s3 + $0xf90] sm:$0xff]
      %v990 = vld [vmem:[%s3 + $0xf98] sm:$0xff]
      %v991 = vld [vmem:[%s3 + $0xfa0] sm:$0xff]
      %v992 = vld [vmem:[%s3 + $0xfa8] sm:$0xff]
      %v993 = vld [vmem:[%s3 + $0xfb0] sm:$0xff]
      %v994 = vld [vmem:[%s3 + $0xfb8] sm:$0xff]
      %v995 = vld [vmem:[%s3 + $0xfc0] sm:$0xff]
      %v996 = vld [vmem:[%s3 + $0xfc8] sm:$0xff]
      %v997 = vld [vmem:[%s3 + $0xfd0] sm:$0xff]
      %v998 = vld [vmem:[%s3 + $0xfd8] sm:$0xff]
      %v999 = vld [vmem:[%s3 + $0xfe0] sm:$0xff]
      %v1000 = vld [vmem:[%s3 + $0xfe8] sm:$0xff]
      %v1001 = vld [vmem:[%s3 + $0xff0] sm:$0xff]
      %v1002 = vld [vmem:[%s3 + $0xff8] sm:$0xff]
      %v1003 = vld [vmem:[%s3 + $0x1000] sm:$0xff]
      %v1004 = vld [vmem:[%s3 + $0x1008] sm:$0xff]
      %v1005 = vld [vmem:[%s3 + $0x1010] sm:$0xff]
      %v1006 = vld [vmem:[%s3 + $0x1018] sm:$0xff]
      %v1007 = vld [vmem:[%s3 + $0x1020] sm:$0xff]
      %v1008 = vld [vmem:[%s3 + $0x1028] sm:$0xff]
      %v1009 = vld [vmem:[%s3 + $0x1030] sm:$0xff]
      %v1010 = vld [vmem:[%s3 + $0x1038] sm:$0xff]
      %v1011 = vld [vmem:[%s3 + $0x1040] sm:$0xff]
      %v1012 = vld [vmem:[%s3 + $0x1048] sm:$0xff]
      %v1013 = vld [vmem:[%s3 + $0x1050] sm:$0xff]
      %v1014 = vld [vmem:[%s3 + $0x1058] sm:$0xff]
      %v1015 = vld [vmem:[%s3 + $0x1060] sm:$0xff]
      %v1016 = vld [vmem:[%s3 + $0x1068] sm:$0xff]
      %v1017 = vld [vmem:[%s3 + $0x1070] sm:$0xff]
      %v1018 = vld [vmem:[%s3 + $0x1078] sm:$0xff]
      %v1019 = vld [vmem:[%s3 + $0x1080] sm:$0xff]
      %v1020 = vld [vmem:[%s3 + $0x1088] sm:$0xff]
      %v1021 = vld [vmem:[%s3 + $0x1090] sm:$0xff]
      %v1022 = vld [vmem:[%s3 + $0x1098] sm:$0xff]
      %v1023 = vld [vmem:[%s3 + $0x10a0] sm:$0xff]
      %v1024 = vld [vmem:[%s3 + $0x10a8] sm:$0xff]
      %v1025 = vld [vmem:[%s3 + $0x10b0] sm:$0xff]
      %v1026 = vld [vmem:[%s3 + $0x10b8] sm:$0xff]
      %v1027 = vld [vmem:[%s3 + $0x10c0] sm:$0xff]
      %v1028 = vld [vmem:[%s3 + $0x10c8] sm:$0xff]
      %v1029 = vld [vmem:[%s3 + $0x10d0] sm:$0xff]
      %v1030 = vld [vmem:[%s3 + $0x10d8] sm:$0xff]
      %v1031 = vld [vmem:[%s3 + $0x10e0] sm:$0xff]
      %v1032 = vld [vmem:[%s3 + $0x10e8] sm:$0xff]
      %v1033 = vld [vmem:[%s3 + $0x10f0] sm:$0xff]
      %v1034 = vld [vmem:[%s3 + $0x10f8] sm:$0xff]
      %v1035 = vld [vmem:[%s3 + $0x1100] sm:$0xff]
      %v1036 = vld [vmem:[%s3 + $0x1108] sm:$0xff]
      %v1037 = vld [vmem:[%s3 + $0x1110] sm:$0xff]
      %v1038 = vld [vmem:[%s3 + $0x1118] sm:$0xff]
      %v1039 = vld [vmem:[%s3 + $0x1120] sm:$0xff]
      %v1040 = vld [vmem:[%s3 + $0x1128] sm:$0xff]
      %v1041 = vld [vmem:[%s3 + $0x1130] sm:$0xff]
      %v1042 = vld [vmem:[%s3 + $0x1138] sm:$0xff]
      %v1043 = vld [vmem:[%s3 + $0x1140] sm:$0xff]
      %v1044 = vld [vmem:[%s3 + $0x1148] sm:$0xff]
      %v1045 = vld [vmem:[%s3 + $0x1150] sm:$0xff]
      %v1046 = vld [vmem:[%s3 + $0x1158] sm:$0xff]
      %v1047 = vld [vmem:[%s3 + $0x1160] sm:$0xff]
      %v1048 = vld [vmem:[%s3 + $0x1168] sm:$0xff]
      %v1049 = vld [vmem:[%s3 + $0x1170] sm:$0xff]
      %v1050 = vld [vmem:[%s3 + $0x1178] sm:$0xff]
      %v1051 = vld [vmem:[%s3 + $0x1180] sm:$0xff]
      %v1052 = vld [vmem:[%s3 + $0x1188] sm:$0xff]
      %v1053 = vld [vmem:[%s3 + $0x1190] sm:$0xff]
      %v1054 = vld [vmem:[%s3 + $0x1198] sm:$0xff]
      %v1055 = vld [vmem:[%s3 + $0x11a0] sm:$0xff]
      %v1056 = vld [vmem:[%s3 + $0x11a8] sm:$0xff]
      %v1057 = vld [vmem:[%s3 + $0x11b0] sm:$0xff]
      %v1058 = vld [vmem:[%s3 + $0x11b8] sm:$0xff]
      %v1059 = vld [vmem:[%s3 + $0x11c0] sm:$0xff]
      %v1060 = vld [vmem:[%s3 + $0x11c8] sm:$0xff]
      %v1061 = vld [vmem:[%s3 + $0x11d0] sm:$0xff]
      %v1062 = vld [vmem:[%s3 + $0x11d8] sm:$0xff]
      %v1063 = vld [vmem:[%s3 + $0x11e0] sm:$0xff]
      %v1064 = vld [vmem:[%s3 + $0x11e8] sm:$0xff]
      %v1065 = vld [vmem:[%s3 + $0x11f0] sm:$0xff]
      %v1066 = vld [vmem:[%s3 + $0x11f8] sm:$0xff]
      %v1067 = vld [vmem:[%s3 + $0x1200] sm:$0xff]
      %v1068 = vld [vmem:[%s3 + $0x1208] sm:$0xff]
      %v1069 = vld [vmem:[%s3 + $0x1210] sm:$0xff]
      %v1070 = vld [vmem:[%s3 + $0x1218] sm:$0xff]
      %v1071 = vld [vmem:[%s3 + $0x1220] sm:$0xff]
      %v1072 = vld [vmem:[%s3 + $0x1228] sm:$0xff]
      %v1073 = vld [vmem:[%s3 + $0x1230] sm:$0xff]
      %v1074 = vld [vmem:[%s3 + $0x1238] sm:$0xff]
      %v1075 = vld [vmem:[%s3 + $0x1240] sm:$0xff]
      %v1076 = vld [vmem:[%s3 + $0x1248] sm:$0xff]
      %v1077 = vld [vmem:[%s3 + $0x1250] sm:$0xff]
      %v1078 = vld [vmem:[%s3 + $0x1258] sm:$0xff]
      %v1079 = vld [vmem:[%s3 + $0x1260] sm:$0xff]
      %v1080 = vld [vmem:[%s3 + $0x1268] sm:$0xff]
      %v1081 = vld [vmem:[%s3 + $0x1270] sm:$0xff]
      %v1082 = vld [vmem:[%s3 + $0x1278] sm:$0xff]
      %v1083 = vld [vmem:[%s3 + $0x1280] sm:$0xff]
      %v1084 = vld [vmem:[%s3 + $0x1288] sm:$0xff]
      %v1085 = vld [vmem:[%s3 + $0x1290] sm:$0xff]
      %v1086 = vld [vmem:[%s3 + $0x1298] sm:$0xff]
      %v1087 = vld [vmem:[%s3 + $0x12a0] sm:$0xff]
      %v1088 = vld [vmem:[%s3 + $0x12a8] sm:$0xff]
      %v1089 = vld [vmem:[%s3 + $0x12b0] sm:$0xff]
      %v1090 = vld [vmem:[%s3 + $0x12b8] sm:$0xff]
      %v1091 = vld [vmem:[%s3 + $0x12c0] sm:$0xff]
      %v1092 = vld [vmem:[%s3 + $0x12c8] sm:$0xff]
      %v1093 = vld [vmem:[%s3 + $0x12d0] sm:$0xff]
      %v1094 = vld [vmem:[%s3 + $0x12d8] sm:$0xff]
      %v1095 = vld [vmem:[%s3 + $0x12e0] sm:$0xff]
      %v1096 = vld [vmem:[%s3 + $0x12e8] sm:$0xff]
      %v1097 = vld [vmem:[%s3 + $0x12f0] sm:$0xff]
      %v1098 = vld [vmem:[%s3 + $0x12f8] sm:$0xff]
      %v1099 = vld [vmem:[%s3 + $0x1300] sm:$0xff]
      %v1100 = vld [vmem:[%s3 + $0x1308] sm:$0xff]
      %v1101 = vld [vmem:[%s3 + $0x1310] sm:$0xff]
      %v1102 = vld [vmem:[%s3 + $0x1318] sm:$0xff]
      %v1103 = vld [vmem:[%s3 + $0x1320] sm:$0xff]
      %v1104 = vld [vmem:[%s3 + $0x1328] sm:$0xff]
      %v1105 = vld [vmem:[%s3 + $0x1330] sm:$0xff]
      %v1106 = vld [vmem:[%s3 + $0x1338] sm:$0xff]
      %v1107 = vld [vmem:[%s3 + $0x1340] sm:$0xff]
      %v1108 = vld [vmem:[%s3 + $0x1348] sm:$0xff]
      %v1109 = vld [vmem:[%s3 + $0x1350] sm:$0xff]
      %v1110 = vld [vmem:[%s3 + $0x1358] sm:$0xff]
      %v1111 = vld [vmem:[%s3 + $0x1360] sm:$0xff]
      %v1112 = vld [vmem:[%s3 + $0x1368] sm:$0xff]
      %v1113 = vld [vmem:[%s3 + $0x1370] sm:$0xff]
      %v1114 = vld [vmem:[%s3 + $0x1378] sm:$0xff]
      %v1115 = vld [vmem:[%s3 + $0x1380] sm:$0xff]
      %v1116 = vld [vmem:[%s3 + $0x1388] sm:$0xff]
      %v1117 = vld [vmem:[%s3 + $0x1390] sm:$0xff]
      %v1118 = vld [vmem:[%s3 + $0x1398] sm:$0xff]
      %v1119 = vld [vmem:[%s3 + $0x13a0] sm:$0xff]
      %v1120 = vld [vmem:[%s3 + $0x13a8] sm:$0xff]
      %v1121 = vld [vmem:[%s3 + $0x13b0] sm:$0xff]
      %v1122 = vld [vmem:[%s3 + $0x13b8] sm:$0xff]
      %v1123 = vld [vmem:[%s3 + $0x13c0] sm:$0xff]
      %v1124 = vld [vmem:[%s3 + $0x13c8] sm:$0xff]
      %v1125 = vld [vmem:[%s3 + $0x13d0] sm:$0xff]
      %v1126 = vld [vmem:[%s3 + $0x13d8] sm:$0xff]
      %v1127 = vld [vmem:[%s3 + $0x13e0] sm:$0xff]
      %v1128 = vld [vmem:[%s3 + $0x13e8] sm:$0xff]
      %v1129 = vld [vmem:[%s3 + $0x13f0] sm:$0xff]
      %v1130 = vld [vmem:[%s3 + $0x13f8] sm:$0xff]
      %v1131 = vld [vmem:[%s3 + $0x1400] sm:$0xff]
      %v1132 = vld [vmem:[%s3 + $0x1408] sm:$0xff]
      %v1133 = vld [vmem:[%s3 + $0x1410] sm:$0xff]
      %v1134 = vld [vmem:[%s3 + $0x1418] sm:$0xff]
      %v1135 = vld [vmem:[%s3 + $0x1420] sm:$0xff]
      %v1136 = vld [vmem:[%s3 + $0x1428] sm:$0xff]
      %v1137 = vld [vmem:[%s3 + $0x1430] sm:$0xff]
      %v1138 = vld [vmem:[%s3 + $0x1438] sm:$0xff]
      %v1139 = vld [vmem:[%s3 + $0x1440] sm:$0xff]
      %v1140 = vld [vmem:[%s3 + $0x1448] sm:$0xff]
      %v1141 = vld [vmem:[%s3 + $0x1450] sm:$0xff]
      %v1142 = vld [vmem:[%s3 + $0x1458] sm:$0xff]
      %v1143 = vld [vmem:[%s3 + $0x1460] sm:$0xff]
      %v1144 = vld [vmem:[%s3 + $0x1468] sm:$0xff]
      %v1145 = vld [vmem:[%s3 + $0x1470] sm:$0xff]
      %v1146 = vld [vmem:[%s3 + $0x1478] sm:$0xff]
      %v1147 = vld [vmem:[%s3 + $0x1480] sm:$0xff]
      %v1148 = vld [vmem:[%s3 + $0x1488] sm:$0xff]
      %v1149 = vld [vmem:[%s3 + $0x1490] sm:$0xff]
      %v1150 = vld [vmem:[%s3 + $0x1498] sm:$0xff]
      %v1151 = vld [vmem:[%s3 + $0x14a0] sm:$0xff]
      %v1152 = vld [vmem:[%s3 + $0x14a8] sm:$0xff]
      %v1153 = vld [vmem:[%s3 + $0x14b0] sm:$0xff]
      %v1154 = vld [vmem:[%s3 + $0x14b8] sm:$0xff]
      %v1155 = vld [vmem:[%s3 + $0x14c0] sm:$0xff]
      %v1156 = vld [vmem:[%s3 + $0x14c8] sm:$0xff]
      %v1157 = vld [vmem:[%s3 + $0x14d0] sm:$0xff]
      %v1158 = vld [vmem:[%s3 + $0x14d8] sm:$0xff]
      %v1159 = vld [vmem:[%s3 + $0x14e0] sm:$0xff]
      %v1160 = vld [vmem:[%s3 + $0x14e8] sm:$0xff]
      %v1161 = vld [vmem:[%s3 + $0x14f0] sm:$0xff]
      %v1162 = vld [vmem:[%s3 + $0x14f8] sm:$0xff]
      %v1163 = vld [vmem:[%s3 + $0x1500] sm:$0xff]
      %v1164 = vld [vmem:[%s3 + $0x1508] sm:$0xff]
      %v1165 = vld [vmem:[%s3 + $0x1510] sm:$0xff]
      %v1166 = vld [vmem:[%s3 + $0x1518] sm:$0xff]
      %v1167 = vld [vmem:[%s3 + $0x1520] sm:$0xff]
      %v1168 = vld [vmem:[%s3 + $0x1528] sm:$0xff]
      %v1169 = vld [vmem:[%s3 + $0x1530] sm:$0xff]
      %v1170 = vld [vmem:[%s3 + $0x1538] sm:$0xff]
      %v1171 = vld [vmem:[%s3 + $0x1540] sm:$0xff]
      %v1172 = vld [vmem:[%s3 + $0x1548] sm:$0xff]
      %v1173 = vld [vmem:[%s3 + $0x1550] sm:$0xff]
      %v1174 = vld [vmem:[%s3 + $0x1558] sm:$0xff]
      %v1175 = vld [vmem:[%s3 + $0x1560] sm:$0xff]
      %v1176 = vld [vmem:[%s3 + $0x1568] sm:$0xff]
      %v1177 = vld [vmem:[%s3 + $0x1570] sm:$0xff]
      %v1178 = vld [vmem:[%s3 + $0x1578] sm:$0xff]
      %v1179 = vld [vmem:[%s3 + $0x1580] sm:$0xff]
      %v1180 = vld [vmem:[%s3 + $0x1588] sm:$0xff]
      %v1181 = vld [vmem:[%s3 + $0x1590] sm:$0xff]
      %v1182 = vld [vmem:[%s3 + $0x1598] sm:$0xff]
      %v1183 = vld [vmem:[%s3 + $0x15a0] sm:$0xff]
      %v1184 = vld [vmem:[%s3 + $0x15a8] sm:$0xff]
      %v1185 = vld [vmem:[%s3 + $0x15b0] sm:$0xff]
      %v1186 = vld [vmem:[%s3 + $0x15b8] sm:$0xff]
      %v1187 = vld [vmem:[%s3 + $0x15c0] sm:$0xff]
      %v1188 = vld [vmem:[%s3 + $0x15c8] sm:$0xff]
      %v1189 = vld [vmem:[%s3 + $0x15d0] sm:$0xff]
      %v1190 = vld [vmem:[%s3 + $0x15d8] sm:$0xff]
      %v1191 = vld [vmem:[%s3 + $0x15e0] sm:$0xff]
      %v1192 = vld [vmem:[%s3 + $0x15e8] sm:$0xff]
      %v1193 = vld [vmem:[%s3 + $0x15f0] sm:$0xff]
      %v1194 = vld [vmem:[%s3 + $0x15f8] sm:$0xff]
      %v1195 = vld [vmem:[%s3 + $0x1600] sm:$0xff]
      %v1196 = vld [vmem:[%s3 + $0x1608] sm:$0xff]
      %v1197 = vld [vmem:[%s3 + $0x1610] sm:$0xff]
      %v1198 = vld [vmem:[%s3 + $0x1618] sm:$0xff]
      %v1199 = vld [vmem:[%s3 + $0x1620] sm:$0xff]
      %v1200 = vld [vmem:[%s3 + $0x1628] sm:$0xff]
      %v1201 = vld [vmem:[%s3 + $0x1630] sm:$0xff]
      %v1202 = vld [vmem:[%s3 + $0x1638] sm:$0xff]
      %v1203 = vld [vmem:[%s3 + $0x1640] sm:$0xff]
      %v1204 = vld [vmem:[%s3 + $0x1648] sm:$0xff]
      %v1205 = vld [vmem:[%s3 + $0x1650] sm:$0xff]
      %v1206 = vld [vmem:[%s3 + $0x1658] sm:$0xff]
      %v1207 = vld [vmem:[%s3 + $0x1660] sm:$0xff]
      %v1208 = vld [vmem:[%s3 + $0x1668] sm:$0xff]
      %v1209 = vld [vmem:[%s3 + $0x1670] sm:$0xff]
      %v1210 = vld [vmem:[%s3 + $0x1678] sm:$0xff]
      %v1211 = vld [vmem:[%s3 + $0x1680] sm:$0xff]
      %v1212 = vld [vmem:[%s3 + $0x1688] sm:$0xff]
      %v1213 = vld [vmem:[%s3 + $0x1690] sm:$0xff]
      %v1214 = vld [vmem:[%s3 + $0x1698] sm:$0xff]
      %v1215 = vld [vmem:[%s3 + $0x16a0] sm:$0xff]
      %v1216 = vld [vmem:[%s3 + $0x16a8] sm:$0xff]
      %v1217 = vld [vmem:[%s3 + $0x16b0] sm:$0xff]
      %v1218 = vld [vmem:[%s3 + $0x16b8] sm:$0xff]
      %v1219 = vld [vmem:[%s3 + $0x16c0] sm:$0xff]
      %v1220 = vld [vmem:[%s3 + $0x16c8] sm:$0xff]
      %v1221 = vld [vmem:[%s3 + $0x16d0] sm:$0xff]
      %v1222 = vld [vmem:[%s3 + $0x16d8] sm:$0xff]
      %v1223 = vld [vmem:[%s3 + $0x16e0] sm:$0xff]
      %v1224 = vld [vmem:[%s3 + $0x16e8] sm:$0xff]
      %v1225 = vld [vmem:[%s3 + $0x16f0] sm:$0xff]
      %v1226 = vld [vmem:[%s3 + $0x16f8] sm:$0xff]
      %v1227 = vld [vmem:[%s3 + $0x1700] sm:$0xff]
      %v1228 = vld [vmem:[%s3 + $0x1708] sm:$0xff]
      %v1229 = vld [vmem:[%s3 + $0x1710] sm:$0xff]
      %v1230 = vld [vmem:[%s3 + $0x1718] sm:$0xff]
      %v1231 = vld [vmem:[%s3 + $0x1720] sm:$0xff]
      %v1232 = vld [vmem:[%s3 + $0x1728] sm:$0xff]
      %v1233 = vld [vmem:[%s3 + $0x1730] sm:$0xff]
      %v1234 = vld [vmem:[%s3 + $0x1738] sm:$0xff]
      %v1235 = vld [vmem:[%s3 + $0x1740] sm:$0xff]
      %v1236 = vld [vmem:[%s3 + $0x1748] sm:$0xff]
      %v1237 = vld [vmem:[%s3 + $0x1750] sm:$0xff]
      %v1238 = vld [vmem:[%s3 + $0x1758] sm:$0xff]
      %v1239 = vld [vmem:[%s3 + $0x1760] sm:$0xff]
      %v1240 = vld [vmem:[%s3 + $0x1768] sm:$0xff]
      %v1241 = vld [vmem:[%s3 + $0x1770] sm:$0xff]
      %v1242 = vld [vmem:[%s3 + $0x1778] sm:$0xff]
      %v1243 = vld [vmem:[%s3 + $0x1780] sm:$0xff]
      %v1244 = vld [vmem:[%s3 + $0x1788] sm:$0xff]
      %v1245 = vld [vmem:[%s3 + $0x1790] sm:$0xff]
      %v1246 = vld [vmem:[%s3 + $0x1798] sm:$0xff]
      %v1247 = vld [vmem:[%s3 + $0x17a0] sm:$0xff]
      %v1248 = vld [vmem:[%s3 + $0x17a8] sm:$0xff]
      %v1249 = vld [vmem:[%s3 + $0x17b0] sm:$0xff]
      %v1250 = vld [vmem:[%s3 + $0x17b8] sm:$0xff]
      %v1251 = vld [vmem:[%s3 + $0x17c0] sm:$0xff]
      %v1252 = vld [vmem:[%s3 + $0x17c8] sm:$0xff]
      %v1253 = vld [vmem:[%s3 + $0x17d0] sm:$0xff]
      %v1254 = vld [vmem:[%s3 + $0x17d8] sm:$0xff]
      %v1255 = vld [vmem:[%s3 + $0x17e0] sm:$0xff]
      %v1256 = vld [vmem:[%s3 + $0x17e8] sm:$0xff]
      %v1257 = vld [vmem:[%s3 + $0x17f0] sm:$0xff]
      %v1258 = vld [vmem:[%s3 + $0x17f8] sm:$0xff]
      %v1259 = vld [vmem:[%s3 + $0x1800] sm:$0xff]
      %v1260 = vld [vmem:[%s3 + $0x1808] sm:$0xff]
      %v1261 = vld [vmem:[%s3 + $0x1810] sm:$0xff]
      %v1262 = vld [vmem:[%s3 + $0x1818] sm:$0xff]
      %v1263 = vld [vmem:[%s3 + $0x1820] sm:$0xff]
      %v1264 = vld [vmem:[%s3 + $0x1828] sm:$0xff]
      %v1265 = vld [vmem:[%s3 + $0x1830] sm:$0xff]
      %v1266 = vld [vmem:[%s3 + $0x1838] sm:$0xff]
      %v1267 = vld [vmem:[%s3 + $0x1840] sm:$0xff]
      %v1268 = vld [vmem:[%s3 + $0x1848] sm:$0xff]
      %v1269 = vld [vmem:[%s3 + $0x1850] sm:$0xff]
      %v1270 = vld [vmem:[%s3 + $0x1858] sm:$0xff]
      %v1271 = vld [vmem:[%s3 + $0x1860] sm:$0xff]
      %v1272 = vld [vmem:[%s3 + $0x1868] sm:$0xff]
      %v1273 = vld [vmem:[%s3 + $0x1870] sm:$0xff]
      %v1274 = vld [vmem:[%s3 + $0x1878] sm:$0xff]
      %v1275 = vld [vmem:[%s3 + $0x1880] sm:$0xff]
      %v1276 = vld [vmem:[%s3 + $0x1888] sm:$0xff]
      %v1277 = vld [vmem:[%s3 + $0x1890] sm:$0xff]
      %v1278 = vld [vmem:[%s3 + $0x1898] sm:$0xff]
      %v1279 = vld [vmem:[%s3 + $0x18a0] sm:$0xff]
      %v1280 = vld [vmem:[%s3 + $0x18a8] sm:$0xff]
      %v1281 = vld [vmem:[%s3 + $0x18b0] sm:$0xff]
      %v1282 = vld [vmem:[%s3 + $0x18b8] sm:$0xff]
      %v1283 = vld [vmem:[%s3 + $0x18c0] sm:$0xff]
      %v1284 = vld [vmem:[%s3 + $0x18c8] sm:$0xff]
      %v1285 = vld [vmem:[%s3 + $0x18d0] sm:$0xff]
      %v1286 = vld [vmem:[%s3 + $0x18d8] sm:$0xff]
      %v1287 = vld [vmem:[%s3 + $0x18e0] sm:$0xff]
      %v1288 = vld [vmem:[%s3 + $0x18e8] sm:$0xff]
      %v1289 = vld [vmem:[%s3 + $0x18f0] sm:$0xff]
      %v1290 = vld [vmem:[%s3 + $0x18f8] sm:$0xff]
      %v1291 = vld [vmem:[%s3 + $0x1900] sm:$0xff]
      %v1292 = vld [vmem:[%s3 + $0x1908] sm:$0xff]
      %v1293 = vld [vmem:[%s3 + $0x1910] sm:$0xff]
      %v1294 = vld [vmem:[%s3 + $0x1918] sm:$0xff]
      %v1295 = vld [vmem:[%s3 + $0x1920] sm:$0xff]
      %v1296 = vld [vmem:[%s3 + $0x1928] sm:$0xff]
      %v1297 = vld [vmem:[%s3 + $0x1930] sm:$0xff]
      %v1298 = vld [vmem:[%s3 + $0x1938] sm:$0xff]
      %v1299 = vld [vmem:[%s3 + $0x1940] sm:$0xff]
      %v1300 = vld [vmem:[%s3 + $0x1948] sm:$0xff]
      %v1301 = vld [vmem:[%s3 + $0x1950] sm:$0xff]
      %v1302 = vld [vmem:[%s3 + $0x1958] sm:$0xff]
      %v1303 = vld [vmem:[%s3 + $0x1960] sm:$0xff]
      %v1304 = vld [vmem:[%s3 + $0x1968] sm:$0xff]
      %v1305 = vld [vmem:[%s3 + $0x1970] sm:$0xff]
      %v1306 = vld [vmem:[%s3 + $0x1978] sm:$0xff]
      %v1307 = vld [vmem:[%s3 + $0x1980] sm:$0xff]
      %v1308 = vld [vmem:[%s3 + $0x1988] sm:$0xff]
      %v1309 = vld [vmem:[%s3 + $0x1990] sm:$0xff]
      %v1310 = vld [vmem:[%s3 + $0x1998] sm:$0xff]
      %v1311 = vld [vmem:[%s3 + $0x19a0] sm:$0xff]
      %v1312 = vld [vmem:[%s3 + $0x19a8] sm:$0xff]
      %v1313 = vld [vmem:[%s3 + $0x19b0] sm:$0xff]
      %v1314 = vld [vmem:[%s3 + $0x19b8] sm:$0xff]
      %v1315 = vld [vmem:[%s3 + $0x19c0] sm:$0xff]
      %v1316 = vld [vmem:[%s3 + $0x19c8] sm:$0xff]
      %v1317 = vld [vmem:[%s3 + $0x19d0] sm:$0xff]
      %v1318 = vld [vmem:[%s3 + $0x19d8] sm:$0xff]
      %v1319 = vld [vmem:[%s3 + $0x19e0] sm:$0xff]
      %v1320 = vld [vmem:[%s3 + $0x19e8] sm:$0xff]
      %v1321 = vld [vmem:[%s3 + $0x19f0] sm:$0xff]
      %v1322 = vld [vmem:[%s3 + $0x19f8] sm:$0xff]
      %v1323 = vld [vmem:[%s3 + $0x1a00] sm:$0xff]
      %v1324 = vld [vmem:[%s3 + $0x1a08] sm:$0xff]
      %v1325 = vld [vmem:[%s3 + $0x1a10] sm:$0xff]
      %v1326 = vld [vmem:[%s3 + $0x1a18] sm:$0xff]
      %v1327 = vld [vmem:[%s3 + $0x1a20] sm:$0xff]
      %v1328 = vld [vmem:[%s3 + $0x1a28] sm:$0xff]
      %v1329 = vld [vmem:[%s3 + $0x1a30] sm:$0xff]
      %v1330 = vld [vmem:[%s3 + $0x1a38] sm:$0xff]
      %v1331 = vld [vmem:[%s3 + $0x1a40] sm:$0xff]
      %v1332 = vld [vmem:[%s3 + $0x1a48] sm:$0xff]
      %v1333 = vld [vmem:[%s3 + $0x1a50] sm:$0xff]
      %v1334 = vld [vmem:[%s3 + $0x1a58] sm:$0xff]
      %v1335 = vld [vmem:[%s3 + $0x1a60] sm:$0xff]
      %v1336 = vld [vmem:[%s3 + $0x1a68] sm:$0xff]
      %v1337 = vld [vmem:[%s3 + $0x1a70] sm:$0xff]
      %v1338 = vld [vmem:[%s3 + $0x1a78] sm:$0xff]
      %v1339 = vld [vmem:[%s3 + $0x1a80] sm:$0xff]
      %v1340 = vld [vmem:[%s3 + $0x1a88] sm:$0xff]
      %v1341 = vld [vmem:[%s3 + $0x1a90] sm:$0xff]
      %v1342 = vld [vmem:[%s3 + $0x1a98] sm:$0xff]
      %v1343 = vld [vmem:[%s3 + $0x1aa0] sm:$0xff]
      %v1344 = vld [vmem:[%s3 + $0x1aa8] sm:$0xff]
      %v1345 = vld [vmem:[%s3 + $0x1ab0] sm:$0xff]
      %v1346 = vld [vmem:[%s3 + $0x1ab8] sm:$0xff]
      %v1347 = vld [vmem:[%s3 + $0x1ac0] sm:$0xff]
      %v1348 = vld [vmem:[%s3 + $0x1ac8] sm:$0xff]
      %v1349 = vld [vmem:[%s3 + $0x1ad0] sm:$0xff]
      %v1350 = vld [vmem:[%s3 + $0x1ad8] sm:$0xff]
      %v1351 = vld [vmem:[%s3 + $0x1ae0] sm:$0xff]
      %v1352 = vld [vmem:[%s3 + $0x1ae8] sm:$0xff]
      %v1353 = vld [vmem:[%s3 + $0x1af0] sm:$0xff]
      %v1354 = vld [vmem:[%s3 + $0x1af8] sm:$0xff]
      %v1355 = vld [vmem:[%s3 + $0x1b00] sm:$0xff]
      %v1356 = vld [vmem:[%s3 + $0x1b08] sm:$0xff]
      %v1357 = vld [vmem:[%s3 + $0x1b10] sm:$0xff]
      %v1358 = vld [vmem:[%s3 + $0x1b18] sm:$0xff]
      %v1359 = vld [vmem:[%s3 + $0x1b20] sm:$0xff]
      %v1360 = vld [vmem:[%s3 + $0x1b28] sm:$0xff]
      %v1361 = vld [vmem:[%s3 + $0x1b30] sm:$0xff]
      %v1362 = vld [vmem:[%s3 + $0x1b38] sm:$0xff]
      %v1363 = vld [vmem:[%s3 + $0x1b40] sm:$0xff]
      %v1364 = vld [vmem:[%s3 + $0x1b48] sm:$0xff]
      %v1365 = vld [vmem:[%s3 + $0x1b50] sm:$0xff]
      %v1366 = vld [vmem:[%s3 + $0x1b58] sm:$0xff]
      %v1367 = vld [vmem:[%s3 + $0x1b60] sm:$0xff]
      %v1368 = vld [vmem:[%s3 + $0x1b68] sm:$0xff]
      %v1369 = vld [vmem:[%s3 + $0x1b70] sm:$0xff]
      %v1370 = vld [vmem:[%s3 + $0x1b78] sm:$0xff]
      %v1371 = vld [vmem:[%s3 + $0x1b80] sm:$0xff]
      %v1372 = vld [vmem:[%s3 + $0x1b88] sm:$0xff]
      %v1373 = vld [vmem:[%s3 + $0x1b90] sm:$0xff]
      %v1374 = vld [vmem:[%s3 + $0x1b98] sm:$0xff]
      %v1375 = vld [vmem:[%s3 + $0x1ba0] sm:$0xff]
      %v1376 = vld [vmem:[%s3 + $0x1ba8] sm:$0xff]
      %v1377 = vld [vmem:[%s3 + $0x1bb0] sm:$0xff]
      %v1378 = vld [vmem:[%s3 + $0x1bb8] sm:$0xff]
      %v1379 = vld [vmem:[%s3 + $0x1bc0] sm:$0xff]
      %v1380 = vld [vmem:[%s3 + $0x1bc8] sm:$0xff]
      %v1381 = vld [vmem:[%s3 + $0x1bd0] sm:$0xff]
      %v1382 = vld [vmem:[%s3 + $0x1bd8] sm:$0xff]
      %v1383 = vld [vmem:[%s3 + $0x1be0] sm:$0xff]
      %v1384 = vld [vmem:[%s3 + $0x1be8] sm:$0xff]
      %v1385 = vld [vmem:[%s3 + $0x1bf0] sm:$0xff]
      %v1386 = vld [vmem:[%s3 + $0x1bf8] sm:$0xff]
      %v1387 = vld [vmem:[%s3 + $0x1c00] sm:$0xff]
      %v1388 = vld [vmem:[%s3 + $0x1c08] sm:$0xff]
      %v1389 = vld [vmem:[%s3 + $0x1c10] sm:$0xff]
      %v1390 = vld [vmem:[%s3 + $0x1c18] sm:$0xff]
      %v1391 = vld [vmem:[%s3 + $0x1c20] sm:$0xff]
      %v1392 = vld [vmem:[%s3 + $0x1c28] sm:$0xff]
      %v1393 = vld [vmem:[%s3 + $0x1c30] sm:$0xff]
      %v1394 = vld [vmem:[%s3 + $0x1c38] sm:$0xff]
      %v1395 = vld [vmem:[%s3 + $0x1c40] sm:$0xff]
      %v1396 = vld [vmem:[%s3 + $0x1c48] sm:$0xff]
      %v1397 = vld [vmem:[%s3 + $0x1c50] sm:$0xff]
      %v1398 = vld [vmem:[%s3 + $0x1c58] sm:$0xff]
      %v1399 = vld [vmem:[%s3 + $0x1c60] sm:$0xff]
      %v1400 = vld [vmem:[%s3 + $0x1c68] sm:$0xff]
      %v1401 = vld [vmem:[%s3 + $0x1c70] sm:$0xff]
      %v1402 = vld [vmem:[%s3 + $0x1c78] sm:$0xff]
      %v1403 = vld [vmem:[%s3 + $0x1c80] sm:$0xff]
      %v1404 = vld [vmem:[%s3 + $0x1c88] sm:$0xff]
      %v1405 = vld [vmem:[%s3 + $0x1c90] sm:$0xff]
      %v1406 = vld [vmem:[%s3 + $0x1c98] sm:$0xff]
      %v1407 = vld [vmem:[%s3 + $0x1ca0] sm:$0xff]
      %v1408 = vld [vmem:[%s3 + $0x1ca8] sm:$0xff]
      %v1409 = vld [vmem:[%s3 + $0x1cb0] sm:$0xff]
      %v1410 = vld [vmem:[%s3 + $0x1cb8] sm:$0xff]
      %v1411 = vld [vmem:[%s3 + $0x1cc0] sm:$0xff]
      %v1412 = vld [vmem:[%s3 + $0x1cc8] sm:$0xff]
      %v1413 = vld [vmem:[%s3 + $0x1cd0] sm:$0xff]
      %v1414 = vld [vmem:[%s3 + $0x1cd8] sm:$0xff]
      %v1415 = vld [vmem:[%s3 + $0x1ce0] sm:$0xff]
      %v1416 = vld [vmem:[%s3 + $0x1ce8] sm:$0xff]
      %v1417 = vld [vmem:[%s3 + $0x1cf0] sm:$0xff]
      %v1418 = vld [vmem:[%s3 + $0x1cf8] sm:$0xff]
      %v1419 = vld [vmem:[%s3 + $0x1d00] sm:$0xff]
      %v1420 = vld [vmem:[%s3 + $0x1d08] sm:$0xff]
      %v1421 = vld [vmem:[%s3 + $0x1d10] sm:$0xff]
      %v1422 = vld [vmem:[%s3 + $0x1d18] sm:$0xff]
      %v1423 = vld [vmem:[%s3 + $0x1d20] sm:$0xff]
      %v1424 = vld [vmem:[%s3 + $0x1d28] sm:$0xff]
      %v1425 = vld [vmem:[%s3 + $0x1d30] sm:$0xff]
      %v1426 = vld [vmem:[%s3 + $0x1d38] sm:$0xff]
      %v1427 = vld [vmem:[%s3 + $0x1d40] sm:$0xff]
      %v1428 = vld [vmem:[%s3 + $0x1d48] sm:$0xff]
      %v1429 = vld [vmem:[%s3 + $0x1d50] sm:$0xff]
      %v1430 = vld [vmem:[%s3 + $0x1d58] sm:$0xff]
      %v1431 = vld [vmem:[%s3 + $0x1d60] sm:$0xff]
      %v1432 = vld [vmem:[%s3 + $0x1d68] sm:$0xff]
      %v1433 = vld [vmem:[%s3 + $0x1d70] sm:$0xff]
      %v1434 = vld [vmem:[%s3 + $0x1d78] sm:$0xff]
      %v1435 = vld [vmem:[%s3 + $0x1d80] sm:$0xff]
      %v1436 = vld [vmem:[%s3 + $0x1d88] sm:$0xff]
      %v1437 = vld [vmem:[%s3 + $0x1d90] sm:$0xff]
      %v1438 = vld [vmem:[%s3 + $0x1d98] sm:$0xff]
      %v1439 = vld [vmem:[%s3 + $0x1da0] sm:$0xff]
      %v1440 = vld [vmem:[%s3 + $0x1da8] sm:$0xff]
      %v1441 = vld [vmem:[%s3 + $0x1db0] sm:$0xff]
      %v1442 = vld [vmem:[%s3 + $0x1db8] sm:$0xff]
      %v1443 = vld [vmem:[%s3 + $0x1dc0] sm:$0xff]
      %v1444 = vld [vmem:[%s3 + $0x1dc8] sm:$0xff]
      %v1445 = vld [vmem:[%s3 + $0x1dd0] sm:$0xff]
      %v1446 = vld [vmem:[%s3 + $0x1dd8] sm:$0xff]
      %v1447 = vld [vmem:[%s3 + $0x1de0] sm:$0xff]
      %v1448 = vld [vmem:[%s3 + $0x1de8] sm:$0xff]
      %v1449 = vld [vmem:[%s3 + $0x1df0] sm:$0xff]
      %v1450 = vld [vmem:[%s3 + $0x1df8] sm:$0xff]
      %v1451 = vld [vmem:[%s3 + $0x1e00] sm:$0xff]
      %v1452 = vld [vmem:[%s3 + $0x1e08] sm:$0xff]
      %v1453 = vld [vmem:[%s3 + $0x1e10] sm:$0xff]
      %v1454 = vld [vmem:[%s3 + $0x1e18] sm:$0xff]
      %v1455 = vld [vmem:[%s3 + $0x1e20] sm:$0xff]
      %v1456 = vld [vmem:[%s3 + $0x1e28] sm:$0xff]
      %v1457 = vld [vmem:[%s3 + $0x1e30] sm:$0xff]
      %v1458 = vld [vmem:[%s3 + $0x1e38] sm:$0xff]
      %v1459 = vld [vmem:[%s3 + $0x1e40] sm:$0xff]
      %v1460 = vld [vmem:[%s3 + $0x1e48] sm:$0xff]
      %v1461 = vld [vmem:[%s3 + $0x1e50] sm:$0xff]
      %v1462 = vld [vmem:[%s3 + $0x1e58] sm:$0xff]
      %v1463 = vld [vmem:[%s3 + $0x1e60] sm:$0xff]
      %v1464 = vld [vmem:[%s3 + $0x1e68] sm:$0xff]
      %v1465 = vld [vmem:[%s3 + $0x1e70] sm:$0xff]
      %v1466 = vld [vmem:[%s3 + $0x1e78] sm:$0xff]
      %v1467 = vld [vmem:[%s3 + $0x1e80] sm:$0xff]
      %v1468 = vld [vmem:[%s3 + $0x1e88] sm:$0xff]
      %v1469 = vld [vmem:[%s3 + $0x1e90] sm:$0xff]
      %v1470 = vld [vmem:[%s3 + $0x1e98] sm:$0xff]
      %v1471 = vld [vmem:[%s3 + $0x1ea0] sm:$0xff]
      %v1472 = vld [vmem:[%s3 + $0x1ea8] sm:$0xff]
      %v1473 = vld [vmem:[%s3 + $0x1eb0] sm:$0xff]
      %v1474 = vld [vmem:[%s3 + $0x1eb8] sm:$0xff]
      %v1475 = vld [vmem:[%s3 + $0x1ec0] sm:$0xff]
      %v1476 = vld [vmem:[%s3 + $0x1ec8] sm:$0xff]
      %v1477 = vld [vmem:[%s3 + $0x1ed0] sm:$0xff]
      %v1478 = vld [vmem:[%s3 + $0x1ed8] sm:$0xff]
      %v1479 = vld [vmem:[%s3 + $0x1ee0] sm:$0xff]
      %v1480 = vld [vmem:[%s3 + $0x1ee8] sm:$0xff]
      %v1481 = vld [vmem:[%s3 + $0x1ef0] sm:$0xff]
      %v1482 = vld [vmem:[%s3 + $0x1ef8] sm:$0xff]
      %v1483 = vld [vmem:[%s3 + $0x1f00] sm:$0xff]
      %v1484 = vld [vmem:[%s3 + $0x1f08] sm:$0xff]
      %v1485 = vld [vmem:[%s3 + $0x1f10] sm:$0xff]
      %v1486 = vld [vmem:[%s3 + $0x1f18] sm:$0xff]
      %v1487 = vld [vmem:[%s3 + $0x1f20] sm:$0xff]
      %v1488 = vld [vmem:[%s3 + $0x1f28] sm:$0xff]
      %v1489 = vld [vmem:[%s3 + $0x1f30] sm:$0xff]
      %v1490 = vld [vmem:[%s3 + $0x1f38] sm:$0xff]
      %v1491 = vld [vmem:[%s3 + $0x1f40] sm:$0xff]
      %v1492 = vld [vmem:[%s3 + $0x1f48] sm:$0xff]
      %v1493 = vld [vmem:[%s3 + $0x1f50] sm:$0xff]
      %v1494 = vld [vmem:[%s3 + $0x1f58] sm:$0xff]
      %v1495 = vld [vmem:[%s3 + $0x1f60] sm:$0xff]
      %v1496 = vld [vmem:[%s3 + $0x1f68] sm:$0xff]
      %v1497 = vld [vmem:[%s3 + $0x1f70] sm:$0xff]
      %v1498 = vld [vmem:[%s3 + $0x1f78] sm:$0xff]
      %v1499 = vld [vmem:[%s3 + $0x1f80] sm:$0xff]
      %v1500 = vld [vmem:[%s3 + $0x1f88] sm:$0xff]
      %v1501 = vld [vmem:[%s3 + $0x1f90] sm:$0xff]
      %v1502 = vld [vmem:[%s3 + $0x1f98] sm:$0xff]
      %v1503 = vld [vmem:[%s3 + $0x1fa0] sm:$0xff]
      %v1504 = vld [vmem:[%s3 + $0x1fa8] sm:$0xff]
      %v1505 = vld [vmem:[%s3 + $0x1fb0] sm:$0xff]
      %v1506 = vld [vmem:[%s3 + $0x1fb8] sm:$0xff]
      %v1507 = vld [vmem:[%s3 + $0x1fc0] sm:$0xff]
      %v1508 = vld [vmem:[%s3 + $0x1fc8] sm:$0xff]
      %v1509 = vld [vmem:[%s3 + $0x1fd0] sm:$0xff]
      %v1510 = vld [vmem:[%s3 + $0x1fd8] sm:$0xff]
      %v1511 = vld [vmem:[%s3 + $0x1fe0] sm:$0xff]
      %v1512 = vld [vmem:[%s3 + $0x1fe8] sm:$0xff]
      %v1513 = vld [vmem:[%s3 + $0x1ff0] sm:$0xff]
      %v1514 = vld [vmem:[%s3 + $0x1ff8] sm:$0xff]
      %v1515 = vld [vmem:[%s3 + $0x2000] sm:$0xff]
      %v1516 = vld [vmem:[%s3 + $0x2008] sm:$0xff]
      %v1517 = vld [vmem:[%s3 + $0x2010] sm:$0xff]
      %v1518 = vld [vmem:[%s3 + $0x2018] sm:$0xff]
      %v1519 = vld [vmem:[%s3 + $0x2020] sm:$0xff]
      %v1520 = vld [vmem:[%s3 + $0x2028] sm:$0xff]
      %v1521 = vld [vmem:[%s3 + $0x2030] sm:$0xff]
      %v1522 = vld [vmem:[%s3 + $0x2038] sm:$0xff]
      %v1523 = vld [vmem:[%s3 + $0x2040] sm:$0xff]
      %v1524 = vld [vmem:[%s3 + $0x2048] sm:$0xff]
      %v1525 = vld [vmem:[%s3 + $0x2050] sm:$0xff]
      %v1526 = vld [vmem:[%s3 + $0x2058] sm:$0xff]
      %v1527 = vld [vmem:[%s3 + $0x2060] sm:$0xff]
      %v1528 = vld [vmem:[%s3 + $0x2068] sm:$0xff]
      %v1529 = vld [vmem:[%s3 + $0x2070] sm:$0xff]
      %v1530 = vld [vmem:[%s3 + $0x2078] sm:$0xff]
      %v1531 = vld [vmem:[%s3 + $0x2080] sm:$0xff]
      %v1532 = vld [vmem:[%s3 + $0x2088] sm:$0xff]
      %v1533 = vld [vmem:[%s3 + $0x2090] sm:$0xff]
      %v1534 = vld [vmem:[%s3 + $0x2098] sm:$0xff]
      %v1535 = vld [vmem:[%s3 + $0x20a0] sm:$0xff]
      %v1536 = vld [vmem:[%s3 + $0x20a8] sm:$0xff]
      %v1537 = vld [vmem:[%s3 + $0x20b0] sm:$0xff]
      %v1538 = vld [vmem:[%s3 + $0x20b8] sm:$0xff]
      %v1539 = vld [vmem:[%s3 + $0x20c0] sm:$0xff]
      %v1540 = vld [vmem:[%s3 + $0x20c8] sm:$0xff]
      %v1541 = vld [vmem:[%s3 + $0x20d0] sm:$0xff]
      %v1542 = vld [vmem:[%s3 + $0x20d8] sm:$0xff]
      %v1543 = vld [vmem:[%s3 + $0x20e0] sm:$0xff]
      %v1544 = vld [vmem:[%s3 + $0x20e8] sm:$0xff]
      %v1545 = vld [vmem:[%s3 + $0x20f0] sm:$0xff]
      %v1546 = vld [vmem:[%s3 + $0x20f8] sm:$0xff]
      %v1547 = vld [vmem:[%s3 + $0x2100] sm:$0xff]
      %v1548 = vld [vmem:[%s3 + $0x2108] sm:$0xff]
      %v1549 = vld [vmem:[%s3 + $0x2110] sm:$0xff]
      %v1550 = vld [vmem:[%s3 + $0x2118] sm:$0xff]
      %v1551 = vld [vmem:[%s3 + $0x2120] sm:$0xff]
      %v1552 = vld [vmem:[%s3 + $0x2128] sm:$0xff]
      %v1553 = vld [vmem:[%s3 + $0x2130] sm:$0xff]
      %v1554 = vld [vmem:[%s3 + $0x2138] sm:$0xff]
      %v1555 = vld [vmem:[%s3 + $0x2140] sm:$0xff]
      %v1556 = vld [vmem:[%s3 + $0x2148] sm:$0xff]
      %v1557 = vld [vmem:[%s3 + $0x2150] sm:$0xff]
      %v1558 = vld [vmem:[%s3 + $0x2158] sm:$0xff]
      %v1559 = vld [vmem:[%s3 + $0x2160] sm:$0xff]
      %v1560 = vld [vmem:[%s3 + $0x2168] sm:$0xff]
      %v1561 = vld [vmem:[%s3 + $0x2170] sm:$0xff]
      %v1562 = vld [vmem:[%s3 + $0x2178] sm:$0xff]
      %v1563 = vld [vmem:[%s3 + $0x2180] sm:$0xff]
      %v1564 = vld [vmem:[%s3 + $0x2188] sm:$0xff]
      %v1565 = vld [vmem:[%s3 + $0x2190] sm:$0xff]
      %v1566 = vld [vmem:[%s3 + $0x2198] sm:$0xff]
      %v1567 = vld [vmem:[%s3 + $0x21a0] sm:$0xff]
      %v1568 = vld [vmem:[%s3 + $0x21a8] sm:$0xff]
      %v1569 = vld [vmem:[%s3 + $0x21b0] sm:$0xff]
      %v1570 = vld [vmem:[%s3 + $0x21b8] sm:$0xff]
      %v1571 = vld [vmem:[%s3 + $0x21c0] sm:$0xff]
      %v1572 = vld [vmem:[%s3 + $0x21c8] sm:$0xff]
      %v1573 = vld [vmem:[%s3 + $0x21d0] sm:$0xff]
      %v1574 = vld [vmem:[%s3 + $0x21d8] sm:$0xff]
      %v1575 = vld [vmem:[%s3 + $0x21e0] sm:$0xff]
      %v1576 = vld [vmem:[%s3 + $0x21e8] sm:$0xff]
      %v1577 = vld [vmem:[%s3 + $0x21f0] sm:$0xff]
      %v1578 = vld [vmem:[%s3 + $0x21f8] sm:$0xff]
      %v1579 = vld [vmem:[%s3 + $0x2200] sm:$0xff]
      %v1580 = vld [vmem:[%s3 + $0x2208] sm:$0xff]
      %v1581 = vld [vmem:[%s3 + $0x2210] sm:$0xff]
      %v1582 = vld [vmem:[%s3 + $0x2218] sm:$0xff]
      %v1583 = vld [vmem:[%s3 + $0x2220] sm:$0xff]
      %v1584 = vld [vmem:[%s3 + $0x2228] sm:$0xff]
      %v1585 = vld [vmem:[%s3 + $0x2230] sm:$0xff]
      %v1586 = vld [vmem:[%s3 + $0x2238] sm:$0xff]
      %v1587 = vld [vmem:[%s3 + $0x2240] sm:$0xff]
      %v1588 = vld [vmem:[%s3 + $0x2248] sm:$0xff]
      %v1589 = vld [vmem:[%s3 + $0x2250] sm:$0xff]
      %v1590 = vld [vmem:[%s3 + $0x2258] sm:$0xff]
      %v1591 = vld [vmem:[%s3 + $0x2260] sm:$0xff]
      %v1592 = vld [vmem:[%s3 + $0x2268] sm:$0xff]
      %v1593 = vld [vmem:[%s3 + $0x2270] sm:$0xff]
      %v1594 = vld [vmem:[%s3 + $0x2278] sm:$0xff]
      %v1595 = vld [vmem:[%s3 + $0x2280] sm:$0xff]
      %v1596 = vld [vmem:[%s3 + $0x2288] sm:$0xff]
      %v1597 = vld [vmem:[%s3 + $0x2290] sm:$0xff]
      %v1598 = vld [vmem:[%s3 + $0x2298] sm:$0xff]
      %v1599 = vld [vmem:[%s3 + $0x22a0] sm:$0xff]
      %v1600 = vld [vmem:[%s3 + $0x22a8] sm:$0xff]
      %v1601 = vld [vmem:[%s3 + $0x22b0] sm:$0xff]
      %v1602 = vld [vmem:[%s3 + $0x22b8] sm:$0xff]
      %v1603 = vld [vmem:[%s3 + $0x22c0] sm:$0xff]
      %v1604 = vld [vmem:[%s3 + $0x22c8] sm:$0xff]
      %v1605 = vld [vmem:[%s3 + $0x22d0] sm:$0xff]
      %v1606 = vld [vmem:[%s3 + $0x22d8] sm:$0xff]
      %v1607 = vld [vmem:[%s3 + $0x22e0] sm:$0xff]
      %v1608 = vld [vmem:[%s3 + $0x22e8] sm:$0xff]
      %v1609 = vld [vmem:[%s3 + $0x22f0] sm:$0xff]
      %v1610 = vld [vmem:[%s3 + $0x22f8] sm:$0xff]
      %v1611 = vld [vmem:[%s3 + $0x2300] sm:$0xff]
      %v1612 = vld [vmem:[%s3 + $0x2308] sm:$0xff]
      %v1613 = vld [vmem:[%s3 + $0x2310] sm:$0xff]
      %v1614 = vld [vmem:[%s3 + $0x2318] sm:$0xff]
      %v1615 = vld [vmem:[%s3 + $0x2320] sm:$0xff]
      %v1616 = vld [vmem:[%s3 + $0x2328] sm:$0xff]
      %v1617 = vld [vmem:[%s3 + $0x2330] sm:$0xff]
      %v1618 = vld [vmem:[%s3 + $0x2338] sm:$0xff]
      %v1619 = vld [vmem:[%s3 + $0x2340] sm:$0xff]
      %v1620 = vld [vmem:[%s3 + $0x2348] sm:$0xff]
      %v1621 = vld [vmem:[%s3 + $0x2350] sm:$0xff]
      %v1622 = vld [vmem:[%s3 + $0x2358] sm:$0xff]
      %v1623 = vld [vmem:[%s3 + $0x2360] sm:$0xff]
      %v1624 = vld [vmem:[%s3 + $0x2368] sm:$0xff]
      %v1625 = vld [vmem:[%s3 + $0x2370] sm:$0xff]
      %v1626 = vld [vmem:[%s3 + $0x2378] sm:$0xff]
      %v1627 = vld [vmem:[%s3 + $0x2380] sm:$0xff]
      %v1628 = vld [vmem:[%s3 + $0x2388] sm:$0xff]
      %v1629 = vld [vmem:[%s3 + $0x2390] sm:$0xff]
      %v1630 = vld [vmem:[%s3 + $0x2398] sm:$0xff]
      %v1631 = vld [vmem:[%s3 + $0x23a0] sm:$0xff]
      %v1632 = vld [vmem:[%s3 + $0x23a8] sm:$0xff]
      %v1633 = vld [vmem:[%s3 + $0x23b0] sm:$0xff]
      %v1634 = vld [vmem:[%s3 + $0x23b8] sm:$0xff]
      %v1635 = vld [vmem:[%s3 + $0x23c0] sm:$0xff]
      %v1636 = vld [vmem:[%s3 + $0x23c8] sm:$0xff]
      %v1637 = vld [vmem:[%s3 + $0x23d0] sm:$0xff]
      %v1638 = vld [vmem:[%s3 + $0x23d8] sm:$0xff]
      %v1639 = vld [vmem:[%s3 + $0x23e0] sm:$0xff]
      %v1640 = vld [vmem:[%s3 + $0x23e8] sm:$0xff]
      %v1641 = vld [vmem:[%s3 + $0x23f0] sm:$0xff]
      %v1642 = vld [vmem:[%s3 + $0x23f8] sm:$0xff]
      %v1643 = vld [vmem:[%s3 + $0x2400] sm:$0xff]
      %v1644 = vld [vmem:[%s3 + $0x2408] sm:$0xff]
      %v1645 = vld [vmem:[%s3 + $0x2410] sm:$0xff]
      %v1646 = vld [vmem:[%s3 + $0x2418] sm:$0xff]
      %v1647 = vld [vmem:[%s3 + $0x2420] sm:$0xff]
      %v1648 = vld [vmem:[%s3 + $0x2428] sm:$0xff]
      %v1649 = vld [vmem:[%s3 + $0x2430] sm:$0xff]
      %v1650 = vld [vmem:[%s3 + $0x2438] sm:$0xff]
      %v1651 = vld [vmem:[%s3 + $0x2440] sm:$0xff]
      %v1652 = vld [vmem:[%s3 + $0x2448] sm:$0xff]
      %v1653 = vld [vmem:[%s3 + $0x2450] sm:$0xff]
      %v1654 = vld [vmem:[%s3 + $0x2458] sm:$0xff]
      %v1655 = vld [vmem:[%s3 + $0x2460] sm:$0xff]
      %v1656 = vld [vmem:[%s3 + $0x2468] sm:$0xff]
      %v1657 = vld [vmem:[%s3 + $0x2470] sm:$0xff]
      %v1658 = vld [vmem:[%s3 + $0x2478] sm:$0xff]
      %v1659 = vld [vmem:[%s3 + $0x2480] sm:$0xff]
      %v1660 = vld [vmem:[%s3 + $0x2488] sm:$0xff]
      %v1661 = vld [vmem:[%s3 + $0x2490] sm:$0xff]
      %v1662 = vld [vmem:[%s3 + $0x2498] sm:$0xff]
      %v1663 = vld [vmem:[%s3 + $0x24a0] sm:$0xff]
      %v1664 = vld [vmem:[%s3 + $0x24a8] sm:$0xff]
      %v1665 = vld [vmem:[%s3 + $0x24b0] sm:$0xff]
      %v1666 = vld [vmem:[%s3 + $0x24b8] sm:$0xff]
      %v1667 = vld [vmem:[%s3 + $0x24c0] sm:$0xff]
      %v1668 = vld [vmem:[%s3 + $0x24c8] sm:$0xff]
      %v1669 = vld [vmem:[%s3 + $0x24d0] sm:$0xff]
      %v1670 = vld [vmem:[%s3 + $0x24d8] sm:$0xff]
      %v1671 = vld [vmem:[%s3 + $0x24e0] sm:$0xff]
      %v1672 = vld [vmem:[%s3 + $0x24e8] sm:$0xff]
      %v1673 = vld [vmem:[%s3 + $0x24f0] sm:$0xff]
      %v1674 = vld [vmem:[%s3 + $0x24f8] sm:$0xff]
      %v1675 = vld [vmem:[%s3 + $0x2500] sm:$0xff]
      %v1676 = vld [vmem:[%s3 + $0x2508] sm:$0xff]
      %v1677 = vld [vmem:[%s3 + $0x2510] sm:$0xff]
      %v1678 = vld [vmem:[%s3 + $0x2518] sm:$0xff]
      %v1679 = vld [vmem:[%s3 + $0x2520] sm:$0xff]
      %v1680 = vld [vmem:[%s3 + $0x2528] sm:$0xff]
      %v1681 = vld [vmem:[%s3 + $0x2530] sm:$0xff]
      %v1682 = vld [vmem:[%s3 + $0x2538] sm:$0xff]
      %v1683 = vld [vmem:[%s3 + $0x2540] sm:$0xff]
      %v1684 = vld [vmem:[%s3 + $0x2548] sm:$0xff]
      %v1685 = vld [vmem:[%s3 + $0x2550] sm:$0xff]
      %v1686 = vld [vmem:[%s3 + $0x2558] sm:$0xff]
      %v1687 = vld [vmem:[%s3 + $0x2560] sm:$0xff]
      %v1688 = vld [vmem:[%s3 + $0x2568] sm:$0xff]
      %v1689 = vld [vmem:[%s3 + $0x2570] sm:$0xff]
      %v1690 = vld [vmem:[%s3 + $0x2578] sm:$0xff]
      %v1691 = vld [vmem:[%s3 + $0x2580] sm:$0xff]
      %v1692 = vld [vmem:[%s3 + $0x2588] sm:$0xff]
      %v1693 = vld [vmem:[%s3 + $0x2590] sm:$0xff]
      %v1694 = vld [vmem:[%s3 + $0x2598] sm:$0xff]
      %v1695 = vld [vmem:[%s3 + $0x25a0] sm:$0xff]
      %v1696 = vld [vmem:[%s3 + $0x25a8] sm:$0xff]
      %v1697 = vld [vmem:[%s3 + $0x25b0] sm:$0xff]
      %v1698 = vld [vmem:[%s3 + $0x25b8] sm:$0xff]
      %v1699 = vld [vmem:[%s3 + $0x25c0] sm:$0xff]
      %v1700 = vld [vmem:[%s3 + $0x25c8] sm:$0xff]
      %v1701 = vld [vmem:[%s3 + $0x25d0] sm:$0xff]
      %v1702 = vld [vmem:[%s3 + $0x25d8] sm:$0xff]
      %v1703 = vld [vmem:[%s3 + $0x25e0] sm:$0xff]
      %v1704 = vld [vmem:[%s3 + $0x25e8] sm:$0xff]
      %v1705 = vld [vmem:[%s3 + $0x25f0] sm:$0xff]
      %v1706 = vld [vmem:[%s3 + $0x25f8] sm:$0xff]
      %v1707 = vld [vmem:[%s3 + $0x2600] sm:$0xff]
      %v1708 = vld [vmem:[%s3 + $0x2608] sm:$0xff]
      %v1709 = vld [vmem:[%s3 + $0x2610] sm:$0xff]
      %v1710 = vld [vmem:[%s3 + $0x2618] sm:$0xff]
      %v1711 = vld [vmem:[%s3 + $0x2620] sm:$0xff]
      %v1712 = vld [vmem:[%s3 + $0x2628] sm:$0xff]
      %v1713 = vld [vmem:[%s3 + $0x2630] sm:$0xff]
      %v1714 = vld [vmem:[%s3 + $0x2638] sm:$0xff]
      %v1715 = vld [vmem:[%s3 + $0x2640] sm:$0xff]
      %v1716 = vld [vmem:[%s3 + $0x2648] sm:$0xff]
      %v1717 = vld [vmem:[%s3 + $0x2650] sm:$0xff]
      %v1718 = vld [vmem:[%s3 + $0x2658] sm:$0xff]
      %v1719 = vld [vmem:[%s3 + $0x2660] sm:$0xff]
      %v1720 = vld [vmem:[%s3 + $0x2668] sm:$0xff]
      %v1721 = vld [vmem:[%s3 + $0x2670] sm:$0xff]
      %v1722 = vld [vmem:[%s3 + $0x2678] sm:$0xff]
      %v1723 = vld [vmem:[%s3 + $0x2680] sm:$0xff]
      %v1724 = vld [vmem:[%s3 + $0x2688] sm:$0xff]
      %v1725 = vld [vmem:[%s3 + $0x2690] sm:$0xff]
      %v1726 = vld [vmem:[%s3 + $0x2698] sm:$0xff]
      %v1727 = vld [vmem:[%s3 + $0x26a0] sm:$0xff]
      %v1728 = vld [vmem:[%s3 + $0x26a8] sm:$0xff]
      %v1729 = vld [vmem:[%s3 + $0x26b0] sm:$0xff]
      %v1730 = vld [vmem:[%s3 + $0x26b8] sm:$0xff]
      %v1731 = vld [vmem:[%s3 + $0x26c0] sm:$0xff]
      %v1732 = vld [vmem:[%s3 + $0x26c8] sm:$0xff]
      %v1733 = vld [vmem:[%s3 + $0x26d0] sm:$0xff]
      %v1734 = vld [vmem:[%s3 + $0x26d8] sm:$0xff]
      %v1735 = vld [vmem:[%s3 + $0x26e0] sm:$0xff]
      %v1736 = vld [vmem:[%s3 + $0x26e8] sm:$0xff]
      %v1737 = vld [vmem:[%s3 + $0x26f0] sm:$0xff]
      %v1738 = vld [vmem:[%s3 + $0x26f8] sm:$0xff]
      %v1739 = vld [vmem:[%s3 + $0x2700] sm:$0xff]
      %v1740 = vld [vmem:[%s3 + $0x2708] sm:$0xff]
      %v1741 = vld [vmem:[%s3 + $0x2710] sm:$0xff]
      %v1742 = vld [vmem:[%s3 + $0x2718] sm:$0xff]
      %v1743 = vld [vmem:[%s3 + $0x2720] sm:$0xff]
      %v1744 = vld [vmem:[%s3 + $0x2728] sm:$0xff]
      %v1745 = vld [vmem:[%s3 + $0x2730] sm:$0xff]
      %v1746 = vld [vmem:[%s3 + $0x2738] sm:$0xff]
      %v1747 = vld [vmem:[%s3 + $0x2740] sm:$0xff]
      %v1748 = vld [vmem:[%s3 + $0x2748] sm:$0xff]
      %v1749 = vld [vmem:[%s3 + $0x2750] sm:$0xff]
      %v1750 = vld [vmem:[%s3 + $0x2758] sm:$0xff]
      %v1751 = vld [vmem:[%s3 + $0x2760] sm:$0xff]
      %v1752 = vld [vmem:[%s3 + $0x2768] sm:$0xff]
      %v1753 = vld [vmem:[%s3 + $0x2770] sm:$0xff]
      %v1754 = vld [vmem:[%s3 + $0x2778] sm:$0xff]
      %v1755 = vld [vmem:[%s3 + $0x2780] sm:$0xff]
      %v1756 = vld [vmem:[%s3 + $0x2788] sm:$0xff]
      %v1757 = vld [vmem:[%s3 + $0x2790] sm:$0xff]
      %v1758 = vld [vmem:[%s3 + $0x2798] sm:$0xff]
      %v1759 = vld [vmem:[%s3 + $0x27a0] sm:$0xff]
      %v1760 = vld [vmem:[%s3 + $0x27a8] sm:$0xff]
      %v1761 = vld [vmem:[%s3 + $0x27b0] sm:$0xff]
      %v1762 = vld [vmem:[%s3 + $0x27b8] sm:$0xff]
      %v1763 = vld [vmem:[%s3 + $0x27c0] sm:$0xff]
      %v1764 = vld [vmem:[%s3 + $0x27c8] sm:$0xff]
      %v1765 = vld [vmem:[%s3 + $0x27d0] sm:$0xff]
      %v1766 = vld [vmem:[%s3 + $0x27d8] sm:$0xff]
      %v1767 = vld [vmem:[%s3 + $0x27e0] sm:$0xff]
      %v1768 = vld [vmem:[%s3 + $0x27e8] sm:$0xff]
      %v1769 = vld [vmem:[%s3 + $0x27f0] sm:$0xff]
      %v1770 = vld [vmem:[%s3 + $0x27f8] sm:$0xff]
      %v1771 = vld [vmem:[%s3 + $0x2800] sm:$0xff]
      %v1772 = vld [vmem:[%s3 + $0x2808] sm:$0xff]
      %v1773 = vld [vmem:[%s3 + $0x2810] sm:$0xff]
      %v1774 = vld [vmem:[%s3 + $0x2818] sm:$0xff]
      %v1775 = vld [vmem:[%s3 + $0x2820] sm:$0xff]
      %v1776 = vld [vmem:[%s3 + $0x2828] sm:$0xff]
      %v1777 = vld [vmem:[%s3 + $0x2830] sm:$0xff]
      %v1778 = vld [vmem:[%s3 + $0x2838] sm:$0xff]
      %v1779 = vld [vmem:[%s3 + $0x2840] sm:$0xff]
      %v1780 = vld [vmem:[%s3 + $0x2848] sm:$0xff]
      %v1781 = vld [vmem:[%s3 + $0x2850] sm:$0xff]
      %v1782 = vld [vmem:[%s3 + $0x2858] sm:$0xff]
      %v1783 = vld [vmem:[%s3 + $0x2860] sm:$0xff]
      %v1784 = vld [vmem:[%s3 + $0x2868] sm:$0xff]
      %v1785 = vld [vmem:[%s3 + $0x2870] sm:$0xff]
      %v1786 = vld [vmem:[%s3 + $0x2878] sm:$0xff]
      %v1787 = vld [vmem:[%s3 + $0x2880] sm:$0xff]
      %v1788 = vld [vmem:[%s3 + $0x2888] sm:$0xff]
      %v1789 = vld [vmem:[%s3 + $0x2890] sm:$0xff]
      %v1790 = vld [vmem:[%s3 + $0x2898] sm:$0xff]
      %v1791 = vld [vmem:[%s3 + $0x28a0] sm:$0xff]
      %v1792 = vld [vmem:[%s3 + $0x28a8] sm:$0xff]
      %v1793 = vld [vmem:[%s3 + $0x28b0] sm:$0xff]
      %v1794 = vld [vmem:[%s3 + $0x28b8] sm:$0xff]
      %v1795 = vld [vmem:[%s3 + $0x28c0] sm:$0xff]
      %v1796 = vld [vmem:[%s3 + $0x28c8] sm:$0xff]
      %v1797 = vld [vmem:[%s3 + $0x28d0] sm:$0xff]
      %v1798 = vld [vmem:[%s3 + $0x28d8] sm:$0xff]
      %v1799 = vld [vmem:[%s3 + $0x28e0] sm:$0xff]
      %v1800 = vld [vmem:[%s3 + $0x28e8] sm:$0xff]
      %v1801 = vld [vmem:[%s3 + $0x28f0] sm:$0xff]
      %v1802 = vld [vmem:[%s3 + $0x28f8] sm:$0xff]
      %v1803 = vld [vmem:[%s3 + $0x2900] sm:$0xff]
      %v1804 = vld [vmem:[%s3 + $0x2908] sm:$0xff]
      %v1805 = vld [vmem:[%s3 + $0x2910] sm:$0xff]
      %v1806 = vld [vmem:[%s3 + $0x2918] sm:$0xff]
      %v1807 = vld [vmem:[%s3 + $0x2920] sm:$0xff]
      %v1808 = vld [vmem:[%s3 + $0x2928] sm:$0xff]
      %v1809 = vld [vmem:[%s3 + $0x2930] sm:$0xff]
      %v1810 = vld [vmem:[%s3 + $0x2938] sm:$0xff]
      %v1811 = vld [vmem:[%s3 + $0x2940] sm:$0xff]
      %v1812 = vld [vmem:[%s3 + $0x2948] sm:$0xff]
      %v1813 = vld [vmem:[%s3 + $0x2950] sm:$0xff]
      %v1814 = vld [vmem:[%s3 + $0x2958] sm:$0xff]
      %v1815 = vld [vmem:[%s3 + $0x2960] sm:$0xff]
      %v1816 = vld [vmem:[%s3 + $0x2968] sm:$0xff]
      %v1817 = vld [vmem:[%s3 + $0x2970] sm:$0xff]
      %v1818 = vld [vmem:[%s3 + $0x2978] sm:$0xff]
      %v1819 = vld [vmem:[%s3 + $0x2980] sm:$0xff]
      %v1820 = vld [vmem:[%s3 + $0x2988] sm:$0xff]
      %v1821 = vld [vmem:[%s3 + $0x2990] sm:$0xff]
      %v1822 = vld [vmem:[%s3 + $0x2998] sm:$0xff]
      %v1823 = vld [vmem:[%s3 + $0x29a0] sm:$0xff]
      %v1824 = vld [vmem:[%s3 + $0x29a8] sm:$0xff]
      %v1825 = vld [vmem:[%s3 + $0x29b0] sm:$0xff]
      %v1826 = vld [vmem:[%s3 + $0x29b8] sm:$0xff]
      %v1827 = vld [vmem:[%s3 + $0x29c0] sm:$0xff]
      %v1828 = vld [vmem:[%s3 + $0x29c8] sm:$0xff]
      %v1829 = vld [vmem:[%s3 + $0x29d0] sm:$0xff]
      %v1830 = vld [vmem:[%s3 + $0x29d8] sm:$0xff]
      %v1831 = vld [vmem:[%s3 + $0x29e0] sm:$0xff]
      %v1832 = vld [vmem:[%s3 + $0x29e8] sm:$0xff]
      %v1833 = vld [vmem:[%s3 + $0x29f0] sm:$0xff]
      %v1834 = vld [vmem:[%s3 + $0x29f8] sm:$0xff]
      %v1835 = vld [vmem:[%s3 + $0x2a00] sm:$0xff]
      %v1836 = vld [vmem:[%s3 + $0x2a08] sm:$0xff]
      %v1837 = vld [vmem:[%s3 + $0x2a10] sm:$0xff]
      %v1838 = vld [vmem:[%s3 + $0x2a18] sm:$0xff]
      %v1839 = vld [vmem:[%s3 + $0x2a20] sm:$0xff]
      %v1840 = vld [vmem:[%s3 + $0x2a28] sm:$0xff]
      %v1841 = vld [vmem:[%s3 + $0x2a30] sm:$0xff]
      %v1842 = vld [vmem:[%s3 + $0x2a38] sm:$0xff]
      %v1843 = vld [vmem:[%s3 + $0x2a40] sm:$0xff]
      %v1844 = vld [vmem:[%s3 + $0x2a48] sm:$0xff]
      %v1845 = vld [vmem:[%s3 + $0x2a50] sm:$0xff]
      %v1846 = vld [vmem:[%s3 + $0x2a58] sm:$0xff]
      %v1847 = vld [vmem:[%s3 + $0x2a60] sm:$0xff]
      %v1848 = vld [vmem:[%s3 + $0x2a68] sm:$0xff]
      %v1849 = vld [vmem:[%s3 + $0x2a70] sm:$0xff]
      %v1850 = vld [vmem:[%s3 + $0x2a78] sm:$0xff]
      %v1851 = vld [vmem:[%s3 + $0x2a80] sm:$0xff]
      %v1852 = vld [vmem:[%s3 + $0x2a88] sm:$0xff]
      %v1853 = vld [vmem:[%s3 + $0x2a90] sm:$0xff]
      %v1854 = vld [vmem:[%s3 + $0x2a98] sm:$0xff]
      %v1855 = vld [vmem:[%s3 + $0x2aa0] sm:$0xff]
      %v1856 = vld [vmem:[%s3 + $0x2aa8] sm:$0xff]
      %v1857 = vld [vmem:[%s3 + $0x2ab0] sm:$0xff]
      %v1858 = vld [vmem:[%s3 + $0x2ab8] sm:$0xff]
      %v1859 = vld [vmem:[%s3 + $0x2ac0] sm:$0xff]
      %v1860 = vld [vmem:[%s3 + $0x2ac8] sm:$0xff]
      %v1861 = vld [vmem:[%s3 + $0x2ad0] sm:$0xff]
      %v1862 = vld [vmem:[%s3 + $0x2ad8] sm:$0xff]
      %v1863 = vld [vmem:[%s3 + $0x2ae0] sm:$0xff]
      %v1864 = vld [vmem:[%s3 + $0x2ae8] sm:$0xff]
      %v1865 = vld [vmem:[%s3 + $0x2af0] sm:$0xff]
      %v1866 = vld [vmem:[%s3 + $0x2af8] sm:$0xff]
      %v1867 = vld [vmem:[%s3 + $0x2b00] sm:$0xff]
      %v1868 = vld [vmem:[%s3 + $0x2b08] sm:$0xff]
      %v1869 = vld [vmem:[%s3 + $0x2b10] sm:$0xff]
      %v1870 = vld [vmem:[%s3 + $0x2b18] sm:$0xff]
      %v1871 = vld [vmem:[%s3 + $0x2b20] sm:$0xff]
      %v1872 = vld [vmem:[%s3 + $0x2b28] sm:$0xff]
      %v1873 = vld [vmem:[%s3 + $0x2b30] sm:$0xff]
      %v1874 = vld [vmem:[%s3 + $0x2b38] sm:$0xff]
      %v1875 = vld [vmem:[%s3 + $0x2b40] sm:$0xff]
      %v1876 = vld [vmem:[%s3 + $0x2b48] sm:$0xff]
      %v1877 = vld [vmem:[%s3 + $0x2b50] sm:$0xff]
      %v1878 = vld [vmem:[%s3 + $0x2b58] sm:$0xff]
      %v1879 = vld [vmem:[%s3 + $0x2b60] sm:$0xff]
      %v1880 = vld [vmem:[%s3 + $0x2b68] sm:$0xff]
      %v1881 = vld [vmem:[%s3 + $0x2b70] sm:$0xff]
      %v1882 = vld [vmem:[%s3 + $0x2b78] sm:$0xff]
      %v1883 = vld [vmem:[%s3 + $0x2b80] sm:$0xff]
      %v1884 = vld [vmem:[%s3 + $0x2b88] sm:$0xff]
      %v1885 = vld [vmem:[%s3 + $0x2b90] sm:$0xff]
      %v1886 = vld [vmem:[%s3 + $0x2b98] sm:$0xff]
      %v1887 = vld [vmem:[%s3 + $0x2ba0] sm:$0xff]
      %v1888 = vld [vmem:[%s3 + $0x2ba8] sm:$0xff]
      %v1889 = vld [vmem:[%s3 + $0x2bb0] sm:$0xff]
      %v1890 = vld [vmem:[%s3 + $0x2bb8] sm:$0xff]
      %v1891 = vld [vmem:[%s3 + $0x2bc0] sm:$0xff]
      %v1892 = vld [vmem:[%s3 + $0x2bc8] sm:$0xff]
      %v1893 = vld [vmem:[%s3 + $0x2bd0] sm:$0xff]
      %v1894 = vld [vmem:[%s3 + $0x2bd8] sm:$0xff]
      %v1895 = vld [vmem:[%s3 + $0x2be0] sm:$0xff]
      %v1896 = vld [vmem:[%s3 + $0x2be8] sm:$0xff]
      %v1897 = vld [vmem:[%s3 + $0x2bf0] sm:$0xff]
      %v1898 = vld [vmem:[%s3 + $0x2bf8] sm:$0xff]
      %v1899 = vld [vmem:[%s3 + $0x2c00] sm:$0xff]
      %v1900 = vld [vmem:[%s3 + $0x2c08] sm:$0xff]
      %v1901 = vld [vmem:[%s3 + $0x2c10] sm:$0xff]
      %v1902 = vld [vmem:[%s3 + $0x2c18] sm:$0xff]
      %v1903 = vld [vmem:[%s3 + $0x2c20] sm:$0xff]
      %v1904 = vld [vmem:[%s3 + $0x2c28] sm:$0xff]
      %v1905 = vld [vmem:[%s3 + $0x2c30] sm:$0xff]
      %v1906 = vld [vmem:[%s3 + $0x2c38] sm:$0xff]
      %v1907 = vld [vmem:[%s3 + $0x2c40] sm:$0xff]
      %v1908 = vld [vmem:[%s3 + $0x2c48] sm:$0xff]
      %v1909 = vld [vmem:[%s3 + $0x2c50] sm:$0xff]
      %v1910 = vld [vmem:[%s3 + $0x2c58] sm:$0xff]
      %v1911 = vld [vmem:[%s3 + $0x2c60] sm:$0xff]
      %v1912 = vld [vmem:[%s3 + $0x2c68] sm:$0xff]
      %v1913 = vld [vmem:[%s3 + $0x2c70] sm:$0xff]
      %v1914 = vld [vmem:[%s3 + $0x2c78] sm:$0xff]
      %v1915 = vld [vmem:[%s3 + $0x2c80] sm:$0xff]
      %v1916 = vld [vmem:[%s3 + $0x2c88] sm:$0xff]
      %v1917 = vld [vmem:[%s3 + $0x2c90] sm:$0xff]
      %v1918 = vld [vmem:[%s3 + $0x2c98] sm:$0xff]
      %v1919 = vld [vmem:[%s3 + $0x2ca0] sm:$0xff]
      %v1920 = vld [vmem:[%s3 + $0x2ca8] sm:$0xff]
      %v1921 = vld [vmem:[%s3 + $0x2cb0] sm:$0xff]
      %v1922 = vld [vmem:[%s3 + $0x2cb8] sm:$0xff]
      %v1923 = vld [vmem:[%s3 + $0x2cc0] sm:$0xff]
      %v1924 = vld [vmem:[%s3 + $0x2cc8] sm:$0xff]
      %v1925 = vld [vmem:[%s3 + $0x2cd0] sm:$0xff]
      %v1926 = vld [vmem:[%s3 + $0x2cd8] sm:$0xff]
      %v1927 = vld [vmem:[%s3 + $0x2ce0] sm:$0xff]
      %v1928 = vld [vmem:[%s3 + $0x2ce8] sm:$0xff]
      %v1929 = vld [vmem:[%s3 + $0x2cf0] sm:$0xff]
      %v1930 = vld [vmem:[%s3 + $0x2cf8] sm:$0xff]
      %v1931 = vld [vmem:[%s3 + $0x2d00] sm:$0xff]
      %v1932 = vld [vmem:[%s3 + $0x2d08] sm:$0xff]
      %v1933 = vld [vmem:[%s3 + $0x2d10] sm:$0xff]
      %v1934 = vld [vmem:[%s3 + $0x2d18] sm:$0xff]
      %v1935 = vld [vmem:[%s3 + $0x2d20] sm:$0xff]
      %v1936 = vld [vmem:[%s3 + $0x2d28] sm:$0xff]
      %v1937 = vld [vmem:[%s3 + $0x2d30] sm:$0xff]
      %v1938 = vld [vmem:[%s3 + $0x2d38] sm:$0xff]
      %v1939 = vld [vmem:[%s3 + $0x2d40] sm:$0xff]
      %v1940 = vld [vmem:[%s3 + $0x2d48] sm:$0xff]
      %v1941 = vld [vmem:[%s3 + $0x2d50] sm:$0xff]
      %v1942 = vld [vmem:[%s3 + $0x2d58] sm:$0xff]
      %v1943 = vld [vmem:[%s3 + $0x2d60] sm:$0xff]
      %v1944 = vld [vmem:[%s3 + $0x2d68] sm:$0xff]
      %v1945 = vld [vmem:[%s3 + $0x2d70] sm:$0xff]
      %v1946 = vld [vmem:[%s3 + $0x2d78] sm:$0xff]
      %v1947 = vld [vmem:[%s3 + $0x2d80] sm:$0xff]
      %v1948 = vld [vmem:[%s3 + $0x2d88] sm:$0xff]
      %v1949 = vld [vmem:[%s3 + $0x2d90] sm:$0xff]
      %v1950 = vld [vmem:[%s3 + $0x2d98] sm:$0xff]
      %v1951 = vld [vmem:[%s3 + $0x2da0] sm:$0xff]
      %v1952 = vld [vmem:[%s3 + $0x2da8] sm:$0xff]
      %v1953 = vld [vmem:[%s3 + $0x2db0] sm:$0xff]
      %v1954 = vld [vmem:[%s3 + $0x2db8] sm:$0xff]
      %v1955 = vld [vmem:[%s3 + $0x2dc0] sm:$0xff]
      %v1956 = vld [vmem:[%s3 + $0x2dc8] sm:$0xff]
      %v1957 = vld [vmem:[%s3 + $0x2dd0] sm:$0xff]
      %v1958 = vld [vmem:[%s3 + $0x2dd8] sm:$0xff]
      %v1959 = vld [vmem:[%s3 + $0x2de0] sm:$0xff]
      %v1960 = vld [vmem:[%s3 + $0x2de8] sm:$0xff]
      %v1961 = vld [vmem:[%s3 + $0x2df0] sm:$0xff]
      %v1962 = vld [vmem:[%s3 + $0x2df8] sm:$0xff]
      %v1963 = vld [vmem:[%s3 + $0x2e00] sm:$0xff]
      %v1964 = vld [vmem:[%s3 + $0x2e08] sm:$0xff]
      %v1965 = vld [vmem:[%s3 + $0x2e10] sm:$0xff]
      %v1966 = vld [vmem:[%s3 + $0x2e18] sm:$0xff]
      %v1967 = vld [vmem:[%s3 + $0x2e20] sm:$0xff]
      %v1968 = vld [vmem:[%s3 + $0x2e28] sm:$0xff]
      %v1969 = vld [vmem:[%s3 + $0x2e30] sm:$0xff]
      %v1970 = vld [vmem:[%s3 + $0x2e38] sm:$0xff]
      %v1971 = vld [vmem:[%s3 + $0x2e40] sm:$0xff]
      %v1972 = vld [vmem:[%s3 + $0x2e48] sm:$0xff]
      %v1973 = vld [vmem:[%s3 + $0x2e50] sm:$0xff]
      %v1974 = vld [vmem:[%s3 + $0x2e58] sm:$0xff]
      %v1975 = vld [vmem:[%s3 + $0x2e60] sm:$0xff]
      %v1976 = vld [vmem:[%s3 + $0x2e68] sm:$0xff]
      %v1977 = vld [vmem:[%s3 + $0x2e70] sm:$0xff]
      %v1978 = vld [vmem:[%s3 + $0x2e78] sm:$0xff]
      %v1979 = vld [vmem:[%s3 + $0x2e80] sm:$0xff]
      %v1980 = vld [vmem:[%s3 + $0x2e88] sm:$0xff]
      %v1981 = vld [vmem:[%s3 + $0x2e90] sm:$0xff]
      %v1982 = vld [vmem:[%s3 + $0x2e98] sm:$0xff]
      %v1983 = vld [vmem:[%s3 + $0x2ea0] sm:$0xff]
      %v1984 = vld [vmem:[%s3 + $0x2ea8] sm:$0xff]
      %v1985 = vld [vmem:[%s3 + $0x2eb0] sm:$0xff]
      %v1986 = vld [vmem:[%s3 + $0x2eb8] sm:$0xff]
      %v1987 = vld [vmem:[%s3 + $0x2ec0] sm:$0xff]
      %v1988 = vld [vmem:[%s3 + $0x2ec8] sm:$0xff]
      %v1989 = vld [vmem:[%s3 + $0x2ed0] sm:$0xff]
      %v1990 = vld [vmem:[%s3 + $0x2ed8] sm:$0xff]
      %v1991 = vld [vmem:[%s3 + $0x2ee0] sm:$0xff]
      %v1992 = vld [vmem:[%s3 + $0x2ee8] sm:$0xff]
      %v1993 = vld [vmem:[%s3 + $0x2ef0] sm:$0xff]
      %v1994 = vld [vmem:[%s3 + $0x2ef8] sm:$0xff]
      %v1995 = vld [vmem:[%s3 + $0x2f00] sm:$0xff]
      %v1996 = vld [vmem:[%s3 + $0x2f08] sm:$0xff]
      %v1997 = vld [vmem:[%s3 + $0x2f10] sm:$0xff]
      %v1998 = vld [vmem:[%s3 + $0x2f18] sm:$0xff]
      %v1999 = vld [vmem:[%s3 + $0x2f20] sm:$0xff]
      %v2000 = vld [vmem:[%s3 + $0x2f28] sm:$0xff]
      %v2001 = vld [vmem:[%s3 + $0x2f30] sm:$0xff]
      %v2002 = vld [vmem:[%s3 + $0x2f38] sm:$0xff]
      %v2003 = vld [vmem:[%s3 + $0x2f40] sm:$0xff]
      %v2004 = vld [vmem:[%s3 + $0x2f48] sm:$0xff]
      %v2005 = vld [vmem:[%s3 + $0x2f50] sm:$0xff]
      %v2006 = vld [vmem:[%s3 + $0x2f58] sm:$0xff]
      %v2007 = vld [vmem:[%s3 + $0x2f60] sm:$0xff]
      %v2008 = vld [vmem:[%s3 + $0x2f68] sm:$0xff]
      %v2009 = vld [vmem:[%s3 + $0x2f70] sm:$0xff]
      %v2010 = vld [vmem:[%s3 + $0x2f78] sm:$0xff]
      %v2011 = vld [vmem:[%s3 + $0x2f80] sm:$0xff]
      %v2012 = vld [vmem:[%s3 + $0x2f88] sm:$0xff]
      %v2013 = vld [vmem:[%s3 + $0x2f90] sm:$0xff]
      %v2014 = vld [vmem:[%s3 + $0x2f98] sm:$0xff]
      %v2015 = vld [vmem:[%s3 + $0x2fa0] sm:$0xff]
      %v2016 = vld [vmem:[%s3 + $0x2fa8] sm:$0xff]
      %v2017 = vld [vmem:[%s3 + $0x2fb0] sm:$0xff]
      %v2018 = vld [vmem:[%s3 + $0x2fb8] sm:$0xff]
      %v2019 = vld [vmem:[%s3 + $0x2fc0] sm:$0xff]
      %v2020 = vld [vmem:[%s3 + $0x2fc8] sm:$0xff]
      %v2021 = vld [vmem:[%s3 + $0x2fd0] sm:$0xff]
      %v2022 = vld [vmem:[%s3 + $0x2fd8] sm:$0xff]
      %v2023 = vld [vmem:[%s3 + $0x2fe0] sm:$0xff]
      %v2024 = vld [vmem:[%s3 + $0x2fe8] sm:$0xff]
      %v2025 = vld [vmem:[%s3 + $0x2ff0] sm:$0xff]
      %v2026 = vld [vmem:[%s3 + $0x2ff8] sm:$0xff]
      %v2027 = vld [vmem:[%s3 + $0x3000] sm:$0xff]
      %v2028 = vld [vmem:[%s3 + $0x3008] sm:$0xff]
      %v2029 = vld [vmem:[%s3 + $0x3010] sm:$0xff]
      %v2030 = vld [vmem:[%s3 + $0x3018] sm:$0xff]
      %v2031 = vld [vmem:[%s3 + $0x3020] sm:$0xff]
      %v2032 = vld [vmem:[%s3 + $0x3028] sm:$0xff]
      %v2033 = vld [vmem:[%s3 + $0x3030] sm:$0xff]
      %v2034 = vld [vmem:[%s3 + $0x3038] sm:$0xff]
      %v2035 = vld [vmem:[%s3 + $0x3040] sm:$0xff]
      %v2036 = vld [vmem:[%s3 + $0x3048] sm:$0xff]
      %v2037 = vld [vmem:[%s3 + $0x3050] sm:$0xff]
      %v2038 = vld [vmem:[%s3 + $0x3058] sm:$0xff]
      %v2039 = vld [vmem:[%s3 + $0x3060] sm:$0xff]
      %v2040 = vld [vmem:[%s3 + $0x3068] sm:$0xff]
      %v2041 = vld [vmem:[%s3 + $0x3070] sm:$0xff]
      %v2042 = vld [vmem:[%s3 + $0x3078] sm:$0xff]
      %v2043 = vld [vmem:[%s3 + $0x3080] sm:$0xff]
      %v2044 = vld [vmem:[%s3 + $0x3088] sm:$0xff]
      %v2045 = vld [vmem:[%s3 + $0x3090] sm:$0xff]
      %v2046 = vld [vmem:[%s3 + $0x3098] sm:$0xff]
      %v2047 = vld [vmem:[%s3 + $0x30a0] sm:$0xff]
      %v2048 = vld [vmem:[%s3 + $0x30a8] sm:$0xff]
      %v2049 = vld [vmem:[%s3 + $0x30b0] sm:$0xff]
      %v2050 = vld [vmem:[%s3 + $0x30b8] sm:$0xff]
      %v2051 = vld [vmem:[%s3 + $0x30c0] sm:$0xff]
      %v2052 = vld [vmem:[%s3 + $0x30c8] sm:$0xff]
      %v2053 = vld [vmem:[%s3 + $0x30d0] sm:$0xff]
      %v2054 = vld [vmem:[%s3 + $0x30d8] sm:$0xff]
      %v2055 = vld [vmem:[%s3 + $0x30e0] sm:$0xff]
      %v2056 = vld [vmem:[%s3 + $0x30e8] sm:$0xff]
      %v2057 = vld [vmem:[%s3 + $0x30f0] sm:$0xff]
      %v2058 = vld [vmem:[%s3 + $0x30f8] sm:$0xff]
      %v2059 = vld [vmem:[%s3 + $0x3100] sm:$0xff]
      %v2060 = vld [vmem:[%s3 + $0x3108] sm:$0xff]
      %v2061 = vld [vmem:[%s3 + $0x3110] sm:$0xff]
      %v2062 = vld [vmem:[%s3 + $0x3118] sm:$0xff]
      %v2063 = vld [vmem:[%s3 + $0x3120] sm:$0xff]
      %v2064 = vld [vmem:[%s3 + $0x3128] sm:$0xff]
      %v2065 = vld [vmem:[%s3 + $0x3130] sm:$0xff]
      %v2066 = vld [vmem:[%s3 + $0x3138] sm:$0xff]
      %v2067 = vld [vmem:[%s3 + $0x3140] sm:$0xff]
      %v2068 = vld [vmem:[%s3 + $0x3148] sm:$0xff]
      %v2069 = vld [vmem:[%s3 + $0x3150] sm:$0xff]
      %v2070 = vld [vmem:[%s3 + $0x3158] sm:$0xff]
      %v2071 = vld [vmem:[%s3 + $0x3160] sm:$0xff]
      %v2072 = vld [vmem:[%s3 + $0x3168] sm:$0xff]
      %v2073 = vld [vmem:[%s3 + $0x3170] sm:$0xff]
      %v2074 = vld [vmem:[%s3 + $0x3178] sm:$0xff]
      %v2075 = vld [vmem:[%s3 + $0x3180] sm:$0xff]
      %v2076 = vld [vmem:[%s3 + $0x3188] sm:$0xff]
      %v2077 = vld [vmem:[%s3 + $0x3190] sm:$0xff]
      %v2078 = vld [vmem:[%s3 + $0x3198] sm:$0xff]
      %v2079 = vld [vmem:[%s3 + $0x31a0] sm:$0xff]
      %v2080 = vld [vmem:[%s3 + $0x31a8] sm:$0xff]
      %v2081 = vld [vmem:[%s3 + $0x31b0] sm:$0xff]
      %v2082 = vld [vmem:[%s3 + $0x31b8] sm:$0xff]
      %v2083 = vld [vmem:[%s3 + $0x31c0] sm:$0xff]
      %v2084 = vld [vmem:[%s3 + $0x31c8] sm:$0xff]
      %v2085 = vld [vmem:[%s3 + $0x31d0] sm:$0xff]
      %v2086 = vld [vmem:[%s3 + $0x31d8] sm:$0xff]
      %v2087 = vld [vmem:[%s3 + $0x31e0] sm:$0xff]
      %v2088 = vld [vmem:[%s3 + $0x31e8] sm:$0xff]
      %v2089 = vld [vmem:[%s3 + $0x31f0] sm:$0xff]
      %v2090 = vld [vmem:[%s3 + $0x31f8] sm:$0xff]
      %v2091 = vld [vmem:[%s3 + $0x3200] sm:$0xff]
      %v2092 = vld [vmem:[%s3 + $0x3208] sm:$0xff]
      %v2093 = vld [vmem:[%s3 + $0x3210] sm:$0xff]
      %v2094 = vld [vmem:[%s3 + $0x3218] sm:$0xff]
      %v2095 = vld [vmem:[%s3 + $0x3220] sm:$0xff]
      %v2096 = vld [vmem:[%s3 + $0x3228] sm:$0xff]
      %v2097 = vld [vmem:[%s3 + $0x3230] sm:$0xff]
      %v2098 = vld [vmem:[%s3 + $0x3238] sm:$0xff]
      %v2099 = vld [vmem:[%s3 + $0x3240] sm:$0xff]
      %v2100 = vld [vmem:[%s3 + $0x3248] sm:$0xff]
      %v2101 = vld [vmem:[%s3 + $0x3250] sm:$0xff]
      %v2102 = vld [vmem:[%s3 + $0x3258] sm:$0xff]
      %v2103 = vld [vmem:[%s3 + $0x3260] sm:$0xff]
      %v2104 = vld [vmem:[%s3 + $0x3268] sm:$0xff]
      %v2105 = vld [vmem:[%s3 + $0x3270] sm:$0xff]
      %v2106 = vld [vmem:[%s3 + $0x3278] sm:$0xff]
      %v2107 = vld [vmem:[%s3 + $0x3280] sm:$0xff]
      %v2108 = vld [vmem:[%s3 + $0x3288] sm:$0xff]
      %v2109 = vld [vmem:[%s3 + $0x3290] sm:$0xff]
      %v2110 = vld [vmem:[%s3 + $0x3298] sm:$0xff]
      %v2111 = vld [vmem:[%s3 + $0x32a0] sm:$0xff]
      %v2112 = vld [vmem:[%s3 + $0x32a8] sm:$0xff]
      %v2113 = vld [vmem:[%s3 + $0x32b0] sm:$0xff]
      %v2114 = vld [vmem:[%s3 + $0x32b8] sm:$0xff]
      %v2115 = vld [vmem:[%s3 + $0x32c0] sm:$0xff]
      %v2116 = vld [vmem:[%s3 + $0x32c8] sm:$0xff]
      %v2117 = vld [vmem:[%s3 + $0x32d0] sm:$0xff]
      %v2118 = vld [vmem:[%s3 + $0x32d8] sm:$0xff]
      %v2119 = vld [vmem:[%s3 + $0x32e0] sm:$0xff]
      %v2120 = vld [vmem:[%s3 + $0x32e8] sm:$0xff]
      %v2121 = vld [vmem:[%s3 + $0x32f0] sm:$0xff]
      %v2122 = vld [vmem:[%s3 + $0x32f8] sm:$0xff]
      %v2123 = vld [vmem:[%s3 + $0x3300] sm:$0xff]
      %v2124 = vld [vmem:[%s3 + $0x3308] sm:$0xff]
      %v2125 = vld [vmem:[%s3 + $0x3310] sm:$0xff]
      %v2126 = vld [vmem:[%s3 + $0x3318] sm:$0xff]
      %v2127 = vld [vmem:[%s3 + $0x3320] sm:$0xff]
      %v2128 = vld [vmem:[%s3 + $0x3328] sm:$0xff]
      %v2129 = vld [vmem:[%s3 + $0x3330] sm:$0xff]
      %v2130 = vld [vmem:[%s3 + $0x3338] sm:$0xff]
      %v2131 = vld [vmem:[%s3 + $0x3340] sm:$0xff]
      %v2132 = vld [vmem:[%s3 + $0x3348] sm:$0xff]
      %v2133 = vld [vmem:[%s3 + $0x3350] sm:$0xff]
      %v2134 = vld [vmem:[%s3 + $0x3358] sm:$0xff]
      %v2135 = vld [vmem:[%s3 + $0x3360] sm:$0xff]
      %v2136 = vld [vmem:[%s3 + $0x3368] sm:$0xff]
      %v2137 = vld [vmem:[%s3 + $0x3370] sm:$0xff]
      %v2138 = vld [vmem:[%s3 + $0x3378] sm:$0xff]
      %v2139 = vld [vmem:[%s3 + $0x3380] sm:$0xff]
      %v2140 = vld [vmem:[%s3 + $0x3388] sm:$0xff]
      %v2141 = vld [vmem:[%s3 + $0x3390] sm:$0xff]
      %v2142 = vld [vmem:[%s3 + $0x3398] sm:$0xff]
      %v2143 = vld [vmem:[%s3 + $0x33a0] sm:$0xff]
      %v2144 = vld [vmem:[%s3 + $0x33a8] sm:$0xff]
      %v2145 = vld [vmem:[%s3 + $0x33b0] sm:$0xff]
      %v2146 = vld [vmem:[%s3 + $0x33b8] sm:$0xff]
      %v2147 = vld [vmem:[%s3 + $0x33c0] sm:$0xff]
      %v2148 = vld [vmem:[%s3 + $0x33c8] sm:$0xff]
      %v2149 = vld [vmem:[%s3 + $0x33d0] sm:$0xff]
      %v2150 = vld [vmem:[%s3 + $0x33d8] sm:$0xff]
      %v2151 = vld [vmem:[%s3 + $0x33e0] sm:$0xff]
      %v2152 = vld [vmem:[%s3 + $0x33e8] sm:$0xff]
      %v2153 = vld [vmem:[%s3 + $0x33f0] sm:$0xff]
      %v2154 = vld [vmem:[%s3 + $0x33f8] sm:$0xff]
      %v2155 = vld [vmem:[%s3 + $0x3400] sm:$0xff]
      %v2156 = vld [vmem:[%s3 + $0x3408] sm:$0xff]
      %v2157 = vld [vmem:[%s3 + $0x3410] sm:$0xff]
      %v2158 = vld [vmem:[%s3 + $0x3418] sm:$0xff]
      %v2159 = vld [vmem:[%s3 + $0x3420] sm:$0xff]
      %v2160 = vld [vmem:[%s3 + $0x3428] sm:$0xff]
      %v2161 = vld [vmem:[%s3 + $0x3430] sm:$0xff]
      %v2162 = vld [vmem:[%s3 + $0x3438] sm:$0xff]
      %v2163 = vld [vmem:[%s3 + $0x3440] sm:$0xff]
      %v2164 = vld [vmem:[%s3 + $0x3448] sm:$0xff]
      %v2165 = vld [vmem:[%s3 + $0x3450] sm:$0xff]
      %v2166 = vld [vmem:[%s3 + $0x3458] sm:$0xff]
      %v2167 = vld [vmem:[%s3 + $0x3460] sm:$0xff]
      %v2168 = vld [vmem:[%s3 + $0x3468] sm:$0xff]
      %v2169 = vld [vmem:[%s3 + $0x3470] sm:$0xff]
      %v2170 = vld [vmem:[%s3 + $0x3478] sm:$0xff]
      %v2171 = vld [vmem:[%s3 + $0x3480] sm:$0xff]
      %v2172 = vld [vmem:[%s3 + $0x3488] sm:$0xff]
      %v2173 = vld [vmem:[%s3 + $0x3490] sm:$0xff]
      %v2174 = vld [vmem:[%s3 + $0x3498] sm:$0xff]
      %v2175 = vld [vmem:[%s3 + $0x34a0] sm:$0xff]
      %v2176 = vld [vmem:[%s3 + $0x34a8] sm:$0xff]
      %v2177 = vld [vmem:[%s3 + $0x34b0] sm:$0xff]
      %v2178 = vld [vmem:[%s3 + $0x34b8] sm:$0xff]
      %v2179 = vld [vmem:[%s3 + $0x34c0] sm:$0xff]
      %v2180 = vld [vmem:[%s3 + $0x34c8] sm:$0xff]
      %v2181 = vld [vmem:[%s3 + $0x34d0] sm:$0xff]
      %v2182 = vld [vmem:[%s3 + $0x34d8] sm:$0xff]
      %v2183 = vld [vmem:[%s3 + $0x34e0] sm:$0xff]
      %v2184 = vld [vmem:[%s3 + $0x34e8] sm:$0xff]
      %v2185 = vld [vmem:[%s3 + $0x34f0] sm:$0xff]
      %v2186 = vld [vmem:[%s309] sm:$0xff]
      %v2187 = vld [vmem:[%s309 + $0x8] sm:$0xff]
      %v2188 = vld [vmem:[%s309 + $0x10] sm:$0xff]
      %v2189 = vld [vmem:[%s309 + $0x18] sm:$0xff]
      %2190 = vmatprep.subr.mxu0 0.0
      %2191 = vmatpush1.msra.mxu0 %v329
      %2192 = vmatprep.subr.mxu0 0.0
      %2193 = vmatpush1.msra.mxu0 %v328
      %2194 = vmatprep.subr.mxu0 0.0
      %2195 = vmatpush1.msra.mxu0 %v327
      %2196 = vmatprep.subr.mxu0 0.0
      %2197 = vmatpush1.msra.mxu0 %v326
      %2198 = vmatprep.subr.mxu0 0.0
      %2199 = vmatpush1.msra.mxu0 %v325
      %2200 = vmatprep.subr.mxu0 0.0
      %2201 = vmatpush1.msra.mxu0 %v324
      %2202 = vmatprep.subr.mxu0 0.0
      %2203 = vmatpush1.msra.mxu0 %v323
      %2204 = vmatprep.subr.mxu0 0.0
      %2205 = vmatpush1.msra.mxu0 %v322
      %2206 = vmatprep.subr.mxu0 0.0
      %2207 = vmatpush1.msra.mxu0 %v321
      %2208 = vmatprep.subr.mxu0 0.0
      %2209 = vmatpush1.msra.mxu0 %v320
      %2210 = vmatprep.subr.mxu0 0.0
      %2211 = vmatpush1.msra.mxu0 %v319
      %2212 = vmatprep.subr.mxu0 0.0
      %2213 = vmatpush1.msra.mxu0 %v318
      %2214 = vmatprep.subr.mxu0 0.0
      %2215 = vmatpush1.msra.mxu0 %v317
      %2216 = vmatprep.subr.mxu0 0.0
      %2217 = vmatpush1.msra.mxu0 %v316
      %2218 = vmatprep.subr.mxu0 0.0
      %2219 = vmatpush1.msra.mxu0 %v315
      %2220 = vmatprep.subr.mxu0 0.0
      %2221 = vmatpush1.msra.mxu0 %v314
      %2222 = vmatprep.subr.mxu0 0.0
      %2223 = vmatpush2.msra.mxu0 %v345
      %2224 = vmatprep.subr.mxu0 0.0
      %2225 = vmatpush2.msra.mxu0 %v344
      %2226 = vmatprep.subr.mxu0 0.0
      %2227 = vmatpush2.msra.mxu0 %v343
      %2228 = vmatprep.subr.mxu0 0.0
      %2229 = vmatpush2.msra.mxu0 %v342
      %2230 = vmatprep.subr.mxu0 0.0
      %2231 = vmatpush2.msra.mxu0 %v341
      %2232 = vmatprep.subr.mxu0 0.0
      %2233 = vmatpush2.msra.mxu0 %v340
      %2234 = vmatprep.subr.mxu0 0.0
      %2235 = vmatpush2.msra.mxu0 %v339
      %2236 = vmatprep.subr.mxu0 0.0
      %2237 = vmatpush2.msra.mxu0 %v338
      %2238 = vmatprep.subr.mxu0 0.0
      %2239 = vmatpush2.msra.mxu0 %v337
      %2240 = vmatprep.subr.mxu0 0.0
      %2241 = vmatpush2.msra.mxu0 %v336
      %2242 = vmatprep.subr.mxu0 0.0
      %2243 = vmatpush2.msra.mxu0 %v335
      %2244 = vmatprep.subr.mxu0 0.0
      %2245 = vmatpush2.msra.mxu0 %v334
      %2246 = vmatprep.subr.mxu0 0.0
      %2247 = vmatpush2.msra.mxu0 %v333
      %2248 = vmatprep.subr.mxu0 0.0
      %2249 = vmatpush2.msra.mxu0 %v332
      %2250 = vmatprep.subr.mxu0 0.0
      %2251 = vmatpush2.msra.mxu0 %v331
      %2252 = vmatprep.subr.mxu0 0.0
      %2253 = vmatpush2.msra.mxu0 %v330
      %2254 = vmatprep.mubr.f32.mxu0 %v2187
      %2255 = vmatmul.mubr.f32.gmra.mxu0 %v2186
      %v2256 = vpop.f32.mrf.mxu0
      %v2257 = vadd.f32 0.0, %v2256
      %v2258 = vpop.f32.mrf.mxu0
      %2259 = vdwg.mxu0
      %2260 = vmatprep.subr.mxu0 0.0
      %2261 = vmatpush1.msra.mxu0 %v361
      %2262 = vmatprep.subr.mxu0 0.0
      %2263 = vmatpush1.msra.mxu0 %v360
      %2264 = vmatprep.subr.mxu0 0.0
      %2265 = vmatpush1.msra.mxu0 %v359
      %2266 = vmatprep.subr.mxu0 0.0
      %2267 = vmatpush1.msra.mxu0 %v358
      %2268 = vmatprep.subr.mxu0 0.0
      %2269 = vmatpush1.msra.mxu0 %v357
      %2270 = vmatprep.subr.mxu0 0.0
      %2271 = vmatpush1.msra.mxu0 %v356
      %2272 = vmatprep.subr.mxu0 0.0
      %2273 = vmatpush1.msra.mxu0 %v355
      %2274 = vmatprep.subr.mxu0 0.0
      %2275 = vmatpush1.msra.mxu0 %v354
      %2276 = vmatprep.subr.mxu0 0.0
      %2277 = vmatpush1.msra.mxu0 %v353
      %2278 = vmatprep.subr.mxu0 0.0
      %2279 = vmatpush1.msra.mxu0 %v352
      %2280 = vmatprep.subr.mxu0 0.0
      %2281 = vmatpush1.msra.mxu0 %v351
      %2282 = vmatprep.subr.mxu0 0.0
      %2283 = vmatpush1.msra.mxu0 %v350
      %2284 = vmatprep.subr.mxu0 0.0
      %2285 = vmatpush1.msra.mxu0 %v349
      %2286 = vmatprep.subr.mxu0 0.0
      %2287 = vmatpush1.msra.mxu0 %v348
      %2288 = vmatprep.subr.mxu0 0.0
      %2289 = vmatpush1.msra.mxu0 %v347
      %2290 = vmatprep.subr.mxu0 0.0
      %2291 = vmatpush1.msra.mxu0 %v346
      %2292 = vmatprep.subr.mxu0 0.0
      %2293 = vmatpush2.msra.mxu0 %v377
      %2294 = vmatprep.subr.mxu0 0.0
      %2295 = vmatpush2.msra.mxu0 %v376
      %2296 = vmatprep.subr.mxu0 0.0
      %2297 = vmatpush2.msra.mxu0 %v375
      %2298 = vmatprep.subr.mxu0 0.0
      %2299 = vmatpush2.msra.mxu0 %v374
      %2300 = vmatprep.subr.mxu0 0.0
      %2301 = vmatpush2.msra.mxu0 %v373
      %2302 = vmatprep.subr.mxu0 0.0
      %2303 = vmatpush2.msra.mxu0 %v372
      %2304 = vmatprep.subr.mxu0 0.0
      %2305 = vmatpush2.msra.mxu0 %v371
      %2306 = vmatprep.subr.mxu0 0.0
      %2307 = vmatpush2.msra.mxu0 %v370
      %2308 = vmatprep.subr.mxu0 0.0
      %2309 = vmatpush2.msra.mxu0 %v369
      %2310 = vmatprep.subr.mxu0 0.0
      %2311 = vmatpush2.msra.mxu0 %v368
      %2312 = vmatprep.subr.mxu0 0.0
      %2313 = vmatpush2.msra.mxu0 %v367
      %2314 = vmatprep.subr.mxu0 0.0
      %2315 = vmatpush2.msra.mxu0 %v366
      %2316 = vmatprep.subr.mxu0 0.0
      %2317 = vmatpush2.msra.mxu0 %v365
      %2318 = vmatprep.subr.mxu0 0.0
      %2319 = vmatpush2.msra.mxu0 %v364
      %2320 = vmatprep.subr.mxu0 0.0
      %2321 = vmatpush2.msra.mxu0 %v363
      %2322 = vmatprep.subr.mxu0 0.0
      %2323 = vmatpush2.msra.mxu0 %v362
      %2324 = vmatprep.mubr.f32.mxu0 %v2189
      %2325 = vmatmul.mubr.f32.gmra.mxu0 %v2188
      %v2326 = vpop.f32.mrf.mxu0
      %v2327 = vadd.f32 %v2257, %v2326
      %v2328 = vpop.f32.mrf.mxu0
      %2329 = vdwg.mxu0
      %vm2330 = vcmask 982016
      %v2332 = vsel %vm2330, %v490, 0
      %2334 = vmatprep.subr.mxu0 0.0
      %2335 = vmatpush1.msra.mxu0 %v506
      %2336 = vmatprep.subr.mxu0 0.0
      %2337 = vmatpush1.msra.mxu0 %v505
      %2338 = vmatprep.subr.mxu0 0.0
      %2339 = vmatpush1.msra.mxu0 %v504
      %2340 = vmatprep.subr.mxu0 0.0
      %2341 = vmatpush1.msra.mxu0 %v503
      %2342 = vmatprep.subr.mxu0 0.0
      %2343 = vmatpush1.msra.mxu0 %v502
      %2344 = vmatprep.subr.mxu0 0.0
      %2345 = vmatpush1.msra.mxu0 %v501
      %2346 = vmatprep.subr.mxu0 0.0
      %2347 = vmatpush1.msra.mxu0 %v500
      %2348 = vmatprep.subr.mxu0 0.0
      %2349 = vmatpush1.msra.mxu0 %v499
      %2350 = vmatprep.subr.mxu0 0.0
      %2351 = vmatpush1.msra.mxu0 %v498
      %2352 = vmatprep.subr.mxu0 0.0
      %2353 = vmatpush1.msra.mxu0 %v497
      %2354 = vmatprep.subr.mxu0 0.0
      %2355 = vmatpush1.msra.mxu0 %v496
      %2356 = vmatprep.subr.mxu0 0.0
      %2357 = vmatpush1.msra.mxu0 %v495
      %2358 = vmatprep.subr.mxu0 0.0
      %2359 = vmatpush1.msra.mxu0 %v494
      %2360 = vmatprep.subr.mxu0 0.0
      %2361 = vmatpush1.msra.mxu0 %v493
      %2362 = vmatprep.subr.mxu0 0.0
      %2363 = vmatpush1.msra.mxu0 %v492
      %2364 = vmatprep.subr.mxu0 0.0
      %2365 = vmatpush1.msra.mxu0 %v491
      %2366 = vmatprep.subr.mxu0 0.0
      %2367 = vmatpush2.msra.mxu0 %v522
      %2368 = vmatprep.subr.mxu0 0.0
      %2369 = vmatpush2.msra.mxu0 %v521
      %2370 = vmatprep.subr.mxu0 0.0
      %2371 = vmatpush2.msra.mxu0 %v520
      %2372 = vmatprep.subr.mxu0 0.0
      %2373 = vmatpush2.msra.mxu0 %v519
      %2374 = vmatprep.subr.mxu0 0.0
      %2375 = vmatpush2.msra.mxu0 %v518
      %2376 = vmatprep.subr.mxu0 0.0
      %2377 = vmatpush2.msra.mxu0 %v517
      %2378 = vmatprep.subr.mxu0 0.0
      %2379 = vmatpush2.msra.mxu0 %v516
      %2380 = vmatprep.subr.mxu0 0.0
      %2381 = vmatpush2.msra.mxu0 %v515
      %2382 = vmatprep.subr.mxu0 0.0
      %2383 = vmatpush2.msra.mxu0 %v514
      %2384 = vmatprep.subr.mxu0 0.0
      %2385 = vmatpush2.msra.mxu0 %v513
      %2386 = vmatprep.subr.mxu0 0.0
      %2387 = vmatpush2.msra.mxu0 %v512
      %2388 = vmatprep.subr.mxu0 0.0
      %2389 = vmatpush2.msra.mxu0 %v511
      %2390 = vmatprep.subr.mxu0 0.0
      %2391 = vmatpush2.msra.mxu0 %v510
      %2392 = vmatprep.subr.mxu0 0.0
      %2393 = vmatpush2.msra.mxu0 %v509
      %2394 = vmatprep.subr.mxu0 0.0
      %2395 = vmatpush2.msra.mxu0 %v508
      %2396 = vmatprep.subr.mxu0 0.0
      %2397 = vmatpush2.msra.mxu0 %v507
      %2398 = vmatprep.mubr.f32.mxu0 %v386
      %2399 = vmatmul.mubr.f32.gmra.mxu0 %v385
      %v2400 = vpop.f32.mrf.mxu0
      %v2401 = vadd.f32 %v2327, %v2400
      %v2402 = vpop.f32.mrf.mxu0
      %2403 = vdwg.mxu0
      %2404 = vmatprep.subr.mxu0 0.0
      %2405 = vmatpush1.msra.mxu0 %v538
      %2406 = vmatprep.subr.mxu0 0.0
      %2407 = vmatpush1.msra.mxu0 %v537
      %2408 = vmatprep.subr.mxu0 0.0
      %2409 = vmatpush1.msra.mxu0 %v536
      %2410 = vmatprep.subr.mxu0 0.0
      %2411 = vmatpush1.msra.mxu0 %v535
      %2412 = vmatprep.subr.mxu0 0.0
      %2413 = vmatpush1.msra.mxu0 %v534
      %2414 = vmatprep.subr.mxu0 0.0
      %2415 = vmatpush1.msra.mxu0 %v533
      %2416 = vmatprep.subr.mxu0 0.0
      %2417 = vmatpush1.msra.mxu0 %v532
      %2418 = vmatprep.subr.mxu0 0.0
      %2419 = vmatpush1.msra.mxu0 %v531
      %2420 = vmatprep.subr.mxu0 0.0
      %2421 = vmatpush1.msra.mxu0 %v530
      %2422 = vmatprep.subr.mxu0 0.0
      %2423 = vmatpush1.msra.mxu0 %v529
      %2424 = vmatprep.subr.mxu0 0.0
      %2425 = vmatpush1.msra.mxu0 %v528
      %2426 = vmatprep.subr.mxu0 0.0
      %2427 = vmatpush1.msra.mxu0 %v527
      %2428 = vmatprep.subr.mxu0 0.0
      %2429 = vmatpush1.msra.mxu0 %v526
      %2430 = vmatprep.subr.mxu0 0.0
      %2431 = vmatpush1.msra.mxu0 %v525
      %2432 = vmatprep.subr.mxu0 0.0
      %2433 = vmatpush1.msra.mxu0 %v524
      %2434 = vmatprep.subr.mxu0 0.0
      %2435 = vmatpush1.msra.mxu0 %v523
      %2436 = vmatprep.subr.mxu0 0.0
      %2437 = vmatpush2.msra.mxu0 %v554
      %2438 = vmatprep.subr.mxu0 0.0
      %2439 = vmatpush2.msra.mxu0 %v553
      %2440 = vmatprep.subr.mxu0 0.0
      %2441 = vmatpush2.msra.mxu0 %v552
      %2442 = vmatprep.subr.mxu0 0.0
      %2443 = vmatpush2.msra.mxu0 %v551
      %2444 = vmatprep.subr.mxu0 0.0
      %2445 = vmatpush2.msra.mxu0 %v550
      %2446 = vmatprep.subr.mxu0 0.0
      %2447 = vmatpush2.msra.mxu0 %v549
      %2448 = vmatprep.subr.mxu0 0.0
      %2449 = vmatpush2.msra.mxu0 %v548
      %2450 = vmatprep.subr.mxu0 0.0
      %2451 = vmatpush2.msra.mxu0 %v547
      %2452 = vmatprep.subr.mxu0 0.0
      %2453 = vmatpush2.msra.mxu0 %v546
      %2454 = vmatprep.subr.mxu0 0.0
      %2455 = vmatpush2.msra.mxu0 %v545
      %2456 = vmatprep.subr.mxu0 0.0
      %2457 = vmatpush2.msra.mxu0 %v544
      %2458 = vmatprep.subr.mxu0 0.0
      %2459 = vmatpush2.msra.mxu0 %v543
      %2460 = vmatprep.subr.mxu0 0.0
      %2461 = vmatpush2.msra.mxu0 %v542
      %2462 = vmatprep.subr.mxu0 0.0
      %2463 = vmatpush2.msra.mxu0 %v541
      %2464 = vmatprep.subr.mxu0 0.0
      %2465 = vmatpush2.msra.mxu0 %v540
      %2466 = vmatprep.subr.mxu0 0.0
      %2467 = vmatpush2.msra.mxu0 %v539
      %2468 = vmatprep.mubr.f32.mxu0 %v388
      %2469 = vmatmul.mubr.f32.gmra.mxu0 %v387
      %v2470 = vpop.f32.mrf.mxu0
      %v2471 = vadd.f32 %v2401, %v2470
      %v2472 = vpop.f32.mrf.mxu0
      %2473 = vdwg.mxu0
      %2474 = vmatprep.subr.mxu0 0.0
      %2475 = vmatpush1.msra.mxu0 %v570
      %2476 = vmatprep.subr.mxu0 0.0
      %2477 = vmatpush1.msra.mxu0 %v569
      %2478 = vmatprep.subr.mxu0 0.0
      %2479 = vmatpush1.msra.mxu0 %v568
      %2480 = vmatprep.subr.mxu0 0.0
      %2481 = vmatpush1.msra.mxu0 %v567
      %2482 = vmatprep.subr.mxu0 0.0
      %2483 = vmatpush1.msra.mxu0 %v566
      %2484 = vmatprep.subr.mxu0 0.0
      %2485 = vmatpush1.msra.mxu0 %v565
      %2486 = vmatprep.subr.mxu0 0.0
      %2487 = vmatpush1.msra.mxu0 %v564
      %2488 = vmatprep.subr.mxu0 0.0
      %2489 = vmatpush1.msra.mxu0 %v563
      %2490 = vmatprep.subr.mxu0 0.0
      %2491 = vmatpush1.msra.mxu0 %v562
      %2492 = vmatprep.subr.mxu0 0.0
      %2493 = vmatpush1.msra.mxu0 %v561
      %2494 = vmatprep.subr.mxu0 0.0
      %2495 = vmatpush1.msra.mxu0 %v560
      %2496 = vmatprep.subr.mxu0 0.0
      %2497 = vmatpush1.msra.mxu0 %v559
      %2498 = vmatprep.subr.mxu0 0.0
      %2499 = vmatpush1.msra.mxu0 %v558
      %2500 = vmatprep.subr.mxu0 0.0
      %2501 = vmatpush1.msra.mxu0 %v557
      %2502 = vmatprep.subr.mxu0 0.0
      %2503 = vmatpush1.msra.mxu0 %v556
      %2504 = vmatprep.subr.mxu0 0.0
      %2505 = vmatpush1.msra.mxu0 %v555
      %2506 = vmatprep.subr.mxu0 0.0
      %2507 = vmatpush2.msra.mxu0 %v586
      %2508 = vmatprep.subr.mxu0 0.0
      %2509 = vmatpush2.msra.mxu0 %v585
      %2510 = vmatprep.subr.mxu0 0.0
      %2511 = vmatpush2.msra.mxu0 %v584
      %2512 = vmatprep.subr.mxu0 0.0
      %2513 = vmatpush2.msra.mxu0 %v583
      %2514 = vmatprep.subr.mxu0 0.0
      %2515 = vmatpush2.msra.mxu0 %v582
      %2516 = vmatprep.subr.mxu0 0.0
      %2517 = vmatpush2.msra.mxu0 %v581
      %2518 = vmatprep.subr.mxu0 0.0
      %2519 = vmatpush2.msra.mxu0 %v580
      %2520 = vmatprep.subr.mxu0 0.0
      %2521 = vmatpush2.msra.mxu0 %v579
      %2522 = vmatprep.subr.mxu0 0.0
      %2523 = vmatpush2.msra.mxu0 %v578
      %2524 = vmatprep.subr.mxu0 0.0
      %2525 = vmatpush2.msra.mxu0 %v577
      %2526 = vmatprep.subr.mxu0 0.0
      %2527 = vmatpush2.msra.mxu0 %v576
      %2528 = vmatprep.subr.mxu0 0.0
      %2529 = vmatpush2.msra.mxu0 %v575
      %2530 = vmatprep.subr.mxu0 0.0
      %2531 = vmatpush2.msra.mxu0 %v574
      %2532 = vmatprep.subr.mxu0 0.0
      %2533 = vmatpush2.msra.mxu0 %v573
      %2534 = vmatprep.subr.mxu0 0.0
      %2535 = vmatpush2.msra.mxu0 %v572
      %2536 = vmatprep.subr.mxu0 0.0
      %2537 = vmatpush2.msra.mxu0 %v571
      %2538 = vmatprep.mubr.f32.mxu0 %v390
      %2539 = vmatmul.mubr.f32.gmra.mxu0 %v389
      %v2540 = vpop.f32.mrf.mxu0
      %v2541 = vadd.f32 %v2471, %v2540
      %v2542 = vpop.f32.mrf.mxu0
      %2543 = vdwg.mxu0
      %2544 = vmatprep.subr.mxu0 0.0
      %2545 = vmatpush1.msra.mxu0 %v602
      %2546 = vmatprep.subr.mxu0 0.0
      %2547 = vmatpush1.msra.mxu0 %v601
      %2548 = vmatprep.subr.mxu0 0.0
      %2549 = vmatpush1.msra.mxu0 %v600
      %2550 = vmatprep.subr.mxu0 0.0
      %2551 = vmatpush1.msra.mxu0 %v599
      %2552 = vmatprep.subr.mxu0 0.0
      %2553 = vmatpush1.msra.mxu0 %v598
      %2554 = vmatprep.subr.mxu0 0.0
      %2555 = vmatpush1.msra.mxu0 %v597
      %2556 = vmatprep.subr.mxu0 0.0
      %2557 = vmatpush1.msra.mxu0 %v596
      %2558 = vmatprep.subr.mxu0 0.0
      %2559 = vmatpush1.msra.mxu0 %v595
      %2560 = vmatprep.subr.mxu0 0.0
      %2561 = vmatpush1.msra.mxu0 %v594
      %2562 = vmatprep.subr.mxu0 0.0
      %2563 = vmatpush1.msra.mxu0 %v593
      %2564 = vmatprep.subr.mxu0 0.0
      %2565 = vmatpush1.msra.mxu0 %v592
      %2566 = vmatprep.subr.mxu0 0.0
      %2567 = vmatpush1.msra.mxu0 %v591
      %2568 = vmatprep.subr.mxu0 0.0
      %2569 = vmatpush1.msra.mxu0 %v590
      %2570 = vmatprep.subr.mxu0 0.0
      %2571 = vmatpush1.msra.mxu0 %v589
      %2572 = vmatprep.subr.mxu0 0.0
      %2573 = vmatpush1.msra.mxu0 %v588
      %2574 = vmatprep.subr.mxu0 0.0
      %2575 = vmatpush1.msra.mxu0 %v587
      %2576 = vmatprep.subr.mxu0 0.0
      %2577 = vmatpush2.msra.mxu0 %v618
      %2578 = vmatprep.subr.mxu0 0.0
      %2579 = vmatpush2.msra.mxu0 %v617
      %2580 = vmatprep.subr.mxu0 0.0
      %2581 = vmatpush2.msra.mxu0 %v616
      %2582 = vmatprep.subr.mxu0 0.0
      %2583 = vmatpush2.msra.mxu0 %v615
      %2584 = vmatprep.subr.mxu0 0.0
      %2585 = vmatpush2.msra.mxu0 %v614
      %2586 = vmatprep.subr.mxu0 0.0
      %2587 = vmatpush2.msra.mxu0 %v613
      %2588 = vmatprep.subr.mxu0 0.0
      %2589 = vmatpush2.msra.mxu0 %v612
      %2590 = vmatprep.subr.mxu0 0.0
      %2591 = vmatpush2.msra.mxu0 %v611
      %2592 = vmatprep.subr.mxu0 0.0
      %2593 = vmatpush2.msra.mxu0 %v610
      %2594 = vmatprep.subr.mxu0 0.0
      %2595 = vmatpush2.msra.mxu0 %v609
      %2596 = vmatprep.subr.mxu0 0.0
      %2597 = vmatpush2.msra.mxu0 %v608
      %2598 = vmatprep.subr.mxu0 0.0
      %2599 = vmatpush2.msra.mxu0 %v607
      %2600 = vmatprep.subr.mxu0 0.0
      %2601 = vmatpush2.msra.mxu0 %v606
      %2602 = vmatprep.subr.mxu0 0.0
      %2603 = vmatpush2.msra.mxu0 %v605
      %2604 = vmatprep.subr.mxu0 0.0
      %2605 = vmatpush2.msra.mxu0 %v604
      %2606 = vmatprep.subr.mxu0 0.0
      %2607 = vmatpush2.msra.mxu0 %v603
      %2608 = vmatprep.mubr.f32.mxu0 %v392
      %2609 = vmatmul.mubr.f32.gmra.mxu0 %v391
      %v2610 = vpop.f32.mrf.mxu0
      %v2611 = vadd.f32 %v2541, %v2610
      %v2612 = vpop.f32.mrf.mxu0
      %2613 = vdwg.mxu0
      %2614 = vmatprep.subr.mxu0 0.0
      %2615 = vmatpush1.msra.mxu0 %v634
      %2616 = vmatprep.subr.mxu0 0.0
      %2617 = vmatpush1.msra.mxu0 %v633
      %2618 = vmatprep.subr.mxu0 0.0
      %2619 = vmatpush1.msra.mxu0 %v632
      %2620 = vmatprep.subr.mxu0 0.0
      %2621 = vmatpush1.msra.mxu0 %v631
      %2622 = vmatprep.subr.mxu0 0.0
      %2623 = vmatpush1.msra.mxu0 %v630
      %2624 = vmatprep.subr.mxu0 0.0
      %2625 = vmatpush1.msra.mxu0 %v629
      %2626 = vmatprep.subr.mxu0 0.0
      %2627 = vmatpush1.msra.mxu0 %v628
      %2628 = vmatprep.subr.mxu0 0.0
      %2629 = vmatpush1.msra.mxu0 %v627
      %2630 = vmatprep.subr.mxu0 0.0
      %2631 = vmatpush1.msra.mxu0 %v626
      %2632 = vmatprep.subr.mxu0 0.0
      %2633 = vmatpush1.msra.mxu0 %v625
      %2634 = vmatprep.subr.mxu0 0.0
      %2635 = vmatpush1.msra.mxu0 %v624
      %2636 = vmatprep.subr.mxu0 0.0
      %2637 = vmatpush1.msra.mxu0 %v623
      %2638 = vmatprep.subr.mxu0 0.0
      %2639 = vmatpush1.msra.mxu0 %v622
      %2640 = vmatprep.subr.mxu0 0.0
      %2641 = vmatpush1.msra.mxu0 %v621
      %2642 = vmatprep.subr.mxu0 0.0
      %2643 = vmatpush1.msra.mxu0 %v620
      %2644 = vmatprep.subr.mxu0 0.0
      %2645 = vmatpush1.msra.mxu0 %v619
      %2646 = vmatprep.subr.mxu0 0.0
      %2647 = vmatpush2.msra.mxu0 %v650
      %2648 = vmatprep.subr.mxu0 0.0
      %2649 = vmatpush2.msra.mxu0 %v649
      %2650 = vmatprep.subr.mxu0 0.0
      %2651 = vmatpush2.msra.mxu0 %v648
      %2652 = vmatprep.subr.mxu0 0.0
      %2653 = vmatpush2.msra.mxu0 %v647
      %2654 = vmatprep.subr.mxu0 0.0
      %2655 = vmatpush2.msra.mxu0 %v646
      %2656 = vmatprep.subr.mxu0 0.0
      %2657 = vmatpush2.msra.mxu0 %v645
      %2658 = vmatprep.subr.mxu0 0.0
      %2659 = vmatpush2.msra.mxu0 %v644
      %2660 = vmatprep.subr.mxu0 0.0
      %2661 = vmatpush2.msra.mxu0 %v643
      %2662 = vmatprep.subr.mxu0 0.0
      %2663 = vmatpush2.msra.mxu0 %v642
      %2664 = vmatprep.subr.mxu0 0.0
      %2665 = vmatpush2.msra.mxu0 %v641
      %2666 = vmatprep.subr.mxu0 0.0
      %2667 = vmatpush2.msra.mxu0 %v640
      %2668 = vmatprep.subr.mxu0 0.0
      %2669 = vmatpush2.msra.mxu0 %v639
      %2670 = vmatprep.subr.mxu0 0.0
      %2671 = vmatpush2.msra.mxu0 %v638
      %2672 = vmatprep.subr.mxu0 0.0
      %2673 = vmatpush2.msra.mxu0 %v637
      %2674 = vmatprep.subr.mxu0 0.0
      %2675 = vmatpush2.msra.mxu0 %v636
      %2676 = vmatprep.subr.mxu0 0.0
      %2677 = vmatpush2.msra.mxu0 %v635
      %2678 = vmatprep.mubr.f32.mxu0 %v394
      %2679 = vmatmul.mubr.f32.gmra.mxu0 %v393
      %v2680 = vpop.f32.mrf.mxu0
      %v2681 = vadd.f32 %v2611, %v2680
      %v2682 = vpop.f32.mrf.mxu0
      %2683 = vdwg.mxu0
      %2684 = vmatprep.subr.mxu0 0.0
      %2685 = vmatpush1.msra.mxu0 %v666
      %2686 = vmatprep.subr.mxu0 0.0
      %2687 = vmatpush1.msra.mxu0 %v665
      %2688 = vmatprep.subr.mxu0 0.0
      %2689 = vmatpush1.msra.mxu0 %v664
      %2690 = vmatprep.subr.mxu0 0.0
      %2691 = vmatpush1.msra.mxu0 %v663
      %2692 = vmatprep.subr.mxu0 0.0
      %2693 = vmatpush1.msra.mxu0 %v662
      %2694 = vmatprep.subr.mxu0 0.0
      %2695 = vmatpush1.msra.mxu0 %v661
      %2696 = vmatprep.subr.mxu0 0.0
      %2697 = vmatpush1.msra.mxu0 %v660
      %2698 = vmatprep.subr.mxu0 0.0
      %2699 = vmatpush1.msra.mxu0 %v659
      %2700 = vmatprep.subr.mxu0 0.0
      %2701 = vmatpush1.msra.mxu0 %v658
      %2702 = vmatprep.subr.mxu0 0.0
      %2703 = vmatpush1.msra.mxu0 %v657
      %2704 = vmatprep.subr.mxu0 0.0
      %2705 = vmatpush1.msra.mxu0 %v656
      %2706 = vmatprep.subr.mxu0 0.0
      %2707 = vmatpush1.msra.mxu0 %v655
      %2708 = vmatprep.subr.mxu0 0.0
      %2709 = vmatpush1.msra.mxu0 %v654
      %2710 = vmatprep.subr.mxu0 0.0
      %2711 = vmatpush1.msra.mxu0 %v653
      %2712 = vmatprep.subr.mxu0 0.0
      %2713 = vmatpush1.msra.mxu0 %v652
      %2714 = vmatprep.subr.mxu0 0.0
      %2715 = vmatpush1.msra.mxu0 %v651
      %2716 = vmatprep.subr.mxu0 0.0
      %2717 = vmatpush2.msra.mxu0 %v682
      %2718 = vmatprep.subr.mxu0 0.0
      %2719 = vmatpush2.msra.mxu0 %v681
      %2720 = vmatprep.subr.mxu0 0.0
      %2721 = vmatpush2.msra.mxu0 %v680
      %2722 = vmatprep.subr.mxu0 0.0
      %2723 = vmatpush2.msra.mxu0 %v679
      %2724 = vmatprep.subr.mxu0 0.0
      %2725 = vmatpush2.msra.mxu0 %v678
      %2726 = vmatprep.subr.mxu0 0.0
      %2727 = vmatpush2.msra.mxu0 %v677
      %2728 = vmatprep.subr.mxu0 0.0
      %2729 = vmatpush2.msra.mxu0 %v676
      %2730 = vmatprep.subr.mxu0 0.0
      %2731 = vmatpush2.msra.mxu0 %v675
      %2732 = vmatprep.subr.mxu0 0.0
      %2733 = vmatpush2.msra.mxu0 %v674
      %2734 = vmatprep.subr.mxu0 0.0
      %2735 = vmatpush2.msra.mxu0 %v673
      %2736 = vmatprep.subr.mxu0 0.0
      %2737 = vmatpush2.msra.mxu0 %v672
      %2738 = vmatprep.subr.mxu0 0.0
      %2739 = vmatpush2.msra.mxu0 %v671
      %2740 = vmatprep.subr.mxu0 0.0
      %2741 = vmatpush2.msra.mxu0 %v670
      %2742 = vmatprep.subr.mxu0 0.0
      %2743 = vmatpush2.msra.mxu0 %v669
      %2744 = vmatprep.subr.mxu0 0.0
      %2745 = vmatpush2.msra.mxu0 %v668
      %2746 = vmatprep.subr.mxu0 0.0
      %2747 = vmatpush2.msra.mxu0 %v667
      %2748 = vmatprep.mubr.f32.mxu0 %v396
      %2749 = vmatmul.mubr.f32.gmra.mxu0 %v395
      %v2750 = vpop.f32.mrf.mxu0
      %v2751 = vadd.f32 %v2681, %v2750
      %v2752 = vpop.f32.mrf.mxu0
      %2753 = vdwg.mxu0
      %2754 = vmatprep.subr.mxu0 0.0
      %2755 = vmatpush1.msra.mxu0 %v698
      %2756 = vmatprep.subr.mxu0 0.0
      %2757 = vmatpush1.msra.mxu0 %v697
      %2758 = vmatprep.subr.mxu0 0.0
      %2759 = vmatpush1.msra.mxu0 %v696
      %2760 = vmatprep.subr.mxu0 0.0
      %2761 = vmatpush1.msra.mxu0 %v695
      %2762 = vmatprep.subr.mxu0 0.0
      %2763 = vmatpush1.msra.mxu0 %v694
      %2764 = vmatprep.subr.mxu0 0.0
      %2765 = vmatpush1.msra.mxu0 %v693
      %2766 = vmatprep.subr.mxu0 0.0
      %2767 = vmatpush1.msra.mxu0 %v692
      %2768 = vmatprep.subr.mxu0 0.0
      %2769 = vmatpush1.msra.mxu0 %v691
      %2770 = vmatprep.subr.mxu0 0.0
      %2771 = vmatpush1.msra.mxu0 %v690
      %2772 = vmatprep.subr.mxu0 0.0
      %2773 = vmatpush1.msra.mxu0 %v689
      %2774 = vmatprep.subr.mxu0 0.0
      %2775 = vmatpush1.msra.mxu0 %v688
      %2776 = vmatprep.subr.mxu0 0.0
      %2777 = vmatpush1.msra.mxu0 %v687
      %2778 = vmatprep.subr.mxu0 0.0
      %2779 = vmatpush1.msra.mxu0 %v686
      %2780 = vmatprep.subr.mxu0 0.0
      %2781 = vmatpush1.msra.mxu0 %v685
      %2782 = vmatprep.subr.mxu0 0.0
      %2783 = vmatpush1.msra.mxu0 %v684
      %2784 = vmatprep.subr.mxu0 0.0
      %2785 = vmatpush1.msra.mxu0 %v683
      %2786 = vmatprep.subr.mxu0 0.0
      %2787 = vmatpush2.msra.mxu0 %v714
      %2788 = vmatprep.subr.mxu0 0.0
      %2789 = vmatpush2.msra.mxu0 %v713
      %2790 = vmatprep.subr.mxu0 0.0
      %2791 = vmatpush2.msra.mxu0 %v712
      %2792 = vmatprep.subr.mxu0 0.0
      %2793 = vmatpush2.msra.mxu0 %v711
      %2794 = vmatprep.subr.mxu0 0.0
      %2795 = vmatpush2.msra.mxu0 %v710
      %2796 = vmatprep.subr.mxu0 0.0
      %2797 = vmatpush2.msra.mxu0 %v709
      %2798 = vmatprep.subr.mxu0 0.0
      %2799 = vmatpush2.msra.mxu0 %v708
      %2800 = vmatprep.subr.mxu0 0.0
      %2801 = vmatpush2.msra.mxu0 %v707
      %2802 = vmatprep.subr.mxu0 0.0
      %2803 = vmatpush2.msra.mxu0 %v706
      %2804 = vmatprep.subr.mxu0 0.0
      %2805 = vmatpush2.msra.mxu0 %v705
      %2806 = vmatprep.subr.mxu0 0.0
      %2807 = vmatpush2.msra.mxu0 %v704
      %2808 = vmatprep.subr.mxu0 0.0
      %2809 = vmatpush2.msra.mxu0 %v703
      %2810 = vmatprep.subr.mxu0 0.0
      %2811 = vmatpush2.msra.mxu0 %v702
      %2812 = vmatprep.subr.mxu0 0.0
      %2813 = vmatpush2.msra.mxu0 %v701
      %2814 = vmatprep.subr.mxu0 0.0
      %2815 = vmatpush2.msra.mxu0 %v700
      %2816 = vmatprep.subr.mxu0 0.0
      %2817 = vmatpush2.msra.mxu0 %v699
      %2818 = vmatprep.mubr.f32.mxu0 %v398
      %2819 = vmatmul.mubr.f32.gmra.mxu0 %v397
      %v2820 = vpop.f32.mrf.mxu0
      %v2821 = vadd.f32 %v2751, %v2820
      %v2822 = vpop.f32.mrf.mxu0
      %2823 = vdwg.mxu0
      %2824 = vmatprep.subr.mxu0 0.0
      %2825 = vmatpush1.msra.mxu0 %v730
      %2826 = vmatprep.subr.mxu0 0.0
      %2827 = vmatpush1.msra.mxu0 %v729
      %2828 = vmatprep.subr.mxu0 0.0
      %2829 = vmatpush1.msra.mxu0 %v728
      %2830 = vmatprep.subr.mxu0 0.0
      %2831 = vmatpush1.msra.mxu0 %v727
      %2832 = vmatprep.subr.mxu0 0.0
      %2833 = vmatpush1.msra.mxu0 %v726
      %2834 = vmatprep.subr.mxu0 0.0
      %2835 = vmatpush1.msra.mxu0 %v725
      %2836 = vmatprep.subr.mxu0 0.0
      %2837 = vmatpush1.msra.mxu0 %v724
      %2838 = vmatprep.subr.mxu0 0.0
      %2839 = vmatpush1.msra.mxu0 %v723
      %2840 = vmatprep.subr.mxu0 0.0
      %2841 = vmatpush1.msra.mxu0 %v722
      %2842 = vmatprep.subr.mxu0 0.0
      %2843 = vmatpush1.msra.mxu0 %v721
      %2844 = vmatprep.subr.mxu0 0.0
      %2845 = vmatpush1.msra.mxu0 %v720
      %2846 = vmatprep.subr.mxu0 0.0
      %2847 = vmatpush1.msra.mxu0 %v719
      %2848 = vmatprep.subr.mxu0 0.0
      %2849 = vmatpush1.msra.mxu0 %v718
      %2850 = vmatprep.subr.mxu0 0.0
      %2851 = vmatpush1.msra.mxu0 %v717
      %2852 = vmatprep.subr.mxu0 0.0
      %2853 = vmatpush1.msra.mxu0 %v716
      %2854 = vmatprep.subr.mxu0 0.0
      %2855 = vmatpush1.msra.mxu0 %v715
      %2856 = vmatprep.subr.mxu0 0.0
      %2857 = vmatpush2.msra.mxu0 %v746
      %2858 = vmatprep.subr.mxu0 0.0
      %2859 = vmatpush2.msra.mxu0 %v745
      %2860 = vmatprep.subr.mxu0 0.0
      %2861 = vmatpush2.msra.mxu0 %v744
      %2862 = vmatprep.subr.mxu0 0.0
      %2863 = vmatpush2.msra.mxu0 %v743
      %2864 = vmatprep.subr.mxu0 0.0
      %2865 = vmatpush2.msra.mxu0 %v742
      %2866 = vmatprep.subr.mxu0 0.0
      %2867 = vmatpush2.msra.mxu0 %v741
      %2868 = vmatprep.subr.mxu0 0.0
      %2869 = vmatpush2.msra.mxu0 %v740
      %2870 = vmatprep.subr.mxu0 0.0
      %2871 = vmatpush2.msra.mxu0 %v739
      %2872 = vmatprep.subr.mxu0 0.0
      %2873 = vmatpush2.msra.mxu0 %v738
      %2874 = vmatprep.subr.mxu0 0.0
      %2875 = vmatpush2.msra.mxu0 %v737
      %2876 = vmatprep.subr.mxu0 0.0
      %2877 = vmatpush2.msra.mxu0 %v736
      %2878 = vmatprep.subr.mxu0 0.0
      %2879 = vmatpush2.msra.mxu0 %v735
      %2880 = vmatprep.subr.mxu0 0.0
      %2881 = vmatpush2.msra.mxu0 %v734
      %2882 = vmatprep.subr.mxu0 0.0
      %2883 = vmatpush2.msra.mxu0 %v733
      %2884 = vmatprep.subr.mxu0 0.0
      %2885 = vmatpush2.msra.mxu0 %v732
      %2886 = vmatprep.subr.mxu0 0.0
      %2887 = vmatpush2.msra.mxu0 %v731
      %2888 = vmatprep.mubr.f32.mxu0 %v400
      %2889 = vmatmul.mubr.f32.gmra.mxu0 %v399
      %v2890 = vpop.f32.mrf.mxu0
      %v2891 = vadd.f32 %v2821, %v2890
      %v2892 = vpop.f32.mrf.mxu0
      %2893 = vdwg.mxu0
      %2894 = vmatprep.subr.mxu0 0.0
      %2895 = vmatpush1.msra.mxu0 %v762
      %2896 = vmatprep.subr.mxu0 0.0
      %2897 = vmatpush1.msra.mxu0 %v761
      %2898 = vmatprep.subr.mxu0 0.0
      %2899 = vmatpush1.msra.mxu0 %v760
      %2900 = vmatprep.subr.mxu0 0.0
      %2901 = vmatpush1.msra.mxu0 %v759
      %2902 = vmatprep.subr.mxu0 0.0
      %2903 = vmatpush1.msra.mxu0 %v758
      %2904 = vmatprep.subr.mxu0 0.0
      %2905 = vmatpush1.msra.mxu0 %v757
      %2906 = vmatprep.subr.mxu0 0.0
      %2907 = vmatpush1.msra.mxu0 %v756
      %2908 = vmatprep.subr.mxu0 0.0
      %2909 = vmatpush1.msra.mxu0 %v755
      %2910 = vmatprep.subr.mxu0 0.0
      %2911 = vmatpush1.msra.mxu0 %v754
      %2912 = vmatprep.subr.mxu0 0.0
      %2913 = vmatpush1.msra.mxu0 %v753
      %2914 = vmatprep.subr.mxu0 0.0
      %2915 = vmatpush1.msra.mxu0 %v752
      %2916 = vmatprep.subr.mxu0 0.0
      %2917 = vmatpush1.msra.mxu0 %v751
      %2918 = vmatprep.subr.mxu0 0.0
      %2919 = vmatpush1.msra.mxu0 %v750
      %2920 = vmatprep.subr.mxu0 0.0
      %2921 = vmatpush1.msra.mxu0 %v749
      %2922 = vmatprep.subr.mxu0 0.0
      %2923 = vmatpush1.msra.mxu0 %v748
      %2924 = vmatprep.subr.mxu0 0.0
      %2925 = vmatpush1.msra.mxu0 %v747
      %2926 = vmatprep.subr.mxu0 0.0
      %2927 = vmatpush2.msra.mxu0 %v778
      %2928 = vmatprep.subr.mxu0 0.0
      %2929 = vmatpush2.msra.mxu0 %v777
      %2930 = vmatprep.subr.mxu0 0.0
      %2931 = vmatpush2.msra.mxu0 %v776
      %2932 = vmatprep.subr.mxu0 0.0
      %2933 = vmatpush2.msra.mxu0 %v775
      %2934 = vmatprep.subr.mxu0 0.0
      %2935 = vmatpush2.msra.mxu0 %v774
      %2936 = vmatprep.subr.mxu0 0.0
      %2937 = vmatpush2.msra.mxu0 %v773
      %2938 = vmatprep.subr.mxu0 0.0
      %2939 = vmatpush2.msra.mxu0 %v772
      %2940 = vmatprep.subr.mxu0 0.0
      %2941 = vmatpush2.msra.mxu0 %v771
      %2942 = vmatprep.subr.mxu0 0.0
      %2943 = vmatpush2.msra.mxu0 %v770
      %2944 = vmatprep.subr.mxu0 0.0
      %2945 = vmatpush2.msra.mxu0 %v769
      %2946 = vmatprep.subr.mxu0 0.0
      %2947 = vmatpush2.msra.mxu0 %v768
      %2948 = vmatprep.subr.mxu0 0.0
      %2949 = vmatpush2.msra.mxu0 %v767
      %2950 = vmatprep.subr.mxu0 0.0
      %2951 = vmatpush2.msra.mxu0 %v766
      %2952 = vmatprep.subr.mxu0 0.0
      %2953 = vmatpush2.msra.mxu0 %v765
      %2954 = vmatprep.subr.mxu0 0.0
      %2955 = vmatpush2.msra.mxu0 %v764
      %2956 = vmatprep.subr.mxu0 0.0
      %2957 = vmatpush2.msra.mxu0 %v763
      %2958 = vmatprep.mubr.f32.mxu0 %v402
      %2959 = vmatmul.mubr.f32.gmra.mxu0 %v401
      %v2960 = vpop.f32.mrf.mxu0
      %v2961 = vadd.f32 %v2891, %v2960
      %v2962 = vpop.f32.mrf.mxu0
      %2963 = vdwg.mxu0
      %2964 = vmatprep.subr.mxu0 0.0
      %2965 = vmatpush1.msra.mxu0 %v794
      %2966 = vmatprep.subr.mxu0 0.0
      %2967 = vmatpush1.msra.mxu0 %v793
      %2968 = vmatprep.subr.mxu0 0.0
      %2969 = vmatpush1.msra.mxu0 %v792
      %2970 = vmatprep.subr.mxu0 0.0
      %2971 = vmatpush1.msra.mxu0 %v791
      %2972 = vmatprep.subr.mxu0 0.0
      %2973 = vmatpush1.msra.mxu0 %v790
      %2974 = vmatprep.subr.mxu0 0.0
      %2975 = vmatpush1.msra.mxu0 %v789
      %2976 = vmatprep.subr.mxu0 0.0
      %2977 = vmatpush1.msra.mxu0 %v788
      %2978 = vmatprep.subr.mxu0 0.0
      %2979 = vmatpush1.msra.mxu0 %v787
      %2980 = vmatprep.subr.mxu0 0.0
      %2981 = vmatpush1.msra.mxu0 %v786
      %2982 = vmatprep.subr.mxu0 0.0
      %2983 = vmatpush1.msra.mxu0 %v785
      %2984 = vmatprep.subr.mxu0 0.0
      %2985 = vmatpush1.msra.mxu0 %v784
      %2986 = vmatprep.subr.mxu0 0.0
      %2987 = vmatpush1.msra.mxu0 %v783
      %2988 = vmatprep.subr.mxu0 0.0
      %2989 = vmatpush1.msra.mxu0 %v782
      %2990 = vmatprep.subr.mxu0 0.0
      %2991 = vmatpush1.msra.mxu0 %v781
      %2992 = vmatprep.subr.mxu0 0.0
      %2993 = vmatpush1.msra.mxu0 %v780
      %2994 = vmatprep.subr.mxu0 0.0
      %2995 = vmatpush1.msra.mxu0 %v779
      %2996 = vmatprep.subr.mxu0 0.0
      %2997 = vmatpush2.msra.mxu0 %v810
      %2998 = vmatprep.subr.mxu0 0.0
      %2999 = vmatpush2.msra.mxu0 %v809
      %3000 = vmatprep.subr.mxu0 0.0
      %3001 = vmatpush2.msra.mxu0 %v808
      %3002 = vmatprep.subr.mxu0 0.0
      %3003 = vmatpush2.msra.mxu0 %v807
      %3004 = vmatprep.subr.mxu0 0.0
      %3005 = vmatpush2.msra.mxu0 %v806
      %3006 = vmatprep.subr.mxu0 0.0
      %3007 = vmatpush2.msra.mxu0 %v805
      %3008 = vmatprep.subr.mxu0 0.0
      %3009 = vmatpush2.msra.mxu0 %v804
      %3010 = vmatprep.subr.mxu0 0.0
      %3011 = vmatpush2.msra.mxu0 %v803
      %3012 = vmatprep.subr.mxu0 0.0
      %3013 = vmatpush2.msra.mxu0 %v802
      %3014 = vmatprep.subr.mxu0 0.0
      %3015 = vmatpush2.msra.mxu0 %v801
      %3016 = vmatprep.subr.mxu0 0.0
      %3017 = vmatpush2.msra.mxu0 %v800
      %3018 = vmatprep.subr.mxu0 0.0
      %3019 = vmatpush2.msra.mxu0 %v799
      %3020 = vmatprep.subr.mxu0 0.0
      %3021 = vmatpush2.msra.mxu0 %v798
      %3022 = vmatprep.subr.mxu0 0.0
      %3023 = vmatpush2.msra.mxu0 %v797
      %3024 = vmatprep.subr.mxu0 0.0
      %3025 = vmatpush2.msra.mxu0 %v796
      %3026 = vmatprep.subr.mxu0 0.0
      %3027 = vmatpush2.msra.mxu0 %v795
      %3028 = vmatprep.mubr.f32.mxu0 %v404
      %3029 = vmatmul.mubr.f32.gmra.mxu0 %v403
      %v3030 = vpop.f32.mrf.mxu0
      %v3031 = vadd.f32 %v2961, %v3030
      %v3032 = vpop.f32.mrf.mxu0
      %3033 = vdwg.mxu0
      %3034 = vmatprep.subr.mxu0 0.0
      %3035 = vmatpush1.msra.mxu0 %v826
      %3036 = vmatprep.subr.mxu0 0.0
      %3037 = vmatpush1.msra.mxu0 %v825
      %3038 = vmatprep.subr.mxu0 0.0
      %3039 = vmatpush1.msra.mxu0 %v824
      %3040 = vmatprep.subr.mxu0 0.0
      %3041 = vmatpush1.msra.mxu0 %v823
      %3042 = vmatprep.subr.mxu0 0.0
      %3043 = vmatpush1.msra.mxu0 %v822
      %3044 = vmatprep.subr.mxu0 0.0
      %3045 = vmatpush1.msra.mxu0 %v821
      %3046 = vmatprep.subr.mxu0 0.0
      %3047 = vmatpush1.msra.mxu0 %v820
      %3048 = vmatprep.subr.mxu0 0.0
      %3049 = vmatpush1.msra.mxu0 %v819
      %3050 = vmatprep.subr.mxu0 0.0
      %3051 = vmatpush1.msra.mxu0 %v818
      %3052 = vmatprep.subr.mxu0 0.0
      %3053 = vmatpush1.msra.mxu0 %v817
      %3054 = vmatprep.subr.mxu0 0.0
      %3055 = vmatpush1.msra.mxu0 %v816
      %3056 = vmatprep.subr.mxu0 0.0
      %3057 = vmatpush1.msra.mxu0 %v815
      %3058 = vmatprep.subr.mxu0 0.0
      %3059 = vmatpush1.msra.mxu0 %v814
      %3060 = vmatprep.subr.mxu0 0.0
      %3061 = vmatpush1.msra.mxu0 %v813
      %3062 = vmatprep.subr.mxu0 0.0
      %3063 = vmatpush1.msra.mxu0 %v812
      %3064 = vmatprep.subr.mxu0 0.0
      %3065 = vmatpush1.msra.mxu0 %v811
      %3066 = vmatprep.subr.mxu0 0.0
      %3067 = vmatpush2.msra.mxu0 %v842
      %3068 = vmatprep.subr.mxu0 0.0
      %3069 = vmatpush2.msra.mxu0 %v841
      %3070 = vmatprep.subr.mxu0 0.0
      %3071 = vmatpush2.msra.mxu0 %v840
      %3072 = vmatprep.subr.mxu0 0.0
      %3073 = vmatpush2.msra.mxu0 %v839
      %3074 = vmatprep.subr.mxu0 0.0
      %3075 = vmatpush2.msra.mxu0 %v838
      %3076 = vmatprep.subr.mxu0 0.0
      %3077 = vmatpush2.msra.mxu0 %v837
      %3078 = vmatprep.subr.mxu0 0.0
      %3079 = vmatpush2.msra.mxu0 %v836
      %3080 = vmatprep.subr.mxu0 0.0
      %3081 = vmatpush2.msra.mxu0 %v835
      %3082 = vmatprep.subr.mxu0 0.0
      %3083 = vmatpush2.msra.mxu0 %v834
      %3084 = vmatprep.subr.mxu0 0.0
      %3085 = vmatpush2.msra.mxu0 %v833
      %3086 = vmatprep.subr.mxu0 0.0
      %3087 = vmatpush2.msra.mxu0 %v832
      %3088 = vmatprep.subr.mxu0 0.0
      %3089 = vmatpush2.msra.mxu0 %v831
      %3090 = vmatprep.subr.mxu0 0.0
      %3091 = vmatpush2.msra.mxu0 %v830
      %3092 = vmatprep.subr.mxu0 0.0
      %3093 = vmatpush2.msra.mxu0 %v829
      %3094 = vmatprep.subr.mxu0 0.0
      %3095 = vmatpush2.msra.mxu0 %v828
      %3096 = vmatprep.subr.mxu0 0.0
      %3097 = vmatpush2.msra.mxu0 %v827
      %3098 = vmatprep.mubr.f32.mxu0 %v406
      %3099 = vmatmul.mubr.f32.gmra.mxu0 %v405
      %v3100 = vpop.f32.mrf.mxu0
      %v3101 = vadd.f32 %v3031, %v3100
      %v3102 = vpop.f32.mrf.mxu0
      %3103 = vdwg.mxu0
      %3104 = vmatprep.subr.mxu0 0.0
      %3105 = vmatpush1.msra.mxu0 %v858
      %3106 = vmatprep.subr.mxu0 0.0
      %3107 = vmatpush1.msra.mxu0 %v857
      %3108 = vmatprep.subr.mxu0 0.0
      %3109 = vmatpush1.msra.mxu0 %v856
      %3110 = vmatprep.subr.mxu0 0.0
      %3111 = vmatpush1.msra.mxu0 %v855
      %3112 = vmatprep.subr.mxu0 0.0
      %3113 = vmatpush1.msra.mxu0 %v854
      %3114 = vmatprep.subr.mxu0 0.0
      %3115 = vmatpush1.msra.mxu0 %v853
      %3116 = vmatprep.subr.mxu0 0.0
      %3117 = vmatpush1.msra.mxu0 %v852
      %3118 = vmatprep.subr.mxu0 0.0
      %3119 = vmatpush1.msra.mxu0 %v851
      %3120 = vmatprep.subr.mxu0 0.0
      %3121 = vmatpush1.msra.mxu0 %v850
      %3122 = vmatprep.subr.mxu0 0.0
      %3123 = vmatpush1.msra.mxu0 %v849
      %3124 = vmatprep.subr.mxu0 0.0
      %3125 = vmatpush1.msra.mxu0 %v848
      %3126 = vmatprep.subr.mxu0 0.0
      %3127 = vmatpush1.msra.mxu0 %v847
      %3128 = vmatprep.subr.mxu0 0.0
      %3129 = vmatpush1.msra.mxu0 %v846
      %3130 = vmatprep.subr.mxu0 0.0
      %3131 = vmatpush1.msra.mxu0 %v845
      %3132 = vmatprep.subr.mxu0 0.0
      %3133 = vmatpush1.msra.mxu0 %v844
      %3134 = vmatprep.subr.mxu0 0.0
      %3135 = vmatpush1.msra.mxu0 %v843
      %3136 = vmatprep.subr.mxu0 0.0
      %3137 = vmatpush2.msra.mxu0 %v874
      %3138 = vmatprep.subr.mxu0 0.0
      %3139 = vmatpush2.msra.mxu0 %v873
      %3140 = vmatprep.subr.mxu0 0.0
      %3141 = vmatpush2.msra.mxu0 %v872
      %3142 = vmatprep.subr.mxu0 0.0
      %3143 = vmatpush2.msra.mxu0 %v871
      %3144 = vmatprep.subr.mxu0 0.0
      %3145 = vmatpush2.msra.mxu0 %v870
      %3146 = vmatprep.subr.mxu0 0.0
      %3147 = vmatpush2.msra.mxu0 %v869
      %3148 = vmatprep.subr.mxu0 0.0
      %3149 = vmatpush2.msra.mxu0 %v868
      %3150 = vmatprep.subr.mxu0 0.0
      %3151 = vmatpush2.msra.mxu0 %v867
      %3152 = vmatprep.subr.mxu0 0.0
      %3153 = vmatpush2.msra.mxu0 %v866
      %3154 = vmatprep.subr.mxu0 0.0
      %3155 = vmatpush2.msra.mxu0 %v865
      %3156 = vmatprep.subr.mxu0 0.0
      %3157 = vmatpush2.msra.mxu0 %v864
      %3158 = vmatprep.subr.mxu0 0.0
      %3159 = vmatpush2.msra.mxu0 %v863
      %3160 = vmatprep.subr.mxu0 0.0
      %3161 = vmatpush2.msra.mxu0 %v862
      %3162 = vmatprep.subr.mxu0 0.0
      %3163 = vmatpush2.msra.mxu0 %v861
      %3164 = vmatprep.subr.mxu0 0.0
      %3165 = vmatpush2.msra.mxu0 %v860
      %3166 = vmatprep.subr.mxu0 0.0
      %3167 = vmatpush2.msra.mxu0 %v859
      %3168 = vmatprep.mubr.f32.mxu0 %v408
      %3169 = vmatmul.mubr.f32.gmra.mxu0 %v407
      %v3170 = vpop.f32.mrf.mxu0
      %v3171 = vadd.f32 %v3101, %v3170
      %v3172 = vpop.f32.mrf.mxu0
      %3173 = vdwg.mxu0
      %3174 = vmatprep.subr.mxu0 0.0
      %3175 = vmatpush1.msra.mxu0 %v890
      %3176 = vmatprep.subr.mxu0 0.0
      %3177 = vmatpush1.msra.mxu0 %v889
      %3178 = vmatprep.subr.mxu0 0.0
      %3179 = vmatpush1.msra.mxu0 %v888
      %3180 = vmatprep.subr.mxu0 0.0
      %3181 = vmatpush1.msra.mxu0 %v887
      %3182 = vmatprep.subr.mxu0 0.0
      %3183 = vmatpush1.msra.mxu0 %v886
      %3184 = vmatprep.subr.mxu0 0.0
      %3185 = vmatpush1.msra.mxu0 %v885
      %3186 = vmatprep.subr.mxu0 0.0
      %3187 = vmatpush1.msra.mxu0 %v884
      %3188 = vmatprep.subr.mxu0 0.0
      %3189 = vmatpush1.msra.mxu0 %v883
      %3190 = vmatprep.subr.mxu0 0.0
      %3191 = vmatpush1.msra.mxu0 %v882
      %3192 = vmatprep.subr.mxu0 0.0
      %3193 = vmatpush1.msra.mxu0 %v881
      %3194 = vmatprep.subr.mxu0 0.0
      %3195 = vmatpush1.msra.mxu0 %v880
      %3196 = vmatprep.subr.mxu0 0.0
      %3197 = vmatpush1.msra.mxu0 %v879
      %3198 = vmatprep.subr.mxu0 0.0
      %3199 = vmatpush1.msra.mxu0 %v878
      %3200 = vmatprep.subr.mxu0 0.0
      %3201 = vmatpush1.msra.mxu0 %v877
      %3202 = vmatprep.subr.mxu0 0.0
      %3203 = vmatpush1.msra.mxu0 %v876
      %3204 = vmatprep.subr.mxu0 0.0
      %3205 = vmatpush1.msra.mxu0 %v875
      %3206 = vmatprep.subr.mxu0 0.0
      %3207 = vmatpush2.msra.mxu0 %v906
      %3208 = vmatprep.subr.mxu0 0.0
      %3209 = vmatpush2.msra.mxu0 %v905
      %3210 = vmatprep.subr.mxu0 0.0
      %3211 = vmatpush2.msra.mxu0 %v904
      %3212 = vmatprep.subr.mxu0 0.0
      %3213 = vmatpush2.msra.mxu0 %v903
      %3214 = vmatprep.subr.mxu0 0.0
      %3215 = vmatpush2.msra.mxu0 %v902
      %3216 = vmatprep.subr.mxu0 0.0
      %3217 = vmatpush2.msra.mxu0 %v901
      %3218 = vmatprep.subr.mxu0 0.0
      %3219 = vmatpush2.msra.mxu0 %v900
      %3220 = vmatprep.subr.mxu0 0.0
      %3221 = vmatpush2.msra.mxu0 %v899
      %3222 = vmatprep.subr.mxu0 0.0
      %3223 = vmatpush2.msra.mxu0 %v898
      %3224 = vmatprep.subr.mxu0 0.0
      %3225 = vmatpush2.msra.mxu0 %v897
      %3226 = vmatprep.subr.mxu0 0.0
      %3227 = vmatpush2.msra.mxu0 %v896
      %3228 = vmatprep.subr.mxu0 0.0
      %3229 = vmatpush2.msra.mxu0 %v895
      %3230 = vmatprep.subr.mxu0 0.0
      %3231 = vmatpush2.msra.mxu0 %v894
      %3232 = vmatprep.subr.mxu0 0.0
      %3233 = vmatpush2.msra.mxu0 %v893
      %3234 = vmatprep.subr.mxu0 0.0
      %3235 = vmatpush2.msra.mxu0 %v892
      %3236 = vmatprep.subr.mxu0 0.0
      %3237 = vmatpush2.msra.mxu0 %v891
      %3238 = vmatprep.mubr.f32.mxu0 %v410
      %3239 = vmatmul.mubr.f32.gmra.mxu0 %v409
      %v3240 = vpop.f32.mrf.mxu0
      %v3241 = vadd.f32 %v3171, %v3240
      %v3242 = vpop.f32.mrf.mxu0
      %3243 = vdwg.mxu0
      %3244 = vmatprep.subr.mxu0 0.0
      %3245 = vmatpush1.msra.mxu0 %v922
      %3246 = vmatprep.subr.mxu0 0.0
      %3247 = vmatpush1.msra.mxu0 %v921
      %3248 = vmatprep.subr.mxu0 0.0
      %3249 = vmatpush1.msra.mxu0 %v920
      %3250 = vmatprep.subr.mxu0 0.0
      %3251 = vmatpush1.msra.mxu0 %v919
      %3252 = vmatprep.subr.mxu0 0.0
      %3253 = vmatpush1.msra.mxu0 %v918
      %3254 = vmatprep.subr.mxu0 0.0
      %3255 = vmatpush1.msra.mxu0 %v917
      %3256 = vmatprep.subr.mxu0 0.0
      %3257 = vmatpush1.msra.mxu0 %v916
      %3258 = vmatprep.subr.mxu0 0.0
      %3259 = vmatpush1.msra.mxu0 %v915
      %3260 = vmatprep.subr.mxu0 0.0
      %3261 = vmatpush1.msra.mxu0 %v914
      %3262 = vmatprep.subr.mxu0 0.0
      %3263 = vmatpush1.msra.mxu0 %v913
      %3264 = vmatprep.subr.mxu0 0.0
      %3265 = vmatpush1.msra.mxu0 %v912
      %3266 = vmatprep.subr.mxu0 0.0
      %3267 = vmatpush1.msra.mxu0 %v911
      %3268 = vmatprep.subr.mxu0 0.0
      %3269 = vmatpush1.msra.mxu0 %v910
      %3270 = vmatprep.subr.mxu0 0.0
      %3271 = vmatpush1.msra.mxu0 %v909
      %3272 = vmatprep.subr.mxu0 0.0
      %3273 = vmatpush1.msra.mxu0 %v908
      %3274 = vmatprep.subr.mxu0 0.0
      %3275 = vmatpush1.msra.mxu0 %v907
      %3276 = vmatprep.subr.mxu0 0.0
      %3277 = vmatpush2.msra.mxu0 %v938
      %3278 = vmatprep.subr.mxu0 0.0
      %3279 = vmatpush2.msra.mxu0 %v937
      %3280 = vmatprep.subr.mxu0 0.0
      %3281 = vmatpush2.msra.mxu0 %v936
      %3282 = vmatprep.subr.mxu0 0.0
      %3283 = vmatpush2.msra.mxu0 %v935
      %3284 = vmatprep.subr.mxu0 0.0
      %3285 = vmatpush2.msra.mxu0 %v934
      %3286 = vmatprep.subr.mxu0 0.0
      %3287 = vmatpush2.msra.mxu0 %v933
      %3288 = vmatprep.subr.mxu0 0.0
      %3289 = vmatpush2.msra.mxu0 %v932
      %3290 = vmatprep.subr.mxu0 0.0
      %3291 = vmatpush2.msra.mxu0 %v931
      %3292 = vmatprep.subr.mxu0 0.0
      %3293 = vmatpush2.msra.mxu0 %v930
      %3294 = vmatprep.subr.mxu0 0.0
      %3295 = vmatpush2.msra.mxu0 %v929
      %3296 = vmatprep.subr.mxu0 0.0
      %3297 = vmatpush2.msra.mxu0 %v928
      %3298 = vmatprep.subr.mxu0 0.0
      %3299 = vmatpush2.msra.mxu0 %v927
      %3300 = vmatprep.subr.mxu0 0.0
      %3301 = vmatpush2.msra.mxu0 %v926
      %3302 = vmatprep.subr.mxu0 0.0
      %3303 = vmatpush2.msra.mxu0 %v925
      %3304 = vmatprep.subr.mxu0 0.0
      %3305 = vmatpush2.msra.mxu0 %v924
      %3306 = vmatprep.subr.mxu0 0.0
      %3307 = vmatpush2.msra.mxu0 %v923
      %3308 = vmatprep.mubr.f32.mxu0 %v412
      %3309 = vmatmul.mubr.f32.gmra.mxu0 %v411
      %v3310 = vpop.f32.mrf.mxu0
      %v3311 = vadd.f32 %v3241, %v3310
      %v3312 = vpop.f32.mrf.mxu0
      %3313 = vdwg.mxu0
      %3314 = vmatprep.subr.mxu0 0.0
      %3315 = vmatpush1.msra.mxu0 %v954
      %3316 = vmatprep.subr.mxu0 0.0
      %3317 = vmatpush1.msra.mxu0 %v953
      %3318 = vmatprep.subr.mxu0 0.0
      %3319 = vmatpush1.msra.mxu0 %v952
      %3320 = vmatprep.subr.mxu0 0.0
      %3321 = vmatpush1.msra.mxu0 %v951
      %3322 = vmatprep.subr.mxu0 0.0
      %3323 = vmatpush1.msra.mxu0 %v950
      %3324 = vmatprep.subr.mxu0 0.0
      %3325 = vmatpush1.msra.mxu0 %v949
      %3326 = vmatprep.subr.mxu0 0.0
      %3327 = vmatpush1.msra.mxu0 %v948
      %3328 = vmatprep.subr.mxu0 0.0
      %3329 = vmatpush1.msra.mxu0 %v947
      %3330 = vmatprep.subr.mxu0 0.0
      %3331 = vmatpush1.msra.mxu0 %v946
      %3332 = vmatprep.subr.mxu0 0.0
      %3333 = vmatpush1.msra.mxu0 %v945
      %3334 = vmatprep.subr.mxu0 0.0
      %3335 = vmatpush1.msra.mxu0 %v944
      %3336 = vmatprep.subr.mxu0 0.0
      %3337 = vmatpush1.msra.mxu0 %v943
      %3338 = vmatprep.subr.mxu0 0.0
      %3339 = vmatpush1.msra.mxu0 %v942
      %3340 = vmatprep.subr.mxu0 0.0
      %3341 = vmatpush1.msra.mxu0 %v941
      %3342 = vmatprep.subr.mxu0 0.0
      %3343 = vmatpush1.msra.mxu0 %v940
      %3344 = vmatprep.subr.mxu0 0.0
      %3345 = vmatpush1.msra.mxu0 %v939
      %3346 = vmatprep.subr.mxu0 0.0
      %3347 = vmatpush2.msra.mxu0 %v970
      %3348 = vmatprep.subr.mxu0 0.0
      %3349 = vmatpush2.msra.mxu0 %v969
      %3350 = vmatprep.subr.mxu0 0.0
      %3351 = vmatpush2.msra.mxu0 %v968
      %3352 = vmatprep.subr.mxu0 0.0
      %3353 = vmatpush2.msra.mxu0 %v967
      %3354 = vmatprep.subr.mxu0 0.0
      %3355 = vmatpush2.msra.mxu0 %v966
      %3356 = vmatprep.subr.mxu0 0.0
      %3357 = vmatpush2.msra.mxu0 %v965
      %3358 = vmatprep.subr.mxu0 0.0
      %3359 = vmatpush2.msra.mxu0 %v964
      %3360 = vmatprep.subr.mxu0 0.0
      %3361 = vmatpush2.msra.mxu0 %v963
      %3362 = vmatprep.subr.mxu0 0.0
      %3363 = vmatpush2.msra.mxu0 %v962
      %3364 = vmatprep.subr.mxu0 0.0
      %3365 = vmatpush2.msra.mxu0 %v961
      %3366 = vmatprep.subr.mxu0 0.0
      %3367 = vmatpush2.msra.mxu0 %v960
      %3368 = vmatprep.subr.mxu0 0.0
      %3369 = vmatpush2.msra.mxu0 %v959
      %3370 = vmatprep.subr.mxu0 0.0
      %3371 = vmatpush2.msra.mxu0 %v958
      %3372 = vmatprep.subr.mxu0 0.0
      %3373 = vmatpush2.msra.mxu0 %v957
      %3374 = vmatprep.subr.mxu0 0.0
      %3375 = vmatpush2.msra.mxu0 %v956
      %3376 = vmatprep.subr.mxu0 0.0
      %3377 = vmatpush2.msra.mxu0 %v955
      %3378 = vmatprep.mubr.f32.mxu0 %v414
      %3379 = vmatmul.mubr.f32.gmra.mxu0 %v413
      %v3380 = vpop.f32.mrf.mxu0
      %v3381 = vadd.f32 %v3311, %v3380
      %v3382 = vpop.f32.mrf.mxu0
      %3383 = vdwg.mxu0
      %3384 = vmatprep.subr.mxu0 0.0
      %3385 = vmatpush1.msra.mxu0 %v986
      %3386 = vmatprep.subr.mxu0 0.0
      %3387 = vmatpush1.msra.mxu0 %v985
      %3388 = vmatprep.subr.mxu0 0.0
      %3389 = vmatpush1.msra.mxu0 %v984
      %3390 = vmatprep.subr.mxu0 0.0
      %3391 = vmatpush1.msra.mxu0 %v983
      %3392 = vmatprep.subr.mxu0 0.0
      %3393 = vmatpush1.msra.mxu0 %v982
      %3394 = vmatprep.subr.mxu0 0.0
      %3395 = vmatpush1.msra.mxu0 %v981
      %3396 = vmatprep.subr.mxu0 0.0
      %3397 = vmatpush1.msra.mxu0 %v980
      %3398 = vmatprep.subr.mxu0 0.0
      %3399 = vmatpush1.msra.mxu0 %v979
      %3400 = vmatprep.subr.mxu0 0.0
      %3401 = vmatpush1.msra.mxu0 %v978
      %3402 = vmatprep.subr.mxu0 0.0
      %3403 = vmatpush1.msra.mxu0 %v977
      %3404 = vmatprep.subr.mxu0 0.0
      %3405 = vmatpush1.msra.mxu0 %v976
      %3406 = vmatprep.subr.mxu0 0.0
      %3407 = vmatpush1.msra.mxu0 %v975
      %3408 = vmatprep.subr.mxu0 0.0
      %3409 = vmatpush1.msra.mxu0 %v974
      %3410 = vmatprep.subr.mxu0 0.0
      %3411 = vmatpush1.msra.mxu0 %v973
      %3412 = vmatprep.subr.mxu0 0.0
      %3413 = vmatpush1.msra.mxu0 %v972
      %3414 = vmatprep.subr.mxu0 0.0
      %3415 = vmatpush1.msra.mxu0 %v971
      %3416 = vmatprep.subr.mxu0 0.0
      %3417 = vmatpush2.msra.mxu0 %v1002
      %3418 = vmatprep.subr.mxu0 0.0
      %3419 = vmatpush2.msra.mxu0 %v1001
      %3420 = vmatprep.subr.mxu0 0.0
      %3421 = vmatpush2.msra.mxu0 %v1000
      %3422 = vmatprep.subr.mxu0 0.0
      %3423 = vmatpush2.msra.mxu0 %v999
      %3424 = vmatprep.subr.mxu0 0.0
      %3425 = vmatpush2.msra.mxu0 %v998
      %3426 = vmatprep.subr.mxu0 0.0
      %3427 = vmatpush2.msra.mxu0 %v997
      %3428 = vmatprep.subr.mxu0 0.0
      %3429 = vmatpush2.msra.mxu0 %v996
      %3430 = vmatprep.subr.mxu0 0.0
      %3431 = vmatpush2.msra.mxu0 %v995
      %3432 = vmatprep.subr.mxu0 0.0
      %3433 = vmatpush2.msra.mxu0 %v994
      %3434 = vmatprep.subr.mxu0 0.0
      %3435 = vmatpush2.msra.mxu0 %v993
      %3436 = vmatprep.subr.mxu0 0.0
      %3437 = vmatpush2.msra.mxu0 %v992
      %3438 = vmatprep.subr.mxu0 0.0
      %3439 = vmatpush2.msra.mxu0 %v991
      %3440 = vmatprep.subr.mxu0 0.0
      %3441 = vmatpush2.msra.mxu0 %v990
      %3442 = vmatprep.subr.mxu0 0.0
      %3443 = vmatpush2.msra.mxu0 %v989
      %3444 = vmatprep.subr.mxu0 0.0
      %3445 = vmatpush2.msra.mxu0 %v988
      %3446 = vmatprep.subr.mxu0 0.0
      %3447 = vmatpush2.msra.mxu0 %v987
      %3448 = vmatprep.mubr.f32.mxu0 %v416
      %3449 = vmatmul.mubr.f32.gmra.mxu0 %v415
      %v3450 = vpop.f32.mrf.mxu0
      %v3451 = vadd.f32 %v3381, %v3450
      %v3452 = vpop.f32.mrf.mxu0
      %3453 = vdwg.mxu0
      %3454 = vmatprep.subr.mxu0 0.0
      %3455 = vmatpush1.msra.mxu0 %v1018
      %3456 = vmatprep.subr.mxu0 0.0
      %3457 = vmatpush1.msra.mxu0 %v1017
      %3458 = vmatprep.subr.mxu0 0.0
      %3459 = vmatpush1.msra.mxu0 %v1016
      %3460 = vmatprep.subr.mxu0 0.0
      %3461 = vmatpush1.msra.mxu0 %v1015
      %3462 = vmatprep.subr.mxu0 0.0
      %3463 = vmatpush1.msra.mxu0 %v1014
      %3464 = vmatprep.subr.mxu0 0.0
      %3465 = vmatpush1.msra.mxu0 %v1013
      %3466 = vmatprep.subr.mxu0 0.0
      %3467 = vmatpush1.msra.mxu0 %v1012
      %3468 = vmatprep.subr.mxu0 0.0
      %3469 = vmatpush1.msra.mxu0 %v1011
      %3470 = vmatprep.subr.mxu0 0.0
      %3471 = vmatpush1.msra.mxu0 %v1010
      %3472 = vmatprep.subr.mxu0 0.0
      %3473 = vmatpush1.msra.mxu0 %v1009
      %3474 = vmatprep.subr.mxu0 0.0
      %3475 = vmatpush1.msra.mxu0 %v1008
      %3476 = vmatprep.subr.mxu0 0.0
      %3477 = vmatpush1.msra.mxu0 %v1007
      %3478 = vmatprep.subr.mxu0 0.0
      %3479 = vmatpush1.msra.mxu0 %v1006
      %3480 = vmatprep.subr.mxu0 0.0
      %3481 = vmatpush1.msra.mxu0 %v1005
      %3482 = vmatprep.subr.mxu0 0.0
      %3483 = vmatpush1.msra.mxu0 %v1004
      %3484 = vmatprep.subr.mxu0 0.0
      %3485 = vmatpush1.msra.mxu0 %v1003
      %3486 = vmatprep.subr.mxu0 0.0
      %3487 = vmatpush2.msra.mxu0 %v1034
      %3488 = vmatprep.subr.mxu0 0.0
      %3489 = vmatpush2.msra.mxu0 %v1033
      %3490 = vmatprep.subr.mxu0 0.0
      %3491 = vmatpush2.msra.mxu0 %v1032
      %3492 = vmatprep.subr.mxu0 0.0
      %3493 = vmatpush2.msra.mxu0 %v1031
      %3494 = vmatprep.subr.mxu0 0.0
      %3495 = vmatpush2.msra.mxu0 %v1030
      %3496 = vmatprep.subr.mxu0 0.0
      %3497 = vmatpush2.msra.mxu0 %v1029
      %3498 = vmatprep.subr.mxu0 0.0
      %3499 = vmatpush2.msra.mxu0 %v1028
      %3500 = vmatprep.subr.mxu0 0.0
      %3501 = vmatpush2.msra.mxu0 %v1027
      %3502 = vmatprep.subr.mxu0 0.0
      %3503 = vmatpush2.msra.mxu0 %v1026
      %3504 = vmatprep.subr.mxu0 0.0
      %3505 = vmatpush2.msra.mxu0 %v1025
      %3506 = vmatprep.subr.mxu0 0.0
      %3507 = vmatpush2.msra.mxu0 %v1024
      %3508 = vmatprep.subr.mxu0 0.0
      %3509 = vmatpush2.msra.mxu0 %v1023
      %3510 = vmatprep.subr.mxu0 0.0
      %3511 = vmatpush2.msra.mxu0 %v1022
      %3512 = vmatprep.subr.mxu0 0.0
      %3513 = vmatpush2.msra.mxu0 %v1021
      %3514 = vmatprep.subr.mxu0 0.0
      %3515 = vmatpush2.msra.mxu0 %v1020
      %3516 = vmatprep.subr.mxu0 0.0
      %3517 = vmatpush2.msra.mxu0 %v1019
      %3518 = vmatprep.mubr.f32.mxu0 %v418
      %3519 = vmatmul.mubr.f32.gmra.mxu0 %v417
      %v3520 = vpop.f32.mrf.mxu0
      %v3521 = vadd.f32 %v3451, %v3520
      %v3522 = vpop.f32.mrf.mxu0
      %3523 = vdwg.mxu0
      %3524 = vmatprep.subr.mxu0 0.0
      %3525 = vmatpush1.msra.mxu0 %v1050
      %3526 = vmatprep.subr.mxu0 0.0
      %3527 = vmatpush1.msra.mxu0 %v1049
      %3528 = vmatprep.subr.mxu0 0.0
      %3529 = vmatpush1.msra.mxu0 %v1048
      %3530 = vmatprep.subr.mxu0 0.0
      %3531 = vmatpush1.msra.mxu0 %v1047
      %3532 = vmatprep.subr.mxu0 0.0
      %3533 = vmatpush1.msra.mxu0 %v1046
      %3534 = vmatprep.subr.mxu0 0.0
      %3535 = vmatpush1.msra.mxu0 %v1045
      %3536 = vmatprep.subr.mxu0 0.0
      %3537 = vmatpush1.msra.mxu0 %v1044
      %3538 = vmatprep.subr.mxu0 0.0
      %3539 = vmatpush1.msra.mxu0 %v1043
      %3540 = vmatprep.subr.mxu0 0.0
      %3541 = vmatpush1.msra.mxu0 %v1042
      %3542 = vmatprep.subr.mxu0 0.0
      %3543 = vmatpush1.msra.mxu0 %v1041
      %3544 = vmatprep.subr.mxu0 0.0
      %3545 = vmatpush1.msra.mxu0 %v1040
      %3546 = vmatprep.subr.mxu0 0.0
      %3547 = vmatpush1.msra.mxu0 %v1039
      %3548 = vmatprep.subr.mxu0 0.0
      %3549 = vmatpush1.msra.mxu0 %v1038
      %3550 = vmatprep.subr.mxu0 0.0
      %3551 = vmatpush1.msra.mxu0 %v1037
      %3552 = vmatprep.subr.mxu0 0.0
      %3553 = vmatpush1.msra.mxu0 %v1036
      %3554 = vmatprep.subr.mxu0 0.0
      %3555 = vmatpush1.msra.mxu0 %v1035
      %3556 = vmatprep.subr.mxu0 0.0
      %3557 = vmatpush2.msra.mxu0 %v1066
      %3558 = vmatprep.subr.mxu0 0.0
      %3559 = vmatpush2.msra.mxu0 %v1065
      %3560 = vmatprep.subr.mxu0 0.0
      %3561 = vmatpush2.msra.mxu0 %v1064
      %3562 = vmatprep.subr.mxu0 0.0
      %3563 = vmatpush2.msra.mxu0 %v1063
      %3564 = vmatprep.subr.mxu0 0.0
      %3565 = vmatpush2.msra.mxu0 %v1062
      %3566 = vmatprep.subr.mxu0 0.0
      %3567 = vmatpush2.msra.mxu0 %v1061
      %3568 = vmatprep.subr.mxu0 0.0
      %3569 = vmatpush2.msra.mxu0 %v1060
      %3570 = vmatprep.subr.mxu0 0.0
      %3571 = vmatpush2.msra.mxu0 %v1059
      %3572 = vmatprep.subr.mxu0 0.0
      %3573 = vmatpush2.msra.mxu0 %v1058
      %3574 = vmatprep.subr.mxu0 0.0
      %3575 = vmatpush2.msra.mxu0 %v1057
      %3576 = vmatprep.subr.mxu0 0.0
      %3577 = vmatpush2.msra.mxu0 %v1056
      %3578 = vmatprep.subr.mxu0 0.0
      %3579 = vmatpush2.msra.mxu0 %v1055
      %3580 = vmatprep.subr.mxu0 0.0
      %3581 = vmatpush2.msra.mxu0 %v1054
      %3582 = vmatprep.subr.mxu0 0.0
      %3583 = vmatpush2.msra.mxu0 %v1053
      %3584 = vmatprep.subr.mxu0 0.0
      %3585 = vmatpush2.msra.mxu0 %v1052
      %3586 = vmatprep.subr.mxu0 0.0
      %3587 = vmatpush2.msra.mxu0 %v1051
      %3588 = vmatprep.mubr.f32.mxu0 %v420
      %3589 = vmatmul.mubr.f32.gmra.mxu0 %v419
      %v3590 = vpop.f32.mrf.mxu0
      %v3591 = vadd.f32 %v3521, %v3590
      %v3592 = vpop.f32.mrf.mxu0
      %3593 = vdwg.mxu0
      %3594 = vmatprep.subr.mxu0 0.0
      %3595 = vmatpush1.msra.mxu0 %v1082
      %3596 = vmatprep.subr.mxu0 0.0
      %3597 = vmatpush1.msra.mxu0 %v1081
      %3598 = vmatprep.subr.mxu0 0.0
      %3599 = vmatpush1.msra.mxu0 %v1080
      %3600 = vmatprep.subr.mxu0 0.0
      %3601 = vmatpush1.msra.mxu0 %v1079
      %3602 = vmatprep.subr.mxu0 0.0
      %3603 = vmatpush1.msra.mxu0 %v1078
      %3604 = vmatprep.subr.mxu0 0.0
      %3605 = vmatpush1.msra.mxu0 %v1077
      %3606 = vmatprep.subr.mxu0 0.0
      %3607 = vmatpush1.msra.mxu0 %v1076
      %3608 = vmatprep.subr.mxu0 0.0
      %3609 = vmatpush1.msra.mxu0 %v1075
      %3610 = vmatprep.subr.mxu0 0.0
      %3611 = vmatpush1.msra.mxu0 %v1074
      %3612 = vmatprep.subr.mxu0 0.0
      %3613 = vmatpush1.msra.mxu0 %v1073
      %3614 = vmatprep.subr.mxu0 0.0
      %3615 = vmatpush1.msra.mxu0 %v1072
      %3616 = vmatprep.subr.mxu0 0.0
      %3617 = vmatpush1.msra.mxu0 %v1071
      %3618 = vmatprep.subr.mxu0 0.0
      %3619 = vmatpush1.msra.mxu0 %v1070
      %3620 = vmatprep.subr.mxu0 0.0
      %3621 = vmatpush1.msra.mxu0 %v1069
      %3622 = vmatprep.subr.mxu0 0.0
      %3623 = vmatpush1.msra.mxu0 %v1068
      %3624 = vmatprep.subr.mxu0 0.0
      %3625 = vmatpush1.msra.mxu0 %v1067
      %3626 = vmatprep.subr.mxu0 0.0
      %3627 = vmatpush2.msra.mxu0 %v1098
      %3628 = vmatprep.subr.mxu0 0.0
      %3629 = vmatpush2.msra.mxu0 %v1097
      %3630 = vmatprep.subr.mxu0 0.0
      %3631 = vmatpush2.msra.mxu0 %v1096
      %3632 = vmatprep.subr.mxu0 0.0
      %3633 = vmatpush2.msra.mxu0 %v1095
      %3634 = vmatprep.subr.mxu0 0.0
      %3635 = vmatpush2.msra.mxu0 %v1094
      %3636 = vmatprep.subr.mxu0 0.0
      %3637 = vmatpush2.msra.mxu0 %v1093
      %3638 = vmatprep.subr.mxu0 0.0
      %3639 = vmatpush2.msra.mxu0 %v1092
      %3640 = vmatprep.subr.mxu0 0.0
      %3641 = vmatpush2.msra.mxu0 %v1091
      %3642 = vmatprep.subr.mxu0 0.0
      %3643 = vmatpush2.msra.mxu0 %v1090
      %3644 = vmatprep.subr.mxu0 0.0
      %3645 = vmatpush2.msra.mxu0 %v1089
      %3646 = vmatprep.subr.mxu0 0.0
      %3647 = vmatpush2.msra.mxu0 %v1088
      %3648 = vmatprep.subr.mxu0 0.0
      %3649 = vmatpush2.msra.mxu0 %v1087
      %3650 = vmatprep.subr.mxu0 0.0
      %3651 = vmatpush2.msra.mxu0 %v1086
      %3652 = vmatprep.subr.mxu0 0.0
      %3653 = vmatpush2.msra.mxu0 %v1085
      %3654 = vmatprep.subr.mxu0 0.0
      %3655 = vmatpush2.msra.mxu0 %v1084
      %3656 = vmatprep.subr.mxu0 0.0
      %3657 = vmatpush2.msra.mxu0 %v1083
      %3658 = vmatprep.mubr.f32.mxu0 %v422
      %3659 = vmatmul.mubr.f32.gmra.mxu0 %v421
      %v3660 = vpop.f32.mrf.mxu0
      %v3661 = vadd.f32 %v3591, %v3660
      %v3662 = vpop.f32.mrf.mxu0
      %3663 = vdwg.mxu0
      %3664 = vmatprep.subr.mxu0 0.0
      %3665 = vmatpush1.msra.mxu0 %v1114
      %3666 = vmatprep.subr.mxu0 0.0
      %3667 = vmatpush1.msra.mxu0 %v1113
      %3668 = vmatprep.subr.mxu0 0.0
      %3669 = vmatpush1.msra.mxu0 %v1112
      %3670 = vmatprep.subr.mxu0 0.0
      %3671 = vmatpush1.msra.mxu0 %v1111
      %3672 = vmatprep.subr.mxu0 0.0
      %3673 = vmatpush1.msra.mxu0 %v1110
      %3674 = vmatprep.subr.mxu0 0.0
      %3675 = vmatpush1.msra.mxu0 %v1109
      %3676 = vmatprep.subr.mxu0 0.0
      %3677 = vmatpush1.msra.mxu0 %v1108
      %3678 = vmatprep.subr.mxu0 0.0
      %3679 = vmatpush1.msra.mxu0 %v1107
      %3680 = vmatprep.subr.mxu0 0.0
      %3681 = vmatpush1.msra.mxu0 %v1106
      %3682 = vmatprep.subr.mxu0 0.0
      %3683 = vmatpush1.msra.mxu0 %v1105
      %3684 = vmatprep.subr.mxu0 0.0
      %3685 = vmatpush1.msra.mxu0 %v1104
      %3686 = vmatprep.subr.mxu0 0.0
      %3687 = vmatpush1.msra.mxu0 %v1103
      %3688 = vmatprep.subr.mxu0 0.0
      %3689 = vmatpush1.msra.mxu0 %v1102
      %3690 = vmatprep.subr.mxu0 0.0
      %3691 = vmatpush1.msra.mxu0 %v1101
      %3692 = vmatprep.subr.mxu0 0.0
      %3693 = vmatpush1.msra.mxu0 %v1100
      %3694 = vmatprep.subr.mxu0 0.0
      %3695 = vmatpush1.msra.mxu0 %v1099
      %3696 = vmatprep.subr.mxu0 0.0
      %3697 = vmatpush2.msra.mxu0 %v1130
      %3698 = vmatprep.subr.mxu0 0.0
      %3699 = vmatpush2.msra.mxu0 %v1129
      %3700 = vmatprep.subr.mxu0 0.0
      %3701 = vmatpush2.msra.mxu0 %v1128
      %3702 = vmatprep.subr.mxu0 0.0
      %3703 = vmatpush2.msra.mxu0 %v1127
      %3704 = vmatprep.subr.mxu0 0.0
      %3705 = vmatpush2.msra.mxu0 %v1126
      %3706 = vmatprep.subr.mxu0 0.0
      %3707 = vmatpush2.msra.mxu0 %v1125
      %3708 = vmatprep.subr.mxu0 0.0
      %3709 = vmatpush2.msra.mxu0 %v1124
      %3710 = vmatprep.subr.mxu0 0.0
      %3711 = vmatpush2.msra.mxu0 %v1123
      %3712 = vmatprep.subr.mxu0 0.0
      %3713 = vmatpush2.msra.mxu0 %v1122
      %3714 = vmatprep.subr.mxu0 0.0
      %3715 = vmatpush2.msra.mxu0 %v1121
      %3716 = vmatprep.subr.mxu0 0.0
      %3717 = vmatpush2.msra.mxu0 %v1120
      %3718 = vmatprep.subr.mxu0 0.0
      %3719 = vmatpush2.msra.mxu0 %v1119
      %3720 = vmatprep.subr.mxu0 0.0
      %3721 = vmatpush2.msra.mxu0 %v1118
      %3722 = vmatprep.subr.mxu0 0.0
      %3723 = vmatpush2.msra.mxu0 %v1117
      %3724 = vmatprep.subr.mxu0 0.0
      %3725 = vmatpush2.msra.mxu0 %v1116
      %3726 = vmatprep.subr.mxu0 0.0
      %3727 = vmatpush2.msra.mxu0 %v1115
      %3728 = vmatprep.mubr.f32.mxu0 %v424
      %3729 = vmatmul.mubr.f32.gmra.mxu0 %v423
      %v3730 = vpop.f32.mrf.mxu0
      %v3731 = vadd.f32 %v3661, %v3730
      %v3732 = vpop.f32.mrf.mxu0
      %3733 = vdwg.mxu0
      %3734 = vmatprep.subr.mxu0 0.0
      %3735 = vmatpush1.msra.mxu0 %v1146
      %3736 = vmatprep.subr.mxu0 0.0
      %3737 = vmatpush1.msra.mxu0 %v1145
      %3738 = vmatprep.subr.mxu0 0.0
      %3739 = vmatpush1.msra.mxu0 %v1144
      %3740 = vmatprep.subr.mxu0 0.0
      %3741 = vmatpush1.msra.mxu0 %v1143
      %3742 = vmatprep.subr.mxu0 0.0
      %3743 = vmatpush1.msra.mxu0 %v1142
      %3744 = vmatprep.subr.mxu0 0.0
      %3745 = vmatpush1.msra.mxu0 %v1141
      %3746 = vmatprep.subr.mxu0 0.0
      %3747 = vmatpush1.msra.mxu0 %v1140
      %3748 = vmatprep.subr.mxu0 0.0
      %3749 = vmatpush1.msra.mxu0 %v1139
      %3750 = vmatprep.subr.mxu0 0.0
      %3751 = vmatpush1.msra.mxu0 %v1138
      %3752 = vmatprep.subr.mxu0 0.0
      %3753 = vmatpush1.msra.mxu0 %v1137
      %3754 = vmatprep.subr.mxu0 0.0
      %3755 = vmatpush1.msra.mxu0 %v1136
      %3756 = vmatprep.subr.mxu0 0.0
      %3757 = vmatpush1.msra.mxu0 %v1135
      %3758 = vmatprep.subr.mxu0 0.0
      %3759 = vmatpush1.msra.mxu0 %v1134
      %3760 = vmatprep.subr.mxu0 0.0
      %3761 = vmatpush1.msra.mxu0 %v1133
      %3762 = vmatprep.subr.mxu0 0.0
      %3763 = vmatpush1.msra.mxu0 %v1132
      %3764 = vmatprep.subr.mxu0 0.0
      %3765 = vmatpush1.msra.mxu0 %v1131
      %3766 = vmatprep.subr.mxu0 0.0
      %3767 = vmatpush2.msra.mxu0 %v1162
      %3768 = vmatprep.subr.mxu0 0.0
      %3769 = vmatpush2.msra.mxu0 %v1161
      %3770 = vmatprep.subr.mxu0 0.0
      %3771 = vmatpush2.msra.mxu0 %v1160
      %3772 = vmatprep.subr.mxu0 0.0
      %3773 = vmatpush2.msra.mxu0 %v1159
      %3774 = vmatprep.subr.mxu0 0.0
      %3775 = vmatpush2.msra.mxu0 %v1158
      %3776 = vmatprep.subr.mxu0 0.0
      %3777 = vmatpush2.msra.mxu0 %v1157
      %3778 = vmatprep.subr.mxu0 0.0
      %3779 = vmatpush2.msra.mxu0 %v1156
      %3780 = vmatprep.subr.mxu0 0.0
      %3781 = vmatpush2.msra.mxu0 %v1155
      %3782 = vmatprep.subr.mxu0 0.0
      %3783 = vmatpush2.msra.mxu0 %v1154
      %3784 = vmatprep.subr.mxu0 0.0
      %3785 = vmatpush2.msra.mxu0 %v1153
      %3786 = vmatprep.subr.mxu0 0.0
      %3787 = vmatpush2.msra.mxu0 %v1152
      %3788 = vmatprep.subr.mxu0 0.0
      %3789 = vmatpush2.msra.mxu0 %v1151
      %3790 = vmatprep.subr.mxu0 0.0
      %3791 = vmatpush2.msra.mxu0 %v1150
      %3792 = vmatprep.subr.mxu0 0.0
      %3793 = vmatpush2.msra.mxu0 %v1149
      %3794 = vmatprep.subr.mxu0 0.0
      %3795 = vmatpush2.msra.mxu0 %v1148
      %3796 = vmatprep.subr.mxu0 0.0
      %3797 = vmatpush2.msra.mxu0 %v1147
      %3798 = vmatprep.mubr.f32.mxu0 %v426
      %3799 = vmatmul.mubr.f32.gmra.mxu0 %v425
      %v3800 = vpop.f32.mrf.mxu0
      %v3801 = vadd.f32 %v3731, %v3800
      %v3802 = vpop.f32.mrf.mxu0
      %3803 = vdwg.mxu0
      %3804 = vmatprep.subr.mxu0 0.0
      %3805 = vmatpush1.msra.mxu0 %v1178
      %3806 = vmatprep.subr.mxu0 0.0
      %3807 = vmatpush1.msra.mxu0 %v1177
      %3808 = vmatprep.subr.mxu0 0.0
      %3809 = vmatpush1.msra.mxu0 %v1176
      %3810 = vmatprep.subr.mxu0 0.0
      %3811 = vmatpush1.msra.mxu0 %v1175
      %3812 = vmatprep.subr.mxu0 0.0
      %3813 = vmatpush1.msra.mxu0 %v1174
      %3814 = vmatprep.subr.mxu0 0.0
      %3815 = vmatpush1.msra.mxu0 %v1173
      %3816 = vmatprep.subr.mxu0 0.0
      %3817 = vmatpush1.msra.mxu0 %v1172
      %3818 = vmatprep.subr.mxu0 0.0
      %3819 = vmatpush1.msra.mxu0 %v1171
      %3820 = vmatprep.subr.mxu0 0.0
      %3821 = vmatpush1.msra.mxu0 %v1170
      %3822 = vmatprep.subr.mxu0 0.0
      %3823 = vmatpush1.msra.mxu0 %v1169
      %3824 = vmatprep.subr.mxu0 0.0
      %3825 = vmatpush1.msra.mxu0 %v1168
      %3826 = vmatprep.subr.mxu0 0.0
      %3827 = vmatpush1.msra.mxu0 %v1167
      %3828 = vmatprep.subr.mxu0 0.0
      %3829 = vmatpush1.msra.mxu0 %v1166
      %3830 = vmatprep.subr.mxu0 0.0
      %3831 = vmatpush1.msra.mxu0 %v1165
      %3832 = vmatprep.subr.mxu0 0.0
      %3833 = vmatpush1.msra.mxu0 %v1164
      %3834 = vmatprep.subr.mxu0 0.0
      %3835 = vmatpush1.msra.mxu0 %v1163
      %3836 = vmatprep.subr.mxu0 0.0
      %3837 = vmatpush2.msra.mxu0 %v1194
      %3838 = vmatprep.subr.mxu0 0.0
      %3839 = vmatpush2.msra.mxu0 %v1193
      %3840 = vmatprep.subr.mxu0 0.0
      %3841 = vmatpush2.msra.mxu0 %v1192
      %3842 = vmatprep.subr.mxu0 0.0
      %3843 = vmatpush2.msra.mxu0 %v1191
      %3844 = vmatprep.subr.mxu0 0.0
      %3845 = vmatpush2.msra.mxu0 %v1190
      %3846 = vmatprep.subr.mxu0 0.0
      %3847 = vmatpush2.msra.mxu0 %v1189
      %3848 = vmatprep.subr.mxu0 0.0
      %3849 = vmatpush2.msra.mxu0 %v1188
      %3850 = vmatprep.subr.mxu0 0.0
      %3851 = vmatpush2.msra.mxu0 %v1187
      %3852 = vmatprep.subr.mxu0 0.0
      %3853 = vmatpush2.msra.mxu0 %v1186
      %3854 = vmatprep.subr.mxu0 0.0
      %3855 = vmatpush2.msra.mxu0 %v1185
      %3856 = vmatprep.subr.mxu0 0.0
      %3857 = vmatpush2.msra.mxu0 %v1184
      %3858 = vmatprep.subr.mxu0 0.0
      %3859 = vmatpush2.msra.mxu0 %v1183
      %3860 = vmatprep.subr.mxu0 0.0
      %3861 = vmatpush2.msra.mxu0 %v1182
      %3862 = vmatprep.subr.mxu0 0.0
      %3863 = vmatpush2.msra.mxu0 %v1181
      %3864 = vmatprep.subr.mxu0 0.0
      %3865 = vmatpush2.msra.mxu0 %v1180
      %3866 = vmatprep.subr.mxu0 0.0
      %3867 = vmatpush2.msra.mxu0 %v1179
      %3868 = vmatprep.mubr.f32.mxu0 %v428
      %3869 = vmatmul.mubr.f32.gmra.mxu0 %v427
      %v3870 = vpop.f32.mrf.mxu0
      %v3871 = vadd.f32 %v3801, %v3870
      %v3872 = vpop.f32.mrf.mxu0
      %3873 = vdwg.mxu0
      %3874 = vmatprep.subr.mxu0 0.0
      %3875 = vmatpush1.msra.mxu0 %v1210
      %3876 = vmatprep.subr.mxu0 0.0
      %3877 = vmatpush1.msra.mxu0 %v1209
      %3878 = vmatprep.subr.mxu0 0.0
      %3879 = vmatpush1.msra.mxu0 %v1208
      %3880 = vmatprep.subr.mxu0 0.0
      %3881 = vmatpush1.msra.mxu0 %v1207
      %3882 = vmatprep.subr.mxu0 0.0
      %3883 = vmatpush1.msra.mxu0 %v1206
      %3884 = vmatprep.subr.mxu0 0.0
      %3885 = vmatpush1.msra.mxu0 %v1205
      %3886 = vmatprep.subr.mxu0 0.0
      %3887 = vmatpush1.msra.mxu0 %v1204
      %3888 = vmatprep.subr.mxu0 0.0
      %3889 = vmatpush1.msra.mxu0 %v1203
      %3890 = vmatprep.subr.mxu0 0.0
      %3891 = vmatpush1.msra.mxu0 %v1202
      %3892 = vmatprep.subr.mxu0 0.0
      %3893 = vmatpush1.msra.mxu0 %v1201
      %3894 = vmatprep.subr.mxu0 0.0
      %3895 = vmatpush1.msra.mxu0 %v1200
      %3896 = vmatprep.subr.mxu0 0.0
      %3897 = vmatpush1.msra.mxu0 %v1199
      %3898 = vmatprep.subr.mxu0 0.0
      %3899 = vmatpush1.msra.mxu0 %v1198
      %3900 = vmatprep.subr.mxu0 0.0
      %3901 = vmatpush1.msra.mxu0 %v1197
      %3902 = vmatprep.subr.mxu0 0.0
      %3903 = vmatpush1.msra.mxu0 %v1196
      %3904 = vmatprep.subr.mxu0 0.0
      %3905 = vmatpush1.msra.mxu0 %v1195
      %3906 = vmatprep.subr.mxu0 0.0
      %3907 = vmatpush2.msra.mxu0 %v1226
      %3908 = vmatprep.subr.mxu0 0.0
      %3909 = vmatpush2.msra.mxu0 %v1225
      %3910 = vmatprep.subr.mxu0 0.0
      %3911 = vmatpush2.msra.mxu0 %v1224
      %3912 = vmatprep.subr.mxu0 0.0
      %3913 = vmatpush2.msra.mxu0 %v1223
      %3914 = vmatprep.subr.mxu0 0.0
      %3915 = vmatpush2.msra.mxu0 %v1222
      %3916 = vmatprep.subr.mxu0 0.0
      %3917 = vmatpush2.msra.mxu0 %v1221
      %3918 = vmatprep.subr.mxu0 0.0
      %3919 = vmatpush2.msra.mxu0 %v1220
      %3920 = vmatprep.subr.mxu0 0.0
      %3921 = vmatpush2.msra.mxu0 %v1219
      %3922 = vmatprep.subr.mxu0 0.0
      %3923 = vmatpush2.msra.mxu0 %v1218
      %3924 = vmatprep.subr.mxu0 0.0
      %3925 = vmatpush2.msra.mxu0 %v1217
      %3926 = vmatprep.subr.mxu0 0.0
      %3927 = vmatpush2.msra.mxu0 %v1216
      %3928 = vmatprep.subr.mxu0 0.0
      %3929 = vmatpush2.msra.mxu0 %v1215
      %3930 = vmatprep.subr.mxu0 0.0
      %3931 = vmatpush2.msra.mxu0 %v1214
      %3932 = vmatprep.subr.mxu0 0.0
      %3933 = vmatpush2.msra.mxu0 %v1213
      %3934 = vmatprep.subr.mxu0 0.0
      %3935 = vmatpush2.msra.mxu0 %v1212
      %3936 = vmatprep.subr.mxu0 0.0
      %3937 = vmatpush2.msra.mxu0 %v1211
      %3938 = vmatprep.mubr.f32.mxu0 %v430
      %3939 = vmatmul.mubr.f32.gmra.mxu0 %v429
      %v3940 = vpop.f32.mrf.mxu0
      %v3941 = vadd.f32 %v3871, %v3940
      %v3942 = vpop.f32.mrf.mxu0
      %3943 = vdwg.mxu0
      %3944 = vmatprep.subr.mxu0 0.0
      %3945 = vmatpush1.msra.mxu0 %v1242
      %3946 = vmatprep.subr.mxu0 0.0
      %3947 = vmatpush1.msra.mxu0 %v1241
      %3948 = vmatprep.subr.mxu0 0.0
      %3949 = vmatpush1.msra.mxu0 %v1240
      %3950 = vmatprep.subr.mxu0 0.0
      %3951 = vmatpush1.msra.mxu0 %v1239
      %3952 = vmatprep.subr.mxu0 0.0
      %3953 = vmatpush1.msra.mxu0 %v1238
      %3954 = vmatprep.subr.mxu0 0.0
      %3955 = vmatpush1.msra.mxu0 %v1237
      %3956 = vmatprep.subr.mxu0 0.0
      %3957 = vmatpush1.msra.mxu0 %v1236
      %3958 = vmatprep.subr.mxu0 0.0
      %3959 = vmatpush1.msra.mxu0 %v1235
      %3960 = vmatprep.subr.mxu0 0.0
      %3961 = vmatpush1.msra.mxu0 %v1234
      %3962 = vmatprep.subr.mxu0 0.0
      %3963 = vmatpush1.msra.mxu0 %v1233
      %3964 = vmatprep.subr.mxu0 0.0
      %3965 = vmatpush1.msra.mxu0 %v1232
      %3966 = vmatprep.subr.mxu0 0.0
      %3967 = vmatpush1.msra.mxu0 %v1231
      %3968 = vmatprep.subr.mxu0 0.0
      %3969 = vmatpush1.msra.mxu0 %v1230
      %3970 = vmatprep.subr.mxu0 0.0
      %3971 = vmatpush1.msra.mxu0 %v1229
      %3972 = vmatprep.subr.mxu0 0.0
      %3973 = vmatpush1.msra.mxu0 %v1228
      %3974 = vmatprep.subr.mxu0 0.0
      %3975 = vmatpush1.msra.mxu0 %v1227
      %3976 = vmatprep.subr.mxu0 0.0
      %3977 = vmatpush2.msra.mxu0 %v1258
      %3978 = vmatprep.subr.mxu0 0.0
      %3979 = vmatpush2.msra.mxu0 %v1257
      %3980 = vmatprep.subr.mxu0 0.0
      %3981 = vmatpush2.msra.mxu0 %v1256
      %3982 = vmatprep.subr.mxu0 0.0
      %3983 = vmatpush2.msra.mxu0 %v1255
      %3984 = vmatprep.subr.mxu0 0.0
      %3985 = vmatpush2.msra.mxu0 %v1254
      %3986 = vmatprep.subr.mxu0 0.0
      %3987 = vmatpush2.msra.mxu0 %v1253
      %3988 = vmatprep.subr.mxu0 0.0
      %3989 = vmatpush2.msra.mxu0 %v1252
      %3990 = vmatprep.subr.mxu0 0.0
      %3991 = vmatpush2.msra.mxu0 %v1251
      %3992 = vmatprep.subr.mxu0 0.0
      %3993 = vmatpush2.msra.mxu0 %v1250
      %3994 = vmatprep.subr.mxu0 0.0
      %3995 = vmatpush2.msra.mxu0 %v1249
      %3996 = vmatprep.subr.mxu0 0.0
      %3997 = vmatpush2.msra.mxu0 %v1248
      %3998 = vmatprep.subr.mxu0 0.0
      %3999 = vmatpush2.msra.mxu0 %v1247
      %4000 = vmatprep.subr.mxu0 0.0
      %4001 = vmatpush2.msra.mxu0 %v1246
      %4002 = vmatprep.subr.mxu0 0.0
      %4003 = vmatpush2.msra.mxu0 %v1245
      %4004 = vmatprep.subr.mxu0 0.0
      %4005 = vmatpush2.msra.mxu0 %v1244
      %4006 = vmatprep.subr.mxu0 0.0
      %4007 = vmatpush2.msra.mxu0 %v1243
      %4008 = vmatprep.mubr.f32.mxu0 %v432
      %4009 = vmatmul.mubr.f32.gmra.mxu0 %v431
      %v4010 = vpop.f32.mrf.mxu0
      %v4011 = vadd.f32 %v3941, %v4010
      %v4012 = vpop.f32.mrf.mxu0
      %4013 = vdwg.mxu0
      %4014 = vmatprep.subr.mxu0 0.0
      %4015 = vmatpush1.msra.mxu0 %v1274
      %4016 = vmatprep.subr.mxu0 0.0
      %4017 = vmatpush1.msra.mxu0 %v1273
      %4018 = vmatprep.subr.mxu0 0.0
      %4019 = vmatpush1.msra.mxu0 %v1272
      %4020 = vmatprep.subr.mxu0 0.0
      %4021 = vmatpush1.msra.mxu0 %v1271
      %4022 = vmatprep.subr.mxu0 0.0
      %4023 = vmatpush1.msra.mxu0 %v1270
      %4024 = vmatprep.subr.mxu0 0.0
      %4025 = vmatpush1.msra.mxu0 %v1269
      %4026 = vmatprep.subr.mxu0 0.0
      %4027 = vmatpush1.msra.mxu0 %v1268
      %4028 = vmatprep.subr.mxu0 0.0
      %4029 = vmatpush1.msra.mxu0 %v1267
      %4030 = vmatprep.subr.mxu0 0.0
      %4031 = vmatpush1.msra.mxu0 %v1266
      %4032 = vmatprep.subr.mxu0 0.0
      %4033 = vmatpush1.msra.mxu0 %v1265
      %4034 = vmatprep.subr.mxu0 0.0
      %4035 = vmatpush1.msra.mxu0 %v1264
      %4036 = vmatprep.subr.mxu0 0.0
      %4037 = vmatpush1.msra.mxu0 %v1263
      %4038 = vmatprep.subr.mxu0 0.0
      %4039 = vmatpush1.msra.mxu0 %v1262
      %4040 = vmatprep.subr.mxu0 0.0
      %4041 = vmatpush1.msra.mxu0 %v1261
      %4042 = vmatprep.subr.mxu0 0.0
      %4043 = vmatpush1.msra.mxu0 %v1260
      %4044 = vmatprep.subr.mxu0 0.0
      %4045 = vmatpush1.msra.mxu0 %v1259
      %4046 = vmatprep.subr.mxu0 0.0
      %4047 = vmatpush2.msra.mxu0 %v1290
      %4048 = vmatprep.subr.mxu0 0.0
      %4049 = vmatpush2.msra.mxu0 %v1289
      %4050 = vmatprep.subr.mxu0 0.0
      %4051 = vmatpush2.msra.mxu0 %v1288
      %4052 = vmatprep.subr.mxu0 0.0
      %4053 = vmatpush2.msra.mxu0 %v1287
      %4054 = vmatprep.subr.mxu0 0.0
      %4055 = vmatpush2.msra.mxu0 %v1286
      %4056 = vmatprep.subr.mxu0 0.0
      %4057 = vmatpush2.msra.mxu0 %v1285
      %4058 = vmatprep.subr.mxu0 0.0
      %4059 = vmatpush2.msra.mxu0 %v1284
      %4060 = vmatprep.subr.mxu0 0.0
      %4061 = vmatpush2.msra.mxu0 %v1283
      %4062 = vmatprep.subr.mxu0 0.0
      %4063 = vmatpush2.msra.mxu0 %v1282
      %4064 = vmatprep.subr.mxu0 0.0
      %4065 = vmatpush2.msra.mxu0 %v1281
      %4066 = vmatprep.subr.mxu0 0.0
      %4067 = vmatpush2.msra.mxu0 %v1280
      %4068 = vmatprep.subr.mxu0 0.0
      %4069 = vmatpush2.msra.mxu0 %v1279
      %4070 = vmatprep.subr.mxu0 0.0
      %4071 = vmatpush2.msra.mxu0 %v1278
      %4072 = vmatprep.subr.mxu0 0.0
      %4073 = vmatpush2.msra.mxu0 %v1277
      %4074 = vmatprep.subr.mxu0 0.0
      %4075 = vmatpush2.msra.mxu0 %v1276
      %4076 = vmatprep.subr.mxu0 0.0
      %4077 = vmatpush2.msra.mxu0 %v1275
      %4078 = vmatprep.mubr.f32.mxu0 %v434
      %4079 = vmatmul.mubr.f32.gmra.mxu0 %v433
      %v4080 = vpop.f32.mrf.mxu0
      %v4081 = vadd.f32 %v4011, %v4080
      %v4082 = vpop.f32.mrf.mxu0
      %4083 = vdwg.mxu0
      %4084 = vmatprep.subr.mxu0 0.0
      %4085 = vmatpush1.msra.mxu0 %v1306
      %4086 = vmatprep.subr.mxu0 0.0
      %4087 = vmatpush1.msra.mxu0 %v1305
      %4088 = vmatprep.subr.mxu0 0.0
      %4089 = vmatpush1.msra.mxu0 %v1304
      %4090 = vmatprep.subr.mxu0 0.0
      %4091 = vmatpush1.msra.mxu0 %v1303
      %4092 = vmatprep.subr.mxu0 0.0
      %4093 = vmatpush1.msra.mxu0 %v1302
      %4094 = vmatprep.subr.mxu0 0.0
      %4095 = vmatpush1.msra.mxu0 %v1301
      %4096 = vmatprep.subr.mxu0 0.0
      %4097 = vmatpush1.msra.mxu0 %v1300
      %4098 = vmatprep.subr.mxu0 0.0
      %4099 = vmatpush1.msra.mxu0 %v1299
      %4100 = vmatprep.subr.mxu0 0.0
      %4101 = vmatpush1.msra.mxu0 %v1298
      %4102 = vmatprep.subr.mxu0 0.0
      %4103 = vmatpush1.msra.mxu0 %v1297
      %4104 = vmatprep.subr.mxu0 0.0
      %4105 = vmatpush1.msra.mxu0 %v1296
      %4106 = vmatprep.subr.mxu0 0.0
      %4107 = vmatpush1.msra.mxu0 %v1295
      %4108 = vmatprep.subr.mxu0 0.0
      %4109 = vmatpush1.msra.mxu0 %v1294
      %4110 = vmatprep.subr.mxu0 0.0
      %4111 = vmatpush1.msra.mxu0 %v1293
      %4112 = vmatprep.subr.mxu0 0.0
      %4113 = vmatpush1.msra.mxu0 %v1292
      %4114 = vmatprep.subr.mxu0 0.0
      %4115 = vmatpush1.msra.mxu0 %v1291
      %4116 = vmatprep.subr.mxu0 0.0
      %4117 = vmatpush2.msra.mxu0 %v1322
      %4118 = vmatprep.subr.mxu0 0.0
      %4119 = vmatpush2.msra.mxu0 %v1321
      %4120 = vmatprep.subr.mxu0 0.0
      %4121 = vmatpush2.msra.mxu0 %v1320
      %4122 = vmatprep.subr.mxu0 0.0
      %4123 = vmatpush2.msra.mxu0 %v1319
      %4124 = vmatprep.subr.mxu0 0.0
      %4125 = vmatpush2.msra.mxu0 %v1318
      %4126 = vmatprep.subr.mxu0 0.0
      %4127 = vmatpush2.msra.mxu0 %v1317
      %4128 = vmatprep.subr.mxu0 0.0
      %4129 = vmatpush2.msra.mxu0 %v1316
      %4130 = vmatprep.subr.mxu0 0.0
      %4131 = vmatpush2.msra.mxu0 %v1315
      %4132 = vmatprep.subr.mxu0 0.0
      %4133 = vmatpush2.msra.mxu0 %v1314
      %4134 = vmatprep.subr.mxu0 0.0
      %4135 = vmatpush2.msra.mxu0 %v1313
      %4136 = vmatprep.subr.mxu0 0.0
      %4137 = vmatpush2.msra.mxu0 %v1312
      %4138 = vmatprep.subr.mxu0 0.0
      %4139 = vmatpush2.msra.mxu0 %v1311
      %4140 = vmatprep.subr.mxu0 0.0
      %4141 = vmatpush2.msra.mxu0 %v1310
      %4142 = vmatprep.subr.mxu0 0.0
      %4143 = vmatpush2.msra.mxu0 %v1309
      %4144 = vmatprep.subr.mxu0 0.0
      %4145 = vmatpush2.msra.mxu0 %v1308
      %4146 = vmatprep.subr.mxu0 0.0
      %4147 = vmatpush2.msra.mxu0 %v1307
      %4148 = vmatprep.mubr.f32.mxu0 %v436
      %4149 = vmatmul.mubr.f32.gmra.mxu0 %v435
      %v4150 = vpop.f32.mrf.mxu0
      %v4151 = vadd.f32 %v4081, %v4150
      %v4152 = vpop.f32.mrf.mxu0
      %4153 = vdwg.mxu0
      %4154 = vmatprep.subr.mxu0 0.0
      %4155 = vmatpush1.msra.mxu0 %v1338
      %4156 = vmatprep.subr.mxu0 0.0
      %4157 = vmatpush1.msra.mxu0 %v1337
      %4158 = vmatprep.subr.mxu0 0.0
      %4159 = vmatpush1.msra.mxu0 %v1336
      %4160 = vmatprep.subr.mxu0 0.0
      %4161 = vmatpush1.msra.mxu0 %v1335
      %4162 = vmatprep.subr.mxu0 0.0
      %4163 = vmatpush1.msra.mxu0 %v1334
      %4164 = vmatprep.subr.mxu0 0.0
      %4165 = vmatpush1.msra.mxu0 %v1333
      %4166 = vmatprep.subr.mxu0 0.0
      %4167 = vmatpush1.msra.mxu0 %v1332
      %4168 = vmatprep.subr.mxu0 0.0
      %4169 = vmatpush1.msra.mxu0 %v1331
      %4170 = vmatprep.subr.mxu0 0.0
      %4171 = vmatpush1.msra.mxu0 %v1330
      %4172 = vmatprep.subr.mxu0 0.0
      %4173 = vmatpush1.msra.mxu0 %v1329
      %4174 = vmatprep.subr.mxu0 0.0
      %4175 = vmatpush1.msra.mxu0 %v1328
      %4176 = vmatprep.subr.mxu0 0.0
      %4177 = vmatpush1.msra.mxu0 %v1327
      %4178 = vmatprep.subr.mxu0 0.0
      %4179 = vmatpush1.msra.mxu0 %v1326
      %4180 = vmatprep.subr.mxu0 0.0
      %4181 = vmatpush1.msra.mxu0 %v1325
      %4182 = vmatprep.subr.mxu0 0.0
      %4183 = vmatpush1.msra.mxu0 %v1324
      %4184 = vmatprep.subr.mxu0 0.0
      %4185 = vmatpush1.msra.mxu0 %v1323
      %4186 = vmatprep.subr.mxu0 0.0
      %4187 = vmatpush2.msra.mxu0 %v1354
      %4188 = vmatprep.subr.mxu0 0.0
      %4189 = vmatpush2.msra.mxu0 %v1353
      %4190 = vmatprep.subr.mxu0 0.0
      %4191 = vmatpush2.msra.mxu0 %v1352
      %4192 = vmatprep.subr.mxu0 0.0
      %4193 = vmatpush2.msra.mxu0 %v1351
      %4194 = vmatprep.subr.mxu0 0.0
      %4195 = vmatpush2.msra.mxu0 %v1350
      %4196 = vmatprep.subr.mxu0 0.0
      %4197 = vmatpush2.msra.mxu0 %v1349
      %4198 = vmatprep.subr.mxu0 0.0
      %4199 = vmatpush2.msra.mxu0 %v1348
      %4200 = vmatprep.subr.mxu0 0.0
      %4201 = vmatpush2.msra.mxu0 %v1347
      %4202 = vmatprep.subr.mxu0 0.0
      %4203 = vmatpush2.msra.mxu0 %v1346
      %4204 = vmatprep.subr.mxu0 0.0
      %4205 = vmatpush2.msra.mxu0 %v1345
      %4206 = vmatprep.subr.mxu0 0.0
      %4207 = vmatpush2.msra.mxu0 %v1344
      %4208 = vmatprep.subr.mxu0 0.0
      %4209 = vmatpush2.msra.mxu0 %v1343
      %4210 = vmatprep.subr.mxu0 0.0
      %4211 = vmatpush2.msra.mxu0 %v1342
      %4212 = vmatprep.subr.mxu0 0.0
      %4213 = vmatpush2.msra.mxu0 %v1341
      %4214 = vmatprep.subr.mxu0 0.0
      %4215 = vmatpush2.msra.mxu0 %v1340
      %4216 = vmatprep.subr.mxu0 0.0
      %4217 = vmatpush2.msra.mxu0 %v1339
      %4218 = vmatprep.mubr.f32.mxu0 %v438
      %4219 = vmatmul.mubr.f32.gmra.mxu0 %v437
      %v4220 = vpop.f32.mrf.mxu0
      %v4221 = vadd.f32 %v4151, %v4220
      %v4222 = vpop.f32.mrf.mxu0
      %4223 = vdwg.mxu0
      %4224 = vmatprep.subr.mxu0 0.0
      %4225 = vmatpush1.msra.mxu0 %v1370
      %4226 = vmatprep.subr.mxu0 0.0
      %4227 = vmatpush1.msra.mxu0 %v1369
      %4228 = vmatprep.subr.mxu0 0.0
      %4229 = vmatpush1.msra.mxu0 %v1368
      %4230 = vmatprep.subr.mxu0 0.0
      %4231 = vmatpush1.msra.mxu0 %v1367
      %4232 = vmatprep.subr.mxu0 0.0
      %4233 = vmatpush1.msra.mxu0 %v1366
      %4234 = vmatprep.subr.mxu0 0.0
      %4235 = vmatpush1.msra.mxu0 %v1365
      %4236 = vmatprep.subr.mxu0 0.0
      %4237 = vmatpush1.msra.mxu0 %v1364
      %4238 = vmatprep.subr.mxu0 0.0
      %4239 = vmatpush1.msra.mxu0 %v1363
      %4240 = vmatprep.subr.mxu0 0.0
      %4241 = vmatpush1.msra.mxu0 %v1362
      %4242 = vmatprep.subr.mxu0 0.0
      %4243 = vmatpush1.msra.mxu0 %v1361
      %4244 = vmatprep.subr.mxu0 0.0
      %4245 = vmatpush1.msra.mxu0 %v1360
      %4246 = vmatprep.subr.mxu0 0.0
      %4247 = vmatpush1.msra.mxu0 %v1359
      %4248 = vmatprep.subr.mxu0 0.0
      %4249 = vmatpush1.msra.mxu0 %v1358
      %4250 = vmatprep.subr.mxu0 0.0
      %4251 = vmatpush1.msra.mxu0 %v1357
      %4252 = vmatprep.subr.mxu0 0.0
      %4253 = vmatpush1.msra.mxu0 %v1356
      %4254 = vmatprep.subr.mxu0 0.0
      %4255 = vmatpush1.msra.mxu0 %v1355
      %4256 = vmatprep.subr.mxu0 0.0
      %4257 = vmatpush2.msra.mxu0 %v1386
      %4258 = vmatprep.subr.mxu0 0.0
      %4259 = vmatpush2.msra.mxu0 %v1385
      %4260 = vmatprep.subr.mxu0 0.0
      %4261 = vmatpush2.msra.mxu0 %v1384
      %4262 = vmatprep.subr.mxu0 0.0
      %4263 = vmatpush2.msra.mxu0 %v1383
      %4264 = vmatprep.subr.mxu0 0.0
      %4265 = vmatpush2.msra.mxu0 %v1382
      %4266 = vmatprep.subr.mxu0 0.0
      %4267 = vmatpush2.msra.mxu0 %v1381
      %4268 = vmatprep.subr.mxu0 0.0
      %4269 = vmatpush2.msra.mxu0 %v1380
      %4270 = vmatprep.subr.mxu0 0.0
      %4271 = vmatpush2.msra.mxu0 %v1379
      %4272 = vmatprep.subr.mxu0 0.0
      %4273 = vmatpush2.msra.mxu0 %v1378
      %4274 = vmatprep.subr.mxu0 0.0
      %4275 = vmatpush2.msra.mxu0 %v1377
      %4276 = vmatprep.subr.mxu0 0.0
      %4277 = vmatpush2.msra.mxu0 %v1376
      %4278 = vmatprep.subr.mxu0 0.0
      %4279 = vmatpush2.msra.mxu0 %v1375
      %4280 = vmatprep.subr.mxu0 0.0
      %4281 = vmatpush2.msra.mxu0 %v1374
      %4282 = vmatprep.subr.mxu0 0.0
      %4283 = vmatpush2.msra.mxu0 %v1373
      %4284 = vmatprep.subr.mxu0 0.0
      %4285 = vmatpush2.msra.mxu0 %v1372
      %4286 = vmatprep.subr.mxu0 0.0
      %4287 = vmatpush2.msra.mxu0 %v1371
      %4288 = vmatprep.mubr.f32.mxu0 %v440
      %4289 = vmatmul.mubr.f32.gmra.mxu0 %v439
      %v4290 = vpop.f32.mrf.mxu0
      %v4291 = vadd.f32 %v4221, %v4290
      %v4292 = vpop.f32.mrf.mxu0
      %4293 = vdwg.mxu0
      %4294 = vmatprep.subr.mxu0 0.0
      %4295 = vmatpush1.msra.mxu0 %v1402
      %4296 = vmatprep.subr.mxu0 0.0
      %4297 = vmatpush1.msra.mxu0 %v1401
      %4298 = vmatprep.subr.mxu0 0.0
      %4299 = vmatpush1.msra.mxu0 %v1400
      %4300 = vmatprep.subr.mxu0 0.0
      %4301 = vmatpush1.msra.mxu0 %v1399
      %4302 = vmatprep.subr.mxu0 0.0
      %4303 = vmatpush1.msra.mxu0 %v1398
      %4304 = vmatprep.subr.mxu0 0.0
      %4305 = vmatpush1.msra.mxu0 %v1397
      %4306 = vmatprep.subr.mxu0 0.0
      %4307 = vmatpush1.msra.mxu0 %v1396
      %4308 = vmatprep.subr.mxu0 0.0
      %4309 = vmatpush1.msra.mxu0 %v1395
      %4310 = vmatprep.subr.mxu0 0.0
      %4311 = vmatpush1.msra.mxu0 %v1394
      %4312 = vmatprep.subr.mxu0 0.0
      %4313 = vmatpush1.msra.mxu0 %v1393
      %4314 = vmatprep.subr.mxu0 0.0
      %4315 = vmatpush1.msra.mxu0 %v1392
      %4316 = vmatprep.subr.mxu0 0.0
      %4317 = vmatpush1.msra.mxu0 %v1391
      %4318 = vmatprep.subr.mxu0 0.0
      %4319 = vmatpush1.msra.mxu0 %v1390
      %4320 = vmatprep.subr.mxu0 0.0
      %4321 = vmatpush1.msra.mxu0 %v1389
      %4322 = vmatprep.subr.mxu0 0.0
      %4323 = vmatpush1.msra.mxu0 %v1388
      %4324 = vmatprep.subr.mxu0 0.0
      %4325 = vmatpush1.msra.mxu0 %v1387
      %4326 = vmatprep.subr.mxu0 0.0
      %4327 = vmatpush2.msra.mxu0 %v1418
      %4328 = vmatprep.subr.mxu0 0.0
      %4329 = vmatpush2.msra.mxu0 %v1417
      %4330 = vmatprep.subr.mxu0 0.0
      %4331 = vmatpush2.msra.mxu0 %v1416
      %4332 = vmatprep.subr.mxu0 0.0
      %4333 = vmatpush2.msra.mxu0 %v1415
      %4334 = vmatprep.subr.mxu0 0.0
      %4335 = vmatpush2.msra.mxu0 %v1414
      %4336 = vmatprep.subr.mxu0 0.0
      %4337 = vmatpush2.msra.mxu0 %v1413
      %4338 = vmatprep.subr.mxu0 0.0
      %4339 = vmatpush2.msra.mxu0 %v1412
      %4340 = vmatprep.subr.mxu0 0.0
      %4341 = vmatpush2.msra.mxu0 %v1411
      %4342 = vmatprep.subr.mxu0 0.0
      %4343 = vmatpush2.msra.mxu0 %v1410
      %4344 = vmatprep.subr.mxu0 0.0
      %4345 = vmatpush2.msra.mxu0 %v1409
      %4346 = vmatprep.subr.mxu0 0.0
      %4347 = vmatpush2.msra.mxu0 %v1408
      %4348 = vmatprep.subr.mxu0 0.0
      %4349 = vmatpush2.msra.mxu0 %v1407
      %4350 = vmatprep.subr.mxu0 0.0
      %4351 = vmatpush2.msra.mxu0 %v1406
      %4352 = vmatprep.subr.mxu0 0.0
      %4353 = vmatpush2.msra.mxu0 %v1405
      %4354 = vmatprep.subr.mxu0 0.0
      %4355 = vmatpush2.msra.mxu0 %v1404
      %4356 = vmatprep.subr.mxu0 0.0
      %4357 = vmatpush2.msra.mxu0 %v1403
      %4358 = vmatprep.mubr.f32.mxu0 %v442
      %4359 = vmatmul.mubr.f32.gmra.mxu0 %v441
      %v4360 = vpop.f32.mrf.mxu0
      %v4361 = vadd.f32 %v4291, %v4360
      %v4362 = vpop.f32.mrf.mxu0
      %4363 = vdwg.mxu0
      %4364 = vmatprep.subr.mxu0 0.0
      %4365 = vmatpush1.msra.mxu0 %v1434
      %4366 = vmatprep.subr.mxu0 0.0
      %4367 = vmatpush1.msra.mxu0 %v1433
      %4368 = vmatprep.subr.mxu0 0.0
      %4369 = vmatpush1.msra.mxu0 %v1432
      %4370 = vmatprep.subr.mxu0 0.0
      %4371 = vmatpush1.msra.mxu0 %v1431
      %4372 = vmatprep.subr.mxu0 0.0
      %4373 = vmatpush1.msra.mxu0 %v1430
      %4374 = vmatprep.subr.mxu0 0.0
      %4375 = vmatpush1.msra.mxu0 %v1429
      %4376 = vmatprep.subr.mxu0 0.0
      %4377 = vmatpush1.msra.mxu0 %v1428
      %4378 = vmatprep.subr.mxu0 0.0
      %4379 = vmatpush1.msra.mxu0 %v1427
      %4380 = vmatprep.subr.mxu0 0.0
      %4381 = vmatpush1.msra.mxu0 %v1426
      %4382 = vmatprep.subr.mxu0 0.0
      %4383 = vmatpush1.msra.mxu0 %v1425
      %4384 = vmatprep.subr.mxu0 0.0
      %4385 = vmatpush1.msra.mxu0 %v1424
      %4386 = vmatprep.subr.mxu0 0.0
      %4387 = vmatpush1.msra.mxu0 %v1423
      %4388 = vmatprep.subr.mxu0 0.0
      %4389 = vmatpush1.msra.mxu0 %v1422
      %4390 = vmatprep.subr.mxu0 0.0
      %4391 = vmatpush1.msra.mxu0 %v1421
      %4392 = vmatprep.subr.mxu0 0.0
      %4393 = vmatpush1.msra.mxu0 %v1420
      %4394 = vmatprep.subr.mxu0 0.0
      %4395 = vmatpush1.msra.mxu0 %v1419
      %4396 = vmatprep.subr.mxu0 0.0
      %4397 = vmatpush2.msra.mxu0 %v1450
      %4398 = vmatprep.subr.mxu0 0.0
      %4399 = vmatpush2.msra.mxu0 %v1449
      %4400 = vmatprep.subr.mxu0 0.0
      %4401 = vmatpush2.msra.mxu0 %v1448
      %4402 = vmatprep.subr.mxu0 0.0
      %4403 = vmatpush2.msra.mxu0 %v1447
      %4404 = vmatprep.subr.mxu0 0.0
      %4405 = vmatpush2.msra.mxu0 %v1446
      %4406 = vmatprep.subr.mxu0 0.0
      %4407 = vmatpush2.msra.mxu0 %v1445
      %4408 = vmatprep.subr.mxu0 0.0
      %4409 = vmatpush2.msra.mxu0 %v1444
      %4410 = vmatprep.subr.mxu0 0.0
      %4411 = vmatpush2.msra.mxu0 %v1443
      %4412 = vmatprep.subr.mxu0 0.0
      %4413 = vmatpush2.msra.mxu0 %v1442
      %4414 = vmatprep.subr.mxu0 0.0
      %4415 = vmatpush2.msra.mxu0 %v1441
      %4416 = vmatprep.subr.mxu0 0.0
      %4417 = vmatpush2.msra.mxu0 %v1440
      %4418 = vmatprep.subr.mxu0 0.0
      %4419 = vmatpush2.msra.mxu0 %v1439
      %4420 = vmatprep.subr.mxu0 0.0
      %4421 = vmatpush2.msra.mxu0 %v1438
      %4422 = vmatprep.subr.mxu0 0.0
      %4423 = vmatpush2.msra.mxu0 %v1437
      %4424 = vmatprep.subr.mxu0 0.0
      %4425 = vmatpush2.msra.mxu0 %v1436
      %4426 = vmatprep.subr.mxu0 0.0
      %4427 = vmatpush2.msra.mxu0 %v1435
      %4428 = vmatprep.mubr.f32.mxu0 %v444
      %4429 = vmatmul.mubr.f32.gmra.mxu0 %v443
      %v4430 = vpop.f32.mrf.mxu0
      %v4431 = vadd.f32 %v4361, %v4430
      %v4432 = vpop.f32.mrf.mxu0
      %4433 = vdwg.mxu0
      %4434 = vmatprep.subr.mxu0 0.0
      %4435 = vmatpush1.msra.mxu0 %v1466
      %4436 = vmatprep.subr.mxu0 0.0
      %4437 = vmatpush1.msra.mxu0 %v1465
      %4438 = vmatprep.subr.mxu0 0.0
      %4439 = vmatpush1.msra.mxu0 %v1464
      %4440 = vmatprep.subr.mxu0 0.0
      %4441 = vmatpush1.msra.mxu0 %v1463
      %4442 = vmatprep.subr.mxu0 0.0
      %4443 = vmatpush1.msra.mxu0 %v1462
      %4444 = vmatprep.subr.mxu0 0.0
      %4445 = vmatpush1.msra.mxu0 %v1461
      %4446 = vmatprep.subr.mxu0 0.0
      %4447 = vmatpush1.msra.mxu0 %v1460
      %4448 = vmatprep.subr.mxu0 0.0
      %4449 = vmatpush1.msra.mxu0 %v1459
      %4450 = vmatprep.subr.mxu0 0.0
      %4451 = vmatpush1.msra.mxu0 %v1458
      %4452 = vmatprep.subr.mxu0 0.0
      %4453 = vmatpush1.msra.mxu0 %v1457
      %4454 = vmatprep.subr.mxu0 0.0
      %4455 = vmatpush1.msra.mxu0 %v1456
      %4456 = vmatprep.subr.mxu0 0.0
      %4457 = vmatpush1.msra.mxu0 %v1455
      %4458 = vmatprep.subr.mxu0 0.0
      %4459 = vmatpush1.msra.mxu0 %v1454
      %4460 = vmatprep.subr.mxu0 0.0
      %4461 = vmatpush1.msra.mxu0 %v1453
      %4462 = vmatprep.subr.mxu0 0.0
      %4463 = vmatpush1.msra.mxu0 %v1452
      %4464 = vmatprep.subr.mxu0 0.0
      %4465 = vmatpush1.msra.mxu0 %v1451
      %4466 = vmatprep.subr.mxu0 0.0
      %4467 = vmatpush2.msra.mxu0 %v1482
      %4468 = vmatprep.subr.mxu0 0.0
      %4469 = vmatpush2.msra.mxu0 %v1481
      %4470 = vmatprep.subr.mxu0 0.0
      %4471 = vmatpush2.msra.mxu0 %v1480
      %4472 = vmatprep.subr.mxu0 0.0
      %4473 = vmatpush2.msra.mxu0 %v1479
      %4474 = vmatprep.subr.mxu0 0.0
      %4475 = vmatpush2.msra.mxu0 %v1478
      %4476 = vmatprep.subr.mxu0 0.0
      %4477 = vmatpush2.msra.mxu0 %v1477
      %4478 = vmatprep.subr.mxu0 0.0
      %4479 = vmatpush2.msra.mxu0 %v1476
      %4480 = vmatprep.subr.mxu0 0.0
      %4481 = vmatpush2.msra.mxu0 %v1475
      %4482 = vmatprep.subr.mxu0 0.0
      %4483 = vmatpush2.msra.mxu0 %v1474
      %4484 = vmatprep.subr.mxu0 0.0
      %4485 = vmatpush2.msra.mxu0 %v1473
      %4486 = vmatprep.subr.mxu0 0.0
      %4487 = vmatpush2.msra.mxu0 %v1472
      %4488 = vmatprep.subr.mxu0 0.0
      %4489 = vmatpush2.msra.mxu0 %v1471
      %4490 = vmatprep.subr.mxu0 0.0
      %4491 = vmatpush2.msra.mxu0 %v1470
      %4492 = vmatprep.subr.mxu0 0.0
      %4493 = vmatpush2.msra.mxu0 %v1469
      %4494 = vmatprep.subr.mxu0 0.0
      %4495 = vmatpush2.msra.mxu0 %v1468
      %4496 = vmatprep.subr.mxu0 0.0
      %4497 = vmatpush2.msra.mxu0 %v1467
      %4498 = vmatprep.mubr.f32.mxu0 %v446
      %4499 = vmatmul.mubr.f32.gmra.mxu0 %v445
      %v4500 = vpop.f32.mrf.mxu0
      %v4501 = vadd.f32 %v4431, %v4500
      %v4502 = vpop.f32.mrf.mxu0
      %4503 = vdwg.mxu0
      %4504 = vmatprep.subr.mxu0 0.0
      %4505 = vmatpush1.msra.mxu0 %v1498
      %4506 = vmatprep.subr.mxu0 0.0
      %4507 = vmatpush1.msra.mxu0 %v1497
      %4508 = vmatprep.subr.mxu0 0.0
      %4509 = vmatpush1.msra.mxu0 %v1496
      %4510 = vmatprep.subr.mxu0 0.0
      %4511 = vmatpush1.msra.mxu0 %v1495
      %4512 = vmatprep.subr.mxu0 0.0
      %4513 = vmatpush1.msra.mxu0 %v1494
      %4514 = vmatprep.subr.mxu0 0.0
      %4515 = vmatpush1.msra.mxu0 %v1493
      %4516 = vmatprep.subr.mxu0 0.0
      %4517 = vmatpush1.msra.mxu0 %v1492
      %4518 = vmatprep.subr.mxu0 0.0
      %4519 = vmatpush1.msra.mxu0 %v1491
      %4520 = vmatprep.subr.mxu0 0.0
      %4521 = vmatpush1.msra.mxu0 %v1490
      %4522 = vmatprep.subr.mxu0 0.0
      %4523 = vmatpush1.msra.mxu0 %v1489
      %4524 = vmatprep.subr.mxu0 0.0
      %4525 = vmatpush1.msra.mxu0 %v1488
      %4526 = vmatprep.subr.mxu0 0.0
      %4527 = vmatpush1.msra.mxu0 %v1487
      %4528 = vmatprep.subr.mxu0 0.0
      %4529 = vmatpush1.msra.mxu0 %v1486
      %4530 = vmatprep.subr.mxu0 0.0
      %4531 = vmatpush1.msra.mxu0 %v1485
      %4532 = vmatprep.subr.mxu0 0.0
      %4533 = vmatpush1.msra.mxu0 %v1484
      %4534 = vmatprep.subr.mxu0 0.0
      %4535 = vmatpush1.msra.mxu0 %v1483
      %4536 = vmatprep.subr.mxu0 0.0
      %4537 = vmatpush2.msra.mxu0 %v1514
      %4538 = vmatprep.subr.mxu0 0.0
      %4539 = vmatpush2.msra.mxu0 %v1513
      %4540 = vmatprep.subr.mxu0 0.0
      %4541 = vmatpush2.msra.mxu0 %v1512
      %4542 = vmatprep.subr.mxu0 0.0
      %4543 = vmatpush2.msra.mxu0 %v1511
      %4544 = vmatprep.subr.mxu0 0.0
      %4545 = vmatpush2.msra.mxu0 %v1510
      %4546 = vmatprep.subr.mxu0 0.0
      %4547 = vmatpush2.msra.mxu0 %v1509
      %4548 = vmatprep.subr.mxu0 0.0
      %4549 = vmatpush2.msra.mxu0 %v1508
      %4550 = vmatprep.subr.mxu0 0.0
      %4551 = vmatpush2.msra.mxu0 %v1507
      %4552 = vmatprep.subr.mxu0 0.0
      %4553 = vmatpush2.msra.mxu0 %v1506
      %4554 = vmatprep.subr.mxu0 0.0
      %4555 = vmatpush2.msra.mxu0 %v1505
      %4556 = vmatprep.subr.mxu0 0.0
      %4557 = vmatpush2.msra.mxu0 %v1504
      %4558 = vmatprep.subr.mxu0 0.0
      %4559 = vmatpush2.msra.mxu0 %v1503
      %4560 = vmatprep.subr.mxu0 0.0
      %4561 = vmatpush2.msra.mxu0 %v1502
      %4562 = vmatprep.subr.mxu0 0.0
      %4563 = vmatpush2.msra.mxu0 %v1501
      %4564 = vmatprep.subr.mxu0 0.0
      %4565 = vmatpush2.msra.mxu0 %v1500
      %4566 = vmatprep.subr.mxu0 0.0
      %4567 = vmatpush2.msra.mxu0 %v1499
      %4568 = vmatprep.mubr.f32.mxu0 %v448
      %4569 = vmatmul.mubr.f32.gmra.mxu0 %v447
      %v4570 = vpop.f32.mrf.mxu0
      %v4571 = vadd.f32 %v4501, %v4570
      %v4572 = vpop.f32.mrf.mxu0
      %4573 = vdwg.mxu0
      %4574 = vmatprep.subr.mxu0 0.0
      %4575 = vmatpush1.msra.mxu0 %v1530
      %4576 = vmatprep.subr.mxu0 0.0
      %4577 = vmatpush1.msra.mxu0 %v1529
      %4578 = vmatprep.subr.mxu0 0.0
      %4579 = vmatpush1.msra.mxu0 %v1528
      %4580 = vmatprep.subr.mxu0 0.0
      %4581 = vmatpush1.msra.mxu0 %v1527
      %4582 = vmatprep.subr.mxu0 0.0
      %4583 = vmatpush1.msra.mxu0 %v1526
      %4584 = vmatprep.subr.mxu0 0.0
      %4585 = vmatpush1.msra.mxu0 %v1525
      %4586 = vmatprep.subr.mxu0 0.0
      %4587 = vmatpush1.msra.mxu0 %v1524
      %4588 = vmatprep.subr.mxu0 0.0
      %4589 = vmatpush1.msra.mxu0 %v1523
      %4590 = vmatprep.subr.mxu0 0.0
      %4591 = vmatpush1.msra.mxu0 %v1522
      %4592 = vmatprep.subr.mxu0 0.0
      %4593 = vmatpush1.msra.mxu0 %v1521
      %4594 = vmatprep.subr.mxu0 0.0
      %4595 = vmatpush1.msra.mxu0 %v1520
      %4596 = vmatprep.subr.mxu0 0.0
      %4597 = vmatpush1.msra.mxu0 %v1519
      %4598 = vmatprep.subr.mxu0 0.0
      %4599 = vmatpush1.msra.mxu0 %v1518
      %4600 = vmatprep.subr.mxu0 0.0
      %4601 = vmatpush1.msra.mxu0 %v1517
      %4602 = vmatprep.subr.mxu0 0.0
      %4603 = vmatpush1.msra.mxu0 %v1516
      %4604 = vmatprep.subr.mxu0 0.0
      %4605 = vmatpush1.msra.mxu0 %v1515
      %4606 = vmatprep.subr.mxu0 0.0
      %4607 = vmatpush2.msra.mxu0 %v1546
      %4608 = vmatprep.subr.mxu0 0.0
      %4609 = vmatpush2.msra.mxu0 %v1545
      %4610 = vmatprep.subr.mxu0 0.0
      %4611 = vmatpush2.msra.mxu0 %v1544
      %4612 = vmatprep.subr.mxu0 0.0
      %4613 = vmatpush2.msra.mxu0 %v1543
      %4614 = vmatprep.subr.mxu0 0.0
      %4615 = vmatpush2.msra.mxu0 %v1542
      %4616 = vmatprep.subr.mxu0 0.0
      %4617 = vmatpush2.msra.mxu0 %v1541
      %4618 = vmatprep.subr.mxu0 0.0
      %4619 = vmatpush2.msra.mxu0 %v1540
      %4620 = vmatprep.subr.mxu0 0.0
      %4621 = vmatpush2.msra.mxu0 %v1539
      %4622 = vmatprep.subr.mxu0 0.0
      %4623 = vmatpush2.msra.mxu0 %v1538
      %4624 = vmatprep.subr.mxu0 0.0
      %4625 = vmatpush2.msra.mxu0 %v1537
      %4626 = vmatprep.subr.mxu0 0.0
      %4627 = vmatpush2.msra.mxu0 %v1536
      %4628 = vmatprep.subr.mxu0 0.0
      %4629 = vmatpush2.msra.mxu0 %v1535
      %4630 = vmatprep.subr.mxu0 0.0
      %4631 = vmatpush2.msra.mxu0 %v1534
      %4632 = vmatprep.subr.mxu0 0.0
      %4633 = vmatpush2.msra.mxu0 %v1533
      %4634 = vmatprep.subr.mxu0 0.0
      %4635 = vmatpush2.msra.mxu0 %v1532
      %4636 = vmatprep.subr.mxu0 0.0
      %4637 = vmatpush2.msra.mxu0 %v1531
      %4638 = vmatprep.mubr.f32.mxu0 %v450
      %4639 = vmatmul.mubr.f32.gmra.mxu0 %v449
      %v4640 = vpop.f32.mrf.mxu0
      %v4641 = vadd.f32 %v4571, %v4640
      %v4642 = vpop.f32.mrf.mxu0
      %4643 = vdwg.mxu0
      %4644 = vmatprep.subr.mxu0 0.0
      %4645 = vmatpush1.msra.mxu0 %v1562
      %4646 = vmatprep.subr.mxu0 0.0
      %4647 = vmatpush1.msra.mxu0 %v1561
      %4648 = vmatprep.subr.mxu0 0.0
      %4649 = vmatpush1.msra.mxu0 %v1560
      %4650 = vmatprep.subr.mxu0 0.0
      %4651 = vmatpush1.msra.mxu0 %v1559
      %4652 = vmatprep.subr.mxu0 0.0
      %4653 = vmatpush1.msra.mxu0 %v1558
      %4654 = vmatprep.subr.mxu0 0.0
      %4655 = vmatpush1.msra.mxu0 %v1557
      %4656 = vmatprep.subr.mxu0 0.0
      %4657 = vmatpush1.msra.mxu0 %v1556
      %4658 = vmatprep.subr.mxu0 0.0
      %4659 = vmatpush1.msra.mxu0 %v1555
      %4660 = vmatprep.subr.mxu0 0.0
      %4661 = vmatpush1.msra.mxu0 %v1554
      %4662 = vmatprep.subr.mxu0 0.0
      %4663 = vmatpush1.msra.mxu0 %v1553
      %4664 = vmatprep.subr.mxu0 0.0
      %4665 = vmatpush1.msra.mxu0 %v1552
      %4666 = vmatprep.subr.mxu0 0.0
      %4667 = vmatpush1.msra.mxu0 %v1551
      %4668 = vmatprep.subr.mxu0 0.0
      %4669 = vmatpush1.msra.mxu0 %v1550
      %4670 = vmatprep.subr.mxu0 0.0
      %4671 = vmatpush1.msra.mxu0 %v1549
      %4672 = vmatprep.subr.mxu0 0.0
      %4673 = vmatpush1.msra.mxu0 %v1548
      %4674 = vmatprep.subr.mxu0 0.0
      %4675 = vmatpush1.msra.mxu0 %v1547
      %4676 = vmatprep.subr.mxu0 0.0
      %4677 = vmatpush2.msra.mxu0 %v1578
      %4678 = vmatprep.subr.mxu0 0.0
      %4679 = vmatpush2.msra.mxu0 %v1577
      %4680 = vmatprep.subr.mxu0 0.0
      %4681 = vmatpush2.msra.mxu0 %v1576
      %4682 = vmatprep.subr.mxu0 0.0
      %4683 = vmatpush2.msra.mxu0 %v1575
      %4684 = vmatprep.subr.mxu0 0.0
      %4685 = vmatpush2.msra.mxu0 %v1574
      %4686 = vmatprep.subr.mxu0 0.0
      %4687 = vmatpush2.msra.mxu0 %v1573
      %4688 = vmatprep.subr.mxu0 0.0
      %4689 = vmatpush2.msra.mxu0 %v1572
      %4690 = vmatprep.subr.mxu0 0.0
      %4691 = vmatpush2.msra.mxu0 %v1571
      %4692 = vmatprep.subr.mxu0 0.0
      %4693 = vmatpush2.msra.mxu0 %v1570
      %4694 = vmatprep.subr.mxu0 0.0
      %4695 = vmatpush2.msra.mxu0 %v1569
      %4696 = vmatprep.subr.mxu0 0.0
      %4697 = vmatpush2.msra.mxu0 %v1568
      %4698 = vmatprep.subr.mxu0 0.0
      %4699 = vmatpush2.msra.mxu0 %v1567
      %4700 = vmatprep.subr.mxu0 0.0
      %4701 = vmatpush2.msra.mxu0 %v1566
      %4702 = vmatprep.subr.mxu0 0.0
      %4703 = vmatpush2.msra.mxu0 %v1565
      %4704 = vmatprep.subr.mxu0 0.0
      %4705 = vmatpush2.msra.mxu0 %v1564
      %4706 = vmatprep.subr.mxu0 0.0
      %4707 = vmatpush2.msra.mxu0 %v1563
      %4708 = vmatprep.mubr.f32.mxu0 %v452
      %4709 = vmatmul.mubr.f32.gmra.mxu0 %v451
      %v4710 = vpop.f32.mrf.mxu0
      %v4711 = vadd.f32 %v4641, %v4710
      %v4712 = vpop.f32.mrf.mxu0
      %4713 = vdwg.mxu0
      %4714 = vmatprep.subr.mxu0 0.0
      %4715 = vmatpush1.msra.mxu0 %v1594
      %4716 = vmatprep.subr.mxu0 0.0
      %4717 = vmatpush1.msra.mxu0 %v1593
      %4718 = vmatprep.subr.mxu0 0.0
      %4719 = vmatpush1.msra.mxu0 %v1592
      %4720 = vmatprep.subr.mxu0 0.0
      %4721 = vmatpush1.msra.mxu0 %v1591
      %4722 = vmatprep.subr.mxu0 0.0
      %4723 = vmatpush1.msra.mxu0 %v1590
      %4724 = vmatprep.subr.mxu0 0.0
      %4725 = vmatpush1.msra.mxu0 %v1589
      %4726 = vmatprep.subr.mxu0 0.0
      %4727 = vmatpush1.msra.mxu0 %v1588
      %4728 = vmatprep.subr.mxu0 0.0
      %4729 = vmatpush1.msra.mxu0 %v1587
      %4730 = vmatprep.subr.mxu0 0.0
      %4731 = vmatpush1.msra.mxu0 %v1586
      %4732 = vmatprep.subr.mxu0 0.0
      %4733 = vmatpush1.msra.mxu0 %v1585
      %4734 = vmatprep.subr.mxu0 0.0
      %4735 = vmatpush1.msra.mxu0 %v1584
      %4736 = vmatprep.subr.mxu0 0.0
      %4737 = vmatpush1.msra.mxu0 %v1583
      %4738 = vmatprep.subr.mxu0 0.0
      %4739 = vmatpush1.msra.mxu0 %v1582
      %4740 = vmatprep.subr.mxu0 0.0
      %4741 = vmatpush1.msra.mxu0 %v1581
      %4742 = vmatprep.subr.mxu0 0.0
      %4743 = vmatpush1.msra.mxu0 %v1580
      %4744 = vmatprep.subr.mxu0 0.0
      %4745 = vmatpush1.msra.mxu0 %v1579
      %4746 = vmatprep.subr.mxu0 0.0
      %4747 = vmatpush2.msra.mxu0 %v1610
      %4748 = vmatprep.subr.mxu0 0.0
      %4749 = vmatpush2.msra.mxu0 %v1609
      %4750 = vmatprep.subr.mxu0 0.0
      %4751 = vmatpush2.msra.mxu0 %v1608
      %4752 = vmatprep.subr.mxu0 0.0
      %4753 = vmatpush2.msra.mxu0 %v1607
      %4754 = vmatprep.subr.mxu0 0.0
      %4755 = vmatpush2.msra.mxu0 %v1606
      %4756 = vmatprep.subr.mxu0 0.0
      %4757 = vmatpush2.msra.mxu0 %v1605
      %4758 = vmatprep.subr.mxu0 0.0
      %4759 = vmatpush2.msra.mxu0 %v1604
      %4760 = vmatprep.subr.mxu0 0.0
      %4761 = vmatpush2.msra.mxu0 %v1603
      %4762 = vmatprep.subr.mxu0 0.0
      %4763 = vmatpush2.msra.mxu0 %v1602
      %4764 = vmatprep.subr.mxu0 0.0
      %4765 = vmatpush2.msra.mxu0 %v1601
      %4766 = vmatprep.subr.mxu0 0.0
      %4767 = vmatpush2.msra.mxu0 %v1600
      %4768 = vmatprep.subr.mxu0 0.0
      %4769 = vmatpush2.msra.mxu0 %v1599
      %4770 = vmatprep.subr.mxu0 0.0
      %4771 = vmatpush2.msra.mxu0 %v1598
      %4772 = vmatprep.subr.mxu0 0.0
      %4773 = vmatpush2.msra.mxu0 %v1597
      %4774 = vmatprep.subr.mxu0 0.0
      %4775 = vmatpush2.msra.mxu0 %v1596
      %4776 = vmatprep.subr.mxu0 0.0
      %4777 = vmatpush2.msra.mxu0 %v1595
      %4778 = vmatprep.mubr.f32.mxu0 %v454
      %4779 = vmatmul.mubr.f32.gmra.mxu0 %v453
      %v4780 = vpop.f32.mrf.mxu0
      %v4781 = vadd.f32 %v4711, %v4780
      %v4782 = vpop.f32.mrf.mxu0
      %4783 = vdwg.mxu0
      %4784 = vmatprep.subr.mxu0 0.0
      %4785 = vmatpush1.msra.mxu0 %v1626
      %4786 = vmatprep.subr.mxu0 0.0
      %4787 = vmatpush1.msra.mxu0 %v1625
      %4788 = vmatprep.subr.mxu0 0.0
      %4789 = vmatpush1.msra.mxu0 %v1624
      %4790 = vmatprep.subr.mxu0 0.0
      %4791 = vmatpush1.msra.mxu0 %v1623
      %4792 = vmatprep.subr.mxu0 0.0
      %4793 = vmatpush1.msra.mxu0 %v1622
      %4794 = vmatprep.subr.mxu0 0.0
      %4795 = vmatpush1.msra.mxu0 %v1621
      %4796 = vmatprep.subr.mxu0 0.0
      %4797 = vmatpush1.msra.mxu0 %v1620
      %4798 = vmatprep.subr.mxu0 0.0
      %4799 = vmatpush1.msra.mxu0 %v1619
      %4800 = vmatprep.subr.mxu0 0.0
      %4801 = vmatpush1.msra.mxu0 %v1618
      %4802 = vmatprep.subr.mxu0 0.0
      %4803 = vmatpush1.msra.mxu0 %v1617
      %4804 = vmatprep.subr.mxu0 0.0
      %4805 = vmatpush1.msra.mxu0 %v1616
      %4806 = vmatprep.subr.mxu0 0.0
      %4807 = vmatpush1.msra.mxu0 %v1615
      %4808 = vmatprep.subr.mxu0 0.0
      %4809 = vmatpush1.msra.mxu0 %v1614
      %4810 = vmatprep.subr.mxu0 0.0
      %4811 = vmatpush1.msra.mxu0 %v1613
      %4812 = vmatprep.subr.mxu0 0.0
      %4813 = vmatpush1.msra.mxu0 %v1612
      %4814 = vmatprep.subr.mxu0 0.0
      %4815 = vmatpush1.msra.mxu0 %v1611
      %4816 = vmatprep.subr.mxu0 0.0
      %4817 = vmatpush2.msra.mxu0 %v1642
      %4818 = vmatprep.subr.mxu0 0.0
      %4819 = vmatpush2.msra.mxu0 %v1641
      %4820 = vmatprep.subr.mxu0 0.0
      %4821 = vmatpush2.msra.mxu0 %v1640
      %4822 = vmatprep.subr.mxu0 0.0
      %4823 = vmatpush2.msra.mxu0 %v1639
      %4824 = vmatprep.subr.mxu0 0.0
      %4825 = vmatpush2.msra.mxu0 %v1638
      %4826 = vmatprep.subr.mxu0 0.0
      %4827 = vmatpush2.msra.mxu0 %v1637
      %4828 = vmatprep.subr.mxu0 0.0
      %4829 = vmatpush2.msra.mxu0 %v1636
      %4830 = vmatprep.subr.mxu0 0.0
      %4831 = vmatpush2.msra.mxu0 %v1635
      %4832 = vmatprep.subr.mxu0 0.0
      %4833 = vmatpush2.msra.mxu0 %v1634
      %4834 = vmatprep.subr.mxu0 0.0
      %4835 = vmatpush2.msra.mxu0 %v1633
      %4836 = vmatprep.subr.mxu0 0.0
      %4837 = vmatpush2.msra.mxu0 %v1632
      %4838 = vmatprep.subr.mxu0 0.0
      %4839 = vmatpush2.msra.mxu0 %v1631
      %4840 = vmatprep.subr.mxu0 0.0
      %4841 = vmatpush2.msra.mxu0 %v1630
      %4842 = vmatprep.subr.mxu0 0.0
      %4843 = vmatpush2.msra.mxu0 %v1629
      %4844 = vmatprep.subr.mxu0 0.0
      %4845 = vmatpush2.msra.mxu0 %v1628
      %4846 = vmatprep.subr.mxu0 0.0
      %4847 = vmatpush2.msra.mxu0 %v1627
      %4848 = vmatprep.mubr.f32.mxu0 %v456
      %4849 = vmatmul.mubr.f32.gmra.mxu0 %v455
      %v4850 = vpop.f32.mrf.mxu0
      %v4851 = vadd.f32 %v4781, %v4850
      %v4852 = vpop.f32.mrf.mxu0
      %4853 = vdwg.mxu0
      %4854 = vmatprep.subr.mxu0 0.0
      %4855 = vmatpush1.msra.mxu0 %v1658
      %4856 = vmatprep.subr.mxu0 0.0
      %4857 = vmatpush1.msra.mxu0 %v1657
      %4858 = vmatprep.subr.mxu0 0.0
      %4859 = vmatpush1.msra.mxu0 %v1656
      %4860 = vmatprep.subr.mxu0 0.0
      %4861 = vmatpush1.msra.mxu0 %v1655
      %4862 = vmatprep.subr.mxu0 0.0
      %4863 = vmatpush1.msra.mxu0 %v1654
      %4864 = vmatprep.subr.mxu0 0.0
      %4865 = vmatpush1.msra.mxu0 %v1653
      %4866 = vmatprep.subr.mxu0 0.0
      %4867 = vmatpush1.msra.mxu0 %v1652
      %4868 = vmatprep.subr.mxu0 0.0
      %4869 = vmatpush1.msra.mxu0 %v1651
      %4870 = vmatprep.subr.mxu0 0.0
      %4871 = vmatpush1.msra.mxu0 %v1650
      %4872 = vmatprep.subr.mxu0 0.0
      %4873 = vmatpush1.msra.mxu0 %v1649
      %4874 = vmatprep.subr.mxu0 0.0
      %4875 = vmatpush1.msra.mxu0 %v1648
      %4876 = vmatprep.subr.mxu0 0.0
      %4877 = vmatpush1.msra.mxu0 %v1647
      %4878 = vmatprep.subr.mxu0 0.0
      %4879 = vmatpush1.msra.mxu0 %v1646
      %4880 = vmatprep.subr.mxu0 0.0
      %4881 = vmatpush1.msra.mxu0 %v1645
      %4882 = vmatprep.subr.mxu0 0.0
      %4883 = vmatpush1.msra.mxu0 %v1644
      %4884 = vmatprep.subr.mxu0 0.0
      %4885 = vmatpush1.msra.mxu0 %v1643
      %4886 = vmatprep.subr.mxu0 0.0
      %4887 = vmatpush2.msra.mxu0 %v1674
      %4888 = vmatprep.subr.mxu0 0.0
      %4889 = vmatpush2.msra.mxu0 %v1673
      %4890 = vmatprep.subr.mxu0 0.0
      %4891 = vmatpush2.msra.mxu0 %v1672
      %4892 = vmatprep.subr.mxu0 0.0
      %4893 = vmatpush2.msra.mxu0 %v1671
      %4894 = vmatprep.subr.mxu0 0.0
      %4895 = vmatpush2.msra.mxu0 %v1670
      %4896 = vmatprep.subr.mxu0 0.0
      %4897 = vmatpush2.msra.mxu0 %v1669
      %4898 = vmatprep.subr.mxu0 0.0
      %4899 = vmatpush2.msra.mxu0 %v1668
      %4900 = vmatprep.subr.mxu0 0.0
      %4901 = vmatpush2.msra.mxu0 %v1667
      %4902 = vmatprep.subr.mxu0 0.0
      %4903 = vmatpush2.msra.mxu0 %v1666
      %4904 = vmatprep.subr.mxu0 0.0
      %4905 = vmatpush2.msra.mxu0 %v1665
      %4906 = vmatprep.subr.mxu0 0.0
      %4907 = vmatpush2.msra.mxu0 %v1664
      %4908 = vmatprep.subr.mxu0 0.0
      %4909 = vmatpush2.msra.mxu0 %v1663
      %4910 = vmatprep.subr.mxu0 0.0
      %4911 = vmatpush2.msra.mxu0 %v1662
      %4912 = vmatprep.subr.mxu0 0.0
      %4913 = vmatpush2.msra.mxu0 %v1661
      %4914 = vmatprep.subr.mxu0 0.0
      %4915 = vmatpush2.msra.mxu0 %v1660
      %4916 = vmatprep.subr.mxu0 0.0
      %4917 = vmatpush2.msra.mxu0 %v1659
      %4918 = vmatprep.mubr.f32.mxu0 %v458
      %4919 = vmatmul.mubr.f32.gmra.mxu0 %v457
      %v4920 = vpop.f32.mrf.mxu0
      %v4921 = vadd.f32 %v4851, %v4920
      %v4922 = vpop.f32.mrf.mxu0
      %4923 = vdwg.mxu0
      %4924 = vmatprep.subr.mxu0 0.0
      %4925 = vmatpush1.msra.mxu0 %v1690
      %4926 = vmatprep.subr.mxu0 0.0
      %4927 = vmatpush1.msra.mxu0 %v1689
      %4928 = vmatprep.subr.mxu0 0.0
      %4929 = vmatpush1.msra.mxu0 %v1688
      %4930 = vmatprep.subr.mxu0 0.0
      %4931 = vmatpush1.msra.mxu0 %v1687
      %4932 = vmatprep.subr.mxu0 0.0
      %4933 = vmatpush1.msra.mxu0 %v1686
      %4934 = vmatprep.subr.mxu0 0.0
      %4935 = vmatpush1.msra.mxu0 %v1685
      %4936 = vmatprep.subr.mxu0 0.0
      %4937 = vmatpush1.msra.mxu0 %v1684
      %4938 = vmatprep.subr.mxu0 0.0
      %4939 = vmatpush1.msra.mxu0 %v1683
      %4940 = vmatprep.subr.mxu0 0.0
      %4941 = vmatpush1.msra.mxu0 %v1682
      %4942 = vmatprep.subr.mxu0 0.0
      %4943 = vmatpush1.msra.mxu0 %v1681
      %4944 = vmatprep.subr.mxu0 0.0
      %4945 = vmatpush1.msra.mxu0 %v1680
      %4946 = vmatprep.subr.mxu0 0.0
      %4947 = vmatpush1.msra.mxu0 %v1679
      %4948 = vmatprep.subr.mxu0 0.0
      %4949 = vmatpush1.msra.mxu0 %v1678
      %4950 = vmatprep.subr.mxu0 0.0
      %4951 = vmatpush1.msra.mxu0 %v1677
      %4952 = vmatprep.subr.mxu0 0.0
      %4953 = vmatpush1.msra.mxu0 %v1676
      %4954 = vmatprep.subr.mxu0 0.0
      %4955 = vmatpush1.msra.mxu0 %v1675
      %4956 = vmatprep.subr.mxu0 0.0
      %4957 = vmatpush2.msra.mxu0 %v1706
      %4958 = vmatprep.subr.mxu0 0.0
      %4959 = vmatpush2.msra.mxu0 %v1705
      %4960 = vmatprep.subr.mxu0 0.0
      %4961 = vmatpush2.msra.mxu0 %v1704
      %4962 = vmatprep.subr.mxu0 0.0
      %4963 = vmatpush2.msra.mxu0 %v1703
      %4964 = vmatprep.subr.mxu0 0.0
      %4965 = vmatpush2.msra.mxu0 %v1702
      %4966 = vmatprep.subr.mxu0 0.0
      %4967 = vmatpush2.msra.mxu0 %v1701
      %4968 = vmatprep.subr.mxu0 0.0
      %4969 = vmatpush2.msra.mxu0 %v1700
      %4970 = vmatprep.subr.mxu0 0.0
      %4971 = vmatpush2.msra.mxu0 %v1699
      %4972 = vmatprep.subr.mxu0 0.0
      %4973 = vmatpush2.msra.mxu0 %v1698
      %4974 = vmatprep.subr.mxu0 0.0
      %4975 = vmatpush2.msra.mxu0 %v1697
      %4976 = vmatprep.subr.mxu0 0.0
      %4977 = vmatpush2.msra.mxu0 %v1696
      %4978 = vmatprep.subr.mxu0 0.0
      %4979 = vmatpush2.msra.mxu0 %v1695
      %4980 = vmatprep.subr.mxu0 0.0
      %4981 = vmatpush2.msra.mxu0 %v1694
      %4982 = vmatprep.subr.mxu0 0.0
      %4983 = vmatpush2.msra.mxu0 %v1693
      %4984 = vmatprep.subr.mxu0 0.0
      %4985 = vmatpush2.msra.mxu0 %v1692
      %4986 = vmatprep.subr.mxu0 0.0
      %4987 = vmatpush2.msra.mxu0 %v1691
      %4988 = vmatprep.mubr.f32.mxu0 %v460
      %4989 = vmatmul.mubr.f32.gmra.mxu0 %v459
      %v4990 = vpop.f32.mrf.mxu0
      %v4991 = vadd.f32 %v4921, %v4990
      %v4992 = vpop.f32.mrf.mxu0
      %4993 = vdwg.mxu0
      %4994 = vmatprep.subr.mxu0 0.0
      %4995 = vmatpush1.msra.mxu0 %v1722
      %4996 = vmatprep.subr.mxu0 0.0
      %4997 = vmatpush1.msra.mxu0 %v1721
      %4998 = vmatprep.subr.mxu0 0.0
      %4999 = vmatpush1.msra.mxu0 %v1720
      %5000 = vmatprep.subr.mxu0 0.0
      %5001 = vmatpush1.msra.mxu0 %v1719
      %5002 = vmatprep.subr.mxu0 0.0
      %5003 = vmatpush1.msra.mxu0 %v1718
      %5004 = vmatprep.subr.mxu0 0.0
      %5005 = vmatpush1.msra.mxu0 %v1717
      %5006 = vmatprep.subr.mxu0 0.0
      %5007 = vmatpush1.msra.mxu0 %v1716
      %5008 = vmatprep.subr.mxu0 0.0
      %5009 = vmatpush1.msra.mxu0 %v1715
      %5010 = vmatprep.subr.mxu0 0.0
      %5011 = vmatpush1.msra.mxu0 %v1714
      %5012 = vmatprep.subr.mxu0 0.0
      %5013 = vmatpush1.msra.mxu0 %v1713
      %5014 = vmatprep.subr.mxu0 0.0
      %5015 = vmatpush1.msra.mxu0 %v1712
      %5016 = vmatprep.subr.mxu0 0.0
      %5017 = vmatpush1.msra.mxu0 %v1711
      %5018 = vmatprep.subr.mxu0 0.0
      %5019 = vmatpush1.msra.mxu0 %v1710
      %5020 = vmatprep.subr.mxu0 0.0
      %5021 = vmatpush1.msra.mxu0 %v1709
      %5022 = vmatprep.subr.mxu0 0.0
      %5023 = vmatpush1.msra.mxu0 %v1708
      %5024 = vmatprep.subr.mxu0 0.0
      %5025 = vmatpush1.msra.mxu0 %v1707
      %5026 = vmatprep.subr.mxu0 0.0
      %5027 = vmatpush2.msra.mxu0 %v1738
      %5028 = vmatprep.subr.mxu0 0.0
      %5029 = vmatpush2.msra.mxu0 %v1737
      %5030 = vmatprep.subr.mxu0 0.0
      %5031 = vmatpush2.msra.mxu0 %v1736
      %5032 = vmatprep.subr.mxu0 0.0
      %5033 = vmatpush2.msra.mxu0 %v1735
      %5034 = vmatprep.subr.mxu0 0.0
      %5035 = vmatpush2.msra.mxu0 %v1734
      %5036 = vmatprep.subr.mxu0 0.0
      %5037 = vmatpush2.msra.mxu0 %v1733
      %5038 = vmatprep.subr.mxu0 0.0
      %5039 = vmatpush2.msra.mxu0 %v1732
      %5040 = vmatprep.subr.mxu0 0.0
      %5041 = vmatpush2.msra.mxu0 %v1731
      %5042 = vmatprep.subr.mxu0 0.0
      %5043 = vmatpush2.msra.mxu0 %v1730
      %5044 = vmatprep.subr.mxu0 0.0
      %5045 = vmatpush2.msra.mxu0 %v1729
      %5046 = vmatprep.subr.mxu0 0.0
      %5047 = vmatpush2.msra.mxu0 %v1728
      %5048 = vmatprep.subr.mxu0 0.0
      %5049 = vmatpush2.msra.mxu0 %v1727
      %5050 = vmatprep.subr.mxu0 0.0
      %5051 = vmatpush2.msra.mxu0 %v1726
      %5052 = vmatprep.subr.mxu0 0.0
      %5053 = vmatpush2.msra.mxu0 %v1725
      %5054 = vmatprep.subr.mxu0 0.0
      %5055 = vmatpush2.msra.mxu0 %v1724
      %5056 = vmatprep.subr.mxu0 0.0
      %5057 = vmatpush2.msra.mxu0 %v1723
      %5058 = vmatprep.mubr.f32.mxu0 %v462
      %5059 = vmatmul.mubr.f32.gmra.mxu0 %v461
      %v5060 = vpop.f32.mrf.mxu0
      %v5061 = vadd.f32 %v4991, %v5060
      %v5062 = vpop.f32.mrf.mxu0
      %5063 = vdwg.mxu0
      %5064 = vmatprep.subr.mxu0 0.0
      %5065 = vmatpush1.msra.mxu0 %v1754
      %5066 = vmatprep.subr.mxu0 0.0
      %5067 = vmatpush1.msra.mxu0 %v1753
      %5068 = vmatprep.subr.mxu0 0.0
      %5069 = vmatpush1.msra.mxu0 %v1752
      %5070 = vmatprep.subr.mxu0 0.0
      %5071 = vmatpush1.msra.mxu0 %v1751
      %5072 = vmatprep.subr.mxu0 0.0
      %5073 = vmatpush1.msra.mxu0 %v1750
      %5074 = vmatprep.subr.mxu0 0.0
      %5075 = vmatpush1.msra.mxu0 %v1749
      %5076 = vmatprep.subr.mxu0 0.0
      %5077 = vmatpush1.msra.mxu0 %v1748
      %5078 = vmatprep.subr.mxu0 0.0
      %5079 = vmatpush1.msra.mxu0 %v1747
      %5080 = vmatprep.subr.mxu0 0.0
      %5081 = vmatpush1.msra.mxu0 %v1746
      %5082 = vmatprep.subr.mxu0 0.0
      %5083 = vmatpush1.msra.mxu0 %v1745
      %5084 = vmatprep.subr.mxu0 0.0
      %5085 = vmatpush1.msra.mxu0 %v1744
      %5086 = vmatprep.subr.mxu0 0.0
      %5087 = vmatpush1.msra.mxu0 %v1743
      %5088 = vmatprep.subr.mxu0 0.0
      %5089 = vmatpush1.msra.mxu0 %v1742
      %5090 = vmatprep.subr.mxu0 0.0
      %5091 = vmatpush1.msra.mxu0 %v1741
      %5092 = vmatprep.subr.mxu0 0.0
      %5093 = vmatpush1.msra.mxu0 %v1740
      %5094 = vmatprep.subr.mxu0 0.0
      %5095 = vmatpush1.msra.mxu0 %v1739
      %5096 = vmatprep.subr.mxu0 0.0
      %5097 = vmatpush2.msra.mxu0 %v1770
      %5098 = vmatprep.subr.mxu0 0.0
      %5099 = vmatpush2.msra.mxu0 %v1769
      %5100 = vmatprep.subr.mxu0 0.0
      %5101 = vmatpush2.msra.mxu0 %v1768
      %5102 = vmatprep.subr.mxu0 0.0
      %5103 = vmatpush2.msra.mxu0 %v1767
      %5104 = vmatprep.subr.mxu0 0.0
      %5105 = vmatpush2.msra.mxu0 %v1766
      %5106 = vmatprep.subr.mxu0 0.0
      %5107 = vmatpush2.msra.mxu0 %v1765
      %5108 = vmatprep.subr.mxu0 0.0
      %5109 = vmatpush2.msra.mxu0 %v1764
      %5110 = vmatprep.subr.mxu0 0.0
      %5111 = vmatpush2.msra.mxu0 %v1763
      %5112 = vmatprep.subr.mxu0 0.0
      %5113 = vmatpush2.msra.mxu0 %v1762
      %5114 = vmatprep.subr.mxu0 0.0
      %5115 = vmatpush2.msra.mxu0 %v1761
      %5116 = vmatprep.subr.mxu0 0.0
      %5117 = vmatpush2.msra.mxu0 %v1760
      %5118 = vmatprep.subr.mxu0 0.0
      %5119 = vmatpush2.msra.mxu0 %v1759
      %5120 = vmatprep.subr.mxu0 0.0
      %5121 = vmatpush2.msra.mxu0 %v1758
      %5122 = vmatprep.subr.mxu0 0.0
      %5123 = vmatpush2.msra.mxu0 %v1757
      %5124 = vmatprep.subr.mxu0 0.0
      %5125 = vmatpush2.msra.mxu0 %v1756
      %5126 = vmatprep.subr.mxu0 0.0
      %5127 = vmatpush2.msra.mxu0 %v1755
      %5128 = vmatprep.mubr.f32.mxu0 %v464
      %5129 = vmatmul.mubr.f32.gmra.mxu0 %v463
      %v5130 = vpop.f32.mrf.mxu0
      %v5131 = vadd.f32 %v5061, %v5130
      %v5132 = vpop.f32.mrf.mxu0
      %5133 = vdwg.mxu0
      %5134 = vmatprep.subr.mxu0 0.0
      %5135 = vmatpush1.msra.mxu0 %v1786
      %5136 = vmatprep.subr.mxu0 0.0
      %5137 = vmatpush1.msra.mxu0 %v1785
      %5138 = vmatprep.subr.mxu0 0.0
      %5139 = vmatpush1.msra.mxu0 %v1784
      %5140 = vmatprep.subr.mxu0 0.0
      %5141 = vmatpush1.msra.mxu0 %v1783
      %5142 = vmatprep.subr.mxu0 0.0
      %5143 = vmatpush1.msra.mxu0 %v1782
      %5144 = vmatprep.subr.mxu0 0.0
      %5145 = vmatpush1.msra.mxu0 %v1781
      %5146 = vmatprep.subr.mxu0 0.0
      %5147 = vmatpush1.msra.mxu0 %v1780
      %5148 = vmatprep.subr.mxu0 0.0
      %5149 = vmatpush1.msra.mxu0 %v1779
      %5150 = vmatprep.subr.mxu0 0.0
      %5151 = vmatpush1.msra.mxu0 %v1778
      %5152 = vmatprep.subr.mxu0 0.0
      %5153 = vmatpush1.msra.mxu0 %v1777
      %5154 = vmatprep.subr.mxu0 0.0
      %5155 = vmatpush1.msra.mxu0 %v1776
      %5156 = vmatprep.subr.mxu0 0.0
      %5157 = vmatpush1.msra.mxu0 %v1775
      %5158 = vmatprep.subr.mxu0 0.0
      %5159 = vmatpush1.msra.mxu0 %v1774
      %5160 = vmatprep.subr.mxu0 0.0
      %5161 = vmatpush1.msra.mxu0 %v1773
      %5162 = vmatprep.subr.mxu0 0.0
      %5163 = vmatpush1.msra.mxu0 %v1772
      %5164 = vmatprep.subr.mxu0 0.0
      %5165 = vmatpush1.msra.mxu0 %v1771
      %5166 = vmatprep.subr.mxu0 0.0
      %5167 = vmatpush2.msra.mxu0 %v1802
      %5168 = vmatprep.subr.mxu0 0.0
      %5169 = vmatpush2.msra.mxu0 %v1801
      %5170 = vmatprep.subr.mxu0 0.0
      %5171 = vmatpush2.msra.mxu0 %v1800
      %5172 = vmatprep.subr.mxu0 0.0
      %5173 = vmatpush2.msra.mxu0 %v1799
      %5174 = vmatprep.subr.mxu0 0.0
      %5175 = vmatpush2.msra.mxu0 %v1798
      %5176 = vmatprep.subr.mxu0 0.0
      %5177 = vmatpush2.msra.mxu0 %v1797
      %5178 = vmatprep.subr.mxu0 0.0
      %5179 = vmatpush2.msra.mxu0 %v1796
      %5180 = vmatprep.subr.mxu0 0.0
      %5181 = vmatpush2.msra.mxu0 %v1795
      %5182 = vmatprep.subr.mxu0 0.0
      %5183 = vmatpush2.msra.mxu0 %v1794
      %5184 = vmatprep.subr.mxu0 0.0
      %5185 = vmatpush2.msra.mxu0 %v1793
      %5186 = vmatprep.subr.mxu0 0.0
      %5187 = vmatpush2.msra.mxu0 %v1792
      %5188 = vmatprep.subr.mxu0 0.0
      %5189 = vmatpush2.msra.mxu0 %v1791
      %5190 = vmatprep.subr.mxu0 0.0
      %5191 = vmatpush2.msra.mxu0 %v1790
      %5192 = vmatprep.subr.mxu0 0.0
      %5193 = vmatpush2.msra.mxu0 %v1789
      %5194 = vmatprep.subr.mxu0 0.0
      %5195 = vmatpush2.msra.mxu0 %v1788
      %5196 = vmatprep.subr.mxu0 0.0
      %5197 = vmatpush2.msra.mxu0 %v1787
      %5198 = vmatprep.mubr.f32.mxu0 %v466
      %5199 = vmatmul.mubr.f32.gmra.mxu0 %v465
      %v5200 = vpop.f32.mrf.mxu0
      %v5201 = vadd.f32 %v5131, %v5200
      %v5202 = vpop.f32.mrf.mxu0
      %5203 = vdwg.mxu0
      %5204 = vmatprep.subr.mxu0 0.0
      %5205 = vmatpush1.msra.mxu0 %v1818
      %5206 = vmatprep.subr.mxu0 0.0
      %5207 = vmatpush1.msra.mxu0 %v1817
      %5208 = vmatprep.subr.mxu0 0.0
      %5209 = vmatpush1.msra.mxu0 %v1816
      %5210 = vmatprep.subr.mxu0 0.0
      %5211 = vmatpush1.msra.mxu0 %v1815
      %5212 = vmatprep.subr.mxu0 0.0
      %5213 = vmatpush1.msra.mxu0 %v1814
      %5214 = vmatprep.subr.mxu0 0.0
      %5215 = vmatpush1.msra.mxu0 %v1813
      %5216 = vmatprep.subr.mxu0 0.0
      %5217 = vmatpush1.msra.mxu0 %v1812
      %5218 = vmatprep.subr.mxu0 0.0
      %5219 = vmatpush1.msra.mxu0 %v1811
      %5220 = vmatprep.subr.mxu0 0.0
      %5221 = vmatpush1.msra.mxu0 %v1810
      %5222 = vmatprep.subr.mxu0 0.0
      %5223 = vmatpush1.msra.mxu0 %v1809
      %5224 = vmatprep.subr.mxu0 0.0
      %5225 = vmatpush1.msra.mxu0 %v1808
      %5226 = vmatprep.subr.mxu0 0.0
      %5227 = vmatpush1.msra.mxu0 %v1807
      %5228 = vmatprep.subr.mxu0 0.0
      %5229 = vmatpush1.msra.mxu0 %v1806
      %5230 = vmatprep.subr.mxu0 0.0
      %5231 = vmatpush1.msra.mxu0 %v1805
      %5232 = vmatprep.subr.mxu0 0.0
      %5233 = vmatpush1.msra.mxu0 %v1804
      %5234 = vmatprep.subr.mxu0 0.0
      %5235 = vmatpush1.msra.mxu0 %v1803
      %5236 = vmatprep.subr.mxu0 0.0
      %5237 = vmatpush2.msra.mxu0 %v1834
      %5238 = vmatprep.subr.mxu0 0.0
      %5239 = vmatpush2.msra.mxu0 %v1833
      %5240 = vmatprep.subr.mxu0 0.0
      %5241 = vmatpush2.msra.mxu0 %v1832
      %5242 = vmatprep.subr.mxu0 0.0
      %5243 = vmatpush2.msra.mxu0 %v1831
      %5244 = vmatprep.subr.mxu0 0.0
      %5245 = vmatpush2.msra.mxu0 %v1830
      %5246 = vmatprep.subr.mxu0 0.0
      %5247 = vmatpush2.msra.mxu0 %v1829
      %5248 = vmatprep.subr.mxu0 0.0
      %5249 = vmatpush2.msra.mxu0 %v1828
      %5250 = vmatprep.subr.mxu0 0.0
      %5251 = vmatpush2.msra.mxu0 %v1827
      %5252 = vmatprep.subr.mxu0 0.0
      %5253 = vmatpush2.msra.mxu0 %v1826
      %5254 = vmatprep.subr.mxu0 0.0
      %5255 = vmatpush2.msra.mxu0 %v1825
      %5256 = vmatprep.subr.mxu0 0.0
      %5257 = vmatpush2.msra.mxu0 %v1824
      %5258 = vmatprep.subr.mxu0 0.0
      %5259 = vmatpush2.msra.mxu0 %v1823
      %5260 = vmatprep.subr.mxu0 0.0
      %5261 = vmatpush2.msra.mxu0 %v1822
      %5262 = vmatprep.subr.mxu0 0.0
      %5263 = vmatpush2.msra.mxu0 %v1821
      %5264 = vmatprep.subr.mxu0 0.0
      %5265 = vmatpush2.msra.mxu0 %v1820
      %5266 = vmatprep.subr.mxu0 0.0
      %5267 = vmatpush2.msra.mxu0 %v1819
      %5268 = vmatprep.mubr.f32.mxu0 %v468
      %5269 = vmatmul.mubr.f32.gmra.mxu0 %v467
      %v5270 = vpop.f32.mrf.mxu0
      %v5271 = vadd.f32 %v5201, %v5270
      %v5272 = vpop.f32.mrf.mxu0
      %5273 = vdwg.mxu0
      %5274 = vmatprep.subr.mxu0 0.0
      %5275 = vmatpush1.msra.mxu0 %v1850
      %5276 = vmatprep.subr.mxu0 0.0
      %5277 = vmatpush1.msra.mxu0 %v1849
      %5278 = vmatprep.subr.mxu0 0.0
      %5279 = vmatpush1.msra.mxu0 %v1848
      %5280 = vmatprep.subr.mxu0 0.0
      %5281 = vmatpush1.msra.mxu0 %v1847
      %5282 = vmatprep.subr.mxu0 0.0
      %5283 = vmatpush1.msra.mxu0 %v1846
      %5284 = vmatprep.subr.mxu0 0.0
      %5285 = vmatpush1.msra.mxu0 %v1845
      %5286 = vmatprep.subr.mxu0 0.0
      %5287 = vmatpush1.msra.mxu0 %v1844
      %5288 = vmatprep.subr.mxu0 0.0
      %5289 = vmatpush1.msra.mxu0 %v1843
      %5290 = vmatprep.subr.mxu0 0.0
      %5291 = vmatpush1.msra.mxu0 %v1842
      %5292 = vmatprep.subr.mxu0 0.0
      %5293 = vmatpush1.msra.mxu0 %v1841
      %5294 = vmatprep.subr.mxu0 0.0
      %5295 = vmatpush1.msra.mxu0 %v1840
      %5296 = vmatprep.subr.mxu0 0.0
      %5297 = vmatpush1.msra.mxu0 %v1839
      %5298 = vmatprep.subr.mxu0 0.0
      %5299 = vmatpush1.msra.mxu0 %v1838
      %5300 = vmatprep.subr.mxu0 0.0
      %5301 = vmatpush1.msra.mxu0 %v1837
      %5302 = vmatprep.subr.mxu0 0.0
      %5303 = vmatpush1.msra.mxu0 %v1836
      %5304 = vmatprep.subr.mxu0 0.0
      %5305 = vmatpush1.msra.mxu0 %v1835
      %5306 = vmatprep.subr.mxu0 0.0
      %5307 = vmatpush2.msra.mxu0 %v1866
      %5308 = vmatprep.subr.mxu0 0.0
      %5309 = vmatpush2.msra.mxu0 %v1865
      %5310 = vmatprep.subr.mxu0 0.0
      %5311 = vmatpush2.msra.mxu0 %v1864
      %5312 = vmatprep.subr.mxu0 0.0
      %5313 = vmatpush2.msra.mxu0 %v1863
      %5314 = vmatprep.subr.mxu0 0.0
      %5315 = vmatpush2.msra.mxu0 %v1862
      %5316 = vmatprep.subr.mxu0 0.0
      %5317 = vmatpush2.msra.mxu0 %v1861
      %5318 = vmatprep.subr.mxu0 0.0
      %5319 = vmatpush2.msra.mxu0 %v1860
      %5320 = vmatprep.subr.mxu0 0.0
      %5321 = vmatpush2.msra.mxu0 %v1859
      %5322 = vmatprep.subr.mxu0 0.0
      %5323 = vmatpush2.msra.mxu0 %v1858
      %5324 = vmatprep.subr.mxu0 0.0
      %5325 = vmatpush2.msra.mxu0 %v1857
      %5326 = vmatprep.subr.mxu0 0.0
      %5327 = vmatpush2.msra.mxu0 %v1856
      %5328 = vmatprep.subr.mxu0 0.0
      %5329 = vmatpush2.msra.mxu0 %v1855
      %5330 = vmatprep.subr.mxu0 0.0
      %5331 = vmatpush2.msra.mxu0 %v1854
      %5332 = vmatprep.subr.mxu0 0.0
      %5333 = vmatpush2.msra.mxu0 %v1853
      %5334 = vmatprep.subr.mxu0 0.0
      %5335 = vmatpush2.msra.mxu0 %v1852
      %5336 = vmatprep.subr.mxu0 0.0
      %5337 = vmatpush2.msra.mxu0 %v1851
      %5338 = vmatprep.mubr.f32.mxu0 %v470
      %5339 = vmatmul.mubr.f32.gmra.mxu0 %v469
      %v5340 = vpop.f32.mrf.mxu0
      %v5341 = vadd.f32 %v5271, %v5340
      %v5342 = vpop.f32.mrf.mxu0
      %5343 = vdwg.mxu0
      %5344 = vmatprep.subr.mxu0 0.0
      %5345 = vmatpush1.msra.mxu0 %v1882
      %5346 = vmatprep.subr.mxu0 0.0
      %5347 = vmatpush1.msra.mxu0 %v1881
      %5348 = vmatprep.subr.mxu0 0.0
      %5349 = vmatpush1.msra.mxu0 %v1880
      %5350 = vmatprep.subr.mxu0 0.0
      %5351 = vmatpush1.msra.mxu0 %v1879
      %5352 = vmatprep.subr.mxu0 0.0
      %5353 = vmatpush1.msra.mxu0 %v1878
      %5354 = vmatprep.subr.mxu0 0.0
      %5355 = vmatpush1.msra.mxu0 %v1877
      %5356 = vmatprep.subr.mxu0 0.0
      %5357 = vmatpush1.msra.mxu0 %v1876
      %5358 = vmatprep.subr.mxu0 0.0
      %5359 = vmatpush1.msra.mxu0 %v1875
      %5360 = vmatprep.subr.mxu0 0.0
      %5361 = vmatpush1.msra.mxu0 %v1874
      %5362 = vmatprep.subr.mxu0 0.0
      %5363 = vmatpush1.msra.mxu0 %v1873
      %5364 = vmatprep.subr.mxu0 0.0
      %5365 = vmatpush1.msra.mxu0 %v1872
      %5366 = vmatprep.subr.mxu0 0.0
      %5367 = vmatpush1.msra.mxu0 %v1871
      %5368 = vmatprep.subr.mxu0 0.0
      %5369 = vmatpush1.msra.mxu0 %v1870
      %5370 = vmatprep.subr.mxu0 0.0
      %5371 = vmatpush1.msra.mxu0 %v1869
      %5372 = vmatprep.subr.mxu0 0.0
      %5373 = vmatpush1.msra.mxu0 %v1868
      %5374 = vmatprep.subr.mxu0 0.0
      %5375 = vmatpush1.msra.mxu0 %v1867
      %5376 = vmatprep.subr.mxu0 0.0
      %5377 = vmatpush2.msra.mxu0 %v1898
      %5378 = vmatprep.subr.mxu0 0.0
      %5379 = vmatpush2.msra.mxu0 %v1897
      %5380 = vmatprep.subr.mxu0 0.0
      %5381 = vmatpush2.msra.mxu0 %v1896
      %5382 = vmatprep.subr.mxu0 0.0
      %5383 = vmatpush2.msra.mxu0 %v1895
      %5384 = vmatprep.subr.mxu0 0.0
      %5385 = vmatpush2.msra.mxu0 %v1894
      %5386 = vmatprep.subr.mxu0 0.0
      %5387 = vmatpush2.msra.mxu0 %v1893
      %5388 = vmatprep.subr.mxu0 0.0
      %5389 = vmatpush2.msra.mxu0 %v1892
      %5390 = vmatprep.subr.mxu0 0.0
      %5391 = vmatpush2.msra.mxu0 %v1891
      %5392 = vmatprep.subr.mxu0 0.0
      %5393 = vmatpush2.msra.mxu0 %v1890
      %5394 = vmatprep.subr.mxu0 0.0
      %5395 = vmatpush2.msra.mxu0 %v1889
      %5396 = vmatprep.subr.mxu0 0.0
      %5397 = vmatpush2.msra.mxu0 %v1888
      %5398 = vmatprep.subr.mxu0 0.0
      %5399 = vmatpush2.msra.mxu0 %v1887
      %5400 = vmatprep.subr.mxu0 0.0
      %5401 = vmatpush2.msra.mxu0 %v1886
      %5402 = vmatprep.subr.mxu0 0.0
      %5403 = vmatpush2.msra.mxu0 %v1885
      %5404 = vmatprep.subr.mxu0 0.0
      %5405 = vmatpush2.msra.mxu0 %v1884
      %5406 = vmatprep.subr.mxu0 0.0
      %5407 = vmatpush2.msra.mxu0 %v1883
      %5408 = vmatprep.mubr.f32.mxu0 %v472
      %5409 = vmatmul.mubr.f32.gmra.mxu0 %v471
      %v5410 = vpop.f32.mrf.mxu0
      %v5411 = vadd.f32 %v5341, %v5410
      %v5412 = vpop.f32.mrf.mxu0
      %5413 = vdwg.mxu0
      %5414 = vmatprep.subr.mxu0 0.0
      %5415 = vmatpush1.msra.mxu0 %v1914
      %5416 = vmatprep.subr.mxu0 0.0
      %5417 = vmatpush1.msra.mxu0 %v1913
      %5418 = vmatprep.subr.mxu0 0.0
      %5419 = vmatpush1.msra.mxu0 %v1912
      %5420 = vmatprep.subr.mxu0 0.0
      %5421 = vmatpush1.msra.mxu0 %v1911
      %5422 = vmatprep.subr.mxu0 0.0
      %5423 = vmatpush1.msra.mxu0 %v1910
      %5424 = vmatprep.subr.mxu0 0.0
      %5425 = vmatpush1.msra.mxu0 %v1909
      %5426 = vmatprep.subr.mxu0 0.0
      %5427 = vmatpush1.msra.mxu0 %v1908
      %5428 = vmatprep.subr.mxu0 0.0
      %5429 = vmatpush1.msra.mxu0 %v1907
      %5430 = vmatprep.subr.mxu0 0.0
      %5431 = vmatpush1.msra.mxu0 %v1906
      %5432 = vmatprep.subr.mxu0 0.0
      %5433 = vmatpush1.msra.mxu0 %v1905
      %5434 = vmatprep.subr.mxu0 0.0
      %5435 = vmatpush1.msra.mxu0 %v1904
      %5436 = vmatprep.subr.mxu0 0.0
      %5437 = vmatpush1.msra.mxu0 %v1903
      %5438 = vmatprep.subr.mxu0 0.0
      %5439 = vmatpush1.msra.mxu0 %v1902
      %5440 = vmatprep.subr.mxu0 0.0
      %5441 = vmatpush1.msra.mxu0 %v1901
      %5442 = vmatprep.subr.mxu0 0.0
      %5443 = vmatpush1.msra.mxu0 %v1900
      %5444 = vmatprep.subr.mxu0 0.0
      %5445 = vmatpush1.msra.mxu0 %v1899
      %5446 = vmatprep.subr.mxu0 0.0
      %5447 = vmatpush2.msra.mxu0 %v1930
      %5448 = vmatprep.subr.mxu0 0.0
      %5449 = vmatpush2.msra.mxu0 %v1929
      %5450 = vmatprep.subr.mxu0 0.0
      %5451 = vmatpush2.msra.mxu0 %v1928
      %5452 = vmatprep.subr.mxu0 0.0
      %5453 = vmatpush2.msra.mxu0 %v1927
      %5454 = vmatprep.subr.mxu0 0.0
      %5455 = vmatpush2.msra.mxu0 %v1926
      %5456 = vmatprep.subr.mxu0 0.0
      %5457 = vmatpush2.msra.mxu0 %v1925
      %5458 = vmatprep.subr.mxu0 0.0
      %5459 = vmatpush2.msra.mxu0 %v1924
      %5460 = vmatprep.subr.mxu0 0.0
      %5461 = vmatpush2.msra.mxu0 %v1923
      %5462 = vmatprep.subr.mxu0 0.0
      %5463 = vmatpush2.msra.mxu0 %v1922
      %5464 = vmatprep.subr.mxu0 0.0
      %5465 = vmatpush2.msra.mxu0 %v1921
      %5466 = vmatprep.subr.mxu0 0.0
      %5467 = vmatpush2.msra.mxu0 %v1920
      %5468 = vmatprep.subr.mxu0 0.0
      %5469 = vmatpush2.msra.mxu0 %v1919
      %5470 = vmatprep.subr.mxu0 0.0
      %5471 = vmatpush2.msra.mxu0 %v1918
      %5472 = vmatprep.subr.mxu0 0.0
      %5473 = vmatpush2.msra.mxu0 %v1917
      %5474 = vmatprep.subr.mxu0 0.0
      %5475 = vmatpush2.msra.mxu0 %v1916
      %5476 = vmatprep.subr.mxu0 0.0
      %5477 = vmatpush2.msra.mxu0 %v1915
      %5478 = vmatprep.mubr.f32.mxu0 %v474
      %5479 = vmatmul.mubr.f32.gmra.mxu0 %v473
      %v5480 = vpop.f32.mrf.mxu0
      %v5481 = vadd.f32 %v5411, %v5480
      %v5482 = vpop.f32.mrf.mxu0
      %5483 = vdwg.mxu0
      %5484 = vmatprep.subr.mxu0 0.0
      %5485 = vmatpush1.msra.mxu0 %v1946
      %5486 = vmatprep.subr.mxu0 0.0
      %5487 = vmatpush1.msra.mxu0 %v1945
      %5488 = vmatprep.subr.mxu0 0.0
      %5489 = vmatpush1.msra.mxu0 %v1944
      %5490 = vmatprep.subr.mxu0 0.0
      %5491 = vmatpush1.msra.mxu0 %v1943
      %5492 = vmatprep.subr.mxu0 0.0
      %5493 = vmatpush1.msra.mxu0 %v1942
      %5494 = vmatprep.subr.mxu0 0.0
      %5495 = vmatpush1.msra.mxu0 %v1941
      %5496 = vmatprep.subr.mxu0 0.0
      %5497 = vmatpush1.msra.mxu0 %v1940
      %5498 = vmatprep.subr.mxu0 0.0
      %5499 = vmatpush1.msra.mxu0 %v1939
      %5500 = vmatprep.subr.mxu0 0.0
      %5501 = vmatpush1.msra.mxu0 %v1938
      %5502 = vmatprep.subr.mxu0 0.0
      %5503 = vmatpush1.msra.mxu0 %v1937
      %5504 = vmatprep.subr.mxu0 0.0
      %5505 = vmatpush1.msra.mxu0 %v1936
      %5506 = vmatprep.subr.mxu0 0.0
      %5507 = vmatpush1.msra.mxu0 %v1935
      %5508 = vmatprep.subr.mxu0 0.0
      %5509 = vmatpush1.msra.mxu0 %v1934
      %5510 = vmatprep.subr.mxu0 0.0
      %5511 = vmatpush1.msra.mxu0 %v1933
      %5512 = vmatprep.subr.mxu0 0.0
      %5513 = vmatpush1.msra.mxu0 %v1932
      %5514 = vmatprep.subr.mxu0 0.0
      %5515 = vmatpush1.msra.mxu0 %v1931
      %5516 = vmatprep.subr.mxu0 0.0
      %5517 = vmatpush2.msra.mxu0 %v1962
      %5518 = vmatprep.subr.mxu0 0.0
      %5519 = vmatpush2.msra.mxu0 %v1961
      %5520 = vmatprep.subr.mxu0 0.0
      %5521 = vmatpush2.msra.mxu0 %v1960
      %5522 = vmatprep.subr.mxu0 0.0
      %5523 = vmatpush2.msra.mxu0 %v1959
      %5524 = vmatprep.subr.mxu0 0.0
      %5525 = vmatpush2.msra.mxu0 %v1958
      %5526 = vmatprep.subr.mxu0 0.0
      %5527 = vmatpush2.msra.mxu0 %v1957
      %5528 = vmatprep.subr.mxu0 0.0
      %5529 = vmatpush2.msra.mxu0 %v1956
      %5530 = vmatprep.subr.mxu0 0.0
      %5531 = vmatpush2.msra.mxu0 %v1955
      %5532 = vmatprep.subr.mxu0 0.0
      %5533 = vmatpush2.msra.mxu0 %v1954
      %5534 = vmatprep.subr.mxu0 0.0
      %5535 = vmatpush2.msra.mxu0 %v1953
      %5536 = vmatprep.subr.mxu0 0.0
      %5537 = vmatpush2.msra.mxu0 %v1952
      %5538 = vmatprep.subr.mxu0 0.0
      %5539 = vmatpush2.msra.mxu0 %v1951
      %5540 = vmatprep.subr.mxu0 0.0
      %5541 = vmatpush2.msra.mxu0 %v1950
      %5542 = vmatprep.subr.mxu0 0.0
      %5543 = vmatpush2.msra.mxu0 %v1949
      %5544 = vmatprep.subr.mxu0 0.0
      %5545 = vmatpush2.msra.mxu0 %v1948
      %5546 = vmatprep.subr.mxu0 0.0
      %5547 = vmatpush2.msra.mxu0 %v1947
      %5548 = vmatprep.mubr.f32.mxu0 %v476
      %5549 = vmatmul.mubr.f32.gmra.mxu0 %v475
      %v5550 = vpop.f32.mrf.mxu0
      %v5551 = vadd.f32 %v5481, %v5550
      %v5552 = vpop.f32.mrf.mxu0
      %5553 = vdwg.mxu0
      %5554 = vmatprep.subr.mxu0 0.0
      %5555 = vmatpush1.msra.mxu0 %v1978
      %5556 = vmatprep.subr.mxu0 0.0
      %5557 = vmatpush1.msra.mxu0 %v1977
      %5558 = vmatprep.subr.mxu0 0.0
      %5559 = vmatpush1.msra.mxu0 %v1976
      %5560 = vmatprep.subr.mxu0 0.0
      %5561 = vmatpush1.msra.mxu0 %v1975
      %5562 = vmatprep.subr.mxu0 0.0
      %5563 = vmatpush1.msra.mxu0 %v1974
      %5564 = vmatprep.subr.mxu0 0.0
      %5565 = vmatpush1.msra.mxu0 %v1973
      %5566 = vmatprep.subr.mxu0 0.0
      %5567 = vmatpush1.msra.mxu0 %v1972
      %5568 = vmatprep.subr.mxu0 0.0
      %5569 = vmatpush1.msra.mxu0 %v1971
      %5570 = vmatprep.subr.mxu0 0.0
      %5571 = vmatpush1.msra.mxu0 %v1970
      %5572 = vmatprep.subr.mxu0 0.0
      %5573 = vmatpush1.msra.mxu0 %v1969
      %5574 = vmatprep.subr.mxu0 0.0
      %5575 = vmatpush1.msra.mxu0 %v1968
      %5576 = vmatprep.subr.mxu0 0.0
      %5577 = vmatpush1.msra.mxu0 %v1967
      %5578 = vmatprep.subr.mxu0 0.0
      %5579 = vmatpush1.msra.mxu0 %v1966
      %5580 = vmatprep.subr.mxu0 0.0
      %5581 = vmatpush1.msra.mxu0 %v1965
      %5582 = vmatprep.subr.mxu0 0.0
      %5583 = vmatpush1.msra.mxu0 %v1964
      %5584 = vmatprep.subr.mxu0 0.0
      %5585 = vmatpush1.msra.mxu0 %v1963
      %5586 = vmatprep.subr.mxu0 0.0
      %5587 = vmatpush2.msra.mxu0 %v1994
      %5588 = vmatprep.subr.mxu0 0.0
      %5589 = vmatpush2.msra.mxu0 %v1993
      %5590 = vmatprep.subr.mxu0 0.0
      %5591 = vmatpush2.msra.mxu0 %v1992
      %5592 = vmatprep.subr.mxu0 0.0
      %5593 = vmatpush2.msra.mxu0 %v1991
      %5594 = vmatprep.subr.mxu0 0.0
      %5595 = vmatpush2.msra.mxu0 %v1990
      %5596 = vmatprep.subr.mxu0 0.0
      %5597 = vmatpush2.msra.mxu0 %v1989
      %5598 = vmatprep.subr.mxu0 0.0
      %5599 = vmatpush2.msra.mxu0 %v1988
      %5600 = vmatprep.subr.mxu0 0.0
      %5601 = vmatpush2.msra.mxu0 %v1987
      %5602 = vmatprep.subr.mxu0 0.0
      %5603 = vmatpush2.msra.mxu0 %v1986
      %5604 = vmatprep.subr.mxu0 0.0
      %5605 = vmatpush2.msra.mxu0 %v1985
      %5606 = vmatprep.subr.mxu0 0.0
      %5607 = vmatpush2.msra.mxu0 %v1984
      %5608 = vmatprep.subr.mxu0 0.0
      %5609 = vmatpush2.msra.mxu0 %v1983
      %5610 = vmatprep.subr.mxu0 0.0
      %5611 = vmatpush2.msra.mxu0 %v1982
      %5612 = vmatprep.subr.mxu0 0.0
      %5613 = vmatpush2.msra.mxu0 %v1981
      %5614 = vmatprep.subr.mxu0 0.0
      %5615 = vmatpush2.msra.mxu0 %v1980
      %5616 = vmatprep.subr.mxu0 0.0
      %5617 = vmatpush2.msra.mxu0 %v1979
      %5618 = vmatprep.mubr.f32.mxu0 %v478
      %5619 = vmatmul.mubr.f32.gmra.mxu0 %v477
      %v5620 = vpop.f32.mrf.mxu0
      %v5621 = vadd.f32 %v5551, %v5620
      %v5622 = vpop.f32.mrf.mxu0
      %5623 = vdwg.mxu0
      %5624 = vmatprep.subr.mxu0 0.0
      %5625 = vmatpush1.msra.mxu0 %v2010
      %5626 = vmatprep.subr.mxu0 0.0
      %5627 = vmatpush1.msra.mxu0 %v2009
      %5628 = vmatprep.subr.mxu0 0.0
      %5629 = vmatpush1.msra.mxu0 %v2008
      %5630 = vmatprep.subr.mxu0 0.0
      %5631 = vmatpush1.msra.mxu0 %v2007
      %5632 = vmatprep.subr.mxu0 0.0
      %5633 = vmatpush1.msra.mxu0 %v2006
      %5634 = vmatprep.subr.mxu0 0.0
      %5635 = vmatpush1.msra.mxu0 %v2005
      %5636 = vmatprep.subr.mxu0 0.0
      %5637 = vmatpush1.msra.mxu0 %v2004
      %5638 = vmatprep.subr.mxu0 0.0
      %5639 = vmatpush1.msra.mxu0 %v2003
      %5640 = vmatprep.subr.mxu0 0.0
      %5641 = vmatpush1.msra.mxu0 %v2002
      %5642 = vmatprep.subr.mxu0 0.0
      %5643 = vmatpush1.msra.mxu0 %v2001
      %5644 = vmatprep.subr.mxu0 0.0
      %5645 = vmatpush1.msra.mxu0 %v2000
      %5646 = vmatprep.subr.mxu0 0.0
      %5647 = vmatpush1.msra.mxu0 %v1999
      %5648 = vmatprep.subr.mxu0 0.0
      %5649 = vmatpush1.msra.mxu0 %v1998
      %5650 = vmatprep.subr.mxu0 0.0
      %5651 = vmatpush1.msra.mxu0 %v1997
      %5652 = vmatprep.subr.mxu0 0.0
      %5653 = vmatpush1.msra.mxu0 %v1996
      %5654 = vmatprep.subr.mxu0 0.0
      %5655 = vmatpush1.msra.mxu0 %v1995
      %5656 = vmatprep.subr.mxu0 0.0
      %5657 = vmatpush2.msra.mxu0 %v2026
      %5658 = vmatprep.subr.mxu0 0.0
      %5659 = vmatpush2.msra.mxu0 %v2025
      %5660 = vmatprep.subr.mxu0 0.0
      %5661 = vmatpush2.msra.mxu0 %v2024
      %5662 = vmatprep.subr.mxu0 0.0
      %5663 = vmatpush2.msra.mxu0 %v2023
      %5664 = vmatprep.subr.mxu0 0.0
      %5665 = vmatpush2.msra.mxu0 %v2022
      %5666 = vmatprep.subr.mxu0 0.0
      %5667 = vmatpush2.msra.mxu0 %v2021
      %5668 = vmatprep.subr.mxu0 0.0
      %5669 = vmatpush2.msra.mxu0 %v2020
      %5670 = vmatprep.subr.mxu0 0.0
      %5671 = vmatpush2.msra.mxu0 %v2019
      %5672 = vmatprep.subr.mxu0 0.0
      %5673 = vmatpush2.msra.mxu0 %v2018
      %5674 = vmatprep.subr.mxu0 0.0
      %5675 = vmatpush2.msra.mxu0 %v2017
      %5676 = vmatprep.subr.mxu0 0.0
      %5677 = vmatpush2.msra.mxu0 %v2016
      %5678 = vmatprep.subr.mxu0 0.0
      %5679 = vmatpush2.msra.mxu0 %v2015
      %5680 = vmatprep.subr.mxu0 0.0
      %5681 = vmatpush2.msra.mxu0 %v2014
      %5682 = vmatprep.subr.mxu0 0.0
      %5683 = vmatpush2.msra.mxu0 %v2013
      %5684 = vmatprep.subr.mxu0 0.0
      %5685 = vmatpush2.msra.mxu0 %v2012
      %5686 = vmatprep.subr.mxu0 0.0
      %5687 = vmatpush2.msra.mxu0 %v2011
      %5688 = vmatprep.mubr.f32.mxu0 %v480
      %5689 = vmatmul.mubr.f32.gmra.mxu0 %v479
      %v5690 = vpop.f32.mrf.mxu0
      %v5691 = vadd.f32 %v5621, %v5690
      %v5692 = vpop.f32.mrf.mxu0
      %5693 = vdwg.mxu0
      %5694 = vmatprep.subr.mxu0 0.0
      %5695 = vmatpush1.msra.mxu0 %v2042
      %5696 = vmatprep.subr.mxu0 0.0
      %5697 = vmatpush1.msra.mxu0 %v2041
      %5698 = vmatprep.subr.mxu0 0.0
      %5699 = vmatpush1.msra.mxu0 %v2040
      %5700 = vmatprep.subr.mxu0 0.0
      %5701 = vmatpush1.msra.mxu0 %v2039
      %5702 = vmatprep.subr.mxu0 0.0
      %5703 = vmatpush1.msra.mxu0 %v2038
      %5704 = vmatprep.subr.mxu0 0.0
      %5705 = vmatpush1.msra.mxu0 %v2037
      %5706 = vmatprep.subr.mxu0 0.0
      %5707 = vmatpush1.msra.mxu0 %v2036
      %5708 = vmatprep.subr.mxu0 0.0
      %5709 = vmatpush1.msra.mxu0 %v2035
      %5710 = vmatprep.subr.mxu0 0.0
      %5711 = vmatpush1.msra.mxu0 %v2034
      %5712 = vmatprep.subr.mxu0 0.0
      %5713 = vmatpush1.msra.mxu0 %v2033
      %5714 = vmatprep.subr.mxu0 0.0
      %5715 = vmatpush1.msra.mxu0 %v2032
      %5716 = vmatprep.subr.mxu0 0.0
      %5717 = vmatpush1.msra.mxu0 %v2031
      %5718 = vmatprep.subr.mxu0 0.0
      %5719 = vmatpush1.msra.mxu0 %v2030
      %5720 = vmatprep.subr.mxu0 0.0
      %5721 = vmatpush1.msra.mxu0 %v2029
      %5722 = vmatprep.subr.mxu0 0.0
      %5723 = vmatpush1.msra.mxu0 %v2028
      %5724 = vmatprep.subr.mxu0 0.0
      %5725 = vmatpush1.msra.mxu0 %v2027
      %5726 = vmatprep.subr.mxu0 0.0
      %5727 = vmatpush2.msra.mxu0 %v2058
      %5728 = vmatprep.subr.mxu0 0.0
      %5729 = vmatpush2.msra.mxu0 %v2057
      %5730 = vmatprep.subr.mxu0 0.0
      %5731 = vmatpush2.msra.mxu0 %v2056
      %5732 = vmatprep.subr.mxu0 0.0
      %5733 = vmatpush2.msra.mxu0 %v2055
      %5734 = vmatprep.subr.mxu0 0.0
      %5735 = vmatpush2.msra.mxu0 %v2054
      %5736 = vmatprep.subr.mxu0 0.0
      %5737 = vmatpush2.msra.mxu0 %v2053
      %5738 = vmatprep.subr.mxu0 0.0
      %5739 = vmatpush2.msra.mxu0 %v2052
      %5740 = vmatprep.subr.mxu0 0.0
      %5741 = vmatpush2.msra.mxu0 %v2051
      %5742 = vmatprep.subr.mxu0 0.0
      %5743 = vmatpush2.msra.mxu0 %v2050
      %5744 = vmatprep.subr.mxu0 0.0
      %5745 = vmatpush2.msra.mxu0 %v2049
      %5746 = vmatprep.subr.mxu0 0.0
      %5747 = vmatpush2.msra.mxu0 %v2048
      %5748 = vmatprep.subr.mxu0 0.0
      %5749 = vmatpush2.msra.mxu0 %v2047
      %5750 = vmatprep.subr.mxu0 0.0
      %5751 = vmatpush2.msra.mxu0 %v2046
      %5752 = vmatprep.subr.mxu0 0.0
      %5753 = vmatpush2.msra.mxu0 %v2045
      %5754 = vmatprep.subr.mxu0 0.0
      %5755 = vmatpush2.msra.mxu0 %v2044
      %5756 = vmatprep.subr.mxu0 0.0
      %5757 = vmatpush2.msra.mxu0 %v2043
      %5758 = vmatprep.mubr.f32.mxu0 %v482
      %5759 = vmatmul.mubr.f32.gmra.mxu0 %v481
      %v5760 = vpop.f32.mrf.mxu0
      %v5761 = vadd.f32 %v5691, %v5760
      %v5762 = vpop.f32.mrf.mxu0
      %5763 = vdwg.mxu0
      %5764 = vmatprep.subr.mxu0 0.0
      %5765 = vmatpush1.msra.mxu0 %v2074
      %5766 = vmatprep.subr.mxu0 0.0
      %5767 = vmatpush1.msra.mxu0 %v2073
      %5768 = vmatprep.subr.mxu0 0.0
      %5769 = vmatpush1.msra.mxu0 %v2072
      %5770 = vmatprep.subr.mxu0 0.0
      %5771 = vmatpush1.msra.mxu0 %v2071
      %5772 = vmatprep.subr.mxu0 0.0
      %5773 = vmatpush1.msra.mxu0 %v2070
      %5774 = vmatprep.subr.mxu0 0.0
      %5775 = vmatpush1.msra.mxu0 %v2069
      %5776 = vmatprep.subr.mxu0 0.0
      %5777 = vmatpush1.msra.mxu0 %v2068
      %5778 = vmatprep.subr.mxu0 0.0
      %5779 = vmatpush1.msra.mxu0 %v2067
      %5780 = vmatprep.subr.mxu0 0.0
      %5781 = vmatpush1.msra.mxu0 %v2066
      %5782 = vmatprep.subr.mxu0 0.0
      %5783 = vmatpush1.msra.mxu0 %v2065
      %5784 = vmatprep.subr.mxu0 0.0
      %5785 = vmatpush1.msra.mxu0 %v2064
      %5786 = vmatprep.subr.mxu0 0.0
      %5787 = vmatpush1.msra.mxu0 %v2063
      %5788 = vmatprep.subr.mxu0 0.0
      %5789 = vmatpush1.msra.mxu0 %v2062
      %5790 = vmatprep.subr.mxu0 0.0
      %5791 = vmatpush1.msra.mxu0 %v2061
      %5792 = vmatprep.subr.mxu0 0.0
      %5793 = vmatpush1.msra.mxu0 %v2060
      %5794 = vmatprep.subr.mxu0 0.0
      %5795 = vmatpush1.msra.mxu0 %v2059
      %5796 = vmatprep.subr.mxu0 0.0
      %5797 = vmatpush2.msra.mxu0 %v2090
      %5798 = vmatprep.subr.mxu0 0.0
      %5799 = vmatpush2.msra.mxu0 %v2089
      %5800 = vmatprep.subr.mxu0 0.0
      %5801 = vmatpush2.msra.mxu0 %v2088
      %5802 = vmatprep.subr.mxu0 0.0
      %5803 = vmatpush2.msra.mxu0 %v2087
      %5804 = vmatprep.subr.mxu0 0.0
      %5805 = vmatpush2.msra.mxu0 %v2086
      %5806 = vmatprep.subr.mxu0 0.0
      %5807 = vmatpush2.msra.mxu0 %v2085
      %5808 = vmatprep.subr.mxu0 0.0
      %5809 = vmatpush2.msra.mxu0 %v2084
      %5810 = vmatprep.subr.mxu0 0.0
      %5811 = vmatpush2.msra.mxu0 %v2083
      %5812 = vmatprep.subr.mxu0 0.0
      %5813 = vmatpush2.msra.mxu0 %v2082
      %5814 = vmatprep.subr.mxu0 0.0
      %5815 = vmatpush2.msra.mxu0 %v2081
      %5816 = vmatprep.subr.mxu0 0.0
      %5817 = vmatpush2.msra.mxu0 %v2080
      %5818 = vmatprep.subr.mxu0 0.0
      %5819 = vmatpush2.msra.mxu0 %v2079
      %5820 = vmatprep.subr.mxu0 0.0
      %5821 = vmatpush2.msra.mxu0 %v2078
      %5822 = vmatprep.subr.mxu0 0.0
      %5823 = vmatpush2.msra.mxu0 %v2077
      %5824 = vmatprep.subr.mxu0 0.0
      %5825 = vmatpush2.msra.mxu0 %v2076
      %5826 = vmatprep.subr.mxu0 0.0
      %5827 = vmatpush2.msra.mxu0 %v2075
      %5828 = vmatprep.mubr.f32.mxu0 %v484
      %5829 = vmatmul.mubr.f32.gmra.mxu0 %v483
      %v5830 = vpop.f32.mrf.mxu0
      %v5831 = vadd.f32 %v5761, %v5830
      %v5832 = vpop.f32.mrf.mxu0
      %5833 = vdwg.mxu0
      %5834 = vmatprep.subr.mxu0 0.0
      %5835 = vmatpush1.msra.mxu0 %v2106
      %5836 = vmatprep.subr.mxu0 0.0
      %5837 = vmatpush1.msra.mxu0 %v2105
      %5838 = vmatprep.subr.mxu0 0.0
      %5839 = vmatpush1.msra.mxu0 %v2104
      %5840 = vmatprep.subr.mxu0 0.0
      %5841 = vmatpush1.msra.mxu0 %v2103
      %5842 = vmatprep.subr.mxu0 0.0
      %5843 = vmatpush1.msra.mxu0 %v2102
      %5844 = vmatprep.subr.mxu0 0.0
      %5845 = vmatpush1.msra.mxu0 %v2101
      %5846 = vmatprep.subr.mxu0 0.0
      %5847 = vmatpush1.msra.mxu0 %v2100
      %5848 = vmatprep.subr.mxu0 0.0
      %5849 = vmatpush1.msra.mxu0 %v2099
      %5850 = vmatprep.subr.mxu0 0.0
      %5851 = vmatpush1.msra.mxu0 %v2098
      %5852 = vmatprep.subr.mxu0 0.0
      %5853 = vmatpush1.msra.mxu0 %v2097
      %5854 = vmatprep.subr.mxu0 0.0
      %5855 = vmatpush1.msra.mxu0 %v2096
      %5856 = vmatprep.subr.mxu0 0.0
      %5857 = vmatpush1.msra.mxu0 %v2095
      %5858 = vmatprep.subr.mxu0 0.0
      %5859 = vmatpush1.msra.mxu0 %v2094
      %5860 = vmatprep.subr.mxu0 0.0
      %5861 = vmatpush1.msra.mxu0 %v2093
      %5862 = vmatprep.subr.mxu0 0.0
      %5863 = vmatpush1.msra.mxu0 %v2092
      %5864 = vmatprep.subr.mxu0 0.0
      %5865 = vmatpush1.msra.mxu0 %v2091
      %5866 = vmatprep.subr.mxu0 0.0
      %5867 = vmatpush2.msra.mxu0 %v2122
      %5868 = vmatprep.subr.mxu0 0.0
      %5869 = vmatpush2.msra.mxu0 %v2121
      %5870 = vmatprep.subr.mxu0 0.0
      %5871 = vmatpush2.msra.mxu0 %v2120
      %5872 = vmatprep.subr.mxu0 0.0
      %5873 = vmatpush2.msra.mxu0 %v2119
      %5874 = vmatprep.subr.mxu0 0.0
      %5875 = vmatpush2.msra.mxu0 %v2118
      %5876 = vmatprep.subr.mxu0 0.0
      %5877 = vmatpush2.msra.mxu0 %v2117
      %5878 = vmatprep.subr.mxu0 0.0
      %5879 = vmatpush2.msra.mxu0 %v2116
      %5880 = vmatprep.subr.mxu0 0.0
      %5881 = vmatpush2.msra.mxu0 %v2115
      %5882 = vmatprep.subr.mxu0 0.0
      %5883 = vmatpush2.msra.mxu0 %v2114
      %5884 = vmatprep.subr.mxu0 0.0
      %5885 = vmatpush2.msra.mxu0 %v2113
      %5886 = vmatprep.subr.mxu0 0.0
      %5887 = vmatpush2.msra.mxu0 %v2112
      %5888 = vmatprep.subr.mxu0 0.0
      %5889 = vmatpush2.msra.mxu0 %v2111
      %5890 = vmatprep.subr.mxu0 0.0
      %5891 = vmatpush2.msra.mxu0 %v2110
      %5892 = vmatprep.subr.mxu0 0.0
      %5893 = vmatpush2.msra.mxu0 %v2109
      %5894 = vmatprep.subr.mxu0 0.0
      %5895 = vmatpush2.msra.mxu0 %v2108
      %5896 = vmatprep.subr.mxu0 0.0
      %5897 = vmatpush2.msra.mxu0 %v2107
      %5898 = vmatprep.mubr.f32.mxu0 %v486
      %5899 = vmatmul.mubr.f32.gmra.mxu0 %v485
      %v5900 = vpop.f32.mrf.mxu0
      %v5901 = vadd.f32 %v5831, %v5900
      %v5902 = vpop.f32.mrf.mxu0
      %5903 = vdwg.mxu0
      %5904 = vmatprep.subr.mxu0 0.0
      %5905 = vmatpush1.msra.mxu0 %v2138
      %5906 = vmatprep.subr.mxu0 0.0
      %5907 = vmatpush1.msra.mxu0 %v2137
      %5908 = vmatprep.subr.mxu0 0.0
      %5909 = vmatpush1.msra.mxu0 %v2136
      %5910 = vmatprep.subr.mxu0 0.0
      %5911 = vmatpush1.msra.mxu0 %v2135
      %5912 = vmatprep.subr.mxu0 0.0
      %5913 = vmatpush1.msra.mxu0 %v2134
      %5914 = vmatprep.subr.mxu0 0.0
      %5915 = vmatpush1.msra.mxu0 %v2133
      %5916 = vmatprep.subr.mxu0 0.0
      %5917 = vmatpush1.msra.mxu0 %v2132
      %5918 = vmatprep.subr.mxu0 0.0
      %5919 = vmatpush1.msra.mxu0 %v2131
      %5920 = vmatprep.subr.mxu0 0.0
      %5921 = vmatpush1.msra.mxu0 %v2130
      %5922 = vmatprep.subr.mxu0 0.0
      %5923 = vmatpush1.msra.mxu0 %v2129
      %5924 = vmatprep.subr.mxu0 0.0
      %5925 = vmatpush1.msra.mxu0 %v2128
      %5926 = vmatprep.subr.mxu0 0.0
      %5927 = vmatpush1.msra.mxu0 %v2127
      %5928 = vmatprep.subr.mxu0 0.0
      %5929 = vmatpush1.msra.mxu0 %v2126
      %5930 = vmatprep.subr.mxu0 0.0
      %5931 = vmatpush1.msra.mxu0 %v2125
      %5932 = vmatprep.subr.mxu0 0.0
      %5933 = vmatpush1.msra.mxu0 %v2124
      %5934 = vmatprep.subr.mxu0 0.0
      %5935 = vmatpush1.msra.mxu0 %v2123
      %5936 = vmatprep.subr.mxu0 0.0
      %5937 = vmatpush2.msra.mxu0 %v2154
      %5938 = vmatprep.subr.mxu0 0.0
      %5939 = vmatpush2.msra.mxu0 %v2153
      %5940 = vmatprep.subr.mxu0 0.0
      %5941 = vmatpush2.msra.mxu0 %v2152
      %5942 = vmatprep.subr.mxu0 0.0
      %5943 = vmatpush2.msra.mxu0 %v2151
      %5944 = vmatprep.subr.mxu0 0.0
      %5945 = vmatpush2.msra.mxu0 %v2150
      %5946 = vmatprep.subr.mxu0 0.0
      %5947 = vmatpush2.msra.mxu0 %v2149
      %5948 = vmatprep.subr.mxu0 0.0
      %5949 = vmatpush2.msra.mxu0 %v2148
      %5950 = vmatprep.subr.mxu0 0.0
      %5951 = vmatpush2.msra.mxu0 %v2147
      %5952 = vmatprep.subr.mxu0 0.0
      %5953 = vmatpush2.msra.mxu0 %v2146
      %5954 = vmatprep.subr.mxu0 0.0
      %5955 = vmatpush2.msra.mxu0 %v2145
      %5956 = vmatprep.subr.mxu0 0.0
      %5957 = vmatpush2.msra.mxu0 %v2144
      %5958 = vmatprep.subr.mxu0 0.0
      %5959 = vmatpush2.msra.mxu0 %v2143
      %5960 = vmatprep.subr.mxu0 0.0
      %5961 = vmatpush2.msra.mxu0 %v2142
      %5962 = vmatprep.subr.mxu0 0.0
      %5963 = vmatpush2.msra.mxu0 %v2141
      %5964 = vmatprep.subr.mxu0 0.0
      %5965 = vmatpush2.msra.mxu0 %v2140
      %5966 = vmatprep.subr.mxu0 0.0
      %5967 = vmatpush2.msra.mxu0 %v2139
      %5968 = vmatprep.mubr.f32.mxu0 %v488
      %5969 = vmatmul.mubr.f32.gmra.mxu0 %v487
      %v5970 = vpop.f32.mrf.mxu0
      %v5971 = vadd.f32 %v5901, %v5970
      %v5972 = vpop.f32.mrf.mxu0
      %5973 = vdwg.mxu0
      %5974 = vmatprep.subr.mxu0 0.0
      %5975 = vmatpush1.msra.mxu0 %v2170
      %5976 = vmatprep.subr.mxu0 0.0
      %5977 = vmatpush1.msra.mxu0 %v2169
      %5978 = vmatprep.subr.mxu0 0.0
      %5979 = vmatpush1.msra.mxu0 %v2168
      %5980 = vmatprep.subr.mxu0 0.0
      %5981 = vmatpush1.msra.mxu0 %v2167
      %5982 = vmatprep.subr.mxu0 0.0
      %5983 = vmatpush1.msra.mxu0 %v2166
      %5984 = vmatprep.subr.mxu0 0.0
      %5985 = vmatpush1.msra.mxu0 %v2165
      %5986 = vmatprep.subr.mxu0 0.0
      %5987 = vmatpush1.msra.mxu0 %v2164
      %5988 = vmatprep.subr.mxu0 0.0
      %5989 = vmatpush1.msra.mxu0 %v2163
      %5990 = vmatprep.subr.mxu0 0.0
      %5991 = vmatpush1.msra.mxu0 %v2162
      %5992 = vmatprep.subr.mxu0 0.0
      %5993 = vmatpush1.msra.mxu0 %v2161
      %5994 = vmatprep.subr.mxu0 0.0
      %5995 = vmatpush1.msra.mxu0 %v2160
      %5996 = vmatprep.subr.mxu0 0.0
      %5997 = vmatpush1.msra.mxu0 %v2159
      %5998 = vmatprep.subr.mxu0 0.0
      %5999 = vmatpush1.msra.mxu0 %v2158
      %6000 = vmatprep.subr.mxu0 0.0
      %6001 = vmatpush1.msra.mxu0 %v2157
      %6002 = vmatprep.subr.mxu0 0.0
      %6003 = vmatpush1.msra.mxu0 %v2156
      %6004 = vmatprep.subr.mxu0 0.0
      %6005 = vmatpush1.msra.mxu0 %v2155
      %6006 = vmatprep.subr.mxu0 0.0
      %6007 = vmatpush2.msra.mxu0 0.0
      %6008 = vmatprep.subr.mxu0 0.0
      %6009 = vmatpush2.msra.mxu0 %v2185
      %6010 = vmatprep.subr.mxu0 0.0
      %6011 = vmatpush2.msra.mxu0 %v2184
      %6012 = vmatprep.subr.mxu0 0.0
      %6013 = vmatpush2.msra.mxu0 %v2183
      %6014 = vmatprep.subr.mxu0 0.0
      %6015 = vmatpush2.msra.mxu0 %v2182
      %6016 = vmatprep.subr.mxu0 0.0
      %6017 = vmatpush2.msra.mxu0 %v2181
      %6018 = vmatprep.subr.mxu0 0.0
      %6019 = vmatpush2.msra.mxu0 %v2180
      %6020 = vmatprep.subr.mxu0 0.0
      %6021 = vmatpush2.msra.mxu0 %v2179
      %6022 = vmatprep.subr.mxu0 0.0
      %6023 = vmatpush2.msra.mxu0 %v2178
      %6024 = vmatprep.subr.mxu0 0.0
      %6025 = vmatpush2.msra.mxu0 %v2177
      %6026 = vmatprep.subr.mxu0 0.0
      %6027 = vmatpush2.msra.mxu0 %v2176
      %6028 = vmatprep.subr.mxu0 0.0
      %6029 = vmatpush2.msra.mxu0 %v2175
      %6030 = vmatprep.subr.mxu0 0.0
      %6031 = vmatpush2.msra.mxu0 %v2174
      %6032 = vmatprep.subr.mxu0 0.0
      %6033 = vmatpush2.msra.mxu0 %v2173
      %6034 = vmatprep.subr.mxu0 0.0
      %6035 = vmatpush2.msra.mxu0 %v2172
      %6036 = vmatprep.subr.mxu0 0.0
      %6037 = vmatpush2.msra.mxu0 %v2171
      %6038 = vmatprep.mubr.f32.mxu0 %v2332
      %6039 = vmatmul.mubr.f32.gmra.mxu0 %v489
      %v6040 = vpop.f32.mrf.mxu0
      %v6041 = vadd.f32 %v5971, %v6040
      %v6042 = vpop.f32.mrf.mxu0
      %6043 = vdwg.mxu0
      %v6044 = vlaneseq
      %v6045 = vshrl.u32 %v6044, 7
      %v6046 = vsub.s32 0, %v6045
      %v6047 = vrot.slane %v383, %v6046
      %v6048 = vadd.f32 %v6041, %v6047
      %v6049 = vld [vmem:[%s299] sm:$0xff]
      %v6050 = vlaneseq
      %v6051 = vshrl.u32 %v6050, 7
      %v6052 = vsub.s32 0, %v6051
      %v6053 = vrot.slane %v384, %v6052
      %vm6054 = vcmask 326656
      %v6056 = vsel %vm6054, %v6048, 0
      %6058 = vmatprep.subr.mxu0 0.0
      %6059 = vmatpush1.msra.mxu0 0.0
      %6060 = vmatprep.subr.mxu0 0.0
      %6061 = vmatpush1.msra.mxu0 0.0
      %6062 = vmatprep.subr.mxu0 0.0
      %6063 = vmatpush1.msra.mxu0 0.0
      %6064 = vmatprep.subr.mxu0 0.0
      %6065 = vmatpush1.msra.mxu0 0.0
      %6066 = vmatprep.subr.mxu0 0.0
      %6067 = vmatpush1.msra.mxu0 0.0
      %6068 = vmatprep.subr.mxu0 0.0
      %6069 = vmatpush1.msra.mxu0 0.0
      %6070 = vmatprep.subr.mxu0 0.0
      %6071 = vmatpush1.msra.mxu0 0.0
      %6072 = vmatprep.subr.mxu0 0.0
      %6073 = vmatpush1.msra.mxu0 0.0
      %6074 = vmatprep.subr.mxu0 0.0
      %6075 = vmatpush1.msra.mxu0 0.0
      %6076 = vmatprep.subr.mxu0 0.0
      %6077 = vmatpush1.msra.mxu0 0.0
      %6078 = vmatprep.subr.mxu0 0.0
      %6079 = vmatpush1.msra.mxu0 0.0
      %6080 = vmatprep.subr.mxu0 0.0
      %6081 = vmatpush1.msra.mxu0 %v382
      %6082 = vmatprep.subr.mxu0 0.0
      %6083 = vmatpush1.msra.mxu0 %v381
      %6084 = vmatprep.subr.mxu0 0.0
      %6085 = vmatpush1.msra.mxu0 %v380
      %6086 = vmatprep.subr.mxu0 0.0
      %6087 = vmatpush1.msra.mxu0 %v379
      %6088 = vmatprep.subr.mxu0 0.0
      %6089 = vmatpush1.msra.mxu0 %v378
      %6090 = vmatprep.subr.mxu0 0.0
      %6091 = vmatpush2.msra.mxu0 0.0
      %6092 = vmatprep.subr.mxu0 0.0
      %6093 = vmatpush2.msra.mxu0 0.0
      %6094 = vmatprep.subr.mxu0 0.0
      %6095 = vmatpush2.msra.mxu0 0.0
      %6096 = vmatprep.subr.mxu0 0.0
      %6097 = vmatpush2.msra.mxu0 0.0
      %6098 = vmatprep.subr.mxu0 0.0
      %6099 = vmatpush2.msra.mxu0 0.0
      %6100 = vmatprep.subr.mxu0 0.0
      %6101 = vmatpush2.msra.mxu0 0.0
      %6102 = vmatprep.subr.mxu0 0.0
      %6103 = vmatpush2.msra.mxu0 0.0
      %6104 = vmatprep.subr.mxu0 0.0
      %6105 = vmatpush2.msra.mxu0 0.0
      %6106 = vmatprep.subr.mxu0 0.0
      %6107 = vmatpush2.msra.mxu0 0.0
      %6108 = vmatprep.subr.mxu0 0.0
      %6109 = vmatpush2.msra.mxu0 0.0
      %6110 = vmatprep.subr.mxu0 0.0
      %6111 = vmatpush2.msra.mxu0 0.0
      %6112 = vmatprep.subr.mxu0 0.0
      %6113 = vmatpush2.msra.mxu0 0.0
      %6114 = vmatprep.subr.mxu0 0.0
      %6115 = vmatpush2.msra.mxu0 0.0
      %6116 = vmatprep.subr.mxu0 0.0
      %6117 = vmatpush2.msra.mxu0 0.0
      %6118 = vmatprep.subr.mxu0 0.0
      %6119 = vmatpush2.msra.mxu0 0.0
      %6120 = vmatprep.subr.mxu0 0.0
      %6121 = vmatpush2.msra.mxu0 0.0
      %6122 = vmatprep.mubr.f32.mxu0 0.0
      %6123 = vmatmul.mubr.f32.gmra.mxu0 %v6056
      %v6124 = vpop.f32.mrf.mxu0
      %v6125 = vadd.f32 %v6053, %v6124
      %v6126 = vpop.f32.mrf.mxu0
      %6127 = vdwg.mxu0
      %v6128 = vmax.f32 %v6125, 0.0
      %v6129 = vmul.f32 %v6049, %v6128
      %v6130 = vsel %vm6054, %v6129, 0.0
      %6131 = vadd.xlane.f32.xlu0 %v6130
      %v6132 = vpop.xlane.xlu0 %6131
      %v6133 = vtanh.pop %v6132
      %v6134 = vmul.f32 %v6133, %v6128
      %v6135 = vld [vmem:[%s5] sm:$0xff]
      %v6136 = vld [vmem:[%s5 + $0x8] sm:$0xff]
      %v6137 = vld [vmem:[%s5 + $0x10] sm:$0xff]
      %v6138 = vld [vmem:[%s5 + $0x18] sm:$0xff]
      %v6139 = vld [vmem:[%s5 + $0x20] sm:$0xff]
      %v6140 = vld [vmem:[%s5 + $0x28] sm:$0xff]
      %v6141 = vld [vmem:[%s5 + $0x30] sm:$0xff]
      %v6142 = vld [vmem:[%s5 + $0x38] sm:$0xff]
      %v6143 = vld [vmem:[%s5 + $0x40] sm:$0xff]
      %v6144 = vld [vmem:[%s5 + $0x48] sm:$0xff]
      %v6145 = vld [vmem:[%s5 + $0x50] sm:$0xff]
      %v6146 = vld [vmem:[%s5 + $0x58] sm:$0xff]
      %v6147 = vld [vmem:[%s5 + $0x60] sm:$0xff]
      %v6148 = vld [vmem:[%s5 + $0x68] sm:$0xff]
      %v6149 = vld [vmem:[%s5 + $0x70] sm:$0xff]
      %v6150 = vld [vmem:[%s5 + $0x78] sm:$0xff]
      %v6151 = vld [vmem:[%s5 + $0x80] sm:$0xff]
      %v6152 = vld [vmem:[%s5 + $0x88] sm:$0xff]
      %v6153 = vld [vmem:[%s5 + $0x90] sm:$0xff]
      %v6154 = vld [vmem:[%s5 + $0x98] sm:$0xff]
      %v6155 = vld [vmem:[%s5 + $0xa0] sm:$0x1]
      %v6156 = vld [vmem:[%s5 + $0xa8] sm:$0x1]
      %v6158 = vsel %vm6054, %v6134, 0
      %6160 = vmatprep.subr.mxu0 0.0
      %6161 = vmatpush1.msra.mxu0 0.0
      %6162 = vmatprep.subr.mxu0 0.0
      %6163 = vmatpush1.msra.mxu0 0.0
      %6164 = vmatprep.subr.mxu0 0.0
      %6165 = vmatpush1.msra.mxu0 0.0
      %6166 = vmatprep.subr.mxu0 0.0
      %6167 = vmatpush1.msra.mxu0 0.0
      %6168 = vmatprep.subr.mxu0 0.0
      %6169 = vmatpush1.msra.mxu0 0.0
      %6170 = vmatprep.subr.mxu0 0.0
      %6171 = vmatpush1.msra.mxu0 0.0
      %6172 = vmatprep.subr.mxu0 0.0
      %6173 = vmatpush1.msra.mxu0 0.0
      %6174 = vmatprep.subr.mxu0 0.0
      %6175 = vmatpush1.msra.mxu0 0.0
      %6176 = vmatprep.subr.mxu0 0.0
      %6177 = vmatpush1.msra.mxu0 0.0
      %6178 = vmatprep.subr.mxu0 0.0
      %6179 = vmatpush1.msra.mxu0 0.0
      %6180 = vmatprep.subr.mxu0 0.0
      %6181 = vmatpush1.msra.mxu0 0.0
      %6182 = vmatprep.subr.mxu0 0.0
      %6183 = vmatpush1.msra.mxu0 %v6144
      %6184 = vmatprep.subr.mxu0 0.0
      %6185 = vmatpush1.msra.mxu0 %v6143
      %6186 = vmatprep.subr.mxu0 0.0
      %6187 = vmatpush1.msra.mxu0 %v6142
      %6188 = vmatprep.subr.mxu0 0.0
      %6189 = vmatpush1.msra.mxu0 %v6141
      %6190 = vmatprep.subr.mxu0 0.0
      %6191 = vmatpush1.msra.mxu0 %v6140
      %6192 = vmatprep.subr.mxu0 0.0
      %6193 = vmatpush2.msra.mxu0 0.0
      %6194 = vmatprep.subr.mxu0 0.0
      %6195 = vmatpush2.msra.mxu0 0.0
      %6196 = vmatprep.subr.mxu0 0.0
      %6197 = vmatpush2.msra.mxu0 0.0
      %6198 = vmatprep.subr.mxu0 0.0
      %6199 = vmatpush2.msra.mxu0 0.0
      %6200 = vmatprep.subr.mxu0 0.0
      %6201 = vmatpush2.msra.mxu0 0.0
      %6202 = vmatprep.subr.mxu0 0.0
      %6203 = vmatpush2.msra.mxu0 0.0
      %6204 = vmatprep.subr.mxu0 0.0
      %6205 = vmatpush2.msra.mxu0 0.0
      %6206 = vmatprep.subr.mxu0 0.0
      %6207 = vmatpush2.msra.mxu0 0.0
      %6208 = vmatprep.subr.mxu0 0.0
      %6209 = vmatpush2.msra.mxu0 0.0
      %6210 = vmatprep.subr.mxu0 0.0
      %6211 = vmatpush2.msra.mxu0 0.0
      %6212 = vmatprep.subr.mxu0 0.0
      %6213 = vmatpush2.msra.mxu0 0.0
      %6214 = vmatprep.subr.mxu0 0.0
      %6215 = vmatpush2.msra.mxu0 0.0
      %6216 = vmatprep.subr.mxu0 0.0
      %6217 = vmatpush2.msra.mxu0 0.0
      %6218 = vmatprep.subr.mxu0 0.0
      %6219 = vmatpush2.msra.mxu0 0.0
      %6220 = vmatprep.subr.mxu0 0.0
      %6221 = vmatpush2.msra.mxu0 0.0
      %6222 = vmatprep.subr.mxu0 0.0
      %6223 = vmatpush2.msra.mxu0 0.0
      %6224 = vmatprep.mubr.f32.mxu0 0.0
      %6225 = vmatmul.mubr.f32.gmra.mxu0 %v6158
      %v6226 = vpop.f32.mrf.mxu0
      %v6227 = vadd.f32 0.0, %v6226
      %v6228 = vpop.f32.mrf.mxu0
      %6229 = vdwg.mxu0
      %v6231 = vsel %vm6054, %v6049, 0
      %6233 = vmatprep.subr.mxu0 0.0
      %6234 = vmatpush1.msra.mxu0 0.0
      %6235 = vmatprep.subr.mxu0 0.0
      %6236 = vmatpush1.msra.mxu0 0.0
      %6237 = vmatprep.subr.mxu0 0.0
      %6238 = vmatpush1.msra.mxu0 0.0
      %6239 = vmatprep.subr.mxu0 0.0
      %6240 = vmatpush1.msra.mxu0 0.0
      %6241 = vmatprep.subr.mxu0 0.0
      %6242 = vmatpush1.msra.mxu0 0.0
      %6243 = vmatprep.subr.mxu0 0.0
      %6244 = vmatpush1.msra.mxu0 0.0
      %6245 = vmatprep.subr.mxu0 0.0
      %6246 = vmatpush1.msra.mxu0 0.0
      %6247 = vmatprep.subr.mxu0 0.0
      %6248 = vmatpush1.msra.mxu0 0.0
      %6249 = vmatprep.subr.mxu0 0.0
      %6250 = vmatpush1.msra.mxu0 0.0
      %6251 = vmatprep.subr.mxu0 0.0
      %6252 = vmatpush1.msra.mxu0 0.0
      %6253 = vmatprep.subr.mxu0 0.0
      %6254 = vmatpush1.msra.mxu0 0.0
      %6255 = vmatprep.subr.mxu0 0.0
      %6256 = vmatpush1.msra.mxu0 %v6139
      %6257 = vmatprep.subr.mxu0 0.0
      %6258 = vmatpush1.msra.mxu0 %v6138
      %6259 = vmatprep.subr.mxu0 0.0
      %6260 = vmatpush1.msra.mxu0 %v6137
      %6261 = vmatprep.subr.mxu0 0.0
      %6262 = vmatpush1.msra.mxu0 %v6136
      %6263 = vmatprep.subr.mxu0 0.0
      %6264 = vmatpush1.msra.mxu0 %v6135
      %6265 = vmatprep.subr.mxu0 0.0
      %6266 = vmatpush2.msra.mxu0 0.0
      %6267 = vmatprep.subr.mxu0 0.0
      %6268 = vmatpush2.msra.mxu0 0.0
      %6269 = vmatprep.subr.mxu0 0.0
      %6270 = vmatpush2.msra.mxu0 0.0
      %6271 = vmatprep.subr.mxu0 0.0
      %6272 = vmatpush2.msra.mxu0 0.0
      %6273 = vmatprep.subr.mxu0 0.0
      %6274 = vmatpush2.msra.mxu0 0.0
      %6275 = vmatprep.subr.mxu0 0.0
      %6276 = vmatpush2.msra.mxu0 0.0
      %6277 = vmatprep.subr.mxu0 0.0
      %6278 = vmatpush2.msra.mxu0 0.0
      %6279 = vmatprep.subr.mxu0 0.0
      %6280 = vmatpush2.msra.mxu0 0.0
      %6281 = vmatprep.subr.mxu0 0.0
      %6282 = vmatpush2.msra.mxu0 0.0
      %6283 = vmatprep.subr.mxu0 0.0
      %6284 = vmatpush2.msra.mxu0 0.0
      %6285 = vmatprep.subr.mxu0 0.0
      %6286 = vmatpush2.msra.mxu0 0.0
      %6287 = vmatprep.subr.mxu0 0.0
      %6288 = vmatpush2.msra.mxu0 0.0
      %6289 = vmatprep.subr.mxu0 0.0
      %6290 = vmatpush2.msra.mxu0 0.0
      %6291 = vmatprep.subr.mxu0 0.0
      %6292 = vmatpush2.msra.mxu0 0.0
      %6293 = vmatprep.subr.mxu0 0.0
      %6294 = vmatpush2.msra.mxu0 0.0
      %6295 = vmatprep.subr.mxu0 0.0
      %6296 = vmatpush2.msra.mxu0 0.0
      %6297 = vmatprep.mubr.f32.mxu0 0.0
      %6298 = vmatmul.mubr.f32.gmra.mxu0 %v6231
      %v6299 = vpop.f32.mrf.mxu0
      %v6300 = vadd.f32 %v6227, %v6299
      %v6301 = vpop.f32.mrf.mxu0
      %6302 = vdwg.mxu0
      %v6303 = vlaneseq
      %v6304 = vshrl.u32 %v6303, 7
      %v6305 = vsub.s32 0, %v6304
      %v6306 = vrot.slane %v6155, %v6305
      %v6307 = vadd.f32 %v6300, %v6306
      %v6308 = vmax.f32 %v6307, 0.0
      %v6309 = vlaneseq
      %v6310 = vshrl.u32 %v6309, 7
      %v6311 = vsub.s32 0, %v6310
      %v6312 = vrot.slane %v6156, %v6311
      %vm6313 = vcmask 654336
      %v6315 = vsel %vm6313, %v6308, 0
      %6317 = vmatprep.subr.mxu0 0.0
      %6318 = vmatpush1.msra.mxu0 0.0
      %6319 = vmatprep.subr.mxu0 0.0
      %6320 = vmatpush1.msra.mxu0 0.0
      %6321 = vmatprep.subr.mxu0 0.0
      %6322 = vmatpush1.msra.mxu0 0.0
      %6323 = vmatprep.subr.mxu0 0.0
      %6324 = vmatpush1.msra.mxu0 0.0
      %6325 = vmatprep.subr.mxu0 0.0
      %6326 = vmatpush1.msra.mxu0 0.0
      %6327 = vmatprep.subr.mxu0 0.0
      %6328 = vmatpush1.msra.mxu0 0.0
      %6329 = vmatprep.subr.mxu0 0.0
      %6330 = vmatpush1.msra.mxu0 %v6154
      %6331 = vmatprep.subr.mxu0 0.0
      %6332 = vmatpush1.msra.mxu0 %v6153
      %6333 = vmatprep.subr.mxu0 0.0
      %6334 = vmatpush1.msra.mxu0 %v6152
      %6335 = vmatprep.subr.mxu0 0.0
      %6336 = vmatpush1.msra.mxu0 %v6151
      %6337 = vmatprep.subr.mxu0 0.0
      %6338 = vmatpush1.msra.mxu0 %v6150
      %6339 = vmatprep.subr.mxu0 0.0
      %6340 = vmatpush1.msra.mxu0 %v6149
      %6341 = vmatprep.subr.mxu0 0.0
      %6342 = vmatpush1.msra.mxu0 %v6148
      %6343 = vmatprep.subr.mxu0 0.0
      %6344 = vmatpush1.msra.mxu0 %v6147
      %6345 = vmatprep.subr.mxu0 0.0
      %6346 = vmatpush1.msra.mxu0 %v6146
      %6347 = vmatprep.subr.mxu0 0.0
      %6348 = vmatpush1.msra.mxu0 %v6145
      %6349 = vmatprep.subr.mxu0 0.0
      %6350 = vmatpush2.msra.mxu0 0.0
      %6351 = vmatprep.subr.mxu0 0.0
      %6352 = vmatpush2.msra.mxu0 0.0
      %6353 = vmatprep.subr.mxu0 0.0
      %6354 = vmatpush2.msra.mxu0 0.0
      %6355 = vmatprep.subr.mxu0 0.0
      %6356 = vmatpush2.msra.mxu0 0.0
      %6357 = vmatprep.subr.mxu0 0.0
      %6358 = vmatpush2.msra.mxu0 0.0
      %6359 = vmatprep.subr.mxu0 0.0
      %6360 = vmatpush2.msra.mxu0 0.0
      %6361 = vmatprep.subr.mxu0 0.0
      %6362 = vmatpush2.msra.mxu0 0.0
      %6363 = vmatprep.subr.mxu0 0.0
      %6364 = vmatpush2.msra.mxu0 0.0
      %6365 = vmatprep.subr.mxu0 0.0
      %6366 = vmatpush2.msra.mxu0 0.0
      %6367 = vmatprep.subr.mxu0 0.0
      %6368 = vmatpush2.msra.mxu0 0.0
      %6369 = vmatprep.subr.mxu0 0.0
      %6370 = vmatpush2.msra.mxu0 0.0
      %6371 = vmatprep.subr.mxu0 0.0
      %6372 = vmatpush2.msra.mxu0 0.0
      %6373 = vmatprep.subr.mxu0 0.0
      %6374 = vmatpush2.msra.mxu0 0.0
      %6375 = vmatprep.subr.mxu0 0.0
      %6376 = vmatpush2.msra.mxu0 0.0
      %6377 = vmatprep.subr.mxu0 0.0
      %6378 = vmatpush2.msra.mxu0 0.0
      %6379 = vmatprep.subr.mxu0 0.0
      %6380 = vmatpush2.msra.mxu0 0.0
      %6381 = vmatprep.mubr.f32.mxu0 0.0
      %6382 = vmatmul.mubr.f32.gmra.mxu0 %v6315
      %v6383 = vpop.f32.mrf.mxu0
      %v6384 = vadd.f32 %v6312, %v6383
      %v6385 = vpop.f32.mrf.mxu0
      %6386 = vdwg.mxu0
      %v6387 = vmax.f32 %v6384, 0.0
      %v6388 = vld [vmem:[%s6] sm:$0xff]
      %v6389 = vld [vmem:[%s6 + $0x8] sm:$0xff]
      %v6390 = vld [vmem:[%s6 + $0x10] sm:$0xff]
      %v6391 = vld [vmem:[%s6 + $0x18] sm:$0xff]
      %v6392 = vld [vmem:[%s6 + $0x20] sm:$0xff]
      %v6393 = vld [vmem:[%s6 + $0x28] sm:$0xff]
      %v6394 = vld [vmem:[%s6 + $0x30] sm:$0xff]
      %v6395 = vld [vmem:[%s6 + $0x38] sm:$0xff]
      %v6396 = vld [vmem:[%s6 + $0x40] sm:$0xff]
      %v6397 = vld [vmem:[%s6 + $0x48] sm:$0xff]
      %v6398 = vld [vmem:[%s6 + $0x50] sm:$0x1]
      %v6399 = vlaneseq
      %v6400 = vshrl.u32 %v6399, 7
      %v6401 = vsub.s32 0, %v6400
      %v6402 = vrot.slane %v6398, %v6401
      %v6404 = vsel %vm6313, %v6387, 0
      %6406 = vmatprep.subr.mxu0 0.0
      %6407 = vmatpush1.msra.mxu0 0.0
      %6408 = vmatprep.subr.mxu0 0.0
      %6409 = vmatpush1.msra.mxu0 0.0
      %6410 = vmatprep.subr.mxu0 0.0
      %6411 = vmatpush1.msra.mxu0 0.0
      %6412 = vmatprep.subr.mxu0 0.0
      %6413 = vmatpush1.msra.mxu0 0.0
      %6414 = vmatprep.subr.mxu0 0.0
      %6415 = vmatpush1.msra.mxu0 0.0
      %6416 = vmatprep.subr.mxu0 0.0
      %6417 = vmatpush1.msra.mxu0 0.0
      %6418 = vmatprep.subr.mxu0 0.0
      %6419 = vmatpush1.msra.mxu0 %v6397
      %6420 = vmatprep.subr.mxu0 0.0
      %6421 = vmatpush1.msra.mxu0 %v6396
      %6422 = vmatprep.subr.mxu0 0.0
      %6423 = vmatpush1.msra.mxu0 %v6395
      %6424 = vmatprep.subr.mxu0 0.0
      %6425 = vmatpush1.msra.mxu0 %v6394
      %6426 = vmatprep.subr.mxu0 0.0
      %6427 = vmatpush1.msra.mxu0 %v6393
      %6428 = vmatprep.subr.mxu0 0.0
      %6429 = vmatpush1.msra.mxu0 %v6392
      %6430 = vmatprep.subr.mxu0 0.0
      %6431 = vmatpush1.msra.mxu0 %v6391
      %6432 = vmatprep.subr.mxu0 0.0
      %6433 = vmatpush1.msra.mxu0 %v6390
      %6434 = vmatprep.subr.mxu0 0.0
      %6435 = vmatpush1.msra.mxu0 %v6389
      %6436 = vmatprep.subr.mxu0 0.0
      %6437 = vmatpush1.msra.mxu0 %v6388
      %6438 = vmatprep.subr.mxu0 0.0
      %6439 = vmatpush2.msra.mxu0 0.0
      %6440 = vmatprep.subr.mxu0 0.0
      %6441 = vmatpush2.msra.mxu0 0.0
      %6442 = vmatprep.subr.mxu0 0.0
      %6443 = vmatpush2.msra.mxu0 0.0
      %6444 = vmatprep.subr.mxu0 0.0
      %6445 = vmatpush2.msra.mxu0 0.0
      %6446 = vmatprep.subr.mxu0 0.0
      %6447 = vmatpush2.msra.mxu0 0.0
      %6448 = vmatprep.subr.mxu0 0.0
      %6449 = vmatpush2.msra.mxu0 0.0
      %6450 = vmatprep.subr.mxu0 0.0
      %6451 = vmatpush2.msra.mxu0 0.0
      %6452 = vmatprep.subr.mxu0 0.0
      %6453 = vmatpush2.msra.mxu0 0.0
      %6454 = vmatprep.subr.mxu0 0.0
      %6455 = vmatpush2.msra.mxu0 0.0
      %6456 = vmatprep.subr.mxu0 0.0
      %6457 = vmatpush2.msra.mxu0 0.0
      %6458 = vmatprep.subr.mxu0 0.0
      %6459 = vmatpush2.msra.mxu0 0.0
      %6460 = vmatprep.subr.mxu0 0.0
      %6461 = vmatpush2.msra.mxu0 0.0
      %6462 = vmatprep.subr.mxu0 0.0
      %6463 = vmatpush2.msra.mxu0 0.0
      %6464 = vmatprep.subr.mxu0 0.0
      %6465 = vmatpush2.msra.mxu0 0.0
      %6466 = vmatprep.subr.mxu0 0.0
      %6467 = vmatpush2.msra.mxu0 0.0
      %6468 = vmatprep.subr.mxu0 0.0
      %6469 = vmatpush2.msra.mxu0 0.0
      %6470 = vmatprep.mubr.f32.mxu0 0.0
      %6471 = vmatmul.mubr.f32.gmra.mxu0 %v6404
      %v6472 = vpop.f32.mrf.mxu0
      %v6473 = vadd.f32 %v6402, %v6472
      %v6474 = vpop.f32.mrf.mxu0
      %6475 = vdwg.mxu0
      %6476 = vst [vmem:[%s313] sm:$0xff] %v6473
      %p6477 = scmp.lt.s32.totalorder %s18, 1
      %s6478 = scalar_select %p6477, %s18, 1
      %s6479 = smul.addr %s6478, 8
      %s6480 = scalar_lea.vmem %s7, %s6479
      // Predicated region
      $region49: #{gandti_forward.1} parent=47 // pred_check
        %p6481 = pneg %p198
      $region50: #{gandti_forward.1} parent=47 // pred_check_branch
        %6483 = sbr.rel (%p6481) target = $region52
      $region51: #{gandti_forward.1} parent=47 // pred_region
        _
      $region52: #{gandti_forward.1} parent=47 // pred_fallthru
        _
    $region48: #{gandti_forward.1} parent=5 // pred_fallthru
      _
    %p6484 = scmp.le.s32.totalorder 2, %s13
    // Predicated region
    $region53: #{gandti_forward.1} parent=5 // pred_check
      %p6485 = pneg %p6484
    $region54: #{gandti_forward.1} parent=5 // pred_check_branch
      %6487 = sbr.rel (%p6485) target = $region56
    $region55: #{gandti_forward.1} parent=5 // pred_region
      %s6488 = ssub.s32 %s13, 2
      // Predicated region
      $region57: #{gandti_forward.1} parent=55 // pred_check
        %p6489 = pneg %p204
      $region58: #{gandti_forward.1} parent=55 // pred_check_branch
        %6491 = sbr.rel (%p6489) target = $region60
      $region59: #{gandti_forward.1} parent=55 // pred_region
        %p6492 = scmp.lt.s32.totalorder %s19, 1
        %s6493 = scalar_select %p6492, %s19, 1
        %s6494 = smul.addr %s6493, 8
        %s6495 = scalar_lea.vmem %s7, %s6494
      $region60: #{gandti_forward.1} parent=55 // pred_fallthru
        _
    $region56: #{gandti_forward.1} parent=5 // pred_fallthru
      _
  $region6: #{gandti_forward.1} parent=0 // loop_footer
    %s17 = sadd.s32 1, %s13
  $region7: #{gandti_forward.1} parent=0 // loop_footer_branch
    %12 = sbr.rel target = $region3
  $region8: #{gandti_forward.1} parent=0 // loop_exit
    _

</llo_original>
